<compile_context>
chip_gen: v7x
topology: tpu7x:2x2x1
jax: 0.10.0
libtpu: 0.0.40
codegen_flags: <defaults>
</compile_context>

<pallas_src>
import functools

import jax
import jax.numpy as jnp
from jax.experimental import pallas as pl
from jax.experimental.pallas import tpu as pltpu


# ----------------------------------------------------------------------------
# Pallas kernel (single invocation, no grid)
# ----------------------------------------------------------------------------
def _hier_decoder_kernel(
    # inputs
    latent_ref,        # (B, L)      f32
    h0_ref,            # (2, B, H)   f32  conductor initial hidden
    c0_ref,            # (2, B, H)   f32  conductor initial cell
    tgt_ref,           # (S*E*B, I)  f32  teacher-forcing notes, row = s*E*B + e*B + b
    cWi0_ref, cWh0_ref, cb0_ref,     # conductor L0: (L,4H) bf16, (H,4H) bf16, (1,4H) f32
    cWi1_ref, cWh1_ref, cb1_ref,     # conductor L1: (H,4H) bf16, (H,4H) bf16, (1,4H) f32
    We_ref, be_ref,                  # conductor_embeddings: (H,L) bf16, (1,L) f32
    dWin_ref, dWie_ref, dWh0_ref, db0_ref,   # decoder L0: (I,4H),(L,4H),(H,4H) bf16, (1,4H) f32
    dWi1_ref, dWh1_ref, db1_ref,             # decoder L1: (H,4H),(H,4H) bf16, (1,4H) f32
    Wo_ref, bo_ref,                  # output head (lane-padded): (H,IPAD) bf16, (1,IPAD) f32
    # outputs
    out_ref,           # (S*E*B, IPAD) f32  softmax probs (padded lanes == 0)
    # scratch
    ng_ref,            # (S, E*B, 4H) f32  precomputed decoder-L0 non-recurrent gate inputs
    hacc_ref,          # (S, E*B, H)  f32  dh1 accumulator for the deferred output head
):
    f32 = jnp.float32
    bf16 = jnp.bfloat16

    B = latent_ref.shape[0]
    H = cWh0_ref.shape[0]
    S, EB, _ = ng_ref.shape
    E = EB // B

    def mm(a, w_ref):
        # bf16 operands, f32 accumulation on the MXU.
        return jnp.dot(a.astype(bf16), w_ref[...], preferred_element_type=f32)

    def cell(xg, h, c, wh_ref):
        # xg already contains the x @ W_ih contribution + bias (f32).
        g = xg + mm(h, wh_ref)
        i_g = jax.nn.sigmoid(g[:, 0:H])
        f_g = jax.nn.sigmoid(g[:, H:2 * H])
        g_g = jnp.tanh(g[:, 2 * H:3 * H])
        o_g = jax.nn.sigmoid(g[:, 3 * H:4 * H])
        c_new = f_g * c + i_g * g_g
        return o_g * jnp.tanh(c_new), c_new

    # ---- phase 1: conductor — E sequential 2-layer LSTM steps on the constant latent
    xg0 = mm(latent_ref[...], cWi0_ref) + cb0_ref[...]     # hoisted: loop-invariant
    ch0 = h0_ref[0].astype(f32)
    cc0 = c0_ref[0].astype(f32)
    ch1 = h0_ref[1].astype(f32)
    cc1 = c0_ref[1].astype(f32)
    embs = []
    for _ in range(E):                                     # E small & static -> unrolled
        ch0, cc0 = cell(xg0, ch0, cc0, cWh0_ref)
        xg1 = mm(ch0, cWi1_ref) + cb1_ref[...]
        ch1, cc1 = cell(xg1, ch1, cc1, cWh1_ref)
        embs.append(jnp.tanh(mm(ch1, We_ref) + be_ref[...]))
    emb_all = jnp.concatenate(embs, axis=0)                # (E*B, L), row = e*B + b

    # ---- phase 2: decoder — E independent sub-sequences folded into batch E*B ------
    # Hoist every non-recurrent matmul out of the sequential chain.
    note_g = mm(tgt_ref[...], dWin_ref)                    # (S*EB, 4H) teacher-forcing i2h
    inv_g = mm(emb_all, dWie_ref) + db0_ref[...]           # (EB, 4H) loop-invariant part
    ng_ref[...] = note_g.reshape(S, EB, 4 * H) + inv_g[None]

    b1 = db1_ref[...]                                      # (1, 4H) f32

    def body(t, carry):
        dh0, dc0, dh1, dc1 = carry
        dh0, dc0 = cell(ng_ref[t], dh0, dc0, dWh0_ref)
        dh1, dc1 = cell(mm(dh0, dWi1_ref) + b1, dh1, dc1, dWh1_ref)
        hacc_ref[t] = dh1                                  # defer the output head
        return dh0, dc0, dh1, dc1

    z = jnp.zeros((EB, H), f32)                            # decoder state resets per sub-seq
    jax.lax.fori_loop(0, S, body, (z, z, z, z), unroll=True)

    # ---- epilogue: deferred output head + softmax, one lane-dense store -------------
    hs = hacc_ref[...].reshape(S * EB, H)
    logits = mm(hs, Wo_ref) + bo_ref[...]                  # padded lanes carry -1e30 bias
    m = jnp.max(logits, axis=-1, keepdims=True)
    ex = jnp.exp(logits - m)                               # padded lanes -> exp underflows to 0
    probs = ex * pl.reciprocal(jnp.sum(ex, axis=-1, keepdims=True), approx=True)
    out_ref[...] = probs.astype(out_ref.dtype)


# ----------------------------------------------------------------------------
# Wrapper
# ----------------------------------------------------------------------------
def hierarchical_lstm_decoder(target, latent, h0, c0, params, *, seq_length):
    T, B, I = target.shape
    H = h0.shape[-1]
    S = seq_length
    E = T // S
    EB = E * B
    IPAD = ((I + 127) // 128) * 128                        # lane-dense output head

    p = params
    bf16 = jnp.bfloat16
    wcast = lambda w: w.astype(bf16)

    # Pad the output head to 128 lanes; padded logits get a huge negative bias so the
    # softmax over the padded lanes is exact (exp underflows to 0).
    Wo_pad = jnp.zeros((H, IPAD), bf16).at[:, :I].set(p["Wo"].astype(bf16))
    bo_pad = jnp.full((1, IPAD), -1e30, jnp.float32).at[:, :I].set(p["bo"])

    # Fold the E independent sub-sequences into the batch, time-major:
    #   row s*E*B + e*B + b  <->  target[e*S + s, b]
    tgt_r = (target.reshape(E, S, B, I)
                   .transpose(1, 0, 2, 3)
                   .reshape(S * EB, I))

    out_flat = pl.pallas_call(
        _hier_decoder_kernel,
        out_shape=jax.ShapeDtypeStruct((S * EB, IPAD), jnp.float32),
        scratch_shapes=[
            pltpu.VMEM((S, EB, 4 * H), jnp.float32),   # hoisted decoder-L0 gate inputs
            pltpu.VMEM((S, EB, H), jnp.float32),       # dh1 accumulator (deferred head)
        ],
    )(
        latent, h0, c0, tgt_r,
        wcast(p["cWi0"]), wcast(p["cWh0"]), p["cb0"],
        wcast(p["cWi1"]), wcast(p["cWh1"]), p["cb1"],
        wcast(p["We"]), p["be"],
        wcast(p["dWin"]), wcast(p["dWie"]), wcast(p["dWh0"]), p["db0"],
        wcast(p["dWi1"]), wcast(p["dWh1"]), p["db1"],
        Wo_pad, bo_pad,
    )

    # Un-fold: (S, E, B, IPAD) -> (E, S, B, IPAD) -> (T, B, I)
    out = (out_flat.reshape(S, E, B, IPAD)
                   .transpose(1, 0, 2, 3)
                   .reshape(T, B, IPAD)[:, :, :I])
    return out


# ----------------------------------------------------------------------------
# Pure-JAX reference (f32, same semantics) for verification
# ----------------------------------------------------------------------------
def reference(target, latent, h0, c0, p, *, seq_length):
    T, B, I = target.shape
    H = h0.shape[-1]
    num_emb = T // seq_length

    def cell(xg, h, c, Wh):
        g = xg + h @ Wh
        i_g = jax.nn.sigmoid(g[:, :H]); f_g = jax.nn.sigmoid(g[:, H:2 * H])
        g_g = jnp.tanh(g[:, 2 * H:3 * H]); o_g = jax.nn.sigmoid(g[:, 3 * H:])
        c = f_g * c + i_g * g_g
        return o_g * jnp.tanh(c), c

    ch0, cc0, ch1, cc1 = h0[0], c0[0], h0[1], c0[1]
    outs = []
    for e in range(num_emb):
        ch0, cc0 = cell(latent @ p["cWi0"] + p["cb0"], ch0, cc0, p["cWh0"])
        ch1, cc1 = cell(ch0 @ p["cWi1"] + p["cb1"], ch1, cc1, p["cWh1"])
        emb = jnp.tanh(ch1 @ p["We"] + p["be"])
        dh0 = dc0 = dh1 = dc1 = jnp.zeros((B, H), jnp.float32)
        for t in range(seq_length):
            note = target[e * seq_length + t]
            xg0 = note @ p["dWin"] + emb @ p["dWie"] + p["db0"]
            dh0, dc0 = cell(xg0, dh0, dc0, p["dWh0"])
            dh1, dc1 = cell(dh0 @ p["dWi1"] + p["db1"], dh1, dc1, p["dWh1"])
            outs.append(jax.nn.softmax(dh1 @ p["Wo"] + p["bo"], axis=-1))
    return jnp.stack(outs, axis=0)


# ----------------------------------------------------------------------------
# Main
# ----------------------------------------------------------------------------
if __name__ == "__main__":
    # Small shapes consistent with the module structure.
    input_size = 16        # note vocab width
    hidden_size = 128
    latent_size = 128
    num_layers = 2
    seq_length = 4
    max_seq_length = 16
    batch = 8

    key = jax.random.PRNGKey(0)
    ks = iter(jax.random.split(key, 32))
    scale = 1.0 / jnp.sqrt(hidden_size)

    def w(shape):
        return jax.random.uniform(next(ks), shape, jnp.float32, -scale, scale)

    H4 = 4 * hidden_size
    params = {
        # conductor LSTM (b = b_ih + b_hh combined)
        "cWi0": w((latent_size, H4)), "cWh0": w((hidden_size, H4)), "cb0": w((1, H4)),
        "cWi1": w((hidden_size, H4)), "cWh1": w((hidden_size, H4)), "cb1": w((1, H4)),
        # conductor_embeddings = Linear(hidden -> latent) + tanh
        "We": w((hidden_size, latent_size)), "be": w((1, latent_size)),
        # decoder LSTM; layer-0 input weight split into note part and embedding part
        "dWin": w((input_size, H4)), "dWie": w((latent_size, H4)),
        "dWh0": w((hidden_size, H4)), "db0": w((1, H4)),
        "dWi1": w((hidden_size, H4)), "dWh1": w((hidden_size, H4)), "db1": w((1, H4)),
        # output head = Linear(hidden -> input_size) + softmax(dim=-1)
        "Wo": w((hidden_size, input_size)), "bo": w((1, input_size)),
    }

    # layout: target (T, B, input_size), latent (B, latent), h0/c0 (num_layers, B, hidden)
    target = jax.random.uniform(next(ks), (max_seq_length, batch, input_size), jnp.float32)
    latent = jax.random.normal(next(ks), (batch, latent_size), jnp.float32)
    h0 = jax.random.normal(next(ks), (num_layers, batch, hidden_size), jnp.float32) * 0.1
    c0 = jax.random.normal(next(ks), (num_layers, batch, hidden_size), jnp.float32) * 0.1

    run = jax.jit(functools.partial(hierarchical_lstm_decoder, seq_length=seq_length))
    out = run(target, latent, h0, c0, params)
    out = jax.block_until_ready(out)

    ref = reference(target, latent, h0, c0, params, seq_length=seq_length)
    assert out.shape == (max_seq_length, batch, input_size)
    assert jnp.allclose(out, ref, atol=2e-2, rtol=2e-2)

    print("KERNEL_OK")
</pallas_src>

<mosaic_0001>
module attributes {stable_mosaic.version = 11 : i64} {
  func.func @_hier_decoder_kernel(%arg0: memref<8x128xf32, #tpu.memory_space<vmem>>, %arg1: memref<2x8x128xf32, #tpu.memory_space<vmem>>, %arg2: memref<2x8x128xf32, #tpu.memory_space<vmem>>, %arg3: memref<128x16xf32, #tpu.memory_space<vmem>>, %arg4: memref<128x512xbf16, #tpu.memory_space<vmem>>, %arg5: memref<128x512xbf16, #tpu.memory_space<vmem>>, %arg6: memref<1x512xf32, #tpu.memory_space<vmem>>, %arg7: memref<128x512xbf16, #tpu.memory_space<vmem>>, %arg8: memref<128x512xbf16, #tpu.memory_space<vmem>>, %arg9: memref<1x512xf32, #tpu.memory_space<vmem>>, %arg10: memref<128x128xbf16, #tpu.memory_space<vmem>>, %arg11: memref<1x128xf32, #tpu.memory_space<vmem>>, %arg12: memref<16x512xbf16, #tpu.memory_space<vmem>>, %arg13: memref<128x512xbf16, #tpu.memory_space<vmem>>, %arg14: memref<128x512xbf16, #tpu.memory_space<vmem>>, %arg15: memref<1x512xf32, #tpu.memory_space<vmem>>, %arg16: memref<128x512xbf16, #tpu.memory_space<vmem>>, %arg17: memref<128x512xbf16, #tpu.memory_space<vmem>>, %arg18: memref<1x512xf32, #tpu.memory_space<vmem>>, %arg19: memref<128x128xbf16, #tpu.memory_space<vmem>>, %arg20: memref<1x128xf32, #tpu.memory_space<vmem>>, %arg21: memref<128x128xf32, #tpu.memory_space<vmem>>, %arg22: memref<4x32x512xf32, #tpu.memory_space<vmem>>, %arg23: memref<4x32x128xf32, #tpu.memory_space<vmem>>) attributes {dimension_semantics = [], scalar_prefetch = 0 : i64, scratch_operands = 2 : i64, tpu.core_type = #tpu.core_type<tc>} {
    %c0 = arith.constant 0 : index
    %c0_0 = arith.constant 0 : index
    %0 = vector.load %arg0[%c0, %c0_0] : memref<8x128xf32, #tpu.memory_space<vmem>>, vector<8x128xf32>
    %1 = arith.truncf %0 : vector<8x128xf32> to vector<8x128xbf16>
    %c0_1 = arith.constant 0 : index
    %c0_2 = arith.constant 0 : index
    %2 = vector.load %arg4[%c0_1, %c0_2] : memref<128x512xbf16, #tpu.memory_space<vmem>>, vector<128x512xbf16>
    %cst = arith.constant dense<0.000000e+00> : vector<8x512xf32>
    %3 = tpu.matmul %1, %2, %cst {dimension_numbers = #tpu.dot_dimension_numbers<[1], [0], [0], [1], [0, 0, 1, 1], [], []>} : vector<8x128xbf16>, vector<128x512xbf16>, vector<8x512xf32> -> vector<8x512xf32>
    %c0_3 = arith.constant 0 : index
    %c0_4 = arith.constant 0 : index
    %4 = vector.load %arg6[%c0_3, %c0_4] : memref<1x512xf32, #tpu.memory_space<vmem>>, vector<1x512xf32>
    %5 = vector.broadcast %4 : vector<1x512xf32> to vector<8x512xf32>
    %6 = arith.addf %3, %5 : vector<8x512xf32>
    %c0_5 = arith.constant 0 : index
    %c0_6 = arith.constant 0 : index
    %c0_7 = arith.constant 0 : index
    %7 = vector.load %arg1[%c0_5, %c0_6, %c0_7] : memref<2x8x128xf32, #tpu.memory_space<vmem>>, vector<1x8x128xf32>
    %8 = vector.shape_cast %7 : vector<1x8x128xf32> to vector<8x128xf32>
    %c0_8 = arith.constant 0 : index
    %c0_9 = arith.constant 0 : index
    %c0_10 = arith.constant 0 : index
    %9 = vector.load %arg2[%c0_8, %c0_9, %c0_10] : memref<2x8x128xf32, #tpu.memory_space<vmem>>, vector<1x8x128xf32>
    %10 = vector.shape_cast %9 : vector<1x8x128xf32> to vector<8x128xf32>
    %c1 = arith.constant 1 : index
    %c0_11 = arith.constant 0 : index
    %c0_12 = arith.constant 0 : index
    %11 = vector.load %arg1[%c1, %c0_11, %c0_12] : memref<2x8x128xf32, #tpu.memory_space<vmem>>, vector<1x8x128xf32>
    %12 = vector.shape_cast %11 : vector<1x8x128xf32> to vector<8x128xf32>
    %c1_13 = arith.constant 1 : index
    %c0_14 = arith.constant 0 : index
    %c0_15 = arith.constant 0 : index
    %13 = vector.load %arg2[%c1_13, %c0_14, %c0_15] : memref<2x8x128xf32, #tpu.memory_space<vmem>>, vector<1x8x128xf32>
    %14 = vector.shape_cast %13 : vector<1x8x128xf32> to vector<8x128xf32>
    %15 = arith.truncf %8 : vector<8x128xf32> to vector<8x128xbf16>
    %c0_16 = arith.constant 0 : index
    %c0_17 = arith.constant 0 : index
    %16 = vector.load %arg5[%c0_16, %c0_17] : memref<128x512xbf16, #tpu.memory_space<vmem>>, vector<128x512xbf16>
    %cst_18 = arith.constant dense<0.000000e+00> : vector<8x512xf32>
    %17 = tpu.matmul %15, %16, %cst_18 {dimension_numbers = #tpu.dot_dimension_numbers<[1], [0], [0], [1], [0, 0, 1, 1], [], []>} : vector<8x128xbf16>, vector<128x512xbf16>, vector<8x512xf32> -> vector<8x512xf32>
    %18 = arith.addf %6, %17 : vector<8x512xf32>
    %19 = vector.extract_strided_slice %18 {offsets = [0, 0], sizes = [8, 128], strides = [1, 1]} : vector<8x512xf32> to vector<8x128xf32>
    %20 = arith.negf %19 : vector<8x128xf32>
    %21 = math.exp %20 : vector<8x128xf32>
    %cst_19 = arith.constant 1.000000e+00 : f32
    %22 = vector.broadcast %cst_19 : f32 to vector<8x128xf32>
    %23 = arith.addf %22, %21 : vector<8x128xf32>
    %24 = arith.divf %22, %23 : vector<8x128xf32>
    %25 = vector.extract_strided_slice %18 {offsets = [0, 128], sizes = [8, 128], strides = [1, 1]} : vector<8x512xf32> to vector<8x128xf32>
    %26 = arith.negf %25 : vector<8x128xf32>
    %27 = math.exp %26 : vector<8x128xf32>
    %cst_20 = arith.constant 1.000000e+00 : f32
    %28 = vector.broadcast %cst_20 : f32 to vector<8x128xf32>
    %29 = arith.addf %28, %27 : vector<8x128xf32>
    %30 = arith.divf %28, %29 : vector<8x128xf32>
    %31 = vector.extract_strided_slice %18 {offsets = [0, 256], sizes = [8, 128], strides = [1, 1]} : vector<8x512xf32> to vector<8x128xf32>
    %32 = math.tanh %31 : vector<8x128xf32>
    %33 = vector.extract_strided_slice %18 {offsets = [0, 384], sizes = [8, 128], strides = [1, 1]} : vector<8x512xf32> to vector<8x128xf32>
    %34 = arith.negf %33 : vector<8x128xf32>
    %35 = math.exp %34 : vector<8x128xf32>
    %cst_21 = arith.constant 1.000000e+00 : f32
    %36 = vector.broadcast %cst_21 : f32 to vector<8x128xf32>
    %37 = arith.addf %36, %35 : vector<8x128xf32>
    %38 = arith.divf %36, %37 : vector<8x128xf32>
    %39 = arith.mulf %30, %10 : vector<8x128xf32>
    %40 = arith.mulf %24, %32 : vector<8x128xf32>
    %41 = arith.addf %39, %40 : vector<8x128xf32>
    %42 = math.tanh %41 : vector<8x128xf32>
    %43 = arith.mulf %38, %42 : vector<8x128xf32>
    %44 = arith.truncf %43 : vector<8x128xf32> to vector<8x128xbf16>
    %c0_22 = arith.constant 0 : index
    %c0_23 = arith.constant 0 : index
    %45 = vector.load %arg7[%c0_22, %c0_23] : memref<128x512xbf16, #tpu.memory_space<vmem>>, vector<128x512xbf16>
    %cst_24 = arith.constant dense<0.000000e+00> : vector<8x512xf32>
    %46 = tpu.matmul %44, %45, %cst_24 {dimension_numbers = #tpu.dot_dimension_numbers<[1], [0], [0], [1], [0, 0, 1, 1], [], []>} : vector<8x128xbf16>, vector<128x512xbf16>, vector<8x512xf32> -> vector<8x512xf32>
    %c0_25 = arith.constant 0 : index
    %c0_26 = arith.constant 0 : index
    %47 = vector.load %arg9[%c0_25, %c0_26] : memref<1x512xf32, #tpu.memory_space<vmem>>, vector<1x512xf32>
    %48 = vector.broadcast %47 : vector<1x512xf32> to vector<8x512xf32>
    %49 = arith.addf %46, %48 : vector<8x512xf32>
    %50 = arith.truncf %12 : vector<8x128xf32> to vector<8x128xbf16>
    %c0_27 = arith.constant 0 : index
    %c0_28 = arith.constant 0 : index
    %51 = vector.load %arg8[%c0_27, %c0_28] : memref<128x512xbf16, #tpu.memory_space<vmem>>, vector<128x512xbf16>
    %cst_29 = arith.constant dense<0.000000e+00> : vector<8x512xf32>
    %52 = tpu.matmul %50, %51, %cst_29 {dimension_numbers = #tpu.dot_dimension_numbers<[1], [0], [0], [1], [0, 0, 1, 1], [], []>} : vector<8x128xbf16>, vector<128x512xbf16>, vector<8x512xf32> -> vector<8x512xf32>
    %53 = arith.addf %49, %52 : vector<8x512xf32>
    %54 = vector.extract_strided_slice %53 {offsets = [0, 0], sizes = [8, 128], strides = [1, 1]} : vector<8x512xf32> to vector<8x128xf32>
    %55 = arith.negf %54 : vector<8x128xf32>
    %56 = math.exp %55 : vector<8x128xf32>
    %cst_30 = arith.constant 1.000000e+00 : f32
    %57 = vector.broadcast %cst_30 : f32 to vector<8x128xf32>
    %58 = arith.addf %57, %56 : vector<8x128xf32>
    %59 = arith.divf %57, %58 : vector<8x128xf32>
    %60 = vector.extract_strided_slice %53 {offsets = [0, 128], sizes = [8, 128], strides = [1, 1]} : vector<8x512xf32> to vector<8x128xf32>
    %61 = arith.negf %60 : vector<8x128xf32>
    %62 = math.exp %61 : vector<8x128xf32>
    %cst_31 = arith.constant 1.000000e+00 : f32
    %63 = vector.broadcast %cst_31 : f32 to vector<8x128xf32>
    %64 = arith.addf %63, %62 : vector<8x128xf32>
    %65 = arith.divf %63, %64 : vector<8x128xf32>
    %66 = vector.extract_strided_slice %53 {offsets = [0, 256], sizes = [8, 128], strides = [1, 1]} : vector<8x512xf32> to vector<8x128xf32>
    %67 = math.tanh %66 : vector<8x128xf32>
    %68 = vector.extract_strided_slice %53 {offsets = [0, 384], sizes = [8, 128], strides = [1, 1]} : vector<8x512xf32> to vector<8x128xf32>
    %69 = arith.negf %68 : vector<8x128xf32>
    %70 = math.exp %69 : vector<8x128xf32>
    %cst_32 = arith.constant 1.000000e+00 : f32
    %71 = vector.broadcast %cst_32 : f32 to vector<8x128xf32>
    %72 = arith.addf %71, %70 : vector<8x128xf32>
    %73 = arith.divf %71, %72 : vector<8x128xf32>
    %74 = arith.mulf %65, %14 : vector<8x128xf32>
    %75 = arith.mulf %59, %67 : vector<8x128xf32>
    %76 = arith.addf %74, %75 : vector<8x128xf32>
    %77 = math.tanh %76 : vector<8x128xf32>
    %78 = arith.mulf %73, %77 : vector<8x128xf32>
    %79 = arith.truncf %78 : vector<8x128xf32> to vector<8x128xbf16>
    %c0_33 = arith.constant 0 : index
    %c0_34 = arith.constant 0 : index
    %80 = vector.load %arg10[%c0_33, %c0_34] : memref<128x128xbf16, #tpu.memory_space<vmem>>, vector<128x128xbf16>
    %cst_35 = arith.constant dense<0.000000e+00> : vector<8x128xf32>
    %81 = tpu.matmul %79, %80, %cst_35 {dimension_numbers = #tpu.dot_dimension_numbers<[1], [0], [0], [1], [0, 0, 1, 1], [], []>} : vector<8x128xbf16>, vector<128x128xbf16>, vector<8x128xf32> -> vector<8x128xf32>
    %c0_36 = arith.constant 0 : index
    %c0_37 = arith.constant 0 : index
    %82 = vector.load %arg11[%c0_36, %c0_37] : memref<1x128xf32, #tpu.memory_space<vmem>>, vector<1x128xf32>
    %83 = vector.broadcast %82 : vector<1x128xf32> to vector<8x128xf32>
    %84 = arith.addf %81, %83 : vector<8x128xf32>
    %85 = math.tanh %84 : vector<8x128xf32>
    %86 = arith.truncf %43 : vector<8x128xf32> to vector<8x128xbf16>
    %c0_38 = arith.constant 0 : index
    %c0_39 = arith.constant 0 : index
    %87 = vector.load %arg5[%c0_38, %c0_39] : memref<128x512xbf16, #tpu.memory_space<vmem>>, vector<128x512xbf16>
    %cst_40 = arith.constant dense<0.000000e+00> : vector<8x512xf32>
    %88 = tpu.matmul %86, %87, %cst_40 {dimension_numbers = #tpu.dot_dimension_numbers<[1], [0], [0], [1], [0, 0, 1, 1], [], []>} : vector<8x128xbf16>, vector<128x512xbf16>, vector<8x512xf32> -> vector<8x512xf32>
    %89 = arith.addf %6, %88 : vector<8x512xf32>
    %90 = vector.extract_strided_slice %89 {offsets = [0, 0], sizes = [8, 128], strides = [1, 1]} : vector<8x512xf32> to vector<8x128xf32>
    %91 = arith.negf %90 : vector<8x128xf32>
    %92 = math.exp %91 : vector<8x128xf32>
    %cst_41 = arith.constant 1.000000e+00 : f32
    %93 = vector.broadcast %cst_41 : f32 to vector<8x128xf32>
    %94 = arith.addf %93, %92 : vector<8x128xf32>
    %95 = arith.divf %93, %94 : vector<8x128xf32>
    %96 = vector.extract_strided_slice %89 {offsets = [0, 128], sizes = [8, 128], strides = [1, 1]} : vector<8x512xf32> to vector<8x128xf32>
    %97 = arith.negf %96 : vector<8x128xf32>
    %98 = math.exp %97 : vector<8x128xf32>
    %cst_42 = arith.constant 1.000000e+00 : f32
    %99 = vector.broadcast %cst_42 : f32 to vector<8x128xf32>
    %100 = arith.addf %99, %98 : vector<8x128xf32>
    %101 = arith.divf %99, %100 : vector<8x128xf32>
    %102 = vector.extract_strided_slice %89 {offsets = [0, 256], sizes = [8, 128], strides = [1, 1]} : vector<8x512xf32> to vector<8x128xf32>
    %103 = math.tanh %102 : vector<8x128xf32>
    %104 = vector.extract_strided_slice %89 {offsets = [0, 384], sizes = [8, 128], strides = [1, 1]} : vector<8x512xf32> to vector<8x128xf32>
    %105 = arith.negf %104 : vector<8x128xf32>
    %106 = math.exp %105 : vector<8x128xf32>
    %cst_43 = arith.constant 1.000000e+00 : f32
    %107 = vector.broadcast %cst_43 : f32 to vector<8x128xf32>
    %108 = arith.addf %107, %106 : vector<8x128xf32>
    %109 = arith.divf %107, %108 : vector<8x128xf32>
    %110 = arith.mulf %101, %41 : vector<8x128xf32>
    %111 = arith.mulf %95, %103 : vector<8x128xf32>
    %112 = arith.addf %110, %111 : vector<8x128xf32>
    %113 = math.tanh %112 : vector<8x128xf32>
    %114 = arith.mulf %109, %113 : vector<8x128xf32>
    %115 = arith.truncf %114 : vector<8x128xf32> to vector<8x128xbf16>
    %c0_44 = arith.constant 0 : index
    %c0_45 = arith.constant 0 : index
    %116 = vector.load %arg7[%c0_44, %c0_45] : memref<128x512xbf16, #tpu.memory_space<vmem>>, vector<128x512xbf16>
    %cst_46 = arith.constant dense<0.000000e+00> : vector<8x512xf32>
    %117 = tpu.matmul %115, %116, %cst_46 {dimension_numbers = #tpu.dot_dimension_numbers<[1], [0], [0], [1], [0, 0, 1, 1], [], []>} : vector<8x128xbf16>, vector<128x512xbf16>, vector<8x512xf32> -> vector<8x512xf32>
    %c0_47 = arith.constant 0 : index
    %c0_48 = arith.constant 0 : index
    %118 = vector.load %arg9[%c0_47, %c0_48] : memref<1x512xf32, #tpu.memory_space<vmem>>, vector<1x512xf32>
    %119 = vector.broadcast %118 : vector<1x512xf32> to vector<8x512xf32>
    %120 = arith.addf %117, %119 : vector<8x512xf32>
    %121 = arith.truncf %78 : vector<8x128xf32> to vector<8x128xbf16>
    %c0_49 = arith.constant 0 : index
    %c0_50 = arith.constant 0 : index
    %122 = vector.load %arg8[%c0_49, %c0_50] : memref<128x512xbf16, #tpu.memory_space<vmem>>, vector<128x512xbf16>
    %cst_51 = arith.constant dense<0.000000e+00> : vector<8x512xf32>
    %123 = tpu.matmul %121, %122, %cst_51 {dimension_numbers = #tpu.dot_dimension_numbers<[1], [0], [0], [1], [0, 0, 1, 1], [], []>} : vector<8x128xbf16>, vector<128x512xbf16>, vector<8x512xf32> -> vector<8x512xf32>
    %124 = arith.addf %120, %123 : vector<8x512xf32>
    %125 = vector.extract_strided_slice %124 {offsets = [0, 0], sizes = [8, 128], strides = [1, 1]} : vector<8x512xf32> to vector<8x128xf32>
    %126 = arith.negf %125 : vector<8x128xf32>
    %127 = math.exp %126 : vector<8x128xf32>
    %cst_52 = arith.constant 1.000000e+00 : f32
    %128 = vector.broadcast %cst_52 : f32 to vector<8x128xf32>
    %129 = arith.addf %128, %127 : vector<8x128xf32>
    %130 = arith.divf %128, %129 : vector<8x128xf32>
    %131 = vector.extract_strided_slice %124 {offsets = [0, 128], sizes = [8, 128], strides = [1, 1]} : vector<8x512xf32> to vector<8x128xf32>
    %132 = arith.negf %131 : vector<8x128xf32>
    %133 = math.exp %132 : vector<8x128xf32>
    %cst_53 = arith.constant 1.000000e+00 : f32
    %134 = vector.broadcast %cst_53 : f32 to vector<8x128xf32>
    %135 = arith.addf %134, %133 : vector<8x128xf32>
    %136 = arith.divf %134, %135 : vector<8x128xf32>
    %137 = vector.extract_strided_slice %124 {offsets = [0, 256], sizes = [8, 128], strides = [1, 1]} : vector<8x512xf32> to vector<8x128xf32>
    %138 = math.tanh %137 : vector<8x128xf32>
    %139 = vector.extract_strided_slice %124 {offsets = [0, 384], sizes = [8, 128], strides = [1, 1]} : vector<8x512xf32> to vector<8x128xf32>
    %140 = arith.negf %139 : vector<8x128xf32>
    %141 = math.exp %140 : vector<8x128xf32>
    %cst_54 = arith.constant 1.000000e+00 : f32
    %142 = vector.broadcast %cst_54 : f32 to vector<8x128xf32>
    %143 = arith.addf %142, %141 : vector<8x128xf32>
    %144 = arith.divf %142, %143 : vector<8x128xf32>
    %145 = arith.mulf %136, %76 : vector<8x128xf32>
    %146 = arith.mulf %130, %138 : vector<8x128xf32>
    %147 = arith.addf %145, %146 : vector<8x128xf32>
    %148 = math.tanh %147 : vector<8x128xf32>
    %149 = arith.mulf %144, %148 : vector<8x128xf32>
    %150 = arith.truncf %149 : vector<8x128xf32> to vector<8x128xbf16>
    %c0_55 = arith.constant 0 : index
    %c0_56 = arith.constant 0 : index
    %151 = vector.load %arg10[%c0_55, %c0_56] : memref<128x128xbf16, #tpu.memory_space<vmem>>, vector<128x128xbf16>
    %cst_57 = arith.constant dense<0.000000e+00> : vector<8x128xf32>
    %152 = tpu.matmul %150, %151, %cst_57 {dimension_numbers = #tpu.dot_dimension_numbers<[1], [0], [0], [1], [0, 0, 1, 1], [], []>} : vector<8x128xbf16>, vector<128x128xbf16>, vector<8x128xf32> -> vector<8x128xf32>
    %c0_58 = arith.constant 0 : index
    %c0_59 = arith.constant 0 : index
    %153 = vector.load %arg11[%c0_58, %c0_59] : memref<1x128xf32, #tpu.memory_space<vmem>>, vector<1x128xf32>
    %154 = vector.broadcast %153 : vector<1x128xf32> to vector<8x128xf32>
    %155 = arith.addf %152, %154 : vector<8x128xf32>
    %156 = math.tanh %155 : vector<8x128xf32>
    %157 = arith.truncf %114 : vector<8x128xf32> to vector<8x128xbf16>
    %c0_60 = arith.constant 0 : index
    %c0_61 = arith.constant 0 : index
    %158 = vector.load %arg5[%c0_60, %c0_61] : memref<128x512xbf16, #tpu.memory_space<vmem>>, vector<128x512xbf16>
    %cst_62 = arith.constant dense<0.000000e+00> : vector<8x512xf32>
    %159 = tpu.matmul %157, %158, %cst_62 {dimension_numbers = #tpu.dot_dimension_numbers<[1], [0], [0], [1], [0, 0, 1, 1], [], []>} : vector<8x128xbf16>, vector<128x512xbf16>, vector<8x512xf32> -> vector<8x512xf32>
    %160 = arith.addf %6, %159 : vector<8x512xf32>
    %161 = vector.extract_strided_slice %160 {offsets = [0, 0], sizes = [8, 128], strides = [1, 1]} : vector<8x512xf32> to vector<8x128xf32>
    %162 = arith.negf %161 : vector<8x128xf32>
    %163 = math.exp %162 : vector<8x128xf32>
    %cst_63 = arith.constant 1.000000e+00 : f32
    %164 = vector.broadcast %cst_63 : f32 to vector<8x128xf32>
    %165 = arith.addf %164, %163 : vector<8x128xf32>
    %166 = arith.divf %164, %165 : vector<8x128xf32>
    %167 = vector.extract_strided_slice %160 {offsets = [0, 128], sizes = [8, 128], strides = [1, 1]} : vector<8x512xf32> to vector<8x128xf32>
    %168 = arith.negf %167 : vector<8x128xf32>
    %169 = math.exp %168 : vector<8x128xf32>
    %cst_64 = arith.constant 1.000000e+00 : f32
    %170 = vector.broadcast %cst_64 : f32 to vector<8x128xf32>
    %171 = arith.addf %170, %169 : vector<8x128xf32>
    %172 = arith.divf %170, %171 : vector<8x128xf32>
    %173 = vector.extract_strided_slice %160 {offsets = [0, 256], sizes = [8, 128], strides = [1, 1]} : vector<8x512xf32> to vector<8x128xf32>
    %174 = math.tanh %173 : vector<8x128xf32>
    %175 = vector.extract_strided_slice %160 {offsets = [0, 384], sizes = [8, 128], strides = [1, 1]} : vector<8x512xf32> to vector<8x128xf32>
    %176 = arith.negf %175 : vector<8x128xf32>
    %177 = math.exp %176 : vector<8x128xf32>
    %cst_65 = arith.constant 1.000000e+00 : f32
    %178 = vector.broadcast %cst_65 : f32 to vector<8x128xf32>
    %179 = arith.addf %178, %177 : vector<8x128xf32>
    %180 = arith.divf %178, %179 : vector<8x128xf32>
    %181 = arith.mulf %172, %112 : vector<8x128xf32>
    %182 = arith.mulf %166, %174 : vector<8x128xf32>
    %183 = arith.addf %181, %182 : vector<8x128xf32>
    %184 = math.tanh %183 : vector<8x128xf32>
    %185 = arith.mulf %180, %184 : vector<8x128xf32>
    %186 = arith.truncf %185 : vector<8x128xf32> to vector<8x128xbf16>
    %c0_66 = arith.constant 0 : index
    %c0_67 = arith.constant 0 : index
    %187 = vector.load %arg7[%c0_66, %c0_67] : memref<128x512xbf16, #tpu.memory_space<vmem>>, vector<128x512xbf16>
    %cst_68 = arith.constant dense<0.000000e+00> : vector<8x512xf32>
    %188 = tpu.matmul %186, %187, %cst_68 {dimension_numbers = #tpu.dot_dimension_numbers<[1], [0], [0], [1], [0, 0, 1, 1], [], []>} : vector<8x128xbf16>, vector<128x512xbf16>, vector<8x512xf32> -> vector<8x512xf32>
    %c0_69 = arith.constant 0 : index
    %c0_70 = arith.constant 0 : index
    %189 = vector.load %arg9[%c0_69, %c0_70] : memref<1x512xf32, #tpu.memory_space<vmem>>, vector<1x512xf32>
    %190 = vector.broadcast %189 : vector<1x512xf32> to vector<8x512xf32>
    %191 = arith.addf %188, %190 : vector<8x512xf32>
    %192 = arith.truncf %149 : vector<8x128xf32> to vector<8x128xbf16>
    %c0_71 = arith.constant 0 : index
    %c0_72 = arith.constant 0 : index
    %193 = vector.load %arg8[%c0_71, %c0_72] : memref<128x512xbf16, #tpu.memory_space<vmem>>, vector<128x512xbf16>
    %cst_73 = arith.constant dense<0.000000e+00> : vector<8x512xf32>
    %194 = tpu.matmul %192, %193, %cst_73 {dimension_numbers = #tpu.dot_dimension_numbers<[1], [0], [0], [1], [0, 0, 1, 1], [], []>} : vector<8x128xbf16>, vector<128x512xbf16>, vector<8x512xf32> -> vector<8x512xf32>
    %195 = arith.addf %191, %194 : vector<8x512xf32>
    %196 = vector.extract_strided_slice %195 {offsets = [0, 0], sizes = [8, 128], strides = [1, 1]} : vector<8x512xf32> to vector<8x128xf32>
    %197 = arith.negf %196 : vector<8x128xf32>
    %198 = math.exp %197 : vector<8x128xf32>
    %cst_74 = arith.constant 1.000000e+00 : f32
    %199 = vector.broadcast %cst_74 : f32 to vector<8x128xf32>
    %200 = arith.addf %199, %198 : vector<8x128xf32>
    %201 = arith.divf %199, %200 : vector<8x128xf32>
    %202 = vector.extract_strided_slice %195 {offsets = [0, 128], sizes = [8, 128], strides = [1, 1]} : vector<8x512xf32> to vector<8x128xf32>
    %203 = arith.negf %202 : vector<8x128xf32>
    %204 = math.exp %203 : vector<8x128xf32>
    %cst_75 = arith.constant 1.000000e+00 : f32
    %205 = vector.broadcast %cst_75 : f32 to vector<8x128xf32>
    %206 = arith.addf %205, %204 : vector<8x128xf32>
    %207 = arith.divf %205, %206 : vector<8x128xf32>
    %208 = vector.extract_strided_slice %195 {offsets = [0, 256], sizes = [8, 128], strides = [1, 1]} : vector<8x512xf32> to vector<8x128xf32>
    %209 = math.tanh %208 : vector<8x128xf32>
    %210 = vector.extract_strided_slice %195 {offsets = [0, 384], sizes = [8, 128], strides = [1, 1]} : vector<8x512xf32> to vector<8x128xf32>
    %211 = arith.negf %210 : vector<8x128xf32>
    %212 = math.exp %211 : vector<8x128xf32>
    %cst_76 = arith.constant 1.000000e+00 : f32
    %213 = vector.broadcast %cst_76 : f32 to vector<8x128xf32>
    %214 = arith.addf %213, %212 : vector<8x128xf32>
    %215 = arith.divf %213, %214 : vector<8x128xf32>
    %216 = arith.mulf %207, %147 : vector<8x128xf32>
    %217 = arith.mulf %201, %209 : vector<8x128xf32>
    %218 = arith.addf %216, %217 : vector<8x128xf32>
    %219 = math.tanh %218 : vector<8x128xf32>
    %220 = arith.mulf %215, %219 : vector<8x128xf32>
    %221 = arith.truncf %220 : vector<8x128xf32> to vector<8x128xbf16>
    %c0_77 = arith.constant 0 : index
    %c0_78 = arith.constant 0 : index
    %222 = vector.load %arg10[%c0_77, %c0_78] : memref<128x128xbf16, #tpu.memory_space<vmem>>, vector<128x128xbf16>
    %cst_79 = arith.constant dense<0.000000e+00> : vector<8x128xf32>
    %223 = tpu.matmul %221, %222, %cst_79 {dimension_numbers = #tpu.dot_dimension_numbers<[1], [0], [0], [1], [0, 0, 1, 1], [], []>} : vector<8x128xbf16>, vector<128x128xbf16>, vector<8x128xf32> -> vector<8x128xf32>
    %c0_80 = arith.constant 0 : index
    %c0_81 = arith.constant 0 : index
    %224 = vector.load %arg11[%c0_80, %c0_81] : memref<1x128xf32, #tpu.memory_space<vmem>>, vector<1x128xf32>
    %225 = vector.broadcast %224 : vector<1x128xf32> to vector<8x128xf32>
    %226 = arith.addf %223, %225 : vector<8x128xf32>
    %227 = math.tanh %226 : vector<8x128xf32>
    %228 = arith.truncf %185 : vector<8x128xf32> to vector<8x128xbf16>
    %c0_82 = arith.constant 0 : index
    %c0_83 = arith.constant 0 : index
    %229 = vector.load %arg5[%c0_82, %c0_83] : memref<128x512xbf16, #tpu.memory_space<vmem>>, vector<128x512xbf16>
    %cst_84 = arith.constant dense<0.000000e+00> : vector<8x512xf32>
    %230 = tpu.matmul %228, %229, %cst_84 {dimension_numbers = #tpu.dot_dimension_numbers<[1], [0], [0], [1], [0, 0, 1, 1], [], []>} : vector<8x128xbf16>, vector<128x512xbf16>, vector<8x512xf32> -> vector<8x512xf32>
    %231 = arith.addf %6, %230 : vector<8x512xf32>
    %232 = vector.extract_strided_slice %231 {offsets = [0, 0], sizes = [8, 128], strides = [1, 1]} : vector<8x512xf32> to vector<8x128xf32>
    %233 = arith.negf %232 : vector<8x128xf32>
    %234 = math.exp %233 : vector<8x128xf32>
    %cst_85 = arith.constant 1.000000e+00 : f32
    %235 = vector.broadcast %cst_85 : f32 to vector<8x128xf32>
    %236 = arith.addf %235, %234 : vector<8x128xf32>
    %237 = arith.divf %235, %236 : vector<8x128xf32>
    %238 = vector.extract_strided_slice %231 {offsets = [0, 128], sizes = [8, 128], strides = [1, 1]} : vector<8x512xf32> to vector<8x128xf32>
    %239 = arith.negf %238 : vector<8x128xf32>
    %240 = math.exp %239 : vector<8x128xf32>
    %cst_86 = arith.constant 1.000000e+00 : f32
    %241 = vector.broadcast %cst_86 : f32 to vector<8x128xf32>
    %242 = arith.addf %241, %240 : vector<8x128xf32>
    %243 = arith.divf %241, %242 : vector<8x128xf32>
    %244 = vector.extract_strided_slice %231 {offsets = [0, 256], sizes = [8, 128], strides = [1, 1]} : vector<8x512xf32> to vector<8x128xf32>
    %245 = math.tanh %244 : vector<8x128xf32>
    %246 = vector.extract_strided_slice %231 {offsets = [0, 384], sizes = [8, 128], strides = [1, 1]} : vector<8x512xf32> to vector<8x128xf32>
    %247 = arith.negf %246 : vector<8x128xf32>
    %248 = math.exp %247 : vector<8x128xf32>
    %cst_87 = arith.constant 1.000000e+00 : f32
    %249 = vector.broadcast %cst_87 : f32 to vector<8x128xf32>
    %250 = arith.addf %249, %248 : vector<8x128xf32>
    %251 = arith.divf %249, %250 : vector<8x128xf32>
    %252 = arith.mulf %243, %183 : vector<8x128xf32>
    %253 = arith.mulf %237, %245 : vector<8x128xf32>
    %254 = arith.addf %252, %253 : vector<8x128xf32>
    %255 = math.tanh %254 : vector<8x128xf32>
    %256 = arith.mulf %251, %255 : vector<8x128xf32>
    %257 = arith.truncf %256 : vector<8x128xf32> to vector<8x128xbf16>
    %c0_88 = arith.constant 0 : index
    %c0_89 = arith.constant 0 : index
    %258 = vector.load %arg7[%c0_88, %c0_89] : memref<128x512xbf16, #tpu.memory_space<vmem>>, vector<128x512xbf16>
    %cst_90 = arith.constant dense<0.000000e+00> : vector<8x512xf32>
    %259 = tpu.matmul %257, %258, %cst_90 {dimension_numbers = #tpu.dot_dimension_numbers<[1], [0], [0], [1], [0, 0, 1, 1], [], []>} : vector<8x128xbf16>, vector<128x512xbf16>, vector<8x512xf32> -> vector<8x512xf32>
    %c0_91 = arith.constant 0 : index
    %c0_92 = arith.constant 0 : index
    %260 = vector.load %arg9[%c0_91, %c0_92] : memref<1x512xf32, #tpu.memory_space<vmem>>, vector<1x512xf32>
    %261 = vector.broadcast %260 : vector<1x512xf32> to vector<8x512xf32>
    %262 = arith.addf %259, %261 : vector<8x512xf32>
    %263 = arith.truncf %220 : vector<8x128xf32> to vector<8x128xbf16>
    %c0_93 = arith.constant 0 : index
    %c0_94 = arith.constant 0 : index
    %264 = vector.load %arg8[%c0_93, %c0_94] : memref<128x512xbf16, #tpu.memory_space<vmem>>, vector<128x512xbf16>
    %cst_95 = arith.constant dense<0.000000e+00> : vector<8x512xf32>
    %265 = tpu.matmul %263, %264, %cst_95 {dimension_numbers = #tpu.dot_dimension_numbers<[1], [0], [0], [1], [0, 0, 1, 1], [], []>} : vector<8x128xbf16>, vector<128x512xbf16>, vector<8x512xf32> -> vector<8x512xf32>
    %266 = arith.addf %262, %265 : vector<8x512xf32>
    %267 = vector.extract_strided_slice %266 {offsets = [0, 0], sizes = [8, 128], strides = [1, 1]} : vector<8x512xf32> to vector<8x128xf32>
    %268 = arith.negf %267 : vector<8x128xf32>
    %269 = math.exp %268 : vector<8x128xf32>
    %cst_96 = arith.constant 1.000000e+00 : f32
    %270 = vector.broadcast %cst_96 : f32 to vector<8x128xf32>
    %271 = arith.addf %270, %269 : vector<8x128xf32>
    %272 = arith.divf %270, %271 : vector<8x128xf32>
    %273 = vector.extract_strided_slice %266 {offsets = [0, 128], sizes = [8, 128], strides = [1, 1]} : vector<8x512xf32> to vector<8x128xf32>
    %274 = arith.negf %273 : vector<8x128xf32>
    %275 = math.exp %274 : vector<8x128xf32>
    %cst_97 = arith.constant 1.000000e+00 : f32
    %276 = vector.broadcast %cst_97 : f32 to vector<8x128xf32>
    %277 = arith.addf %276, %275 : vector<8x128xf32>
    %278 = arith.divf %276, %277 : vector<8x128xf32>
    %279 = vector.extract_strided_slice %266 {offsets = [0, 256], sizes = [8, 128], strides = [1, 1]} : vector<8x512xf32> to vector<8x128xf32>
    %280 = math.tanh %279 : vector<8x128xf32>
    %281 = vector.extract_strided_slice %266 {offsets = [0, 384], sizes = [8, 128], strides = [1, 1]} : vector<8x512xf32> to vector<8x128xf32>
    %282 = arith.negf %281 : vector<8x128xf32>
    %283 = math.exp %282 : vector<8x128xf32>
    %cst_98 = arith.constant 1.000000e+00 : f32
    %284 = vector.broadcast %cst_98 : f32 to vector<8x128xf32>
    %285 = arith.addf %284, %283 : vector<8x128xf32>
    %286 = arith.divf %284, %285 : vector<8x128xf32>
    %287 = arith.mulf %278, %218 : vector<8x128xf32>
    %288 = arith.mulf %272, %280 : vector<8x128xf32>
    %289 = arith.addf %287, %288 : vector<8x128xf32>
    %290 = math.tanh %289 : vector<8x128xf32>
    %291 = arith.mulf %286, %290 : vector<8x128xf32>
    %292 = arith.truncf %291 : vector<8x128xf32> to vector<8x128xbf16>
    %c0_99 = arith.constant 0 : index
    %c0_100 = arith.constant 0 : index
    %293 = vector.load %arg10[%c0_99, %c0_100] : memref<128x128xbf16, #tpu.memory_space<vmem>>, vector<128x128xbf16>
    %cst_101 = arith.constant dense<0.000000e+00> : vector<8x128xf32>
    %294 = tpu.matmul %292, %293, %cst_101 {dimension_numbers = #tpu.dot_dimension_numbers<[1], [0], [0], [1], [0, 0, 1, 1], [], []>} : vector<8x128xbf16>, vector<128x128xbf16>, vector<8x128xf32> -> vector<8x128xf32>
    %c0_102 = arith.constant 0 : index
    %c0_103 = arith.constant 0 : index
    %295 = vector.load %arg11[%c0_102, %c0_103] : memref<1x128xf32, #tpu.memory_space<vmem>>, vector<1x128xf32>
    %296 = vector.broadcast %295 : vector<1x128xf32> to vector<8x128xf32>
    %297 = arith.addf %294, %296 : vector<8x128xf32>
    %298 = math.tanh %297 : vector<8x128xf32>
    %299 = tpu.concatenate %85, %156, %227, %298 in 0 : vector<8x128xf32>, vector<8x128xf32>, vector<8x128xf32>, vector<8x128xf32> -> vector<32x128xf32>
    %c0_104 = arith.constant 0 : index
    %c0_105 = arith.constant 0 : index
    %300 = vector.load %arg3[%c0_104, %c0_105] : memref<128x16xf32, #tpu.memory_space<vmem>>, vector<128x16xf32>
    %301 = arith.truncf %300 : vector<128x16xf32> to vector<128x16xbf16>
    %c0_106 = arith.constant 0 : index
    %c0_107 = arith.constant 0 : index
    %302 = vector.load %arg12[%c0_106, %c0_107] : memref<16x512xbf16, #tpu.memory_space<vmem>>, vector<16x512xbf16>
    %cst_108 = arith.constant dense<0.000000e+00> : vector<128x512xf32>
    %303 = tpu.matmul %301, %302, %cst_108 {dimension_numbers = #tpu.dot_dimension_numbers<[1], [0], [0], [1], [0, 0, 1, 1], [], []>} : vector<128x16xbf16>, vector<16x512xbf16>, vector<128x512xf32> -> vector<128x512xf32>
    %304 = arith.truncf %299 : vector<32x128xf32> to vector<32x128xbf16>
    %c0_109 = arith.constant 0 : index
    %c0_110 = arith.constant 0 : index
    %305 = vector.load %arg13[%c0_109, %c0_110] : memref<128x512xbf16, #tpu.memory_space<vmem>>, vector<128x512xbf16>
    %cst_111 = arith.constant dense<0.000000e+00> : vector<32x512xf32>
    %306 = tpu.matmul %304, %305, %cst_111 {dimension_numbers = #tpu.dot_dimension_numbers<[1], [0], [0], [1], [0, 0, 1, 1], [], []>} : vector<32x128xbf16>, vector<128x512xbf16>, vector<32x512xf32> -> vector<32x512xf32>
    %c0_112 = arith.constant 0 : index
    %c0_113 = arith.constant 0 : index
    %307 = vector.load %arg15[%c0_112, %c0_113] : memref<1x512xf32, #tpu.memory_space<vmem>>, vector<1x512xf32>
    %308 = vector.broadcast %307 : vector<1x512xf32> to vector<32x512xf32>
    %309 = arith.addf %306, %308 : vector<32x512xf32>
    %310 = vector.shape_cast %303 : vector<128x512xf32> to vector<4x32x512xf32>
    %311 = vector.shape_cast %309 : vector<32x512xf32> to vector<1x32x512xf32>
    %312 = vector.broadcast %311 : vector<1x32x512xf32> to vector<4x32x512xf32>
    %313 = arith.addf %310, %312 : vector<4x32x512xf32>
    %c0_114 = arith.constant 0 : index
    %c0_115 = arith.constant 0 : index
    %c0_116 = arith.constant 0 : index
    %314 = vector.load %arg22[%c0_114, %c0_115, %c0_116] : memref<4x32x512xf32, #tpu.memory_space<vmem>>, vector<4x32x512xf32>
    tpu.vector_store %arg22[%c0_114, %c0_115, %c0_116], %313 {strides = array<i32>} : memref<4x32x512xf32, #tpu.memory_space<vmem>>, vector<4x32x512xf32>,
    %c0_117 = arith.constant 0 : index
    %c0_118 = arith.constant 0 : index
    %315 = vector.load %arg18[%c0_117, %c0_118] : memref<1x512xf32, #tpu.memory_space<vmem>>, vector<1x512xf32>
    %cst_119 = arith.constant 0.000000e+00 : f32
    %316 = vector.broadcast %cst_119 : f32 to vector<32x128xf32>
    %c0_i32 = arith.constant 0 : i32
    %317 = arith.index_cast %c0_i32 : i32 to index
    %c0_120 = arith.constant 0 : index
    %c0_121 = arith.constant 0 : index
    %318 = vector.load %arg22[%317, %c0_120, %c0_121] : memref<4x32x512xf32, #tpu.memory_space<vmem>>, vector<1x32x512xf32>
    %319 = vector.shape_cast %318 : vector<1x32x512xf32> to vector<32x512xf32>
    %320 = arith.truncf %316 : vector<32x128xf32> to vector<32x128xbf16>
    %c0_122 = arith.constant 0 : index
    %c0_123 = arith.constant 0 : index
    %321 = vector.load %arg14[%c0_122, %c0_123] : memref<128x512xbf16, #tpu.memory_space<vmem>>, vector<128x512xbf16>
    %cst_124 = arith.constant dense<0.000000e+00> : vector<32x512xf32>
    %322 = tpu.matmul %320, %321, %cst_124 {dimension_numbers = #tpu.dot_dimension_numbers<[1], [0], [0], [1], [0, 0, 1, 1], [], []>} : vector<32x128xbf16>, vector<128x512xbf16>, vector<32x512xf32> -> vector<32x512xf32>
    %323 = arith.addf %319, %322 : vector<32x512xf32>
    %324 = vector.extract_strided_slice %323 {offsets = [0, 0], sizes = [32, 128], strides = [1, 1]} : vector<32x512xf32> to vector<32x128xf32>
    %325 = arith.negf %324 : vector<32x128xf32>
    %326 = math.exp %325 : vector<32x128xf32>
    %cst_125 = arith.constant 1.000000e+00 : f32
    %327 = vector.broadcast %cst_125 : f32 to vector<32x128xf32>
    %328 = arith.addf %327, %326 : vector<32x128xf32>
    %329 = arith.divf %327, %328 : vector<32x128xf32>
    %330 = vector.extract_strided_slice %323 {offsets = [0, 128], sizes = [32, 128], strides = [1, 1]} : vector<32x512xf32> to vector<32x128xf32>
    %331 = arith.negf %330 : vector<32x128xf32>
    %332 = math.exp %331 : vector<32x128xf32>
    %cst_126 = arith.constant 1.000000e+00 : f32
    %333 = vector.broadcast %cst_126 : f32 to vector<32x128xf32>
    %334 = arith.addf %333, %332 : vector<32x128xf32>
    %335 = arith.divf %333, %334 : vector<32x128xf32>
    %336 = vector.extract_strided_slice %323 {offsets = [0, 256], sizes = [32, 128], strides = [1, 1]} : vector<32x512xf32> to vector<32x128xf32>
    %337 = math.tanh %336 : vector<32x128xf32>
    %338 = vector.extract_strided_slice %323 {offsets = [0, 384], sizes = [32, 128], strides = [1, 1]} : vector<32x512xf32> to vector<32x128xf32>
    %339 = arith.negf %338 : vector<32x128xf32>
    %340 = math.exp %339 : vector<32x128xf32>
    %cst_127 = arith.constant 1.000000e+00 : f32
    %341 = vector.broadcast %cst_127 : f32 to vector<32x128xf32>
    %342 = arith.addf %341, %340 : vector<32x128xf32>
    %343 = arith.divf %341, %342 : vector<32x128xf32>
    %344 = arith.mulf %335, %316 : vector<32x128xf32>
    %345 = arith.mulf %329, %337 : vector<32x128xf32>
    %346 = arith.addf %344, %345 : vector<32x128xf32>
    %347 = math.tanh %346 : vector<32x128xf32>
    %348 = arith.mulf %343, %347 : vector<32x128xf32>
    %349 = arith.truncf %348 : vector<32x128xf32> to vector<32x128xbf16>
    %c0_128 = arith.constant 0 : index
    %c0_129 = arith.constant 0 : index
    %350 = vector.load %arg16[%c0_128, %c0_129] : memref<128x512xbf16, #tpu.memory_space<vmem>>, vector<128x512xbf16>
    %cst_130 = arith.constant dense<0.000000e+00> : vector<32x512xf32>
    %351 = tpu.matmul %349, %350, %cst_130 {dimension_numbers = #tpu.dot_dimension_numbers<[1], [0], [0], [1], [0, 0, 1, 1], [], []>} : vector<32x128xbf16>, vector<128x512xbf16>, vector<32x512xf32> -> vector<32x512xf32>
    %352 = vector.broadcast %315 : vector<1x512xf32> to vector<32x512xf32>
    %353 = arith.addf %351, %352 : vector<32x512xf32>
    %354 = arith.truncf %316 : vector<32x128xf32> to vector<32x128xbf16>
    %c0_131 = arith.constant 0 : index
    %c0_132 = arith.constant 0 : index
    %355 = vector.load %arg17[%c0_131, %c0_132] : memref<128x512xbf16, #tpu.memory_space<vmem>>, vector<128x512xbf16>
    %cst_133 = arith.constant dense<0.000000e+00> : vector<32x512xf32>
    %356 = tpu.matmul %354, %355, %cst_133 {dimension_numbers = #tpu.dot_dimension_numbers<[1], [0], [0], [1], [0, 0, 1, 1], [], []>} : vector<32x128xbf16>, vector<128x512xbf16>, vector<32x512xf32> -> vector<32x512xf32>
    %357 = arith.addf %353, %356 : vector<32x512xf32>
    %358 = vector.extract_strided_slice %357 {offsets = [0, 0], sizes = [32, 128], strides = [1, 1]} : vector<32x512xf32> to vector<32x128xf32>
    %359 = arith.negf %358 : vector<32x128xf32>
    %360 = math.exp %359 : vector<32x128xf32>
    %cst_134 = arith.constant 1.000000e+00 : f32
    %361 = vector.broadcast %cst_134 : f32 to vector<32x128xf32>
    %362 = arith.addf %361, %360 : vector<32x128xf32>
    %363 = arith.divf %361, %362 : vector<32x128xf32>
    %364 = vector.extract_strided_slice %357 {offsets = [0, 128], sizes = [32, 128], strides = [1, 1]} : vector<32x512xf32> to vector<32x128xf32>
    %365 = arith.negf %364 : vector<32x128xf32>
    %366 = math.exp %365 : vector<32x128xf32>
    %cst_135 = arith.constant 1.000000e+00 : f32
    %367 = vector.broadcast %cst_135 : f32 to vector<32x128xf32>
    %368 = arith.addf %367, %366 : vector<32x128xf32>
    %369 = arith.divf %367, %368 : vector<32x128xf32>
    %370 = vector.extract_strided_slice %357 {offsets = [0, 256], sizes = [32, 128], strides = [1, 1]} : vector<32x512xf32> to vector<32x128xf32>
    %371 = math.tanh %370 : vector<32x128xf32>
    %372 = vector.extract_strided_slice %357 {offsets = [0, 384], sizes = [32, 128], strides = [1, 1]} : vector<32x512xf32> to vector<32x128xf32>
    %373 = arith.negf %372 : vector<32x128xf32>
    %374 = math.exp %373 : vector<32x128xf32>
    %cst_136 = arith.constant 1.000000e+00 : f32
    %375 = vector.broadcast %cst_136 : f32 to vector<32x128xf32>
    %376 = arith.addf %375, %374 : vector<32x128xf32>
    %377 = arith.divf %375, %376 : vector<32x128xf32>
    %378 = arith.mulf %369, %316 : vector<32x128xf32>
    %379 = arith.mulf %363, %371 : vector<32x128xf32>
    %380 = arith.addf %378, %379 : vector<32x128xf32>
    %381 = math.tanh %380 : vector<32x128xf32>
    %382 = arith.mulf %377, %381 : vector<32x128xf32>
    %383 = arith.index_cast %c0_i32 : i32 to index
    %c0_137 = arith.constant 0 : index
    %c0_138 = arith.constant 0 : index
    %384 = vector.load %arg23[%383, %c0_137, %c0_138] : memref<4x32x128xf32, #tpu.memory_space<vmem>>, vector<1x32x128xf32>
    %385 = vector.shape_cast %384 : vector<1x32x128xf32> to vector<32x128xf32>
    %386 = vector.shape_cast %382 : vector<32x128xf32> to vector<1x32x128xf32>
    tpu.vector_store %arg23[%383, %c0_137, %c0_138], %386 {strides = array<i32>} : memref<4x32x128xf32, #tpu.memory_space<vmem>>, vector<1x32x128xf32>,
    %c1_i32 = arith.constant 1 : i32
    %387 = arith.index_cast %c1_i32 : i32 to index
    %c0_139 = arith.constant 0 : index
    %c0_140 = arith.constant 0 : index
    %388 = vector.load %arg22[%387, %c0_139, %c0_140] : memref<4x32x512xf32, #tpu.memory_space<vmem>>, vector<1x32x512xf32>
    %389 = vector.shape_cast %388 : vector<1x32x512xf32> to vector<32x512xf32>
    %390 = arith.truncf %348 : vector<32x128xf32> to vector<32x128xbf16>
    %c0_141 = arith.constant 0 : index
    %c0_142 = arith.constant 0 : index
    %391 = vector.load %arg14[%c0_141, %c0_142] : memref<128x512xbf16, #tpu.memory_space<vmem>>, vector<128x512xbf16>
    %cst_143 = arith.constant dense<0.000000e+00> : vector<32x512xf32>
    %392 = tpu.matmul %390, %391, %cst_143 {dimension_numbers = #tpu.dot_dimension_numbers<[1], [0], [0], [1], [0, 0, 1, 1], [], []>} : vector<32x128xbf16>, vector<128x512xbf16>, vector<32x512xf32> -> vector<32x512xf32>
    %393 = arith.addf %389, %392 : vector<32x512xf32>
    %394 = vector.extract_strided_slice %393 {offsets = [0, 0], sizes = [32, 128], strides = [1, 1]} : vector<32x512xf32> to vector<32x128xf32>
    %395 = arith.negf %394 : vector<32x128xf32>
    %396 = math.exp %395 : vector<32x128xf32>
    %cst_144 = arith.constant 1.000000e+00 : f32
    %397 = vector.broadcast %cst_144 : f32 to vector<32x128xf32>
    %398 = arith.addf %397, %396 : vector<32x128xf32>
    %399 = arith.divf %397, %398 : vector<32x128xf32>
    %400 = vector.extract_strided_slice %393 {offsets = [0, 128], sizes = [32, 128], strides = [1, 1]} : vector<32x512xf32> to vector<32x128xf32>
    %401 = arith.negf %400 : vector<32x128xf32>
    %402 = math.exp %401 : vector<32x128xf32>
    %cst_145 = arith.constant 1.000000e+00 : f32
    %403 = vector.broadcast %cst_145 : f32 to vector<32x128xf32>
    %404 = arith.addf %403, %402 : vector<32x128xf32>
    %405 = arith.divf %403, %404 : vector<32x128xf32>
    %406 = vector.extract_strided_slice %393 {offsets = [0, 256], sizes = [32, 128], strides = [1, 1]} : vector<32x512xf32> to vector<32x128xf32>
    %407 = math.tanh %406 : vector<32x128xf32>
    %408 = vector.extract_strided_slice %393 {offsets = [0, 384], sizes = [32, 128], strides = [1, 1]} : vector<32x512xf32> to vector<32x128xf32>
    %409 = arith.negf %408 : vector<32x128xf32>
    %410 = math.exp %409 : vector<32x128xf32>
    %cst_146 = arith.constant 1.000000e+00 : f32
    %411 = vector.broadcast %cst_146 : f32 to vector<32x128xf32>
    %412 = arith.addf %411, %410 : vector<32x128xf32>
    %413 = arith.divf %411, %412 : vector<32x128xf32>
    %414 = arith.mulf %405, %346 : vector<32x128xf32>
    %415 = arith.mulf %399, %407 : vector<32x128xf32>
    %416 = arith.addf %414, %415 : vector<32x128xf32>
    %417 = math.tanh %416 : vector<32x128xf32>
    %418 = arith.mulf %413, %417 : vector<32x128xf32>
    %419 = arith.truncf %418 : vector<32x128xf32> to vector<32x128xbf16>
    %c0_147 = arith.constant 0 : index
    %c0_148 = arith.constant 0 : index
    %420 = vector.load %arg16[%c0_147, %c0_148] : memref<128x512xbf16, #tpu.memory_space<vmem>>, vector<128x512xbf16>
    %cst_149 = arith.constant dense<0.000000e+00> : vector<32x512xf32>
    %421 = tpu.matmul %419, %420, %cst_149 {dimension_numbers = #tpu.dot_dimension_numbers<[1], [0], [0], [1], [0, 0, 1, 1], [], []>} : vector<32x128xbf16>, vector<128x512xbf16>, vector<32x512xf32> -> vector<32x512xf32>
    %422 = vector.broadcast %315 : vector<1x512xf32> to vector<32x512xf32>
    %423 = arith.addf %421, %422 : vector<32x512xf32>
    %424 = arith.truncf %382 : vector<32x128xf32> to vector<32x128xbf16>
    %c0_150 = arith.constant 0 : index
    %c0_151 = arith.constant 0 : index
    %425 = vector.load %arg17[%c0_150, %c0_151] : memref<128x512xbf16, #tpu.memory_space<vmem>>, vector<128x512xbf16>
    %cst_152 = arith.constant dense<0.000000e+00> : vector<32x512xf32>
    %426 = tpu.matmul %424, %425, %cst_152 {dimension_numbers = #tpu.dot_dimension_numbers<[1], [0], [0], [1], [0, 0, 1, 1], [], []>} : vector<32x128xbf16>, vector<128x512xbf16>, vector<32x512xf32> -> vector<32x512xf32>
    %427 = arith.addf %423, %426 : vector<32x512xf32>
    %428 = vector.extract_strided_slice %427 {offsets = [0, 0], sizes = [32, 128], strides = [1, 1]} : vector<32x512xf32> to vector<32x128xf32>
    %429 = arith.negf %428 : vector<32x128xf32>
    %430 = math.exp %429 : vector<32x128xf32>
    %cst_153 = arith.constant 1.000000e+00 : f32
    %431 = vector.broadcast %cst_153 : f32 to vector<32x128xf32>
    %432 = arith.addf %431, %430 : vector<32x128xf32>
    %433 = arith.divf %431, %432 : vector<32x128xf32>
    %434 = vector.extract_strided_slice %427 {offsets = [0, 128], sizes = [32, 128], strides = [1, 1]} : vector<32x512xf32> to vector<32x128xf32>
    %435 = arith.negf %434 : vector<32x128xf32>
    %436 = math.exp %435 : vector<32x128xf32>
    %cst_154 = arith.constant 1.000000e+00 : f32
    %437 = vector.broadcast %cst_154 : f32 to vector<32x128xf32>
    %438 = arith.addf %437, %436 : vector<32x128xf32>
    %439 = arith.divf %437, %438 : vector<32x128xf32>
    %440 = vector.extract_strided_slice %427 {offsets = [0, 256], sizes = [32, 128], strides = [1, 1]} : vector<32x512xf32> to vector<32x128xf32>
    %441 = math.tanh %440 : vector<32x128xf32>
    %442 = vector.extract_strided_slice %427 {offsets = [0, 384], sizes = [32, 128], strides = [1, 1]} : vector<32x512xf32> to vector<32x128xf32>
    %443 = arith.negf %442 : vector<32x128xf32>
    %444 = math.exp %443 : vector<32x128xf32>
    %cst_155 = arith.constant 1.000000e+00 : f32
    %445 = vector.broadcast %cst_155 : f32 to vector<32x128xf32>
    %446 = arith.addf %445, %444 : vector<32x128xf32>
    %447 = arith.divf %445, %446 : vector<32x128xf32>
    %448 = arith.mulf %439, %380 : vector<32x128xf32>
    %449 = arith.mulf %433, %441 : vector<32x128xf32>
    %450 = arith.addf %448, %449 : vector<32x128xf32>
    %451 = math.tanh %450 : vector<32x128xf32>
    %452 = arith.mulf %447, %451 : vector<32x128xf32>
    %453 = arith.index_cast %c1_i32 : i32 to index
    %c0_156 = arith.constant 0 : index
    %c0_157 = arith.constant 0 : index
    %454 = vector.load %arg23[%453, %c0_156, %c0_157] : memref<4x32x128xf32, #tpu.memory_space<vmem>>, vector<1x32x128xf32>
    %455 = vector.shape_cast %454 : vector<1x32x128xf32> to vector<32x128xf32>
    %456 = vector.shape_cast %452 : vector<32x128xf32> to vector<1x32x128xf32>
    tpu.vector_store %arg23[%453, %c0_156, %c0_157], %456 {strides = array<i32>} : memref<4x32x128xf32, #tpu.memory_space<vmem>>, vector<1x32x128xf32>,
    %c2_i32 = arith.constant 2 : i32
    %457 = arith.index_cast %c2_i32 : i32 to index
    %c0_158 = arith.constant 0 : index
    %c0_159 = arith.constant 0 : index
    %458 = vector.load %arg22[%457, %c0_158, %c0_159] : memref<4x32x512xf32, #tpu.memory_space<vmem>>, vector<1x32x512xf32>
    %459 = vector.shape_cast %458 : vector<1x32x512xf32> to vector<32x512xf32>
    %460 = arith.truncf %418 : vector<32x128xf32> to vector<32x128xbf16>
    %c0_160 = arith.constant 0 : index
    %c0_161 = arith.constant 0 : index
    %461 = vector.load %arg14[%c0_160, %c0_161] : memref<128x512xbf16, #tpu.memory_space<vmem>>, vector<128x512xbf16>
    %cst_162 = arith.constant dense<0.000000e+00> : vector<32x512xf32>
    %462 = tpu.matmul %460, %461, %cst_162 {dimension_numbers = #tpu.dot_dimension_numbers<[1], [0], [0], [1], [0, 0, 1, 1], [], []>} : vector<32x128xbf16>, vector<128x512xbf16>, vector<32x512xf32> -> vector<32x512xf32>
    %463 = arith.addf %459, %462 : vector<32x512xf32>
    %464 = vector.extract_strided_slice %463 {offsets = [0, 0], sizes = [32, 128], strides = [1, 1]} : vector<32x512xf32> to vector<32x128xf32>
    %465 = arith.negf %464 : vector<32x128xf32>
    %466 = math.exp %465 : vector<32x128xf32>
    %cst_163 = arith.constant 1.000000e+00 : f32
    %467 = vector.broadcast %cst_163 : f32 to vector<32x128xf32>
    %468 = arith.addf %467, %466 : vector<32x128xf32>
    %469 = arith.divf %467, %468 : vector<32x128xf32>
    %470 = vector.extract_strided_slice %463 {offsets = [0, 128], sizes = [32, 128], strides = [1, 1]} : vector<32x512xf32> to vector<32x128xf32>
    %471 = arith.negf %470 : vector<32x128xf32>
    %472 = math.exp %471 : vector<32x128xf32>
    %cst_164 = arith.constant 1.000000e+00 : f32
    %473 = vector.broadcast %cst_164 : f32 to vector<32x128xf32>
    %474 = arith.addf %473, %472 : vector<32x128xf32>
    %475 = arith.divf %473, %474 : vector<32x128xf32>
    %476 = vector.extract_strided_slice %463 {offsets = [0, 256], sizes = [32, 128], strides = [1, 1]} : vector<32x512xf32> to vector<32x128xf32>
    %477 = math.tanh %476 : vector<32x128xf32>
    %478 = vector.extract_strided_slice %463 {offsets = [0, 384], sizes = [32, 128], strides = [1, 1]} : vector<32x512xf32> to vector<32x128xf32>
    %479 = arith.negf %478 : vector<32x128xf32>
    %480 = math.exp %479 : vector<32x128xf32>
    %cst_165 = arith.constant 1.000000e+00 : f32
    %481 = vector.broadcast %cst_165 : f32 to vector<32x128xf32>
    %482 = arith.addf %481, %480 : vector<32x128xf32>
    %483 = arith.divf %481, %482 : vector<32x128xf32>
    %484 = arith.mulf %475, %416 : vector<32x128xf32>
    %485 = arith.mulf %469, %477 : vector<32x128xf32>
    %486 = arith.addf %484, %485 : vector<32x128xf32>
    %487 = math.tanh %486 : vector<32x128xf32>
    %488 = arith.mulf %483, %487 : vector<32x128xf32>
    %489 = arith.truncf %488 : vector<32x128xf32> to vector<32x128xbf16>
    %c0_166 = arith.constant 0 : index
    %c0_167 = arith.constant 0 : index
    %490 = vector.load %arg16[%c0_166, %c0_167] : memref<128x512xbf16, #tpu.memory_space<vmem>>, vector<128x512xbf16>
    %cst_168 = arith.constant dense<0.000000e+00> : vector<32x512xf32>
    %491 = tpu.matmul %489, %490, %cst_168 {dimension_numbers = #tpu.dot_dimension_numbers<[1], [0], [0], [1], [0, 0, 1, 1], [], []>} : vector<32x128xbf16>, vector<128x512xbf16>, vector<32x512xf32> -> vector<32x512xf32>
    %492 = vector.broadcast %315 : vector<1x512xf32> to vector<32x512xf32>
    %493 = arith.addf %491, %492 : vector<32x512xf32>
    %494 = arith.truncf %452 : vector<32x128xf32> to vector<32x128xbf16>
    %c0_169 = arith.constant 0 : index
    %c0_170 = arith.constant 0 : index
    %495 = vector.load %arg17[%c0_169, %c0_170] : memref<128x512xbf16, #tpu.memory_space<vmem>>, vector<128x512xbf16>
    %cst_171 = arith.constant dense<0.000000e+00> : vector<32x512xf32>
    %496 = tpu.matmul %494, %495, %cst_171 {dimension_numbers = #tpu.dot_dimension_numbers<[1], [0], [0], [1], [0, 0, 1, 1], [], []>} : vector<32x128xbf16>, vector<128x512xbf16>, vector<32x512xf32> -> vector<32x512xf32>
    %497 = arith.addf %493, %496 : vector<32x512xf32>
    %498 = vector.extract_strided_slice %497 {offsets = [0, 0], sizes = [32, 128], strides = [1, 1]} : vector<32x512xf32> to vector<32x128xf32>
    %499 = arith.negf %498 : vector<32x128xf32>
    %500 = math.exp %499 : vector<32x128xf32>
    %cst_172 = arith.constant 1.000000e+00 : f32
    %501 = vector.broadcast %cst_172 : f32 to vector<32x128xf32>
    %502 = arith.addf %501, %500 : vector<32x128xf32>
    %503 = arith.divf %501, %502 : vector<32x128xf32>
    %504 = vector.extract_strided_slice %497 {offsets = [0, 128], sizes = [32, 128], strides = [1, 1]} : vector<32x512xf32> to vector<32x128xf32>
    %505 = arith.negf %504 : vector<32x128xf32>
    %506 = math.exp %505 : vector<32x128xf32>
    %cst_173 = arith.constant 1.000000e+00 : f32
    %507 = vector.broadcast %cst_173 : f32 to vector<32x128xf32>
    %508 = arith.addf %507, %506 : vector<32x128xf32>
    %509 = arith.divf %507, %508 : vector<32x128xf32>
    %510 = vector.extract_strided_slice %497 {offsets = [0, 256], sizes = [32, 128], strides = [1, 1]} : vector<32x512xf32> to vector<32x128xf32>
    %511 = math.tanh %510 : vector<32x128xf32>
    %512 = vector.extract_strided_slice %497 {offsets = [0, 384], sizes = [32, 128], strides = [1, 1]} : vector<32x512xf32> to vector<32x128xf32>
    %513 = arith.negf %512 : vector<32x128xf32>
    %514 = math.exp %513 : vector<32x128xf32>
    %cst_174 = arith.constant 1.000000e+00 : f32
    %515 = vector.broadcast %cst_174 : f32 to vector<32x128xf32>
    %516 = arith.addf %515, %514 : vector<32x128xf32>
    %517 = arith.divf %515, %516 : vector<32x128xf32>
    %518 = arith.mulf %509, %450 : vector<32x128xf32>
    %519 = arith.mulf %503, %511 : vector<32x128xf32>
    %520 = arith.addf %518, %519 : vector<32x128xf32>
    %521 = math.tanh %520 : vector<32x128xf32>
    %522 = arith.mulf %517, %521 : vector<32x128xf32>
    %523 = arith.index_cast %c2_i32 : i32 to index
    %c0_175 = arith.constant 0 : index
    %c0_176 = arith.constant 0 : index
    %524 = vector.load %arg23[%523, %c0_175, %c0_176] : memref<4x32x128xf32, #tpu.memory_space<vmem>>, vector<1x32x128xf32>
    %525 = vector.shape_cast %524 : vector<1x32x128xf32> to vector<32x128xf32>
    %526 = vector.shape_cast %522 : vector<32x128xf32> to vector<1x32x128xf32>
    tpu.vector_store %arg23[%523, %c0_175, %c0_176], %526 {strides = array<i32>} : memref<4x32x128xf32, #tpu.memory_space<vmem>>, vector<1x32x128xf32>,
    %c3_i32 = arith.constant 3 : i32
    %527 = arith.index_cast %c3_i32 : i32 to index
    %c0_177 = arith.constant 0 : index
    %c0_178 = arith.constant 0 : index
    %528 = vector.load %arg22[%527, %c0_177, %c0_178] : memref<4x32x512xf32, #tpu.memory_space<vmem>>, vector<1x32x512xf32>
    %529 = vector.shape_cast %528 : vector<1x32x512xf32> to vector<32x512xf32>
    %530 = arith.truncf %488 : vector<32x128xf32> to vector<32x128xbf16>
    %c0_179 = arith.constant 0 : index
    %c0_180 = arith.constant 0 : index
    %531 = vector.load %arg14[%c0_179, %c0_180] : memref<128x512xbf16, #tpu.memory_space<vmem>>, vector<128x512xbf16>
    %cst_181 = arith.constant dense<0.000000e+00> : vector<32x512xf32>
    %532 = tpu.matmul %530, %531, %cst_181 {dimension_numbers = #tpu.dot_dimension_numbers<[1], [0], [0], [1], [0, 0, 1, 1], [], []>} : vector<32x128xbf16>, vector<128x512xbf16>, vector<32x512xf32> -> vector<32x512xf32>
    %533 = arith.addf %529, %532 : vector<32x512xf32>
    %534 = vector.extract_strided_slice %533 {offsets = [0, 0], sizes = [32, 128], strides = [1, 1]} : vector<32x512xf32> to vector<32x128xf32>
    %535 = arith.negf %534 : vector<32x128xf32>
    %536 = math.exp %535 : vector<32x128xf32>
    %cst_182 = arith.constant 1.000000e+00 : f32
    %537 = vector.broadcast %cst_182 : f32 to vector<32x128xf32>
    %538 = arith.addf %537, %536 : vector<32x128xf32>
    %539 = arith.divf %537, %538 : vector<32x128xf32>
    %540 = vector.extract_strided_slice %533 {offsets = [0, 128], sizes = [32, 128], strides = [1, 1]} : vector<32x512xf32> to vector<32x128xf32>
    %541 = arith.negf %540 : vector<32x128xf32>
    %542 = math.exp %541 : vector<32x128xf32>
    %cst_183 = arith.constant 1.000000e+00 : f32
    %543 = vector.broadcast %cst_183 : f32 to vector<32x128xf32>
    %544 = arith.addf %543, %542 : vector<32x128xf32>
    %545 = arith.divf %543, %544 : vector<32x128xf32>
    %546 = vector.extract_strided_slice %533 {offsets = [0, 256], sizes = [32, 128], strides = [1, 1]} : vector<32x512xf32> to vector<32x128xf32>
    %547 = math.tanh %546 : vector<32x128xf32>
    %548 = vector.extract_strided_slice %533 {offsets = [0, 384], sizes = [32, 128], strides = [1, 1]} : vector<32x512xf32> to vector<32x128xf32>
    %549 = arith.negf %548 : vector<32x128xf32>
    %550 = math.exp %549 : vector<32x128xf32>
    %cst_184 = arith.constant 1.000000e+00 : f32
    %551 = vector.broadcast %cst_184 : f32 to vector<32x128xf32>
    %552 = arith.addf %551, %550 : vector<32x128xf32>
    %553 = arith.divf %551, %552 : vector<32x128xf32>
    %554 = arith.mulf %545, %486 : vector<32x128xf32>
    %555 = arith.mulf %539, %547 : vector<32x128xf32>
    %556 = arith.addf %554, %555 : vector<32x128xf32>
    %557 = math.tanh %556 : vector<32x128xf32>
    %558 = arith.mulf %553, %557 : vector<32x128xf32>
    %559 = arith.truncf %558 : vector<32x128xf32> to vector<32x128xbf16>
    %c0_185 = arith.constant 0 : index
    %c0_186 = arith.constant 0 : index
    %560 = vector.load %arg16[%c0_185, %c0_186] : memref<128x512xbf16, #tpu.memory_space<vmem>>, vector<128x512xbf16>
    %cst_187 = arith.constant dense<0.000000e+00> : vector<32x512xf32>
    %561 = tpu.matmul %559, %560, %cst_187 {dimension_numbers = #tpu.dot_dimension_numbers<[1], [0], [0], [1], [0, 0, 1, 1], [], []>} : vector<32x128xbf16>, vector<128x512xbf16>, vector<32x512xf32> -> vector<32x512xf32>
    %562 = vector.broadcast %315 : vector<1x512xf32> to vector<32x512xf32>
    %563 = arith.addf %561, %562 : vector<32x512xf32>
    %564 = arith.truncf %522 : vector<32x128xf32> to vector<32x128xbf16>
    %c0_188 = arith.constant 0 : index
    %c0_189 = arith.constant 0 : index
    %565 = vector.load %arg17[%c0_188, %c0_189] : memref<128x512xbf16, #tpu.memory_space<vmem>>, vector<128x512xbf16>
    %cst_190 = arith.constant dense<0.000000e+00> : vector<32x512xf32>
    %566 = tpu.matmul %564, %565, %cst_190 {dimension_numbers = #tpu.dot_dimension_numbers<[1], [0], [0], [1], [0, 0, 1, 1], [], []>} : vector<32x128xbf16>, vector<128x512xbf16>, vector<32x512xf32> -> vector<32x512xf32>
    %567 = arith.addf %563, %566 : vector<32x512xf32>
    %568 = vector.extract_strided_slice %567 {offsets = [0, 0], sizes = [32, 128], strides = [1, 1]} : vector<32x512xf32> to vector<32x128xf32>
    %569 = arith.negf %568 : vector<32x128xf32>
    %570 = math.exp %569 : vector<32x128xf32>
    %cst_191 = arith.constant 1.000000e+00 : f32
    %571 = vector.broadcast %cst_191 : f32 to vector<32x128xf32>
    %572 = arith.addf %571, %570 : vector<32x128xf32>
    %573 = arith.divf %571, %572 : vector<32x128xf32>
    %574 = vector.extract_strided_slice %567 {offsets = [0, 128], sizes = [32, 128], strides = [1, 1]} : vector<32x512xf32> to vector<32x128xf32>
    %575 = arith.negf %574 : vector<32x128xf32>
    %576 = math.exp %575 : vector<32x128xf32>
    %cst_192 = arith.constant 1.000000e+00 : f32
    %577 = vector.broadcast %cst_192 : f32 to vector<32x128xf32>
    %578 = arith.addf %577, %576 : vector<32x128xf32>
    %579 = arith.divf %577, %578 : vector<32x128xf32>
    %580 = vector.extract_strided_slice %567 {offsets = [0, 256], sizes = [32, 128], strides = [1, 1]} : vector<32x512xf32> to vector<32x128xf32>
    %581 = math.tanh %580 : vector<32x128xf32>
    %582 = vector.extract_strided_slice %567 {offsets = [0, 384], sizes = [32, 128], strides = [1, 1]} : vector<32x512xf32> to vector<32x128xf32>
    %583 = arith.negf %582 : vector<32x128xf32>
    %584 = math.exp %583 : vector<32x128xf32>
    %cst_193 = arith.constant 1.000000e+00 : f32
    %585 = vector.broadcast %cst_193 : f32 to vector<32x128xf32>
    %586 = arith.addf %585, %584 : vector<32x128xf32>
    %587 = arith.divf %585, %586 : vector<32x128xf32>
    %588 = arith.mulf %579, %520 : vector<32x128xf32>
    %589 = arith.mulf %573, %581 : vector<32x128xf32>
    %590 = arith.addf %588, %589 : vector<32x128xf32>
    %591 = math.tanh %590 : vector<32x128xf32>
    %592 = arith.mulf %587, %591 : vector<32x128xf32>
    %593 = arith.index_cast %c3_i32 : i32 to index
    %c0_194 = arith.constant 0 : index
    %c0_195 = arith.constant 0 : index
    %594 = vector.load %arg23[%593, %c0_194, %c0_195] : memref<4x32x128xf32, #tpu.memory_space<vmem>>, vector<1x32x128xf32>
    %595 = vector.shape_cast %594 : vector<1x32x128xf32> to vector<32x128xf32>
    %596 = vector.shape_cast %592 : vector<32x128xf32> to vector<1x32x128xf32>
    tpu.vector_store %arg23[%593, %c0_194, %c0_195], %596 {strides = array<i32>} : memref<4x32x128xf32, #tpu.memory_space<vmem>>, vector<1x32x128xf32>,
    %c4_i32 = arith.constant 4 : i32
    %c0_196 = arith.constant 0 : index
    %c0_197 = arith.constant 0 : index
    %c0_198 = arith.constant 0 : index
    %597 = vector.load %arg23[%c0_196, %c0_197, %c0_198] : memref<4x32x128xf32, #tpu.memory_space<vmem>>, vector<4x32x128xf32>
    %598 = vector.shape_cast %597 : vector<4x32x128xf32> to vector<128x128xf32>
    %599 = arith.truncf %598 : vector<128x128xf32> to vector<128x128xbf16>
    %c0_199 = arith.constant 0 : index
    %c0_200 = arith.constant 0 : index
    %600 = vector.load %arg19[%c0_199, %c0_200] : memref<128x128xbf16, #tpu.memory_space<vmem>>, vector<128x128xbf16>
    %cst_201 = arith.constant dense<0.000000e+00> : vector<128x128xf32>
    %601 = tpu.matmul %599, %600, %cst_201 {dimension_numbers = #tpu.dot_dimension_numbers<[1], [0], [0], [1], [0, 0, 1, 1], [], []>} : vector<128x128xbf16>, vector<128x128xbf16>, vector<128x128xf32> -> vector<128x128xf32>
    %c0_202 = arith.constant 0 : index
    %c0_203 = arith.constant 0 : index
    %602 = vector.load %arg20[%c0_202, %c0_203] : memref<1x128xf32, #tpu.memory_space<vmem>>, vector<1x128xf32>
    %603 = vector.broadcast %602 : vector<1x128xf32> to vector<128x128xf32>
    %604 = arith.addf %601, %603 : vector<128x128xf32>
    %cst_204 = arith.constant dense<0xFF800000> : vector<128xf32>
    %605 = vector.multi_reduction <maximumf>, %604, %cst_204 [1] : vector<128x128xf32> to vector<128xf32>
    %606 = vector.shape_cast %605 : vector<128xf32> to vector<128x1xf32>
    %607 = vector.broadcast %606 : vector<128x1xf32> to vector<128x128xf32>
    %608 = arith.subf %604, %607 : vector<128x128xf32>
    %609 = math.exp %608 : vector<128x128xf32>
    %cst_205 = arith.constant dense<0.000000e+00> : vector<128xf32>
    %610 = vector.multi_reduction <add>, %609, %cst_205 [1] : vector<128x128xf32> to vector<128xf32>
    %611 = vector.shape_cast %610 : vector<128xf32> to vector<128x1xf32>
    %612 = tpu.reciprocal %611 {approx = true} : vector<128x1xf32> -> vector<128x1xf32>
    %613 = vector.broadcast %612 : vector<128x1xf32> to vector<128x128xf32>
    %614 = arith.mulf %609, %613 : vector<128x128xf32>
    %c0_206 = arith.constant 0 : index
    %c0_207 = arith.constant 0 : index
    %615 = vector.load %arg21[%c0_206, %c0_207] : memref<128x128xf32, #tpu.memory_space<vmem>>, vector<128x128xf32>
    tpu.vector_store %arg21[%c0_206, %c0_207], %614 {strides = array<i32>} : memref<128x128xf32, #tpu.memory_space<vmem>>, vector<128x128xf32>,
    return
  }
}

</mosaic_0001>

<llo_original>
// kernel: hierarchical_lstm_decoder.1
$region0: #{hierarchical_lstm_decoder.1}
  #allocation0 [shape = 'u32[]', space=smem, size = 0x4, offset = 0x4, fixed_abs, tag = 'smem constant byte address 0x4 - core index']
  #allocation1 [shape = 'u32[144,128]{1,0:T(1,128)}', space=vmem, size = 0x12000, scoped, tag = 'internal scratch']
  #allocation2 [shape = 'f32[4,32,512]{2,1,0:T(8,128)}', space=vmem, size = 0x40000, scoped, tag = 'scratch operand']
  #allocation3 [shape = 'f32[4,32,128]{2,1,0:T(8,128)}', space=vmem, size = 0x10000, scoped, tag = 'scratch operand']
  %s0 = inlined_call_operand.vmem [shape: f32[8,128], index: 0, kind: input, shape index: {}]
  %s1 = inlined_call_operand.vmem [shape: f32[2,8,128], index: 1, kind: input, shape index: {}]
  %s2 = inlined_call_operand.vmem [shape: f32[2,8,128], index: 2, kind: input, shape index: {}]
  %s3 = inlined_call_operand.vmem [shape: f32[128,16], index: 3, kind: input, shape index: {}]
  %s4 = inlined_call_operand.vmem [shape: bf16[128,512], index: 4, kind: input, shape index: {}]
  %s5 = inlined_call_operand.vmem [shape: bf16[128,512], index: 5, kind: input, shape index: {}]
  %s6 = inlined_call_operand.vmem [shape: f32[1,512], index: 6, kind: input, shape index: {}]
  %s7 = inlined_call_operand.vmem [shape: bf16[128,512], index: 7, kind: input, shape index: {}]
  %s8 = inlined_call_operand.vmem [shape: bf16[128,512], index: 8, kind: input, shape index: {}]
  %s9 = inlined_call_operand.vmem [shape: f32[1,512], index: 9, kind: input, shape index: {}]
  %s10 = inlined_call_operand.vmem [shape: bf16[128,128], index: 10, kind: input, shape index: {}]
  %s11 = inlined_call_operand.vmem [shape: f32[1,128], index: 11, kind: input, shape index: {}]
  %s12 = inlined_call_operand.vmem [shape: bf16[16,512], index: 12, kind: input, shape index: {}]
  %s13 = inlined_call_operand.vmem [shape: bf16[128,512], index: 13, kind: input, shape index: {}]
  %s14 = inlined_call_operand.vmem [shape: bf16[128,512], index: 14, kind: input, shape index: {}]
  %s15 = inlined_call_operand.vmem [shape: f32[1,512], index: 15, kind: input, shape index: {}]
  %s16 = inlined_call_operand.vmem [shape: bf16[128,512], index: 16, kind: input, shape index: {}]
  %s17 = inlined_call_operand.vmem [shape: bf16[128,512], index: 17, kind: input, shape index: {}]
  %s18 = inlined_call_operand.vmem [shape: f32[1,512], index: 18, kind: input, shape index: {}]
  %s19 = inlined_call_operand.vmem [shape: bf16[128,128], index: 19, kind: input, shape index: {}]
  %s20 = inlined_call_operand.vmem [shape: f32[1,128], index: 20, kind: input, shape index: {}]
  %s21 = inlined_call_operand.vmem [shape: f32[128,128], index: 21, kind: output, shape index: {}]
  %s22 = sld [smem:[#allocation0]]
  $region94: #{hierarchical_lstm_decoder.1} parent=0
    _
  %s24 = ssub.s32 1, %s22
  %s25 = scalar_select 0, %s24, %s22
  // Predicated region
  $region2: #{hierarchical_lstm_decoder.1} parent=0 // pred_check
    _
  $region3: #{hierarchical_lstm_decoder.1} parent=0 // pred_check_branch
    %27 = sbr.rel (0) target = $region5
  $region4: #{hierarchical_lstm_decoder.1} parent=0 // pred_region
    _
  $region5: #{hierarchical_lstm_decoder.1} parent=0 // pred_fallthru
    _
  // Predicated region
  $region6: #{hierarchical_lstm_decoder.1} parent=0 // pred_check
    _
  $region7: #{hierarchical_lstm_decoder.1} parent=0 // pred_check_branch
    %29 = sbr.rel (0) target = $region9
  $region8: #{hierarchical_lstm_decoder.1} parent=0 // pred_region
    _
  $region9: #{hierarchical_lstm_decoder.1} parent=0 // pred_fallthru
    _
  // Predicated region
  $region10: #{hierarchical_lstm_decoder.1} parent=0 // pred_check
    _
  $region11: #{hierarchical_lstm_decoder.1} parent=0 // pred_check_branch
    %31 = sbr.rel (0) target = $region13
  $region12: #{hierarchical_lstm_decoder.1} parent=0 // pred_region
    _
  $region13: #{hierarchical_lstm_decoder.1} parent=0 // pred_fallthru
    _
  // Predicated region
  $region14: #{hierarchical_lstm_decoder.1} parent=0 // pred_check
    _
  $region15: #{hierarchical_lstm_decoder.1} parent=0 // pred_check_branch
    %33 = sbr.rel (0) target = $region17
  $region16: #{hierarchical_lstm_decoder.1} parent=0 // pred_region
    _
  $region17: #{hierarchical_lstm_decoder.1} parent=0 // pred_fallthru
    _
  // Predicated region
  $region18: #{hierarchical_lstm_decoder.1} parent=0 // pred_check
    _
  $region19: #{hierarchical_lstm_decoder.1} parent=0 // pred_check_branch
    %35 = sbr.rel (0) target = $region21
  $region20: #{hierarchical_lstm_decoder.1} parent=0 // pred_region
    _
  $region21: #{hierarchical_lstm_decoder.1} parent=0 // pred_fallthru
    _
  // Predicated region
  $region22: #{hierarchical_lstm_decoder.1} parent=0 // pred_check
    _
  $region23: #{hierarchical_lstm_decoder.1} parent=0 // pred_check_branch
    %37 = sbr.rel (0) target = $region25
  $region24: #{hierarchical_lstm_decoder.1} parent=0 // pred_region
    _
  $region25: #{hierarchical_lstm_decoder.1} parent=0 // pred_fallthru
    _
  // Predicated region
  $region26: #{hierarchical_lstm_decoder.1} parent=0 // pred_check
    _
  $region27: #{hierarchical_lstm_decoder.1} parent=0 // pred_check_branch
    %39 = sbr.rel (0) target = $region29
  $region28: #{hierarchical_lstm_decoder.1} parent=0 // pred_region
    _
  $region29: #{hierarchical_lstm_decoder.1} parent=0 // pred_fallthru
    _
  // Predicated region
  $region30: #{hierarchical_lstm_decoder.1} parent=0 // pred_check
    _
  $region31: #{hierarchical_lstm_decoder.1} parent=0 // pred_check_branch
    %41 = sbr.rel (0) target = $region33
  $region32: #{hierarchical_lstm_decoder.1} parent=0 // pred_region
    _
  $region33: #{hierarchical_lstm_decoder.1} parent=0 // pred_fallthru
    _
  // Predicated region
  $region34: #{hierarchical_lstm_decoder.1} parent=0 // pred_check
    _
  $region35: #{hierarchical_lstm_decoder.1} parent=0 // pred_check_branch
    %43 = sbr.rel (0) target = $region37
  $region36: #{hierarchical_lstm_decoder.1} parent=0 // pred_region
    _
  $region37: #{hierarchical_lstm_decoder.1} parent=0 // pred_fallthru
    _
  // Predicated region
  $region38: #{hierarchical_lstm_decoder.1} parent=0 // pred_check
    _
  $region39: #{hierarchical_lstm_decoder.1} parent=0 // pred_check_branch
    %45 = sbr.rel (0) target = $region41
  $region40: #{hierarchical_lstm_decoder.1} parent=0 // pred_region
    _
  $region41: #{hierarchical_lstm_decoder.1} parent=0 // pred_fallthru
    _
  // Predicated region
  $region42: #{hierarchical_lstm_decoder.1} parent=0 // pred_check
    _
  $region43: #{hierarchical_lstm_decoder.1} parent=0 // pred_check_branch
    %47 = sbr.rel (0) target = $region45
  $region44: #{hierarchical_lstm_decoder.1} parent=0 // pred_region
    _
  $region45: #{hierarchical_lstm_decoder.1} parent=0 // pred_fallthru
    _
  // Predicated region
  $region46: #{hierarchical_lstm_decoder.1} parent=0 // pred_check
    _
  $region47: #{hierarchical_lstm_decoder.1} parent=0 // pred_check_branch
    %49 = sbr.rel (0) target = $region49
  $region48: #{hierarchical_lstm_decoder.1} parent=0 // pred_region
    _
  $region49: #{hierarchical_lstm_decoder.1} parent=0 // pred_fallthru
    _
  // Predicated region
  $region50: #{hierarchical_lstm_decoder.1} parent=0 // pred_check
    _
  $region51: #{hierarchical_lstm_decoder.1} parent=0 // pred_check_branch
    %51 = sbr.rel (0) target = $region53
  $region52: #{hierarchical_lstm_decoder.1} parent=0 // pred_region
    _
  $region53: #{hierarchical_lstm_decoder.1} parent=0 // pred_fallthru
    _
  // Predicated region
  $region54: #{hierarchical_lstm_decoder.1} parent=0 // pred_check
    _
  $region55: #{hierarchical_lstm_decoder.1} parent=0 // pred_check_branch
    %53 = sbr.rel (0) target = $region57
  $region56: #{hierarchical_lstm_decoder.1} parent=0 // pred_region
    _
  $region57: #{hierarchical_lstm_decoder.1} parent=0 // pred_fallthru
    _
  // Predicated region
  $region58: #{hierarchical_lstm_decoder.1} parent=0 // pred_check
    _
  $region59: #{hierarchical_lstm_decoder.1} parent=0 // pred_check_branch
    %55 = sbr.rel (0) target = $region61
  $region60: #{hierarchical_lstm_decoder.1} parent=0 // pred_region
    _
  $region61: #{hierarchical_lstm_decoder.1} parent=0 // pred_fallthru
    _
  // Predicated region
  $region62: #{hierarchical_lstm_decoder.1} parent=0 // pred_check
    _
  $region63: #{hierarchical_lstm_decoder.1} parent=0 // pred_check_branch
    %57 = sbr.rel (0) target = $region65
  $region64: #{hierarchical_lstm_decoder.1} parent=0 // pred_region
    _
  $region65: #{hierarchical_lstm_decoder.1} parent=0 // pred_fallthru
    _
  // Predicated region
  $region66: #{hierarchical_lstm_decoder.1} parent=0 // pred_check
    _
  $region67: #{hierarchical_lstm_decoder.1} parent=0 // pred_check_branch
    %59 = sbr.rel (0) target = $region69
  $region68: #{hierarchical_lstm_decoder.1} parent=0 // pred_region
    _
  $region69: #{hierarchical_lstm_decoder.1} parent=0 // pred_fallthru
    _
  // Predicated region
  $region70: #{hierarchical_lstm_decoder.1} parent=0 // pred_check
    _
  $region71: #{hierarchical_lstm_decoder.1} parent=0 // pred_check_branch
    %61 = sbr.rel (0) target = $region73
  $region72: #{hierarchical_lstm_decoder.1} parent=0 // pred_region
    _
  $region73: #{hierarchical_lstm_decoder.1} parent=0 // pred_fallthru
    _
  // Predicated region
  $region74: #{hierarchical_lstm_decoder.1} parent=0 // pred_check
    _
  $region75: #{hierarchical_lstm_decoder.1} parent=0 // pred_check_branch
    %63 = sbr.rel (0) target = $region77
  $region76: #{hierarchical_lstm_decoder.1} parent=0 // pred_region
    _
  $region77: #{hierarchical_lstm_decoder.1} parent=0 // pred_fallthru
    _
  // Predicated region
  $region78: #{hierarchical_lstm_decoder.1} parent=0 // pred_check
    _
  $region79: #{hierarchical_lstm_decoder.1} parent=0 // pred_check_branch
    %65 = sbr.rel (0) target = $region81
  $region80: #{hierarchical_lstm_decoder.1} parent=0 // pred_region
    _
  $region81: #{hierarchical_lstm_decoder.1} parent=0 // pred_fallthru
    _
  // Predicated region
  $region82: #{hierarchical_lstm_decoder.1} parent=0 // pred_check
    _
  $region83: #{hierarchical_lstm_decoder.1} parent=0 // pred_check_branch
    %67 = sbr.rel (0) target = $region85
  $region84: #{hierarchical_lstm_decoder.1} parent=0 // pred_region
    _
  $region85: #{hierarchical_lstm_decoder.1} parent=0 // pred_fallthru
    _
  %v69 = vld [vmem:[%s0] sm:$0xff]
  %v70 = vpack.c.bf16 %v69, %v69
  %v71 = vld [vmem:[%s4] sm:$0xff]
  %v72 = vld [vmem:[%s4 + $0x8] sm:$0xff]
  %v73 = vld [vmem:[%s4 + $0x10] sm:$0xff]
  %v74 = vld [vmem:[%s4 + $0x18] sm:$0xff]
  %v75 = vld [vmem:[%s4 + $0x20] sm:$0xff]
  %v76 = vld [vmem:[%s4 + $0x28] sm:$0xff]
  %v77 = vld [vmem:[%s4 + $0x30] sm:$0xff]
  %v78 = vld [vmem:[%s4 + $0x38] sm:$0xff]
  %v79 = vld [vmem:[%s4 + $0x40] sm:$0xff]
  %v80 = vld [vmem:[%s4 + $0x48] sm:$0xff]
  %v81 = vld [vmem:[%s4 + $0x50] sm:$0xff]
  %v82 = vld [vmem:[%s4 + $0x58] sm:$0xff]
  %v83 = vld [vmem:[%s4 + $0x60] sm:$0xff]
  %v84 = vld [vmem:[%s4 + $0x68] sm:$0xff]
  %v85 = vld [vmem:[%s4 + $0x70] sm:$0xff]
  %v86 = vld [vmem:[%s4 + $0x78] sm:$0xff]
  %v87 = vld [vmem:[%s4 + $0x80] sm:$0xff]
  %v88 = vld [vmem:[%s4 + $0x88] sm:$0xff]
  %v89 = vld [vmem:[%s4 + $0x90] sm:$0xff]
  %v90 = vld [vmem:[%s4 + $0x98] sm:$0xff]
  %v91 = vld [vmem:[%s4 + $0xa0] sm:$0xff]
  %v92 = vld [vmem:[%s4 + $0xa8] sm:$0xff]
  %v93 = vld [vmem:[%s4 + $0xb0] sm:$0xff]
  %v94 = vld [vmem:[%s4 + $0xb8] sm:$0xff]
  %v95 = vld [vmem:[%s4 + $0xc0] sm:$0xff]
  %v96 = vld [vmem:[%s4 + $0xc8] sm:$0xff]
  %v97 = vld [vmem:[%s4 + $0xd0] sm:$0xff]
  %v98 = vld [vmem:[%s4 + $0xd8] sm:$0xff]
  %v99 = vld [vmem:[%s4 + $0xe0] sm:$0xff]
  %v100 = vld [vmem:[%s4 + $0xe8] sm:$0xff]
  %v101 = vld [vmem:[%s4 + $0xf0] sm:$0xff]
  %v102 = vld [vmem:[%s4 + $0xf8] sm:$0xff]
  %v103 = vld [vmem:[%s6] sm:$0xf]
  %v105 = vlaneseq
  %v106 = vshrl.u32 %v105, 7
  %v107 = vsub.s32 0, %v106
  %v108 = vrot.slane %v103, %v107
  %v109 = vlaneseq
  %v110 = vshrl.u32 %v109, 7
  %v111 = vsub.s32 1, %v110
  %v112 = vrot.slane %v103, %v111
  %v113 = vlaneseq
  %v114 = vshrl.u32 %v113, 7
  %v115 = vsub.s32 2, %v114
  %v116 = vrot.slane %v103, %v115
  %v117 = vlaneseq
  %v118 = vshrl.u32 %v117, 7
  %v119 = vsub.s32 3, %v118
  %v120 = vrot.slane %v103, %v119
  %v157 = vunpack.c.l.b16 %v71
  %v158 = vunpack.c.h.b16 %v71
  %v159 = vunpack.c.l.b16 %v72
  %v160 = vunpack.c.h.b16 %v72
  %v161 = vunpack.c.l.b16 %v73
  %v162 = vunpack.c.h.b16 %v73
  %v163 = vunpack.c.l.b16 %v74
  %v164 = vunpack.c.h.b16 %v74
  %v165 = vunpack.c.l.b16 %v75
  %v166 = vunpack.c.h.b16 %v75
  %v167 = vunpack.c.l.b16 %v76
  %v168 = vunpack.c.h.b16 %v76
  %v169 = vunpack.c.l.b16 %v77
  %v170 = vunpack.c.h.b16 %v77
  %v171 = vunpack.c.l.b16 %v78
  %v172 = vunpack.c.h.b16 %v78
  %v173 = vunpack.c.l.b16 %v79
  %v174 = vunpack.c.h.b16 %v79
  %v175 = vunpack.c.l.b16 %v80
  %v176 = vunpack.c.h.b16 %v80
  %v177 = vunpack.c.l.b16 %v81
  %v178 = vunpack.c.h.b16 %v81
  %v179 = vunpack.c.l.b16 %v82
  %v180 = vunpack.c.h.b16 %v82
  %v181 = vunpack.c.l.b16 %v83
  %v182 = vunpack.c.h.b16 %v83
  %v183 = vunpack.c.l.b16 %v84
  %v184 = vunpack.c.h.b16 %v84
  %v185 = vunpack.c.l.b16 %v85
  %v186 = vunpack.c.h.b16 %v85
  %v187 = vunpack.c.l.b16 %v86
  %v188 = vunpack.c.h.b16 %v86
  %v189 = vunpack.c.l.b16 %v87
  %v190 = vunpack.c.h.b16 %v87
  %v191 = vunpack.c.l.b16 %v88
  %v192 = vunpack.c.h.b16 %v88
  %v193 = vunpack.c.l.b16 %v89
  %v194 = vunpack.c.h.b16 %v89
  %v195 = vunpack.c.l.b16 %v90
  %v196 = vunpack.c.h.b16 %v90
  %v197 = vunpack.c.l.b16 %v91
  %v198 = vunpack.c.h.b16 %v91
  %v199 = vunpack.c.l.b16 %v92
  %v200 = vunpack.c.h.b16 %v92
  %v201 = vunpack.c.l.b16 %v93
  %v202 = vunpack.c.h.b16 %v93
  %v203 = vunpack.c.l.b16 %v94
  %v204 = vunpack.c.h.b16 %v94
  %v205 = vunpack.c.l.b16 %v95
  %v206 = vunpack.c.h.b16 %v95
  %v207 = vunpack.c.l.b16 %v96
  %v208 = vunpack.c.h.b16 %v96
  %v209 = vunpack.c.l.b16 %v97
  %v210 = vunpack.c.h.b16 %v97
  %v211 = vunpack.c.l.b16 %v98
  %v212 = vunpack.c.h.b16 %v98
  %v213 = vunpack.c.l.b16 %v99
  %v214 = vunpack.c.h.b16 %v99
  %v215 = vunpack.c.l.b16 %v100
  %v216 = vunpack.c.h.b16 %v100
  %v217 = vunpack.c.l.b16 %v101
  %v218 = vunpack.c.h.b16 %v101
  %v219 = vunpack.c.l.b16 %v102
  %v220 = vunpack.c.h.b16 %v102
  %v221 = vpack.c.b16 %v161, %v157
  %v222 = vpack.c.b16 %v162, %v158
  %v223 = vpack.c.b16 %v163, %v159
  %v224 = vpack.c.b16 %v164, %v160
  %v225 = vpack.c.b16 %v169, %v165
  %v226 = vpack.c.b16 %v170, %v166
  %v227 = vpack.c.b16 %v171, %v167
  %v228 = vpack.c.b16 %v172, %v168
  %v229 = vpack.c.b16 %v177, %v173
  %v230 = vpack.c.b16 %v178, %v174
  %v231 = vpack.c.b16 %v179, %v175
  %v232 = vpack.c.b16 %v180, %v176
  %v233 = vpack.c.b16 %v185, %v181
  %v234 = vpack.c.b16 %v186, %v182
  %v235 = vpack.c.b16 %v187, %v183
  %v236 = vpack.c.b16 %v188, %v184
  %v237 = vpack.c.b16 %v193, %v189
  %v238 = vpack.c.b16 %v194, %v190
  %v239 = vpack.c.b16 %v195, %v191
  %v240 = vpack.c.b16 %v196, %v192
  %v241 = vpack.c.b16 %v201, %v197
  %v242 = vpack.c.b16 %v202, %v198
  %v243 = vpack.c.b16 %v203, %v199
  %v244 = vpack.c.b16 %v204, %v200
  %v245 = vpack.c.b16 %v209, %v205
  %v246 = vpack.c.b16 %v210, %v206
  %v247 = vpack.c.b16 %v211, %v207
  %v248 = vpack.c.b16 %v212, %v208
  %v249 = vpack.c.b16 %v217, %v213
  %v250 = vpack.c.b16 %v218, %v214
  %v251 = vpack.c.b16 %v219, %v215
  %v252 = vpack.c.b16 %v220, %v216
  %285 = vmatprep.subr.bf16.mxu0 %v222
  %286 = vmatpush1.bf16.msra.mxu0 %v221
  %287 = vmatprep.subr.bf16.mxu0 %v226
  %288 = vmatpush1.bf16.msra.mxu0 %v225
  %289 = vmatprep.subr.bf16.mxu0 %v230
  %290 = vmatpush1.bf16.msra.mxu0 %v229
  %291 = vmatprep.subr.bf16.mxu0 %v234
  %292 = vmatpush1.bf16.msra.mxu0 %v233
  %293 = vmatprep.subr.bf16.mxu0 %v238
  %294 = vmatpush1.bf16.msra.mxu0 %v237
  %295 = vmatprep.subr.bf16.mxu0 %v242
  %296 = vmatpush1.bf16.msra.mxu0 %v241
  %297 = vmatprep.subr.bf16.mxu0 %v246
  %298 = vmatpush1.bf16.msra.mxu0 %v245
  %299 = vmatprep.subr.bf16.mxu0 %v250
  %300 = vmatpush1.bf16.msra.mxu0 %v249
  %301 = vmatprep.subr.bf16.mxu0 0
  %302 = vmatpush1.bf16.msra.mxu0 0
  %303 = vmatprep.subr.bf16.mxu0 0
  %304 = vmatpush1.bf16.msra.mxu0 0
  %305 = vmatprep.subr.bf16.mxu0 0
  %306 = vmatpush1.bf16.msra.mxu0 0
  %307 = vmatprep.subr.bf16.mxu0 0
  %308 = vmatpush1.bf16.msra.mxu0 0
  %309 = vmatprep.subr.bf16.mxu0 0
  %310 = vmatpush1.bf16.msra.mxu0 0
  %311 = vmatprep.subr.bf16.mxu0 0
  %312 = vmatpush1.bf16.msra.mxu0 0
  %313 = vmatprep.subr.bf16.mxu0 0
  %314 = vmatpush1.bf16.msra.mxu0 0
  %315 = vmatprep.subr.bf16.mxu0 0
  %316 = vmatpush1.bf16.msra.mxu0 0
  %317 = vmatprep.mubr.bf16.mxu0 0
  %318 = vmatmul.mubr.bf16.gmra.mrb[0].mxu0 %v70
  %v319 = vpop.f32.mrb[0].mxu0
  %v320 = vadd.f32 %v108, %v319
  %v321 = vpop.f32.mrb[0].mxu0
  %v322 = vadd.f32 %v112, %v321
  %v323 = vpop.f32.mrb[0].mxu0
  %v324 = vpop.f32.mrb[0].mxu0
  %325 = vdwg.mxu0
  %326 = vmatprep.subr.bf16.mxu0 %v224
  %327 = vmatpush1.bf16.msra.mxu0 %v223
  %328 = vmatprep.subr.bf16.mxu0 %v228
  %329 = vmatpush1.bf16.msra.mxu0 %v227
  %330 = vmatprep.subr.bf16.mxu0 %v232
  %331 = vmatpush1.bf16.msra.mxu0 %v231
  %332 = vmatprep.subr.bf16.mxu0 %v236
  %333 = vmatpush1.bf16.msra.mxu0 %v235
  %334 = vmatprep.subr.bf16.mxu0 %v240
  %335 = vmatpush1.bf16.msra.mxu0 %v239
  %336 = vmatprep.subr.bf16.mxu0 %v244
  %337 = vmatpush1.bf16.msra.mxu0 %v243
  %338 = vmatprep.subr.bf16.mxu0 %v248
  %339 = vmatpush1.bf16.msra.mxu0 %v247
  %340 = vmatprep.subr.bf16.mxu0 %v252
  %341 = vmatpush1.bf16.msra.mxu0 %v251
  %342 = vmatprep.subr.bf16.mxu0 0
  %343 = vmatpush1.bf16.msra.mxu0 0
  %344 = vmatprep.subr.bf16.mxu0 0
  %345 = vmatpush1.bf16.msra.mxu0 0
  %346 = vmatprep.subr.bf16.mxu0 0
  %347 = vmatpush1.bf16.msra.mxu0 0
  %348 = vmatprep.subr.bf16.mxu0 0
  %349 = vmatpush1.bf16.msra.mxu0 0
  %350 = vmatprep.subr.bf16.mxu0 0
  %351 = vmatpush1.bf16.msra.mxu0 0
  %352 = vmatprep.subr.bf16.mxu0 0
  %353 = vmatpush1.bf16.msra.mxu0 0
  %354 = vmatprep.subr.bf16.mxu0 0
  %355 = vmatpush1.bf16.msra.mxu0 0
  %356 = vmatprep.subr.bf16.mxu0 0
  %357 = vmatpush1.bf16.msra.mxu0 0
  %358 = vmatprep.mubr.bf16.mxu0 0
  %359 = vmatmul.mubr.bf16.gmra.mrb[0].mxu0 %v70
  %v360 = vpop.f32.mrb[0].mxu0
  %v361 = vadd.f32 %v116, %v360
  %v362 = vpop.f32.mrb[0].mxu0
  %v363 = vadd.f32 %v120, %v362
  %v364 = vpop.f32.mrb[0].mxu0
  %v365 = vpop.f32.mrb[0].mxu0
  %366 = vdwg.mxu0
  %v367 = vld [vmem:[%s1] sm:$0xff]
  %v368 = vld [vmem:[%s2] sm:$0xff]
  %s369 = scalar_lea.vmem %s1, 8
  %v370 = vld [vmem:[%s369] sm:$0xff]
  %s371 = scalar_lea.vmem %s2, 8
  %v372 = vld [vmem:[%s371] sm:$0xff]
  %v373 = vpack.c.bf16 %v367, %v367
  %v374 = vld [vmem:[%s5] sm:$0xff]
  %v375 = vld [vmem:[%s5 + $0x8] sm:$0xff]
  %v376 = vld [vmem:[%s5 + $0x10] sm:$0xff]
  %v377 = vld [vmem:[%s5 + $0x18] sm:$0xff]
  %v378 = vld [vmem:[%s5 + $0x20] sm:$0xff]
  %v379 = vld [vmem:[%s5 + $0x28] sm:$0xff]
  %v380 = vld [vmem:[%s5 + $0x30] sm:$0xff]
  %v381 = vld [vmem:[%s5 + $0x38] sm:$0xff]
  %v382 = vld [vmem:[%s5 + $0x40] sm:$0xff]
  %v383 = vld [vmem:[%s5 + $0x48] sm:$0xff]
  %v384 = vld [vmem:[%s5 + $0x50] sm:$0xff]
  %v385 = vld [vmem:[%s5 + $0x58] sm:$0xff]
  %v386 = vld [vmem:[%s5 + $0x60] sm:$0xff]
  %v387 = vld [vmem:[%s5 + $0x68] sm:$0xff]
  %v388 = vld [vmem:[%s5 + $0x70] sm:$0xff]
  %v389 = vld [vmem:[%s5 + $0x78] sm:$0xff]
  %v390 = vld [vmem:[%s5 + $0x80] sm:$0xff]
  %v391 = vld [vmem:[%s5 + $0x88] sm:$0xff]
  %v392 = vld [vmem:[%s5 + $0x90] sm:$0xff]
  %v393 = vld [vmem:[%s5 + $0x98] sm:$0xff]
  %v394 = vld [vmem:[%s5 + $0xa0] sm:$0xff]
  %v395 = vld [vmem:[%s5 + $0xa8] sm:$0xff]
  %v396 = vld [vmem:[%s5 + $0xb0] sm:$0xff]
  %v397 = vld [vmem:[%s5 + $0xb8] sm:$0xff]
  %v398 = vld [vmem:[%s5 + $0xc0] sm:$0xff]
  %v399 = vld [vmem:[%s5 + $0xc8] sm:$0xff]
  %v400 = vld [vmem:[%s5 + $0xd0] sm:$0xff]
  %v401 = vld [vmem:[%s5 + $0xd8] sm:$0xff]
  %v402 = vld [vmem:[%s5 + $0xe0] sm:$0xff]
  %v403 = vld [vmem:[%s5 + $0xe8] sm:$0xff]
  %v404 = vld [vmem:[%s5 + $0xf0] sm:$0xff]
  %v405 = vld [vmem:[%s5 + $0xf8] sm:$0xff]
  %v438 = vunpack.c.l.b16 %v374
  %v439 = vunpack.c.h.b16 %v374
  %v440 = vunpack.c.l.b16 %v375
  %v441 = vunpack.c.h.b16 %v375
  %v442 = vunpack.c.l.b16 %v376
  %v443 = vunpack.c.h.b16 %v376
  %v444 = vunpack.c.l.b16 %v377
  %v445 = vunpack.c.h.b16 %v377
  %v446 = vunpack.c.l.b16 %v378
  %v447 = vunpack.c.h.b16 %v378
  %v448 = vunpack.c.l.b16 %v379
  %v449 = vunpack.c.h.b16 %v379
  %v450 = vunpack.c.l.b16 %v380
  %v451 = vunpack.c.h.b16 %v380
  %v452 = vunpack.c.l.b16 %v381
  %v453 = vunpack.c.h.b16 %v381
  %v454 = vunpack.c.l.b16 %v382
  %v455 = vunpack.c.h.b16 %v382
  %v456 = vunpack.c.l.b16 %v383
  %v457 = vunpack.c.h.b16 %v383
  %v458 = vunpack.c.l.b16 %v384
  %v459 = vunpack.c.h.b16 %v384
  %v460 = vunpack.c.l.b16 %v385
  %v461 = vunpack.c.h.b16 %v385
  %v462 = vunpack.c.l.b16 %v386
  %v463 = vunpack.c.h.b16 %v386
  %v464 = vunpack.c.l.b16 %v387
  %v465 = vunpack.c.h.b16 %v387
  %v466 = vunpack.c.l.b16 %v388
  %v467 = vunpack.c.h.b16 %v388
  %v468 = vunpack.c.l.b16 %v389
  %v469 = vunpack.c.h.b16 %v389
  %v470 = vunpack.c.l.b16 %v390
  %v471 = vunpack.c.h.b16 %v390
  %v472 = vunpack.c.l.b16 %v391
  %v473 = vunpack.c.h.b16 %v391
  %v474 = vunpack.c.l.b16 %v392
  %v475 = vunpack.c.h.b16 %v392
  %v476 = vunpack.c.l.b16 %v393
  %v477 = vunpack.c.h.b16 %v393
  %v478 = vunpack.c.l.b16 %v394
  %v479 = vunpack.c.h.b16 %v394
  %v480 = vunpack.c.l.b16 %v395
  %v481 = vunpack.c.h.b16 %v395
  %v482 = vunpack.c.l.b16 %v396
  %v483 = vunpack.c.h.b16 %v396
  %v484 = vunpack.c.l.b16 %v397
  %v485 = vunpack.c.h.b16 %v397
  %v486 = vunpack.c.l.b16 %v398
  %v487 = vunpack.c.h.b16 %v398
  %v488 = vunpack.c.l.b16 %v399
  %v489 = vunpack.c.h.b16 %v399
  %v490 = vunpack.c.l.b16 %v400
  %v491 = vunpack.c.h.b16 %v400
  %v492 = vunpack.c.l.b16 %v401
  %v493 = vunpack.c.h.b16 %v401
  %v494 = vunpack.c.l.b16 %v402
  %v495 = vunpack.c.h.b16 %v402
  %v496 = vunpack.c.l.b16 %v403
  %v497 = vunpack.c.h.b16 %v403
  %v498 = vunpack.c.l.b16 %v404
  %v499 = vunpack.c.h.b16 %v404
  %v500 = vunpack.c.l.b16 %v405
  %v501 = vunpack.c.h.b16 %v405
  %v502 = vpack.c.b16 %v442, %v438
  %v503 = vpack.c.b16 %v443, %v439
  %v504 = vpack.c.b16 %v444, %v440
  %v505 = vpack.c.b16 %v445, %v441
  %v506 = vpack.c.b16 %v450, %v446
  %v507 = vpack.c.b16 %v451, %v447
  %v508 = vpack.c.b16 %v452, %v448
  %v509 = vpack.c.b16 %v453, %v449
  %v510 = vpack.c.b16 %v458, %v454
  %v511 = vpack.c.b16 %v459, %v455
  %v512 = vpack.c.b16 %v460, %v456
  %v513 = vpack.c.b16 %v461, %v457
  %v514 = vpack.c.b16 %v466, %v462
  %v515 = vpack.c.b16 %v467, %v463
  %v516 = vpack.c.b16 %v468, %v464
  %v517 = vpack.c.b16 %v469, %v465
  %v518 = vpack.c.b16 %v474, %v470
  %v519 = vpack.c.b16 %v475, %v471
  %v520 = vpack.c.b16 %v476, %v472
  %v521 = vpack.c.b16 %v477, %v473
  %v522 = vpack.c.b16 %v482, %v478
  %v523 = vpack.c.b16 %v483, %v479
  %v524 = vpack.c.b16 %v484, %v480
  %v525 = vpack.c.b16 %v485, %v481
  %v526 = vpack.c.b16 %v490, %v486
  %v527 = vpack.c.b16 %v491, %v487
  %v528 = vpack.c.b16 %v492, %v488
  %v529 = vpack.c.b16 %v493, %v489
  %v530 = vpack.c.b16 %v498, %v494
  %v531 = vpack.c.b16 %v499, %v495
  %v532 = vpack.c.b16 %v500, %v496
  %v533 = vpack.c.b16 %v501, %v497
  %566 = vmatprep.subr.bf16.mxu0 %v503
  %567 = vmatpush1.bf16.msra.mxu0 %v502
  %568 = vmatprep.subr.bf16.mxu0 %v507
  %569 = vmatpush1.bf16.msra.mxu0 %v506
  %570 = vmatprep.subr.bf16.mxu0 %v511
  %571 = vmatpush1.bf16.msra.mxu0 %v510
  %572 = vmatprep.subr.bf16.mxu0 %v515
  %573 = vmatpush1.bf16.msra.mxu0 %v514
  %574 = vmatprep.subr.bf16.mxu0 %v519
  %575 = vmatpush1.bf16.msra.mxu0 %v518
  %576 = vmatprep.subr.bf16.mxu0 %v523
  %577 = vmatpush1.bf16.msra.mxu0 %v522
  %578 = vmatprep.subr.bf16.mxu0 %v527
  %579 = vmatpush1.bf16.msra.mxu0 %v526
  %580 = vmatprep.subr.bf16.mxu0 %v531
  %581 = vmatpush1.bf16.msra.mxu0 %v530
  %582 = vmatprep.subr.bf16.mxu0 0
  %583 = vmatpush1.bf16.msra.mxu0 0
  %584 = vmatprep.subr.bf16.mxu0 0
  %585 = vmatpush1.bf16.msra.mxu0 0
  %586 = vmatprep.subr.bf16.mxu0 0
  %587 = vmatpush1.bf16.msra.mxu0 0
  %588 = vmatprep.subr.bf16.mxu0 0
  %589 = vmatpush1.bf16.msra.mxu0 0
  %590 = vmatprep.subr.bf16.mxu0 0
  %591 = vmatpush1.bf16.msra.mxu0 0
  %592 = vmatprep.subr.bf16.mxu0 0
  %593 = vmatpush1.bf16.msra.mxu0 0
  %594 = vmatprep.subr.bf16.mxu0 0
  %595 = vmatpush1.bf16.msra.mxu0 0
  %596 = vmatprep.subr.bf16.mxu0 0
  %597 = vmatpush1.bf16.msra.mxu0 0
  %598 = vmatprep.mubr.bf16.mxu0 0
  %599 = vmatmul.mubr.bf16.gmra.mrb[0].mxu0 %v373
  %v600 = vpop.f32.mrb[0].mxu0
  %v601 = vadd.f32 0.0, %v600
  %v602 = vpop.f32.mrb[0].mxu0
  %v603 = vadd.f32 0.0, %v602
  %v604 = vpop.f32.mrb[0].mxu0
  %v605 = vpop.f32.mrb[0].mxu0
  %606 = vdwg.mxu0
  %607 = vmatprep.subr.bf16.mxu0 %v505
  %608 = vmatpush1.bf16.msra.mxu0 %v504
  %609 = vmatprep.subr.bf16.mxu0 %v509
  %610 = vmatpush1.bf16.msra.mxu0 %v508
  %611 = vmatprep.subr.bf16.mxu0 %v513
  %612 = vmatpush1.bf16.msra.mxu0 %v512
  %613 = vmatprep.subr.bf16.mxu0 %v517
  %614 = vmatpush1.bf16.msra.mxu0 %v516
  %615 = vmatprep.subr.bf16.mxu0 %v521
  %616 = vmatpush1.bf16.msra.mxu0 %v520
  %617 = vmatprep.subr.bf16.mxu0 %v525
  %618 = vmatpush1.bf16.msra.mxu0 %v524
  %619 = vmatprep.subr.bf16.mxu0 %v529
  %620 = vmatpush1.bf16.msra.mxu0 %v528
  %621 = vmatprep.subr.bf16.mxu0 %v533
  %622 = vmatpush1.bf16.msra.mxu0 %v532
  %623 = vmatprep.subr.bf16.mxu0 0
  %624 = vmatpush1.bf16.msra.mxu0 0
  %625 = vmatprep.subr.bf16.mxu0 0
  %626 = vmatpush1.bf16.msra.mxu0 0
  %627 = vmatprep.subr.bf16.mxu0 0
  %628 = vmatpush1.bf16.msra.mxu0 0
  %629 = vmatprep.subr.bf16.mxu0 0
  %630 = vmatpush1.bf16.msra.mxu0 0
  %631 = vmatprep.subr.bf16.mxu0 0
  %632 = vmatpush1.bf16.msra.mxu0 0
  %633 = vmatprep.subr.bf16.mxu0 0
  %634 = vmatpush1.bf16.msra.mxu0 0
  %635 = vmatprep.subr.bf16.mxu0 0
  %636 = vmatpush1.bf16.msra.mxu0 0
  %637 = vmatprep.subr.bf16.mxu0 0
  %638 = vmatpush1.bf16.msra.mxu0 0
  %639 = vmatprep.mubr.bf16.mxu0 0
  %640 = vmatmul.mubr.bf16.gmra.mrb[0].mxu0 %v373
  %v641 = vpop.f32.mrb[0].mxu0
  %v642 = vadd.f32 0.0, %v641
  %v643 = vpop.f32.mrb[0].mxu0
  %v644 = vadd.f32 0.0, %v643
  %v645 = vpop.f32.mrb[0].mxu0
  %v646 = vpop.f32.mrb[0].mxu0
  %647 = vdwg.mxu0
  %v648 = vadd.f32 %v320, %v601
  %v649 = vadd.f32 %v322, %v603
  %v650 = vadd.f32 %v361, %v642
  %v651 = vadd.f32 %v363, %v644
  %v652 = vxor.u32 %v648, 2147483648
  %v653 = vmul.f32 %v652, 1.442695
  %v654 = vpow.pop %v653
  %v655 = vadd.f32 %v654, 1.0
  %v656 = vrcp.pop %v655
  %v657 = vmul.f32 1.0, %v656
  %v658 = vxor.u32 %v649, 2147483648
  %v659 = vmul.f32 %v658, 1.442695
  %v660 = vpow.pop %v659
  %v661 = vadd.f32 %v660, 1.0
  %v662 = vrcp.pop %v661
  %v663 = vmul.f32 1.0, %v662
  %v664 = vtanh.pop %v650
  %v665 = vxor.u32 %v651, 2147483648
  %v666 = vmul.f32 %v665, 1.442695
  %v667 = vpow.pop %v666
  %v668 = vadd.f32 %v667, 1.0
  %v669 = vrcp.pop %v668
  %v670 = vmul.f32 1.0, %v669
  %v671 = vmul.f32 %v663, %v368
  %v672 = vmul.f32 %v657, %v664
  %v673 = vadd.f32 %v671, %v672
  %v674 = vtanh.pop %v673
  %v675 = vmul.f32 %v670, %v674
  %v676 = vpack.c.bf16 %v675, %v675
  %v677 = vld [vmem:[%s7] sm:$0xff]
  %v678 = vld [vmem:[%s7 + $0x8] sm:$0xff]
  %v679 = vld [vmem:[%s7 + $0x10] sm:$0xff]
  %v680 = vld [vmem:[%s7 + $0x18] sm:$0xff]
  %v681 = vld [vmem:[%s7 + $0x20] sm:$0xff]
  %v682 = vld [vmem:[%s7 + $0x28] sm:$0xff]
  %v683 = vld [vmem:[%s7 + $0x30] sm:$0xff]
  %v684 = vld [vmem:[%s7 + $0x38] sm:$0xff]
  %v685 = vld [vmem:[%s7 + $0x40] sm:$0xff]
  %v686 = vld [vmem:[%s7 + $0x48] sm:$0xff]
  %v687 = vld [vmem:[%s7 + $0x50] sm:$0xff]
  %v688 = vld [vmem:[%s7 + $0x58] sm:$0xff]
  %v689 = vld [vmem:[%s7 + $0x60] sm:$0xff]
  %v690 = vld [vmem:[%s7 + $0x68] sm:$0xff]
  %v691 = vld [vmem:[%s7 + $0x70] sm:$0xff]
  %v692 = vld [vmem:[%s7 + $0x78] sm:$0xff]
  %v693 = vld [vmem:[%s7 + $0x80] sm:$0xff]
  %v694 = vld [vmem:[%s7 + $0x88] sm:$0xff]
  %v695 = vld [vmem:[%s7 + $0x90] sm:$0xff]
  %v696 = vld [vmem:[%s7 + $0x98] sm:$0xff]
  %v697 = vld [vmem:[%s7 + $0xa0] sm:$0xff]
  %v698 = vld [vmem:[%s7 + $0xa8] sm:$0xff]
  %v699 = vld [vmem:[%s7 + $0xb0] sm:$0xff]
  %v700 = vld [vmem:[%s7 + $0xb8] sm:$0xff]
  %v701 = vld [vmem:[%s7 + $0xc0] sm:$0xff]
  %v702 = vld [vmem:[%s7 + $0xc8] sm:$0xff]
  %v703 = vld [vmem:[%s7 + $0xd0] sm:$0xff]
  %v704 = vld [vmem:[%s7 + $0xd8] sm:$0xff]
  %v705 = vld [vmem:[%s7 + $0xe0] sm:$0xff]
  %v706 = vld [vmem:[%s7 + $0xe8] sm:$0xff]
  %v707 = vld [vmem:[%s7 + $0xf0] sm:$0xff]
  %v708 = vld [vmem:[%s7 + $0xf8] sm:$0xff]
  %v709 = vld [vmem:[%s9] sm:$0xf]
  %v711 = vlaneseq
  %v712 = vshrl.u32 %v711, 7
  %v713 = vsub.s32 0, %v712
  %v714 = vrot.slane %v709, %v713
  %v715 = vlaneseq
  %v716 = vshrl.u32 %v715, 7
  %v717 = vsub.s32 1, %v716
  %v718 = vrot.slane %v709, %v717
  %v719 = vlaneseq
  %v720 = vshrl.u32 %v719, 7
  %v721 = vsub.s32 2, %v720
  %v722 = vrot.slane %v709, %v721
  %v723 = vlaneseq
  %v724 = vshrl.u32 %v723, 7
  %v725 = vsub.s32 3, %v724
  %v726 = vrot.slane %v709, %v725
  %v763 = vunpack.c.l.b16 %v677
  %v764 = vunpack.c.h.b16 %v677
  %v765 = vunpack.c.l.b16 %v678
  %v766 = vunpack.c.h.b16 %v678
  %v767 = vunpack.c.l.b16 %v679
  %v768 = vunpack.c.h.b16 %v679
  %v769 = vunpack.c.l.b16 %v680
  %v770 = vunpack.c.h.b16 %v680
  %v771 = vunpack.c.l.b16 %v681
  %v772 = vunpack.c.h.b16 %v681
  %v773 = vunpack.c.l.b16 %v682
  %v774 = vunpack.c.h.b16 %v682
  %v775 = vunpack.c.l.b16 %v683
  %v776 = vunpack.c.h.b16 %v683
  %v777 = vunpack.c.l.b16 %v684
  %v778 = vunpack.c.h.b16 %v684
  %v779 = vunpack.c.l.b16 %v685
  %v780 = vunpack.c.h.b16 %v685
  %v781 = vunpack.c.l.b16 %v686
  %v782 = vunpack.c.h.b16 %v686
  %v783 = vunpack.c.l.b16 %v687
  %v784 = vunpack.c.h.b16 %v687
  %v785 = vunpack.c.l.b16 %v688
  %v786 = vunpack.c.h.b16 %v688
  %v787 = vunpack.c.l.b16 %v689
  %v788 = vunpack.c.h.b16 %v689
  %v789 = vunpack.c.l.b16 %v690
  %v790 = vunpack.c.h.b16 %v690
  %v791 = vunpack.c.l.b16 %v691
  %v792 = vunpack.c.h.b16 %v691
  %v793 = vunpack.c.l.b16 %v692
  %v794 = vunpack.c.h.b16 %v692
  %v795 = vunpack.c.l.b16 %v693
  %v796 = vunpack.c.h.b16 %v693
  %v797 = vunpack.c.l.b16 %v694
  %v798 = vunpack.c.h.b16 %v694
  %v799 = vunpack.c.l.b16 %v695
  %v800 = vunpack.c.h.b16 %v695
  %v801 = vunpack.c.l.b16 %v696
  %v802 = vunpack.c.h.b16 %v696
  %v803 = vunpack.c.l.b16 %v697
  %v804 = vunpack.c.h.b16 %v697
  %v805 = vunpack.c.l.b16 %v698
  %v806 = vunpack.c.h.b16 %v698
  %v807 = vunpack.c.l.b16 %v699
  %v808 = vunpack.c.h.b16 %v699
  %v809 = vunpack.c.l.b16 %v700
  %v810 = vunpack.c.h.b16 %v700
  %v811 = vunpack.c.l.b16 %v701
  %v812 = vunpack.c.h.b16 %v701
  %v813 = vunpack.c.l.b16 %v702
  %v814 = vunpack.c.h.b16 %v702
  %v815 = vunpack.c.l.b16 %v703
  %v816 = vunpack.c.h.b16 %v703
  %v817 = vunpack.c.l.b16 %v704
  %v818 = vunpack.c.h.b16 %v704
  %v819 = vunpack.c.l.b16 %v705
  %v820 = vunpack.c.h.b16 %v705
  %v821 = vunpack.c.l.b16 %v706
  %v822 = vunpack.c.h.b16 %v706
  %v823 = vunpack.c.l.b16 %v707
  %v824 = vunpack.c.h.b16 %v707
  %v825 = vunpack.c.l.b16 %v708
  %v826 = vunpack.c.h.b16 %v708
  %v827 = vpack.c.b16 %v767, %v763
  %v828 = vpack.c.b16 %v768, %v764
  %v829 = vpack.c.b16 %v769, %v765
  %v830 = vpack.c.b16 %v770, %v766
  %v831 = vpack.c.b16 %v775, %v771
  %v832 = vpack.c.b16 %v776, %v772
  %v833 = vpack.c.b16 %v777, %v773
  %v834 = vpack.c.b16 %v778, %v774
  %v835 = vpack.c.b16 %v783, %v779
  %v836 = vpack.c.b16 %v784, %v780
  %v837 = vpack.c.b16 %v785, %v781
  %v838 = vpack.c.b16 %v786, %v782
  %v839 = vpack.c.b16 %v791, %v787
  %v840 = vpack.c.b16 %v792, %v788
  %v841 = vpack.c.b16 %v793, %v789
  %v842 = vpack.c.b16 %v794, %v790
  %v843 = vpack.c.b16 %v799, %v795
  %v844 = vpack.c.b16 %v800, %v796
  %v845 = vpack.c.b16 %v801, %v797
  %v846 = vpack.c.b16 %v802, %v798
  %v847 = vpack.c.b16 %v807, %v803
  %v848 = vpack.c.b16 %v808, %v804
  %v849 = vpack.c.b16 %v809, %v805
  %v850 = vpack.c.b16 %v810, %v806
  %v851 = vpack.c.b16 %v815, %v811
  %v852 = vpack.c.b16 %v816, %v812
  %v853 = vpack.c.b16 %v817, %v813
  %v854 = vpack.c.b16 %v818, %v814
  %v855 = vpack.c.b16 %v823, %v819
  %v856 = vpack.c.b16 %v824, %v820
  %v857 = vpack.c.b16 %v825, %v821
  %v858 = vpack.c.b16 %v826, %v822
  %891 = vmatprep.subr.bf16.mxu0 %v828
  %892 = vmatpush1.bf16.msra.mxu0 %v827
  %893 = vmatprep.subr.bf16.mxu0 %v832
  %894 = vmatpush1.bf16.msra.mxu0 %v831
  %895 = vmatprep.subr.bf16.mxu0 %v836
  %896 = vmatpush1.bf16.msra.mxu0 %v835
  %897 = vmatprep.subr.bf16.mxu0 %v840
  %898 = vmatpush1.bf16.msra.mxu0 %v839
  %899 = vmatprep.subr.bf16.mxu0 %v844
  %900 = vmatpush1.bf16.msra.mxu0 %v843
  %901 = vmatprep.subr.bf16.mxu0 %v848
  %902 = vmatpush1.bf16.msra.mxu0 %v847
  %903 = vmatprep.subr.bf16.mxu0 %v852
  %904 = vmatpush1.bf16.msra.mxu0 %v851
  %905 = vmatprep.subr.bf16.mxu0 %v856
  %906 = vmatpush1.bf16.msra.mxu0 %v855
  %907 = vmatprep.subr.bf16.mxu0 0
  %908 = vmatpush1.bf16.msra.mxu0 0
  %909 = vmatprep.subr.bf16.mxu0 0
  %910 = vmatpush1.bf16.msra.mxu0 0
  %911 = vmatprep.subr.bf16.mxu0 0
  %912 = vmatpush1.bf16.msra.mxu0 0
  %913 = vmatprep.subr.bf16.mxu0 0
  %914 = vmatpush1.bf16.msra.mxu0 0
  %915 = vmatprep.subr.bf16.mxu0 0
  %916 = vmatpush1.bf16.msra.mxu0 0
  %917 = vmatprep.subr.bf16.mxu0 0
  %918 = vmatpush1.bf16.msra.mxu0 0
  %919 = vmatprep.subr.bf16.mxu0 0
  %920 = vmatpush1.bf16.msra.mxu0 0
  %921 = vmatprep.subr.bf16.mxu0 0
  %922 = vmatpush1.bf16.msra.mxu0 0
  %923 = vmatprep.mubr.bf16.mxu0 0
  %924 = vmatmul.mubr.bf16.gmra.mrb[0].mxu0 %v676
  %v925 = vpop.f32.mrb[0].mxu0
  %v926 = vadd.f32 %v714, %v925
  %v927 = vpop.f32.mrb[0].mxu0
  %v928 = vadd.f32 %v718, %v927
  %v929 = vpop.f32.mrb[0].mxu0
  %v930 = vpop.f32.mrb[0].mxu0
  %931 = vdwg.mxu0
  %932 = vmatprep.subr.bf16.mxu0 %v830
  %933 = vmatpush1.bf16.msra.mxu0 %v829
  %934 = vmatprep.subr.bf16.mxu0 %v834
  %935 = vmatpush1.bf16.msra.mxu0 %v833
  %936 = vmatprep.subr.bf16.mxu0 %v838
  %937 = vmatpush1.bf16.msra.mxu0 %v837
  %938 = vmatprep.subr.bf16.mxu0 %v842
  %939 = vmatpush1.bf16.msra.mxu0 %v841
  %940 = vmatprep.subr.bf16.mxu0 %v846
  %941 = vmatpush1.bf16.msra.mxu0 %v845
  %942 = vmatprep.subr.bf16.mxu0 %v850
  %943 = vmatpush1.bf16.msra.mxu0 %v849
  %944 = vmatprep.subr.bf16.mxu0 %v854
  %945 = vmatpush1.bf16.msra.mxu0 %v853
  %946 = vmatprep.subr.bf16.mxu0 %v858
  %947 = vmatpush1.bf16.msra.mxu0 %v857
  %948 = vmatprep.subr.bf16.mxu0 0
  %949 = vmatpush1.bf16.msra.mxu0 0
  %950 = vmatprep.subr.bf16.mxu0 0
  %951 = vmatpush1.bf16.msra.mxu0 0
  %952 = vmatprep.subr.bf16.mxu0 0
  %953 = vmatpush1.bf16.msra.mxu0 0
  %954 = vmatprep.subr.bf16.mxu0 0
  %955 = vmatpush1.bf16.msra.mxu0 0
  %956 = vmatprep.subr.bf16.mxu0 0
  %957 = vmatpush1.bf16.msra.mxu0 0
  %958 = vmatprep.subr.bf16.mxu0 0
  %959 = vmatpush1.bf16.msra.mxu0 0
  %960 = vmatprep.subr.bf16.mxu0 0
  %961 = vmatpush1.bf16.msra.mxu0 0
  %962 = vmatprep.subr.bf16.mxu0 0
  %963 = vmatpush1.bf16.msra.mxu0 0
  %964 = vmatprep.mubr.bf16.mxu0 0
  %965 = vmatmul.mubr.bf16.gmra.mrb[0].mxu0 %v676
  %v966 = vpop.f32.mrb[0].mxu0
  %v967 = vadd.f32 %v722, %v966
  %v968 = vpop.f32.mrb[0].mxu0
  %v969 = vadd.f32 %v726, %v968
  %v970 = vpop.f32.mrb[0].mxu0
  %v971 = vpop.f32.mrb[0].mxu0
  %972 = vdwg.mxu0
  %v973 = vpack.c.bf16 %v370, %v370
  %v974 = vld [vmem:[%s8] sm:$0xff]
  %v975 = vld [vmem:[%s8 + $0x8] sm:$0xff]
  %v976 = vld [vmem:[%s8 + $0x10] sm:$0xff]
  %v977 = vld [vmem:[%s8 + $0x18] sm:$0xff]
  %v978 = vld [vmem:[%s8 + $0x20] sm:$0xff]
  %v979 = vld [vmem:[%s8 + $0x28] sm:$0xff]
  %v980 = vld [vmem:[%s8 + $0x30] sm:$0xff]
  %v981 = vld [vmem:[%s8 + $0x38] sm:$0xff]
  %v982 = vld [vmem:[%s8 + $0x40] sm:$0xff]
  %v983 = vld [vmem:[%s8 + $0x48] sm:$0xff]
  %v984 = vld [vmem:[%s8 + $0x50] sm:$0xff]
  %v985 = vld [vmem:[%s8 + $0x58] sm:$0xff]
  %v986 = vld [vmem:[%s8 + $0x60] sm:$0xff]
  %v987 = vld [vmem:[%s8 + $0x68] sm:$0xff]
  %v988 = vld [vmem:[%s8 + $0x70] sm:$0xff]
  %v989 = vld [vmem:[%s8 + $0x78] sm:$0xff]
  %v990 = vld [vmem:[%s8 + $0x80] sm:$0xff]
  %v991 = vld [vmem:[%s8 + $0x88] sm:$0xff]
  %v992 = vld [vmem:[%s8 + $0x90] sm:$0xff]
  %v993 = vld [vmem:[%s8 + $0x98] sm:$0xff]
  %v994 = vld [vmem:[%s8 + $0xa0] sm:$0xff]
  %v995 = vld [vmem:[%s8 + $0xa8] sm:$0xff]
  %v996 = vld [vmem:[%s8 + $0xb0] sm:$0xff]
  %v997 = vld [vmem:[%s8 + $0xb8] sm:$0xff]
  %v998 = vld [vmem:[%s8 + $0xc0] sm:$0xff]
  %v999 = vld [vmem:[%s8 + $0xc8] sm:$0xff]
  %v1000 = vld [vmem:[%s8 + $0xd0] sm:$0xff]
  %v1001 = vld [vmem:[%s8 + $0xd8] sm:$0xff]
  %v1002 = vld [vmem:[%s8 + $0xe0] sm:$0xff]
  %v1003 = vld [vmem:[%s8 + $0xe8] sm:$0xff]
  %v1004 = vld [vmem:[%s8 + $0xf0] sm:$0xff]
  %v1005 = vld [vmem:[%s8 + $0xf8] sm:$0xff]
  %v1038 = vunpack.c.l.b16 %v974
  %v1039 = vunpack.c.h.b16 %v974
  %v1040 = vunpack.c.l.b16 %v975
  %v1041 = vunpack.c.h.b16 %v975
  %v1042 = vunpack.c.l.b16 %v976
  %v1043 = vunpack.c.h.b16 %v976
  %v1044 = vunpack.c.l.b16 %v977
  %v1045 = vunpack.c.h.b16 %v977
  %v1046 = vunpack.c.l.b16 %v978
  %v1047 = vunpack.c.h.b16 %v978
  %v1048 = vunpack.c.l.b16 %v979
  %v1049 = vunpack.c.h.b16 %v979
  %v1050 = vunpack.c.l.b16 %v980
  %v1051 = vunpack.c.h.b16 %v980
  %v1052 = vunpack.c.l.b16 %v981
  %v1053 = vunpack.c.h.b16 %v981
  %v1054 = vunpack.c.l.b16 %v982
  %v1055 = vunpack.c.h.b16 %v982
  %v1056 = vunpack.c.l.b16 %v983
  %v1057 = vunpack.c.h.b16 %v983
  %v1058 = vunpack.c.l.b16 %v984
  %v1059 = vunpack.c.h.b16 %v984
  %v1060 = vunpack.c.l.b16 %v985
  %v1061 = vunpack.c.h.b16 %v985
  %v1062 = vunpack.c.l.b16 %v986
  %v1063 = vunpack.c.h.b16 %v986
  %v1064 = vunpack.c.l.b16 %v987
  %v1065 = vunpack.c.h.b16 %v987
  %v1066 = vunpack.c.l.b16 %v988
  %v1067 = vunpack.c.h.b16 %v988
  %v1068 = vunpack.c.l.b16 %v989
  %v1069 = vunpack.c.h.b16 %v989
  %v1070 = vunpack.c.l.b16 %v990
  %v1071 = vunpack.c.h.b16 %v990
  %v1072 = vunpack.c.l.b16 %v991
  %v1073 = vunpack.c.h.b16 %v991
  %v1074 = vunpack.c.l.b16 %v992
  %v1075 = vunpack.c.h.b16 %v992
  %v1076 = vunpack.c.l.b16 %v993
  %v1077 = vunpack.c.h.b16 %v993
  %v1078 = vunpack.c.l.b16 %v994
  %v1079 = vunpack.c.h.b16 %v994
  %v1080 = vunpack.c.l.b16 %v995
  %v1081 = vunpack.c.h.b16 %v995
  %v1082 = vunpack.c.l.b16 %v996
  %v1083 = vunpack.c.h.b16 %v996
  %v1084 = vunpack.c.l.b16 %v997
  %v1085 = vunpack.c.h.b16 %v997
  %v1086 = vunpack.c.l.b16 %v998
  %v1087 = vunpack.c.h.b16 %v998
  %v1088 = vunpack.c.l.b16 %v999
  %v1089 = vunpack.c.h.b16 %v999
  %v1090 = vunpack.c.l.b16 %v1000
  %v1091 = vunpack.c.h.b16 %v1000
  %v1092 = vunpack.c.l.b16 %v1001
  %v1093 = vunpack.c.h.b16 %v1001
  %v1094 = vunpack.c.l.b16 %v1002
  %v1095 = vunpack.c.h.b16 %v1002
  %v1096 = vunpack.c.l.b16 %v1003
  %v1097 = vunpack.c.h.b16 %v1003
  %v1098 = vunpack.c.l.b16 %v1004
  %v1099 = vunpack.c.h.b16 %v1004
  %v1100 = vunpack.c.l.b16 %v1005
  %v1101 = vunpack.c.h.b16 %v1005
  %v1102 = vpack.c.b16 %v1042, %v1038
  %v1103 = vpack.c.b16 %v1043, %v1039
  %v1104 = vpack.c.b16 %v1044, %v1040
  %v1105 = vpack.c.b16 %v1045, %v1041
  %v1106 = vpack.c.b16 %v1050, %v1046
  %v1107 = vpack.c.b16 %v1051, %v1047
  %v1108 = vpack.c.b16 %v1052, %v1048
  %v1109 = vpack.c.b16 %v1053, %v1049
  %v1110 = vpack.c.b16 %v1058, %v1054
  %v1111 = vpack.c.b16 %v1059, %v1055
  %v1112 = vpack.c.b16 %v1060, %v1056
  %v1113 = vpack.c.b16 %v1061, %v1057
  %v1114 = vpack.c.b16 %v1066, %v1062
  %v1115 = vpack.c.b16 %v1067, %v1063
  %v1116 = vpack.c.b16 %v1068, %v1064
  %v1117 = vpack.c.b16 %v1069, %v1065
  %v1118 = vpack.c.b16 %v1074, %v1070
  %v1119 = vpack.c.b16 %v1075, %v1071
  %v1120 = vpack.c.b16 %v1076, %v1072
  %v1121 = vpack.c.b16 %v1077, %v1073
  %v1122 = vpack.c.b16 %v1082, %v1078
  %v1123 = vpack.c.b16 %v1083, %v1079
  %v1124 = vpack.c.b16 %v1084, %v1080
  %v1125 = vpack.c.b16 %v1085, %v1081
  %v1126 = vpack.c.b16 %v1090, %v1086
  %v1127 = vpack.c.b16 %v1091, %v1087
  %v1128 = vpack.c.b16 %v1092, %v1088
  %v1129 = vpack.c.b16 %v1093, %v1089
  %v1130 = vpack.c.b16 %v1098, %v1094
  %v1131 = vpack.c.b16 %v1099, %v1095
  %v1132 = vpack.c.b16 %v1100, %v1096
  %v1133 = vpack.c.b16 %v1101, %v1097
  %1166 = vmatprep.subr.bf16.mxu0 %v1103
  %1167 = vmatpush1.bf16.msra.mxu0 %v1102
  %1168 = vmatprep.subr.bf16.mxu0 %v1107
  %1169 = vmatpush1.bf16.msra.mxu0 %v1106
  %1170 = vmatprep.subr.bf16.mxu0 %v1111
  %1171 = vmatpush1.bf16.msra.mxu0 %v1110
  %1172 = vmatprep.subr.bf16.mxu0 %v1115
  %1173 = vmatpush1.bf16.msra.mxu0 %v1114
  %1174 = vmatprep.subr.bf16.mxu0 %v1119
  %1175 = vmatpush1.bf16.msra.mxu0 %v1118
  %1176 = vmatprep.subr.bf16.mxu0 %v1123
  %1177 = vmatpush1.bf16.msra.mxu0 %v1122
  %1178 = vmatprep.subr.bf16.mxu0 %v1127
  %1179 = vmatpush1.bf16.msra.mxu0 %v1126
  %1180 = vmatprep.subr.bf16.mxu0 %v1131
  %1181 = vmatpush1.bf16.msra.mxu0 %v1130
  %1182 = vmatprep.subr.bf16.mxu0 0
  %1183 = vmatpush1.bf16.msra.mxu0 0
  %1184 = vmatprep.subr.bf16.mxu0 0
  %1185 = vmatpush1.bf16.msra.mxu0 0
  %1186 = vmatprep.subr.bf16.mxu0 0
  %1187 = vmatpush1.bf16.msra.mxu0 0
  %1188 = vmatprep.subr.bf16.mxu0 0
  %1189 = vmatpush1.bf16.msra.mxu0 0
  %1190 = vmatprep.subr.bf16.mxu0 0
  %1191 = vmatpush1.bf16.msra.mxu0 0
  %1192 = vmatprep.subr.bf16.mxu0 0
  %1193 = vmatpush1.bf16.msra.mxu0 0
  %1194 = vmatprep.subr.bf16.mxu0 0
  %1195 = vmatpush1.bf16.msra.mxu0 0
  %1196 = vmatprep.subr.bf16.mxu0 0
  %1197 = vmatpush1.bf16.msra.mxu0 0
  %1198 = vmatprep.mubr.bf16.mxu0 0
  %1199 = vmatmul.mubr.bf16.gmra.mrb[0].mxu0 %v973
  %v1200 = vpop.f32.mrb[0].mxu0
  %v1201 = vadd.f32 0.0, %v1200
  %v1202 = vpop.f32.mrb[0].mxu0
  %v1203 = vadd.f32 0.0, %v1202
  %v1204 = vpop.f32.mrb[0].mxu0
  %v1205 = vpop.f32.mrb[0].mxu0
  %1206 = vdwg.mxu0
  %1207 = vmatprep.subr.bf16.mxu0 %v1105
  %1208 = vmatpush1.bf16.msra.mxu0 %v1104
  %1209 = vmatprep.subr.bf16.mxu0 %v1109
  %1210 = vmatpush1.bf16.msra.mxu0 %v1108
  %1211 = vmatprep.subr.bf16.mxu0 %v1113
  %1212 = vmatpush1.bf16.msra.mxu0 %v1112
  %1213 = vmatprep.subr.bf16.mxu0 %v1117
  %1214 = vmatpush1.bf16.msra.mxu0 %v1116
  %1215 = vmatprep.subr.bf16.mxu0 %v1121
  %1216 = vmatpush1.bf16.msra.mxu0 %v1120
  %1217 = vmatprep.subr.bf16.mxu0 %v1125
  %1218 = vmatpush1.bf16.msra.mxu0 %v1124
  %1219 = vmatprep.subr.bf16.mxu0 %v1129
  %1220 = vmatpush1.bf16.msra.mxu0 %v1128
  %1221 = vmatprep.subr.bf16.mxu0 %v1133
  %1222 = vmatpush1.bf16.msra.mxu0 %v1132
  %1223 = vmatprep.subr.bf16.mxu0 0
  %1224 = vmatpush1.bf16.msra.mxu0 0
  %1225 = vmatprep.subr.bf16.mxu0 0
  %1226 = vmatpush1.bf16.msra.mxu0 0
  %1227 = vmatprep.subr.bf16.mxu0 0
  %1228 = vmatpush1.bf16.msra.mxu0 0
  %1229 = vmatprep.subr.bf16.mxu0 0
  %1230 = vmatpush1.bf16.msra.mxu0 0
  %1231 = vmatprep.subr.bf16.mxu0 0
  %1232 = vmatpush1.bf16.msra.mxu0 0
  %1233 = vmatprep.subr.bf16.mxu0 0
  %1234 = vmatpush1.bf16.msra.mxu0 0
  %1235 = vmatprep.subr.bf16.mxu0 0
  %1236 = vmatpush1.bf16.msra.mxu0 0
  %1237 = vmatprep.subr.bf16.mxu0 0
  %1238 = vmatpush1.bf16.msra.mxu0 0
  %1239 = vmatprep.mubr.bf16.mxu0 0
  %1240 = vmatmul.mubr.bf16.gmra.mrb[0].mxu0 %v973
  %v1241 = vpop.f32.mrb[0].mxu0
  %v1242 = vadd.f32 0.0, %v1241
  %v1243 = vpop.f32.mrb[0].mxu0
  %v1244 = vadd.f32 0.0, %v1243
  %v1245 = vpop.f32.mrb[0].mxu0
  %v1246 = vpop.f32.mrb[0].mxu0
  %1247 = vdwg.mxu0
  %v1248 = vadd.f32 %v926, %v1201
  %v1249 = vadd.f32 %v928, %v1203
  %v1250 = vadd.f32 %v967, %v1242
  %v1251 = vadd.f32 %v969, %v1244
  %v1252 = vxor.u32 %v1248, 2147483648
  %v1253 = vmul.f32 %v1252, 1.442695
  %v1254 = vpow.pop %v1253
  %v1255 = vadd.f32 %v1254, 1.0
  %v1256 = vrcp.pop %v1255
  %v1257 = vmul.f32 1.0, %v1256
  %v1258 = vxor.u32 %v1249, 2147483648
  %v1259 = vmul.f32 %v1258, 1.442695
  %v1260 = vpow.pop %v1259
  %v1261 = vadd.f32 %v1260, 1.0
  %v1262 = vrcp.pop %v1261
  %v1263 = vmul.f32 1.0, %v1262
  %v1264 = vtanh.pop %v1250
  %v1265 = vxor.u32 %v1251, 2147483648
  %v1266 = vmul.f32 %v1265, 1.442695
  %v1267 = vpow.pop %v1266
  %v1268 = vadd.f32 %v1267, 1.0
  %v1269 = vrcp.pop %v1268
  %v1270 = vmul.f32 1.0, %v1269
  %v1271 = vmul.f32 %v1263, %v372
  %v1272 = vmul.f32 %v1257, %v1264
  %v1273 = vadd.f32 %v1271, %v1272
  %v1274 = vtanh.pop %v1273
  %v1275 = vmul.f32 %v1270, %v1274
  %v1276 = vpack.c.bf16 %v1275, %v1275
  %v1277 = vld [vmem:[%s10] sm:$0xf]
  %v1278 = vld [vmem:[%s10 + $0x4] sm:$0xf]
  %v1279 = vld [vmem:[%s10 + $0x8] sm:$0xf]
  %v1280 = vld [vmem:[%s10 + $0xc] sm:$0xf]
  %v1281 = vld [vmem:[%s10 + $0x10] sm:$0xf]
  %v1282 = vld [vmem:[%s10 + $0x14] sm:$0xf]
  %v1283 = vld [vmem:[%s10 + $0x18] sm:$0xf]
  %v1284 = vld [vmem:[%s10 + $0x1c] sm:$0xf]
  %v1285 = vld [vmem:[%s10 + $0x20] sm:$0xf]
  %v1286 = vld [vmem:[%s10 + $0x24] sm:$0xf]
  %v1287 = vld [vmem:[%s10 + $0x28] sm:$0xf]
  %v1288 = vld [vmem:[%s10 + $0x2c] sm:$0xf]
  %v1289 = vld [vmem:[%s10 + $0x30] sm:$0xf]
  %v1290 = vld [vmem:[%s10 + $0x34] sm:$0xf]
  %v1291 = vld [vmem:[%s10 + $0x38] sm:$0xf]
  %v1292 = vld [vmem:[%s10 + $0x3c] sm:$0xf]
  %v1293 = vld [vmem:[%s11] sm:$0x1]
  %v1295 = vlaneseq
  %v1296 = vshrl.u32 %v1295, 7
  %v1297 = vsub.s32 0, %v1296
  %v1298 = vrot.slane %v1293, %v1297
  %v1316 = vunpack.c.l.b16 %v1277
  %v1317 = vunpack.c.l.b16 %v1278
  %v1318 = vunpack.c.l.b16 %v1279
  %v1319 = vunpack.c.l.b16 %v1280
  %v1320 = vunpack.c.l.b16 %v1281
  %v1321 = vunpack.c.l.b16 %v1282
  %v1322 = vunpack.c.l.b16 %v1283
  %v1323 = vunpack.c.l.b16 %v1284
  %v1324 = vunpack.c.l.b16 %v1285
  %v1325 = vunpack.c.l.b16 %v1286
  %v1326 = vunpack.c.l.b16 %v1287
  %v1327 = vunpack.c.l.b16 %v1288
  %v1328 = vunpack.c.l.b16 %v1289
  %v1329 = vunpack.c.l.b16 %v1290
  %v1330 = vunpack.c.l.b16 %v1291
  %v1331 = vunpack.c.l.b16 %v1292
  %v1332 = vpack.c.b16 %v1317, %v1316
  %v1333 = vpack.c.b16 %v1319, %v1318
  %v1334 = vpack.c.b16 %v1321, %v1320
  %v1335 = vpack.c.b16 %v1323, %v1322
  %v1336 = vpack.c.b16 %v1325, %v1324
  %v1337 = vpack.c.b16 %v1327, %v1326
  %v1338 = vpack.c.b16 %v1329, %v1328
  %v1339 = vpack.c.b16 %v1331, %v1330
  %1348 = vmatprep.subr.bf16.mxu0 0
  %1349 = vmatpush1.bf16.msra.mxu0 %v1332
  %1350 = vmatprep.subr.bf16.mxu0 0
  %1351 = vmatpush1.bf16.msra.mxu0 %v1333
  %1352 = vmatprep.subr.bf16.mxu0 0
  %1353 = vmatpush1.bf16.msra.mxu0 %v1334
  %1354 = vmatprep.subr.bf16.mxu0 0
  %1355 = vmatpush1.bf16.msra.mxu0 %v1335
  %1356 = vmatprep.subr.bf16.mxu0 0
  %1357 = vmatpush1.bf16.msra.mxu0 %v1336
  %1358 = vmatprep.subr.bf16.mxu0 0
  %1359 = vmatpush1.bf16.msra.mxu0 %v1337
  %1360 = vmatprep.subr.bf16.mxu0 0
  %1361 = vmatpush1.bf16.msra.mxu0 %v1338
  %1362 = vmatprep.subr.bf16.mxu0 0
  %1363 = vmatpush1.bf16.msra.mxu0 %v1339
  %1364 = vmatprep.subr.bf16.mxu0 0
  %1365 = vmatpush1.bf16.msra.mxu0 0
  %1366 = vmatprep.subr.bf16.mxu0 0
  %1367 = vmatpush1.bf16.msra.mxu0 0
  %1368 = vmatprep.subr.bf16.mxu0 0
  %1369 = vmatpush1.bf16.msra.mxu0 0
  %1370 = vmatprep.subr.bf16.mxu0 0
  %1371 = vmatpush1.bf16.msra.mxu0 0
  %1372 = vmatprep.subr.bf16.mxu0 0
  %1373 = vmatpush1.bf16.msra.mxu0 0
  %1374 = vmatprep.subr.bf16.mxu0 0
  %1375 = vmatpush1.bf16.msra.mxu0 0
  %1376 = vmatprep.subr.bf16.mxu0 0
  %1377 = vmatpush1.bf16.msra.mxu0 0
  %1378 = vmatprep.subr.bf16.mxu0 0
  %1379 = vmatpush1.bf16.msra.mxu0 0
  %1380 = vmatprep.mubr.bf16.mxu0 0
  %1381 = vmatmul.mubr.bf16.gmra.mrb[0].mxu0 %v1276
  %v1382 = vpop.f32.mrb[0].mxu0
  %v1383 = vadd.f32 %v1298, %v1382
  %v1384 = vpop.f32.mrb[0].mxu0
  %v1385 = vpop.f32.mrb[0].mxu0
  %v1386 = vpop.f32.mrb[0].mxu0
  %1387 = vdwg.mxu0
  %v1388 = vtanh.pop %v1383
  %1389 = vmatprep.subr.bf16.mxu0 %v503
  %1390 = vmatpush1.bf16.msra.mxu0 %v502
  %1391 = vmatprep.subr.bf16.mxu0 %v507
  %1392 = vmatpush1.bf16.msra.mxu0 %v506
  %1393 = vmatprep.subr.bf16.mxu0 %v511
  %1394 = vmatpush1.bf16.msra.mxu0 %v510
  %1395 = vmatprep.subr.bf16.mxu0 %v515
  %1396 = vmatpush1.bf16.msra.mxu0 %v514
  %1397 = vmatprep.subr.bf16.mxu0 %v519
  %1398 = vmatpush1.bf16.msra.mxu0 %v518
  %1399 = vmatprep.subr.bf16.mxu0 %v523
  %1400 = vmatpush1.bf16.msra.mxu0 %v522
  %1401 = vmatprep.subr.bf16.mxu0 %v527
  %1402 = vmatpush1.bf16.msra.mxu0 %v526
  %1403 = vmatprep.subr.bf16.mxu0 %v531
  %1404 = vmatpush1.bf16.msra.mxu0 %v530
  %1405 = vmatprep.subr.bf16.mxu0 0
  %1406 = vmatpush1.bf16.msra.mxu0 0
  %1407 = vmatprep.subr.bf16.mxu0 0
  %1408 = vmatpush1.bf16.msra.mxu0 0
  %1409 = vmatprep.subr.bf16.mxu0 0
  %1410 = vmatpush1.bf16.msra.mxu0 0
  %1411 = vmatprep.subr.bf16.mxu0 0
  %1412 = vmatpush1.bf16.msra.mxu0 0
  %1413 = vmatprep.subr.bf16.mxu0 0
  %1414 = vmatpush1.bf16.msra.mxu0 0
  %1415 = vmatprep.subr.bf16.mxu0 0
  %1416 = vmatpush1.bf16.msra.mxu0 0
  %1417 = vmatprep.subr.bf16.mxu0 0
  %1418 = vmatpush1.bf16.msra.mxu0 0
  %1419 = vmatprep.subr.bf16.mxu0 0
  %1420 = vmatpush1.bf16.msra.mxu0 0
  %1421 = vmatprep.mubr.bf16.mxu0 0
  %1422 = vmatmul.mubr.bf16.gmra.mrb[0].mxu0 %v676
  %v1423 = vpop.f32.mrb[0].mxu0
  %v1424 = vadd.f32 0.0, %v1423
  %v1425 = vpop.f32.mrb[0].mxu0
  %v1426 = vadd.f32 0.0, %v1425
  %v1427 = vpop.f32.mrb[0].mxu0
  %v1428 = vpop.f32.mrb[0].mxu0
  %1429 = vdwg.mxu0
  %1430 = vmatprep.subr.bf16.mxu0 %v505
  %1431 = vmatpush1.bf16.msra.mxu0 %v504
  %1432 = vmatprep.subr.bf16.mxu0 %v509
  %1433 = vmatpush1.bf16.msra.mxu0 %v508
  %1434 = vmatprep.subr.bf16.mxu0 %v513
  %1435 = vmatpush1.bf16.msra.mxu0 %v512
  %1436 = vmatprep.subr.bf16.mxu0 %v517
  %1437 = vmatpush1.bf16.msra.mxu0 %v516
  %1438 = vmatprep.subr.bf16.mxu0 %v521
  %1439 = vmatpush1.bf16.msra.mxu0 %v520
  %1440 = vmatprep.subr.bf16.mxu0 %v525
  %1441 = vmatpush1.bf16.msra.mxu0 %v524
  %1442 = vmatprep.subr.bf16.mxu0 %v529
  %1443 = vmatpush1.bf16.msra.mxu0 %v528
  %1444 = vmatprep.subr.bf16.mxu0 %v533
  %1445 = vmatpush1.bf16.msra.mxu0 %v532
  %1446 = vmatprep.subr.bf16.mxu0 0
  %1447 = vmatpush1.bf16.msra.mxu0 0
  %1448 = vmatprep.subr.bf16.mxu0 0
  %1449 = vmatpush1.bf16.msra.mxu0 0
  %1450 = vmatprep.subr.bf16.mxu0 0
  %1451 = vmatpush1.bf16.msra.mxu0 0
  %1452 = vmatprep.subr.bf16.mxu0 0
  %1453 = vmatpush1.bf16.msra.mxu0 0
  %1454 = vmatprep.subr.bf16.mxu0 0
  %1455 = vmatpush1.bf16.msra.mxu0 0
  %1456 = vmatprep.subr.bf16.mxu0 0
  %1457 = vmatpush1.bf16.msra.mxu0 0
  %1458 = vmatprep.subr.bf16.mxu0 0
  %1459 = vmatpush1.bf16.msra.mxu0 0
  %1460 = vmatprep.subr.bf16.mxu0 0
  %1461 = vmatpush1.bf16.msra.mxu0 0
  %1462 = vmatprep.mubr.bf16.mxu0 0
  %1463 = vmatmul.mubr.bf16.gmra.mrb[0].mxu0 %v676
  %v1464 = vpop.f32.mrb[0].mxu0
  %v1465 = vadd.f32 0.0, %v1464
  %v1466 = vpop.f32.mrb[0].mxu0
  %v1467 = vadd.f32 0.0, %v1466
  %v1468 = vpop.f32.mrb[0].mxu0
  %v1469 = vpop.f32.mrb[0].mxu0
  %1470 = vdwg.mxu0
  %v1471 = vadd.f32 %v320, %v1424
  %v1472 = vadd.f32 %v322, %v1426
  %v1473 = vadd.f32 %v361, %v1465
  %v1474 = vadd.f32 %v363, %v1467
  %v1475 = vxor.u32 %v1471, 2147483648
  %v1476 = vmul.f32 %v1475, 1.442695
  %v1477 = vpow.pop %v1476
  %v1478 = vadd.f32 %v1477, 1.0
  %v1479 = vrcp.pop %v1478
  %v1480 = vmul.f32 1.0, %v1479
  %v1481 = vxor.u32 %v1472, 2147483648
  %v1482 = vmul.f32 %v1481, 1.442695
  %v1483 = vpow.pop %v1482
  %v1484 = vadd.f32 %v1483, 1.0
  %v1485 = vrcp.pop %v1484
  %v1486 = vmul.f32 1.0, %v1485
  %v1487 = vtanh.pop %v1473
  %v1488 = vxor.u32 %v1474, 2147483648
  %v1489 = vmul.f32 %v1488, 1.442695
  %v1490 = vpow.pop %v1489
  %v1491 = vadd.f32 %v1490, 1.0
  %v1492 = vrcp.pop %v1491
  %v1493 = vmul.f32 1.0, %v1492
  %v1494 = vmul.f32 %v1486, %v673
  %v1495 = vmul.f32 %v1480, %v1487
  %v1496 = vadd.f32 %v1494, %v1495
  %v1497 = vtanh.pop %v1496
  %v1498 = vmul.f32 %v1493, %v1497
  %v1499 = vpack.c.bf16 %v1498, %v1498
  %1500 = vmatprep.subr.bf16.mxu0 %v828
  %1501 = vmatpush1.bf16.msra.mxu0 %v827
  %1502 = vmatprep.subr.bf16.mxu0 %v832
  %1503 = vmatpush1.bf16.msra.mxu0 %v831
  %1504 = vmatprep.subr.bf16.mxu0 %v836
  %1505 = vmatpush1.bf16.msra.mxu0 %v835
  %1506 = vmatprep.subr.bf16.mxu0 %v840
  %1507 = vmatpush1.bf16.msra.mxu0 %v839
  %1508 = vmatprep.subr.bf16.mxu0 %v844
  %1509 = vmatpush1.bf16.msra.mxu0 %v843
  %1510 = vmatprep.subr.bf16.mxu0 %v848
  %1511 = vmatpush1.bf16.msra.mxu0 %v847
  %1512 = vmatprep.subr.bf16.mxu0 %v852
  %1513 = vmatpush1.bf16.msra.mxu0 %v851
  %1514 = vmatprep.subr.bf16.mxu0 %v856
  %1515 = vmatpush1.bf16.msra.mxu0 %v855
  %1516 = vmatprep.subr.bf16.mxu0 0
  %1517 = vmatpush1.bf16.msra.mxu0 0
  %1518 = vmatprep.subr.bf16.mxu0 0
  %1519 = vmatpush1.bf16.msra.mxu0 0
  %1520 = vmatprep.subr.bf16.mxu0 0
  %1521 = vmatpush1.bf16.msra.mxu0 0
  %1522 = vmatprep.subr.bf16.mxu0 0
  %1523 = vmatpush1.bf16.msra.mxu0 0
  %1524 = vmatprep.subr.bf16.mxu0 0
  %1525 = vmatpush1.bf16.msra.mxu0 0
  %1526 = vmatprep.subr.bf16.mxu0 0
  %1527 = vmatpush1.bf16.msra.mxu0 0
  %1528 = vmatprep.subr.bf16.mxu0 0
  %1529 = vmatpush1.bf16.msra.mxu0 0
  %1530 = vmatprep.subr.bf16.mxu0 0
  %1531 = vmatpush1.bf16.msra.mxu0 0
  %1532 = vmatprep.mubr.bf16.mxu0 0
  %1533 = vmatmul.mubr.bf16.gmra.mrb[0].mxu0 %v1499
  %v1534 = vpop.f32.mrb[0].mxu0
  %v1535 = vadd.f32 %v714, %v1534
  %v1536 = vpop.f32.mrb[0].mxu0
  %v1537 = vadd.f32 %v718, %v1536
  %v1538 = vpop.f32.mrb[0].mxu0
  %v1539 = vpop.f32.mrb[0].mxu0
  %1540 = vdwg.mxu0
  %1541 = vmatprep.subr.bf16.mxu0 %v830
  %1542 = vmatpush1.bf16.msra.mxu0 %v829
  %1543 = vmatprep.subr.bf16.mxu0 %v834
  %1544 = vmatpush1.bf16.msra.mxu0 %v833
  %1545 = vmatprep.subr.bf16.mxu0 %v838
  %1546 = vmatpush1.bf16.msra.mxu0 %v837
  %1547 = vmatprep.subr.bf16.mxu0 %v842
  %1548 = vmatpush1.bf16.msra.mxu0 %v841
  %1549 = vmatprep.subr.bf16.mxu0 %v846
  %1550 = vmatpush1.bf16.msra.mxu0 %v845
  %1551 = vmatprep.subr.bf16.mxu0 %v850
  %1552 = vmatpush1.bf16.msra.mxu0 %v849
  %1553 = vmatprep.subr.bf16.mxu0 %v854
  %1554 = vmatpush1.bf16.msra.mxu0 %v853
  %1555 = vmatprep.subr.bf16.mxu0 %v858
  %1556 = vmatpush1.bf16.msra.mxu0 %v857
  %1557 = vmatprep.subr.bf16.mxu0 0
  %1558 = vmatpush1.bf16.msra.mxu0 0
  %1559 = vmatprep.subr.bf16.mxu0 0
  %1560 = vmatpush1.bf16.msra.mxu0 0
  %1561 = vmatprep.subr.bf16.mxu0 0
  %1562 = vmatpush1.bf16.msra.mxu0 0
  %1563 = vmatprep.subr.bf16.mxu0 0
  %1564 = vmatpush1.bf16.msra.mxu0 0
  %1565 = vmatprep.subr.bf16.mxu0 0
  %1566 = vmatpush1.bf16.msra.mxu0 0
  %1567 = vmatprep.subr.bf16.mxu0 0
  %1568 = vmatpush1.bf16.msra.mxu0 0
  %1569 = vmatprep.subr.bf16.mxu0 0
  %1570 = vmatpush1.bf16.msra.mxu0 0
  %1571 = vmatprep.subr.bf16.mxu0 0
  %1572 = vmatpush1.bf16.msra.mxu0 0
  %1573 = vmatprep.mubr.bf16.mxu0 0
  %1574 = vmatmul.mubr.bf16.gmra.mrb[0].mxu0 %v1499
  %v1575 = vpop.f32.mrb[0].mxu0
  %v1576 = vadd.f32 %v722, %v1575
  %v1577 = vpop.f32.mrb[0].mxu0
  %v1578 = vadd.f32 %v726, %v1577
  %v1579 = vpop.f32.mrb[0].mxu0
  %v1580 = vpop.f32.mrb[0].mxu0
  %1581 = vdwg.mxu0
  %1582 = vmatprep.subr.bf16.mxu0 %v1103
  %1583 = vmatpush1.bf16.msra.mxu0 %v1102
  %1584 = vmatprep.subr.bf16.mxu0 %v1107
  %1585 = vmatpush1.bf16.msra.mxu0 %v1106
  %1586 = vmatprep.subr.bf16.mxu0 %v1111
  %1587 = vmatpush1.bf16.msra.mxu0 %v1110
  %1588 = vmatprep.subr.bf16.mxu0 %v1115
  %1589 = vmatpush1.bf16.msra.mxu0 %v1114
  %1590 = vmatprep.subr.bf16.mxu0 %v1119
  %1591 = vmatpush1.bf16.msra.mxu0 %v1118
  %1592 = vmatprep.subr.bf16.mxu0 %v1123
  %1593 = vmatpush1.bf16.msra.mxu0 %v1122
  %1594 = vmatprep.subr.bf16.mxu0 %v1127
  %1595 = vmatpush1.bf16.msra.mxu0 %v1126
  %1596 = vmatprep.subr.bf16.mxu0 %v1131
  %1597 = vmatpush1.bf16.msra.mxu0 %v1130
  %1598 = vmatprep.subr.bf16.mxu0 0
  %1599 = vmatpush1.bf16.msra.mxu0 0
  %1600 = vmatprep.subr.bf16.mxu0 0
  %1601 = vmatpush1.bf16.msra.mxu0 0
  %1602 = vmatprep.subr.bf16.mxu0 0
  %1603 = vmatpush1.bf16.msra.mxu0 0
  %1604 = vmatprep.subr.bf16.mxu0 0
  %1605 = vmatpush1.bf16.msra.mxu0 0
  %1606 = vmatprep.subr.bf16.mxu0 0
  %1607 = vmatpush1.bf16.msra.mxu0 0
  %1608 = vmatprep.subr.bf16.mxu0 0
  %1609 = vmatpush1.bf16.msra.mxu0 0
  %1610 = vmatprep.subr.bf16.mxu0 0
  %1611 = vmatpush1.bf16.msra.mxu0 0
  %1612 = vmatprep.subr.bf16.mxu0 0
  %1613 = vmatpush1.bf16.msra.mxu0 0
  %1614 = vmatprep.mubr.bf16.mxu0 0
  %1615 = vmatmul.mubr.bf16.gmra.mrb[0].mxu0 %v1276
  %v1616 = vpop.f32.mrb[0].mxu0
  %v1617 = vadd.f32 0.0, %v1616
  %v1618 = vpop.f32.mrb[0].mxu0
  %v1619 = vadd.f32 0.0, %v1618
  %v1620 = vpop.f32.mrb[0].mxu0
  %v1621 = vpop.f32.mrb[0].mxu0
  %1622 = vdwg.mxu0
  %1623 = vmatprep.subr.bf16.mxu0 %v1105
  %1624 = vmatpush1.bf16.msra.mxu0 %v1104
  %1625 = vmatprep.subr.bf16.mxu0 %v1109
  %1626 = vmatpush1.bf16.msra.mxu0 %v1108
  %1627 = vmatprep.subr.bf16.mxu0 %v1113
  %1628 = vmatpush1.bf16.msra.mxu0 %v1112
  %1629 = vmatprep.subr.bf16.mxu0 %v1117
  %1630 = vmatpush1.bf16.msra.mxu0 %v1116
  %1631 = vmatprep.subr.bf16.mxu0 %v1121
  %1632 = vmatpush1.bf16.msra.mxu0 %v1120
  %1633 = vmatprep.subr.bf16.mxu0 %v1125
  %1634 = vmatpush1.bf16.msra.mxu0 %v1124
  %1635 = vmatprep.subr.bf16.mxu0 %v1129
  %1636 = vmatpush1.bf16.msra.mxu0 %v1128
  %1637 = vmatprep.subr.bf16.mxu0 %v1133
  %1638 = vmatpush1.bf16.msra.mxu0 %v1132
  %1639 = vmatprep.subr.bf16.mxu0 0
  %1640 = vmatpush1.bf16.msra.mxu0 0
  %1641 = vmatprep.subr.bf16.mxu0 0
  %1642 = vmatpush1.bf16.msra.mxu0 0
  %1643 = vmatprep.subr.bf16.mxu0 0
  %1644 = vmatpush1.bf16.msra.mxu0 0
  %1645 = vmatprep.subr.bf16.mxu0 0
  %1646 = vmatpush1.bf16.msra.mxu0 0
  %1647 = vmatprep.subr.bf16.mxu0 0
  %1648 = vmatpush1.bf16.msra.mxu0 0
  %1649 = vmatprep.subr.bf16.mxu0 0
  %1650 = vmatpush1.bf16.msra.mxu0 0
  %1651 = vmatprep.subr.bf16.mxu0 0
  %1652 = vmatpush1.bf16.msra.mxu0 0
  %1653 = vmatprep.subr.bf16.mxu0 0
  %1654 = vmatpush1.bf16.msra.mxu0 0
  %1655 = vmatprep.mubr.bf16.mxu0 0
  %1656 = vmatmul.mubr.bf16.gmra.mrb[0].mxu0 %v1276
  %v1657 = vpop.f32.mrb[0].mxu0
  %v1658 = vadd.f32 0.0, %v1657
  %v1659 = vpop.f32.mrb[0].mxu0
  %v1660 = vadd.f32 0.0, %v1659
  %v1661 = vpop.f32.mrb[0].mxu0
  %v1662 = vpop.f32.mrb[0].mxu0
  %1663 = vdwg.mxu0
  %v1664 = vadd.f32 %v1535, %v1617
  %v1665 = vadd.f32 %v1537, %v1619
  %v1666 = vadd.f32 %v1576, %v1658
  %v1667 = vadd.f32 %v1578, %v1660
  %v1668 = vxor.u32 %v1664, 2147483648
  %v1669 = vmul.f32 %v1668, 1.442695
  %v1670 = vpow.pop %v1669
  %v1671 = vadd.f32 %v1670, 1.0
  %v1672 = vrcp.pop %v1671
  %v1673 = vmul.f32 1.0, %v1672
  %v1674 = vxor.u32 %v1665, 2147483648
  %v1675 = vmul.f32 %v1674, 1.442695
  %v1676 = vpow.pop %v1675
  %v1677 = vadd.f32 %v1676, 1.0
  %v1678 = vrcp.pop %v1677
  %v1679 = vmul.f32 1.0, %v1678
  %v1680 = vtanh.pop %v1666
  %v1681 = vxor.u32 %v1667, 2147483648
  %v1682 = vmul.f32 %v1681, 1.442695
  %v1683 = vpow.pop %v1682
  %v1684 = vadd.f32 %v1683, 1.0
  %v1685 = vrcp.pop %v1684
  %v1686 = vmul.f32 1.0, %v1685
  %v1687 = vmul.f32 %v1679, %v1273
  %v1688 = vmul.f32 %v1673, %v1680
  %v1689 = vadd.f32 %v1687, %v1688
  %v1690 = vtanh.pop %v1689
  %v1691 = vmul.f32 %v1686, %v1690
  %v1692 = vpack.c.bf16 %v1691, %v1691
  %1693 = vmatprep.subr.bf16.mxu0 0
  %1694 = vmatpush1.bf16.msra.mxu0 %v1332
  %1695 = vmatprep.subr.bf16.mxu0 0
  %1696 = vmatpush1.bf16.msra.mxu0 %v1333
  %1697 = vmatprep.subr.bf16.mxu0 0
  %1698 = vmatpush1.bf16.msra.mxu0 %v1334
  %1699 = vmatprep.subr.bf16.mxu0 0
  %1700 = vmatpush1.bf16.msra.mxu0 %v1335
  %1701 = vmatprep.subr.bf16.mxu0 0
  %1702 = vmatpush1.bf16.msra.mxu0 %v1336
  %1703 = vmatprep.subr.bf16.mxu0 0
  %1704 = vmatpush1.bf16.msra.mxu0 %v1337
  %1705 = vmatprep.subr.bf16.mxu0 0
  %1706 = vmatpush1.bf16.msra.mxu0 %v1338
  %1707 = vmatprep.subr.bf16.mxu0 0
  %1708 = vmatpush1.bf16.msra.mxu0 %v1339
  %1709 = vmatprep.subr.bf16.mxu0 0
  %1710 = vmatpush1.bf16.msra.mxu0 0
  %1711 = vmatprep.subr.bf16.mxu0 0
  %1712 = vmatpush1.bf16.msra.mxu0 0
  %1713 = vmatprep.subr.bf16.mxu0 0
  %1714 = vmatpush1.bf16.msra.mxu0 0
  %1715 = vmatprep.subr.bf16.mxu0 0
  %1716 = vmatpush1.bf16.msra.mxu0 0
  %1717 = vmatprep.subr.bf16.mxu0 0
  %1718 = vmatpush1.bf16.msra.mxu0 0
  %1719 = vmatprep.subr.bf16.mxu0 0
  %1720 = vmatpush1.bf16.msra.mxu0 0
  %1721 = vmatprep.subr.bf16.mxu0 0
  %1722 = vmatpush1.bf16.msra.mxu0 0
  %1723 = vmatprep.subr.bf16.mxu0 0
  %1724 = vmatpush1.bf16.msra.mxu0 0
  %1725 = vmatprep.mubr.bf16.mxu0 0
  %1726 = vmatmul.mubr.bf16.gmra.mrb[0].mxu0 %v1692
  %v1727 = vpop.f32.mrb[0].mxu0
  %v1728 = vadd.f32 %v1298, %v1727
  %v1729 = vpop.f32.mrb[0].mxu0
  %v1730 = vpop.f32.mrb[0].mxu0
  %v1731 = vpop.f32.mrb[0].mxu0
  %1732 = vdwg.mxu0
  %v1733 = vtanh.pop %v1728
  %1734 = vmatprep.subr.bf16.mxu0 %v503
  %1735 = vmatpush1.bf16.msra.mxu0 %v502
  %1736 = vmatprep.subr.bf16.mxu0 %v507
  %1737 = vmatpush1.bf16.msra.mxu0 %v506
  %1738 = vmatprep.subr.bf16.mxu0 %v511
  %1739 = vmatpush1.bf16.msra.mxu0 %v510
  %1740 = vmatprep.subr.bf16.mxu0 %v515
  %1741 = vmatpush1.bf16.msra.mxu0 %v514
  %1742 = vmatprep.subr.bf16.mxu0 %v519
  %1743 = vmatpush1.bf16.msra.mxu0 %v518
  %1744 = vmatprep.subr.bf16.mxu0 %v523
  %1745 = vmatpush1.bf16.msra.mxu0 %v522
  %1746 = vmatprep.subr.bf16.mxu0 %v527
  %1747 = vmatpush1.bf16.msra.mxu0 %v526
  %1748 = vmatprep.subr.bf16.mxu0 %v531
  %1749 = vmatpush1.bf16.msra.mxu0 %v530
  %1750 = vmatprep.subr.bf16.mxu0 0
  %1751 = vmatpush1.bf16.msra.mxu0 0
  %1752 = vmatprep.subr.bf16.mxu0 0
  %1753 = vmatpush1.bf16.msra.mxu0 0
  %1754 = vmatprep.subr.bf16.mxu0 0
  %1755 = vmatpush1.bf16.msra.mxu0 0
  %1756 = vmatprep.subr.bf16.mxu0 0
  %1757 = vmatpush1.bf16.msra.mxu0 0
  %1758 = vmatprep.subr.bf16.mxu0 0
  %1759 = vmatpush1.bf16.msra.mxu0 0
  %1760 = vmatprep.subr.bf16.mxu0 0
  %1761 = vmatpush1.bf16.msra.mxu0 0
  %1762 = vmatprep.subr.bf16.mxu0 0
  %1763 = vmatpush1.bf16.msra.mxu0 0
  %1764 = vmatprep.subr.bf16.mxu0 0
  %1765 = vmatpush1.bf16.msra.mxu0 0
  %1766 = vmatprep.mubr.bf16.mxu0 0
  %1767 = vmatmul.mubr.bf16.gmra.mrb[0].mxu0 %v1499
  %v1768 = vpop.f32.mrb[0].mxu0
  %v1769 = vadd.f32 0.0, %v1768
  %v1770 = vpop.f32.mrb[0].mxu0
  %v1771 = vadd.f32 0.0, %v1770
  %v1772 = vpop.f32.mrb[0].mxu0
  %v1773 = vpop.f32.mrb[0].mxu0
  %1774 = vdwg.mxu0
  %1775 = vmatprep.subr.bf16.mxu0 %v505
  %1776 = vmatpush1.bf16.msra.mxu0 %v504
  %1777 = vmatprep.subr.bf16.mxu0 %v509
  %1778 = vmatpush1.bf16.msra.mxu0 %v508
  %1779 = vmatprep.subr.bf16.mxu0 %v513
  %1780 = vmatpush1.bf16.msra.mxu0 %v512
  %1781 = vmatprep.subr.bf16.mxu0 %v517
  %1782 = vmatpush1.bf16.msra.mxu0 %v516
  %1783 = vmatprep.subr.bf16.mxu0 %v521
  %1784 = vmatpush1.bf16.msra.mxu0 %v520
  %1785 = vmatprep.subr.bf16.mxu0 %v525
  %1786 = vmatpush1.bf16.msra.mxu0 %v524
  %1787 = vmatprep.subr.bf16.mxu0 %v529
  %1788 = vmatpush1.bf16.msra.mxu0 %v528
  %1789 = vmatprep.subr.bf16.mxu0 %v533
  %1790 = vmatpush1.bf16.msra.mxu0 %v532
  %1791 = vmatprep.subr.bf16.mxu0 0
  %1792 = vmatpush1.bf16.msra.mxu0 0
  %1793 = vmatprep.subr.bf16.mxu0 0
  %1794 = vmatpush1.bf16.msra.mxu0 0
  %1795 = vmatprep.subr.bf16.mxu0 0
  %1796 = vmatpush1.bf16.msra.mxu0 0
  %1797 = vmatprep.subr.bf16.mxu0 0
  %1798 = vmatpush1.bf16.msra.mxu0 0
  %1799 = vmatprep.subr.bf16.mxu0 0
  %1800 = vmatpush1.bf16.msra.mxu0 0
  %1801 = vmatprep.subr.bf16.mxu0 0
  %1802 = vmatpush1.bf16.msra.mxu0 0
  %1803 = vmatprep.subr.bf16.mxu0 0
  %1804 = vmatpush1.bf16.msra.mxu0 0
  %1805 = vmatprep.subr.bf16.mxu0 0
  %1806 = vmatpush1.bf16.msra.mxu0 0
  %1807 = vmatprep.mubr.bf16.mxu0 0
  %1808 = vmatmul.mubr.bf16.gmra.mrb[0].mxu0 %v1499
  %v1809 = vpop.f32.mrb[0].mxu0
  %v1810 = vadd.f32 0.0, %v1809
  %v1811 = vpop.f32.mrb[0].mxu0
  %v1812 = vadd.f32 0.0, %v1811
  %v1813 = vpop.f32.mrb[0].mxu0
  %v1814 = vpop.f32.mrb[0].mxu0
  %1815 = vdwg.mxu0
  %v1816 = vadd.f32 %v320, %v1769
  %v1817 = vadd.f32 %v322, %v1771
  %v1818 = vadd.f32 %v361, %v1810
  %v1819 = vadd.f32 %v363, %v1812
  %v1820 = vxor.u32 %v1816, 2147483648
  %v1821 = vmul.f32 %v1820, 1.442695
  %v1822 = vpow.pop %v1821
  %v1823 = vadd.f32 %v1822, 1.0
  %v1824 = vrcp.pop %v1823
  %v1825 = vmul.f32 1.0, %v1824
  %v1826 = vxor.u32 %v1817, 2147483648
  %v1827 = vmul.f32 %v1826, 1.442695
  %v1828 = vpow.pop %v1827
  %v1829 = vadd.f32 %v1828, 1.0
  %v1830 = vrcp.pop %v1829
  %v1831 = vmul.f32 1.0, %v1830
  %v1832 = vtanh.pop %v1818
  %v1833 = vxor.u32 %v1819, 2147483648
  %v1834 = vmul.f32 %v1833, 1.442695
  %v1835 = vpow.pop %v1834
  %v1836 = vadd.f32 %v1835, 1.0
  %v1837 = vrcp.pop %v1836
  %v1838 = vmul.f32 1.0, %v1837
  %v1839 = vmul.f32 %v1831, %v1496
  %v1840 = vmul.f32 %v1825, %v1832
  %v1841 = vadd.f32 %v1839, %v1840
  %v1842 = vtanh.pop %v1841
  %v1843 = vmul.f32 %v1838, %v1842
  %v1844 = vpack.c.bf16 %v1843, %v1843
  %1845 = vmatprep.subr.bf16.mxu0 %v828
  %1846 = vmatpush1.bf16.msra.mxu0 %v827
  %1847 = vmatprep.subr.bf16.mxu0 %v832
  %1848 = vmatpush1.bf16.msra.mxu0 %v831
  %1849 = vmatprep.subr.bf16.mxu0 %v836
  %1850 = vmatpush1.bf16.msra.mxu0 %v835
  %1851 = vmatprep.subr.bf16.mxu0 %v840
  %1852 = vmatpush1.bf16.msra.mxu0 %v839
  %1853 = vmatprep.subr.bf16.mxu0 %v844
  %1854 = vmatpush1.bf16.msra.mxu0 %v843
  %1855 = vmatprep.subr.bf16.mxu0 %v848
  %1856 = vmatpush1.bf16.msra.mxu0 %v847
  %1857 = vmatprep.subr.bf16.mxu0 %v852
  %1858 = vmatpush1.bf16.msra.mxu0 %v851
  %1859 = vmatprep.subr.bf16.mxu0 %v856
  %1860 = vmatpush1.bf16.msra.mxu0 %v855
  %1861 = vmatprep.subr.bf16.mxu0 0
  %1862 = vmatpush1.bf16.msra.mxu0 0
  %1863 = vmatprep.subr.bf16.mxu0 0
  %1864 = vmatpush1.bf16.msra.mxu0 0
  %1865 = vmatprep.subr.bf16.mxu0 0
  %1866 = vmatpush1.bf16.msra.mxu0 0
  %1867 = vmatprep.subr.bf16.mxu0 0
  %1868 = vmatpush1.bf16.msra.mxu0 0
  %1869 = vmatprep.subr.bf16.mxu0 0
  %1870 = vmatpush1.bf16.msra.mxu0 0
  %1871 = vmatprep.subr.bf16.mxu0 0
  %1872 = vmatpush1.bf16.msra.mxu0 0
  %1873 = vmatprep.subr.bf16.mxu0 0
  %1874 = vmatpush1.bf16.msra.mxu0 0
  %1875 = vmatprep.subr.bf16.mxu0 0
  %1876 = vmatpush1.bf16.msra.mxu0 0
  %1877 = vmatprep.mubr.bf16.mxu0 0
  %1878 = vmatmul.mubr.bf16.gmra.mrb[0].mxu0 %v1844
  %v1879 = vpop.f32.mrb[0].mxu0
  %v1880 = vadd.f32 %v714, %v1879
  %v1881 = vpop.f32.mrb[0].mxu0
  %v1882 = vadd.f32 %v718, %v1881
  %v1883 = vpop.f32.mrb[0].mxu0
  %v1884 = vpop.f32.mrb[0].mxu0
  %1885 = vdwg.mxu0
  %1886 = vmatprep.subr.bf16.mxu0 %v830
  %1887 = vmatpush1.bf16.msra.mxu0 %v829
  %1888 = vmatprep.subr.bf16.mxu0 %v834
  %1889 = vmatpush1.bf16.msra.mxu0 %v833
  %1890 = vmatprep.subr.bf16.mxu0 %v838
  %1891 = vmatpush1.bf16.msra.mxu0 %v837
  %1892 = vmatprep.subr.bf16.mxu0 %v842
  %1893 = vmatpush1.bf16.msra.mxu0 %v841
  %1894 = vmatprep.subr.bf16.mxu0 %v846
  %1895 = vmatpush1.bf16.msra.mxu0 %v845
  %1896 = vmatprep.subr.bf16.mxu0 %v850
  %1897 = vmatpush1.bf16.msra.mxu0 %v849
  %1898 = vmatprep.subr.bf16.mxu0 %v854
  %1899 = vmatpush1.bf16.msra.mxu0 %v853
  %1900 = vmatprep.subr.bf16.mxu0 %v858
  %1901 = vmatpush1.bf16.msra.mxu0 %v857
  %1902 = vmatprep.subr.bf16.mxu0 0
  %1903 = vmatpush1.bf16.msra.mxu0 0
  %1904 = vmatprep.subr.bf16.mxu0 0
  %1905 = vmatpush1.bf16.msra.mxu0 0
  %1906 = vmatprep.subr.bf16.mxu0 0
  %1907 = vmatpush1.bf16.msra.mxu0 0
  %1908 = vmatprep.subr.bf16.mxu0 0
  %1909 = vmatpush1.bf16.msra.mxu0 0
  %1910 = vmatprep.subr.bf16.mxu0 0
  %1911 = vmatpush1.bf16.msra.mxu0 0
  %1912 = vmatprep.subr.bf16.mxu0 0
  %1913 = vmatpush1.bf16.msra.mxu0 0
  %1914 = vmatprep.subr.bf16.mxu0 0
  %1915 = vmatpush1.bf16.msra.mxu0 0
  %1916 = vmatprep.subr.bf16.mxu0 0
  %1917 = vmatpush1.bf16.msra.mxu0 0
  %1918 = vmatprep.mubr.bf16.mxu0 0
  %1919 = vmatmul.mubr.bf16.gmra.mrb[0].mxu0 %v1844
  %v1920 = vpop.f32.mrb[0].mxu0
  %v1921 = vadd.f32 %v722, %v1920
  %v1922 = vpop.f32.mrb[0].mxu0
  %v1923 = vadd.f32 %v726, %v1922
  %v1924 = vpop.f32.mrb[0].mxu0
  %v1925 = vpop.f32.mrb[0].mxu0
  %1926 = vdwg.mxu0
  %1927 = vmatprep.subr.bf16.mxu0 %v1103
  %1928 = vmatpush1.bf16.msra.mxu0 %v1102
  %1929 = vmatprep.subr.bf16.mxu0 %v1107
  %1930 = vmatpush1.bf16.msra.mxu0 %v1106
  %1931 = vmatprep.subr.bf16.mxu0 %v1111
  %1932 = vmatpush1.bf16.msra.mxu0 %v1110
  %1933 = vmatprep.subr.bf16.mxu0 %v1115
  %1934 = vmatpush1.bf16.msra.mxu0 %v1114
  %1935 = vmatprep.subr.bf16.mxu0 %v1119
  %1936 = vmatpush1.bf16.msra.mxu0 %v1118
  %1937 = vmatprep.subr.bf16.mxu0 %v1123
  %1938 = vmatpush1.bf16.msra.mxu0 %v1122
  %1939 = vmatprep.subr.bf16.mxu0 %v1127
  %1940 = vmatpush1.bf16.msra.mxu0 %v1126
  %1941 = vmatprep.subr.bf16.mxu0 %v1131
  %1942 = vmatpush1.bf16.msra.mxu0 %v1130
  %1943 = vmatprep.subr.bf16.mxu0 0
  %1944 = vmatpush1.bf16.msra.mxu0 0
  %1945 = vmatprep.subr.bf16.mxu0 0
  %1946 = vmatpush1.bf16.msra.mxu0 0
  %1947 = vmatprep.subr.bf16.mxu0 0
  %1948 = vmatpush1.bf16.msra.mxu0 0
  %1949 = vmatprep.subr.bf16.mxu0 0
  %1950 = vmatpush1.bf16.msra.mxu0 0
  %1951 = vmatprep.subr.bf16.mxu0 0
  %1952 = vmatpush1.bf16.msra.mxu0 0
  %1953 = vmatprep.subr.bf16.mxu0 0
  %1954 = vmatpush1.bf16.msra.mxu0 0
  %1955 = vmatprep.subr.bf16.mxu0 0
  %1956 = vmatpush1.bf16.msra.mxu0 0
  %1957 = vmatprep.subr.bf16.mxu0 0
  %1958 = vmatpush1.bf16.msra.mxu0 0
  %1959 = vmatprep.mubr.bf16.mxu0 0
  %1960 = vmatmul.mubr.bf16.gmra.mrb[0].mxu0 %v1692
  %v1961 = vpop.f32.mrb[0].mxu0
  %v1962 = vadd.f32 0.0, %v1961
  %v1963 = vpop.f32.mrb[0].mxu0
  %v1964 = vadd.f32 0.0, %v1963
  %v1965 = vpop.f32.mrb[0].mxu0
  %v1966 = vpop.f32.mrb[0].mxu0
  %1967 = vdwg.mxu0
  %1968 = vmatprep.subr.bf16.mxu0 %v1105
  %1969 = vmatpush1.bf16.msra.mxu0 %v1104
  %1970 = vmatprep.subr.bf16.mxu0 %v1109
  %1971 = vmatpush1.bf16.msra.mxu0 %v1108
  %1972 = vmatprep.subr.bf16.mxu0 %v1113
  %1973 = vmatpush1.bf16.msra.mxu0 %v1112
  %1974 = vmatprep.subr.bf16.mxu0 %v1117
  %1975 = vmatpush1.bf16.msra.mxu0 %v1116
  %1976 = vmatprep.subr.bf16.mxu0 %v1121
  %1977 = vmatpush1.bf16.msra.mxu0 %v1120
  %1978 = vmatprep.subr.bf16.mxu0 %v1125
  %1979 = vmatpush1.bf16.msra.mxu0 %v1124
  %1980 = vmatprep.subr.bf16.mxu0 %v1129
  %1981 = vmatpush1.bf16.msra.mxu0 %v1128
  %1982 = vmatprep.subr.bf16.mxu0 %v1133
  %1983 = vmatpush1.bf16.msra.mxu0 %v1132
  %1984 = vmatprep.subr.bf16.mxu0 0
  %1985 = vmatpush1.bf16.msra.mxu0 0
  %1986 = vmatprep.subr.bf16.mxu0 0
  %1987 = vmatpush1.bf16.msra.mxu0 0
  %1988 = vmatprep.subr.bf16.mxu0 0
  %1989 = vmatpush1.bf16.msra.mxu0 0
  %1990 = vmatprep.subr.bf16.mxu0 0
  %1991 = vmatpush1.bf16.msra.mxu0 0
  %1992 = vmatprep.subr.bf16.mxu0 0
  %1993 = vmatpush1.bf16.msra.mxu0 0
  %1994 = vmatprep.subr.bf16.mxu0 0
  %1995 = vmatpush1.bf16.msra.mxu0 0
  %1996 = vmatprep.subr.bf16.mxu0 0
  %1997 = vmatpush1.bf16.msra.mxu0 0
  %1998 = vmatprep.subr.bf16.mxu0 0
  %1999 = vmatpush1.bf16.msra.mxu0 0
  %2000 = vmatprep.mubr.bf16.mxu0 0
  %2001 = vmatmul.mubr.bf16.gmra.mrb[0].mxu0 %v1692
  %v2002 = vpop.f32.mrb[0].mxu0
  %v2003 = vadd.f32 0.0, %v2002
  %v2004 = vpop.f32.mrb[0].mxu0
  %v2005 = vadd.f32 0.0, %v2004
  %v2006 = vpop.f32.mrb[0].mxu0
  %v2007 = vpop.f32.mrb[0].mxu0
  %2008 = vdwg.mxu0
  %v2009 = vadd.f32 %v1880, %v1962
  %v2010 = vadd.f32 %v1882, %v1964
  %v2011 = vadd.f32 %v1921, %v2003
  %v2012 = vadd.f32 %v1923, %v2005
  %v2013 = vxor.u32 %v2009, 2147483648
  %v2014 = vmul.f32 %v2013, 1.442695
  %v2015 = vpow.pop %v2014
  %v2016 = vadd.f32 %v2015, 1.0
  %v2017 = vrcp.pop %v2016
  %v2018 = vmul.f32 1.0, %v2017
  %v2019 = vxor.u32 %v2010, 2147483648
  %v2020 = vmul.f32 %v2019, 1.442695
  %v2021 = vpow.pop %v2020
  %v2022 = vadd.f32 %v2021, 1.0
  %v2023 = vrcp.pop %v2022
  %v2024 = vmul.f32 1.0, %v2023
  %v2025 = vtanh.pop %v2011
  %v2026 = vxor.u32 %v2012, 2147483648
  %v2027 = vmul.f32 %v2026, 1.442695
  %v2028 = vpow.pop %v2027
  %v2029 = vadd.f32 %v2028, 1.0
  %v2030 = vrcp.pop %v2029
  %v2031 = vmul.f32 1.0, %v2030
  %v2032 = vmul.f32 %v2024, %v1689
  %v2033 = vmul.f32 %v2018, %v2025
  %v2034 = vadd.f32 %v2032, %v2033
  %v2035 = vtanh.pop %v2034
  %v2036 = vmul.f32 %v2031, %v2035
  %v2037 = vpack.c.bf16 %v2036, %v2036
  %2038 = vmatprep.subr.bf16.mxu0 0
  %2039 = vmatpush1.bf16.msra.mxu0 %v1332
  %2040 = vmatprep.subr.bf16.mxu0 0
  %2041 = vmatpush1.bf16.msra.mxu0 %v1333
  %2042 = vmatprep.subr.bf16.mxu0 0
  %2043 = vmatpush1.bf16.msra.mxu0 %v1334
  %2044 = vmatprep.subr.bf16.mxu0 0
  %2045 = vmatpush1.bf16.msra.mxu0 %v1335
  %2046 = vmatprep.subr.bf16.mxu0 0
  %2047 = vmatpush1.bf16.msra.mxu0 %v1336
  %2048 = vmatprep.subr.bf16.mxu0 0
  %2049 = vmatpush1.bf16.msra.mxu0 %v1337
  %2050 = vmatprep.subr.bf16.mxu0 0
  %2051 = vmatpush1.bf16.msra.mxu0 %v1338
  %2052 = vmatprep.subr.bf16.mxu0 0
  %2053 = vmatpush1.bf16.msra.mxu0 %v1339
  %2054 = vmatprep.subr.bf16.mxu0 0
  %2055 = vmatpush1.bf16.msra.mxu0 0
  %2056 = vmatprep.subr.bf16.mxu0 0
  %2057 = vmatpush1.bf16.msra.mxu0 0
  %2058 = vmatprep.subr.bf16.mxu0 0
  %2059 = vmatpush1.bf16.msra.mxu0 0
  %2060 = vmatprep.subr.bf16.mxu0 0
  %2061 = vmatpush1.bf16.msra.mxu0 0
  %2062 = vmatprep.subr.bf16.mxu0 0
  %2063 = vmatpush1.bf16.msra.mxu0 0
  %2064 = vmatprep.subr.bf16.mxu0 0
  %2065 = vmatpush1.bf16.msra.mxu0 0
  %2066 = vmatprep.subr.bf16.mxu0 0
  %2067 = vmatpush1.bf16.msra.mxu0 0
  %2068 = vmatprep.subr.bf16.mxu0 0
  %2069 = vmatpush1.bf16.msra.mxu0 0
  %2070 = vmatprep.mubr.bf16.mxu0 0
  %2071 = vmatmul.mubr.bf16.gmra.mrb[0].mxu0 %v2037
  %v2072 = vpop.f32.mrb[0].mxu0
  %v2073 = vadd.f32 %v1298, %v2072
  %v2074 = vpop.f32.mrb[0].mxu0
  %v2075 = vpop.f32.mrb[0].mxu0
  %v2076 = vpop.f32.mrb[0].mxu0
  %2077 = vdwg.mxu0
  %v2078 = vtanh.pop %v2073
  %2079 = vmatprep.subr.bf16.mxu0 %v503
  %2080 = vmatpush1.bf16.msra.mxu0 %v502
  %2081 = vmatprep.subr.bf16.mxu0 %v507
  %2082 = vmatpush1.bf16.msra.mxu0 %v506
  %2083 = vmatprep.subr.bf16.mxu0 %v511
  %2084 = vmatpush1.bf16.msra.mxu0 %v510
  %2085 = vmatprep.subr.bf16.mxu0 %v515
  %2086 = vmatpush1.bf16.msra.mxu0 %v514
  %2087 = vmatprep.subr.bf16.mxu0 %v519
  %2088 = vmatpush1.bf16.msra.mxu0 %v518
  %2089 = vmatprep.subr.bf16.mxu0 %v523
  %2090 = vmatpush1.bf16.msra.mxu0 %v522
  %2091 = vmatprep.subr.bf16.mxu0 %v527
  %2092 = vmatpush1.bf16.msra.mxu0 %v526
  %2093 = vmatprep.subr.bf16.mxu0 %v531
  %2094 = vmatpush1.bf16.msra.mxu0 %v530
  %2095 = vmatprep.subr.bf16.mxu0 0
  %2096 = vmatpush1.bf16.msra.mxu0 0
  %2097 = vmatprep.subr.bf16.mxu0 0
  %2098 = vmatpush1.bf16.msra.mxu0 0
  %2099 = vmatprep.subr.bf16.mxu0 0
  %2100 = vmatpush1.bf16.msra.mxu0 0
  %2101 = vmatprep.subr.bf16.mxu0 0
  %2102 = vmatpush1.bf16.msra.mxu0 0
  %2103 = vmatprep.subr.bf16.mxu0 0
  %2104 = vmatpush1.bf16.msra.mxu0 0
  %2105 = vmatprep.subr.bf16.mxu0 0
  %2106 = vmatpush1.bf16.msra.mxu0 0
  %2107 = vmatprep.subr.bf16.mxu0 0
  %2108 = vmatpush1.bf16.msra.mxu0 0
  %2109 = vmatprep.subr.bf16.mxu0 0
  %2110 = vmatpush1.bf16.msra.mxu0 0
  %2111 = vmatprep.mubr.bf16.mxu0 0
  %2112 = vmatmul.mubr.bf16.gmra.mrb[0].mxu0 %v1844
  %v2113 = vpop.f32.mrb[0].mxu0
  %v2114 = vadd.f32 0.0, %v2113
  %v2115 = vpop.f32.mrb[0].mxu0
  %v2116 = vadd.f32 0.0, %v2115
  %v2117 = vpop.f32.mrb[0].mxu0
  %v2118 = vpop.f32.mrb[0].mxu0
  %2119 = vdwg.mxu0
  %2120 = vmatprep.subr.bf16.mxu0 %v505
  %2121 = vmatpush1.bf16.msra.mxu0 %v504
  %2122 = vmatprep.subr.bf16.mxu0 %v509
  %2123 = vmatpush1.bf16.msra.mxu0 %v508
  %2124 = vmatprep.subr.bf16.mxu0 %v513
  %2125 = vmatpush1.bf16.msra.mxu0 %v512
  %2126 = vmatprep.subr.bf16.mxu0 %v517
  %2127 = vmatpush1.bf16.msra.mxu0 %v516
  %2128 = vmatprep.subr.bf16.mxu0 %v521
  %2129 = vmatpush1.bf16.msra.mxu0 %v520
  %2130 = vmatprep.subr.bf16.mxu0 %v525
  %2131 = vmatpush1.bf16.msra.mxu0 %v524
  %2132 = vmatprep.subr.bf16.mxu0 %v529
  %2133 = vmatpush1.bf16.msra.mxu0 %v528
  %2134 = vmatprep.subr.bf16.mxu0 %v533
  %2135 = vmatpush1.bf16.msra.mxu0 %v532
  %2136 = vmatprep.subr.bf16.mxu0 0
  %2137 = vmatpush1.bf16.msra.mxu0 0
  %2138 = vmatprep.subr.bf16.mxu0 0
  %2139 = vmatpush1.bf16.msra.mxu0 0
  %2140 = vmatprep.subr.bf16.mxu0 0
  %2141 = vmatpush1.bf16.msra.mxu0 0
  %2142 = vmatprep.subr.bf16.mxu0 0
  %2143 = vmatpush1.bf16.msra.mxu0 0
  %2144 = vmatprep.subr.bf16.mxu0 0
  %2145 = vmatpush1.bf16.msra.mxu0 0
  %2146 = vmatprep.subr.bf16.mxu0 0
  %2147 = vmatpush1.bf16.msra.mxu0 0
  %2148 = vmatprep.subr.bf16.mxu0 0
  %2149 = vmatpush1.bf16.msra.mxu0 0
  %2150 = vmatprep.subr.bf16.mxu0 0
  %2151 = vmatpush1.bf16.msra.mxu0 0
  %2152 = vmatprep.mubr.bf16.mxu0 0
  %2153 = vmatmul.mubr.bf16.gmra.mrb[0].mxu0 %v1844
  %v2154 = vpop.f32.mrb[0].mxu0
  %v2155 = vadd.f32 0.0, %v2154
  %v2156 = vpop.f32.mrb[0].mxu0
  %v2157 = vadd.f32 0.0, %v2156
  %v2158 = vpop.f32.mrb[0].mxu0
  %v2159 = vpop.f32.mrb[0].mxu0
  %2160 = vdwg.mxu0
  %v2161 = vadd.f32 %v320, %v2114
  %v2162 = vadd.f32 %v322, %v2116
  %v2163 = vadd.f32 %v361, %v2155
  %v2164 = vadd.f32 %v363, %v2157
  %v2165 = vxor.u32 %v2161, 2147483648
  %v2166 = vmul.f32 %v2165, 1.442695
  %v2167 = vpow.pop %v2166
  %v2168 = vadd.f32 %v2167, 1.0
  %v2169 = vrcp.pop %v2168
  %v2170 = vmul.f32 1.0, %v2169
  %v2171 = vxor.u32 %v2162, 2147483648
  %v2172 = vmul.f32 %v2171, 1.442695
  %v2173 = vpow.pop %v2172
  %v2174 = vadd.f32 %v2173, 1.0
  %v2175 = vrcp.pop %v2174
  %v2176 = vmul.f32 1.0, %v2175
  %v2177 = vtanh.pop %v2163
  %v2178 = vxor.u32 %v2164, 2147483648
  %v2179 = vmul.f32 %v2178, 1.442695
  %v2180 = vpow.pop %v2179
  %v2181 = vadd.f32 %v2180, 1.0
  %v2182 = vrcp.pop %v2181
  %v2183 = vmul.f32 1.0, %v2182
  %v2184 = vmul.f32 %v2176, %v1841
  %v2185 = vmul.f32 %v2170, %v2177
  %v2186 = vadd.f32 %v2184, %v2185
  %v2187 = vtanh.pop %v2186
  %v2188 = vmul.f32 %v2183, %v2187
  %v2189 = vpack.c.bf16 %v2188, %v2188
  %2190 = vmatprep.subr.bf16.mxu0 %v828
  %2191 = vmatpush1.bf16.msra.mxu0 %v827
  %2192 = vmatprep.subr.bf16.mxu0 %v832
  %2193 = vmatpush1.bf16.msra.mxu0 %v831
  %2194 = vmatprep.subr.bf16.mxu0 %v836
  %2195 = vmatpush1.bf16.msra.mxu0 %v835
  %2196 = vmatprep.subr.bf16.mxu0 %v840
  %2197 = vmatpush1.bf16.msra.mxu0 %v839
  %2198 = vmatprep.subr.bf16.mxu0 %v844
  %2199 = vmatpush1.bf16.msra.mxu0 %v843
  %2200 = vmatprep.subr.bf16.mxu0 %v848
  %2201 = vmatpush1.bf16.msra.mxu0 %v847
  %2202 = vmatprep.subr.bf16.mxu0 %v852
  %2203 = vmatpush1.bf16.msra.mxu0 %v851
  %2204 = vmatprep.subr.bf16.mxu0 %v856
  %2205 = vmatpush1.bf16.msra.mxu0 %v855
  %2206 = vmatprep.subr.bf16.mxu0 0
  %2207 = vmatpush1.bf16.msra.mxu0 0
  %2208 = vmatprep.subr.bf16.mxu0 0
  %2209 = vmatpush1.bf16.msra.mxu0 0
  %2210 = vmatprep.subr.bf16.mxu0 0
  %2211 = vmatpush1.bf16.msra.mxu0 0
  %2212 = vmatprep.subr.bf16.mxu0 0
  %2213 = vmatpush1.bf16.msra.mxu0 0
  %2214 = vmatprep.subr.bf16.mxu0 0
  %2215 = vmatpush1.bf16.msra.mxu0 0
  %2216 = vmatprep.subr.bf16.mxu0 0
  %2217 = vmatpush1.bf16.msra.mxu0 0
  %2218 = vmatprep.subr.bf16.mxu0 0
  %2219 = vmatpush1.bf16.msra.mxu0 0
  %2220 = vmatprep.subr.bf16.mxu0 0
  %2221 = vmatpush1.bf16.msra.mxu0 0
  %2222 = vmatprep.mubr.bf16.mxu0 0
  %2223 = vmatmul.mubr.bf16.gmra.mrb[0].mxu0 %v2189
  %v2224 = vpop.f32.mrb[0].mxu0
  %v2225 = vadd.f32 %v714, %v2224
  %v2226 = vpop.f32.mrb[0].mxu0
  %v2227 = vadd.f32 %v718, %v2226
  %v2228 = vpop.f32.mrb[0].mxu0
  %v2229 = vpop.f32.mrb[0].mxu0
  %2230 = vdwg.mxu0
  %2231 = vmatprep.subr.bf16.mxu0 %v830
  %2232 = vmatpush1.bf16.msra.mxu0 %v829
  %2233 = vmatprep.subr.bf16.mxu0 %v834
  %2234 = vmatpush1.bf16.msra.mxu0 %v833
  %2235 = vmatprep.subr.bf16.mxu0 %v838
  %2236 = vmatpush1.bf16.msra.mxu0 %v837
  %2237 = vmatprep.subr.bf16.mxu0 %v842
  %2238 = vmatpush1.bf16.msra.mxu0 %v841
  %2239 = vmatprep.subr.bf16.mxu0 %v846
  %2240 = vmatpush1.bf16.msra.mxu0 %v845
  %2241 = vmatprep.subr.bf16.mxu0 %v850
  %2242 = vmatpush1.bf16.msra.mxu0 %v849
  %2243 = vmatprep.subr.bf16.mxu0 %v854
  %2244 = vmatpush1.bf16.msra.mxu0 %v853
  %2245 = vmatprep.subr.bf16.mxu0 %v858
  %2246 = vmatpush1.bf16.msra.mxu0 %v857
  %2247 = vmatprep.subr.bf16.mxu0 0
  %2248 = vmatpush1.bf16.msra.mxu0 0
  %2249 = vmatprep.subr.bf16.mxu0 0
  %2250 = vmatpush1.bf16.msra.mxu0 0
  %2251 = vmatprep.subr.bf16.mxu0 0
  %2252 = vmatpush1.bf16.msra.mxu0 0
  %2253 = vmatprep.subr.bf16.mxu0 0
  %2254 = vmatpush1.bf16.msra.mxu0 0
  %2255 = vmatprep.subr.bf16.mxu0 0
  %2256 = vmatpush1.bf16.msra.mxu0 0
  %2257 = vmatprep.subr.bf16.mxu0 0
  %2258 = vmatpush1.bf16.msra.mxu0 0
  %2259 = vmatprep.subr.bf16.mxu0 0
  %2260 = vmatpush1.bf16.msra.mxu0 0
  %2261 = vmatprep.subr.bf16.mxu0 0
  %2262 = vmatpush1.bf16.msra.mxu0 0
  %2263 = vmatprep.mubr.bf16.mxu0 0
  %2264 = vmatmul.mubr.bf16.gmra.mrb[0].mxu0 %v2189
  %v2265 = vpop.f32.mrb[0].mxu0
  %v2266 = vadd.f32 %v722, %v2265
  %v2267 = vpop.f32.mrb[0].mxu0
  %v2268 = vadd.f32 %v726, %v2267
  %v2269 = vpop.f32.mrb[0].mxu0
  %v2270 = vpop.f32.mrb[0].mxu0
  %2271 = vdwg.mxu0
  %2272 = vmatprep.subr.bf16.mxu0 %v1103
  %2273 = vmatpush1.bf16.msra.mxu0 %v1102
  %2274 = vmatprep.subr.bf16.mxu0 %v1107
  %2275 = vmatpush1.bf16.msra.mxu0 %v1106
  %2276 = vmatprep.subr.bf16.mxu0 %v1111
  %2277 = vmatpush1.bf16.msra.mxu0 %v1110
  %2278 = vmatprep.subr.bf16.mxu0 %v1115
  %2279 = vmatpush1.bf16.msra.mxu0 %v1114
  %2280 = vmatprep.subr.bf16.mxu0 %v1119
  %2281 = vmatpush1.bf16.msra.mxu0 %v1118
  %2282 = vmatprep.subr.bf16.mxu0 %v1123
  %2283 = vmatpush1.bf16.msra.mxu0 %v1122
  %2284 = vmatprep.subr.bf16.mxu0 %v1127
  %2285 = vmatpush1.bf16.msra.mxu0 %v1126
  %2286 = vmatprep.subr.bf16.mxu0 %v1131
  %2287 = vmatpush1.bf16.msra.mxu0 %v1130
  %2288 = vmatprep.subr.bf16.mxu0 0
  %2289 = vmatpush1.bf16.msra.mxu0 0
  %2290 = vmatprep.subr.bf16.mxu0 0
  %2291 = vmatpush1.bf16.msra.mxu0 0
  %2292 = vmatprep.subr.bf16.mxu0 0
  %2293 = vmatpush1.bf16.msra.mxu0 0
  %2294 = vmatprep.subr.bf16.mxu0 0
  %2295 = vmatpush1.bf16.msra.mxu0 0
  %2296 = vmatprep.subr.bf16.mxu0 0
  %2297 = vmatpush1.bf16.msra.mxu0 0
  %2298 = vmatprep.subr.bf16.mxu0 0
  %2299 = vmatpush1.bf16.msra.mxu0 0
  %2300 = vmatprep.subr.bf16.mxu0 0
  %2301 = vmatpush1.bf16.msra.mxu0 0
  %2302 = vmatprep.subr.bf16.mxu0 0
  %2303 = vmatpush1.bf16.msra.mxu0 0
  %2304 = vmatprep.mubr.bf16.mxu0 0
  %2305 = vmatmul.mubr.bf16.gmra.mrb[0].mxu0 %v2037
  %v2306 = vpop.f32.mrb[0].mxu0
  %v2307 = vadd.f32 0.0, %v2306
  %v2308 = vpop.f32.mrb[0].mxu0
  %v2309 = vadd.f32 0.0, %v2308
  %v2310 = vpop.f32.mrb[0].mxu0
  %v2311 = vpop.f32.mrb[0].mxu0
  %2312 = vdwg.mxu0
  %2313 = vmatprep.subr.bf16.mxu0 %v1105
  %2314 = vmatpush1.bf16.msra.mxu0 %v1104
  %2315 = vmatprep.subr.bf16.mxu0 %v1109
  %2316 = vmatpush1.bf16.msra.mxu0 %v1108
  %2317 = vmatprep.subr.bf16.mxu0 %v1113
  %2318 = vmatpush1.bf16.msra.mxu0 %v1112
  %2319 = vmatprep.subr.bf16.mxu0 %v1117
  %2320 = vmatpush1.bf16.msra.mxu0 %v1116
  %2321 = vmatprep.subr.bf16.mxu0 %v1121
  %2322 = vmatpush1.bf16.msra.mxu0 %v1120
  %2323 = vmatprep.subr.bf16.mxu0 %v1125
  %2324 = vmatpush1.bf16.msra.mxu0 %v1124
  %2325 = vmatprep.subr.bf16.mxu0 %v1129
  %2326 = vmatpush1.bf16.msra.mxu0 %v1128
  %2327 = vmatprep.subr.bf16.mxu0 %v1133
  %2328 = vmatpush1.bf16.msra.mxu0 %v1132
  %2329 = vmatprep.subr.bf16.mxu0 0
  %2330 = vmatpush1.bf16.msra.mxu0 0
  %2331 = vmatprep.subr.bf16.mxu0 0
  %2332 = vmatpush1.bf16.msra.mxu0 0
  %2333 = vmatprep.subr.bf16.mxu0 0
  %2334 = vmatpush1.bf16.msra.mxu0 0
  %2335 = vmatprep.subr.bf16.mxu0 0
  %2336 = vmatpush1.bf16.msra.mxu0 0
  %2337 = vmatprep.subr.bf16.mxu0 0
  %2338 = vmatpush1.bf16.msra.mxu0 0
  %2339 = vmatprep.subr.bf16.mxu0 0
  %2340 = vmatpush1.bf16.msra.mxu0 0
  %2341 = vmatprep.subr.bf16.mxu0 0
  %2342 = vmatpush1.bf16.msra.mxu0 0
  %2343 = vmatprep.subr.bf16.mxu0 0
  %2344 = vmatpush1.bf16.msra.mxu0 0
  %2345 = vmatprep.mubr.bf16.mxu0 0
  %2346 = vmatmul.mubr.bf16.gmra.mrb[0].mxu0 %v2037
  %v2347 = vpop.f32.mrb[0].mxu0
  %v2348 = vadd.f32 0.0, %v2347
  %v2349 = vpop.f32.mrb[0].mxu0
  %v2350 = vadd.f32 0.0, %v2349
  %v2351 = vpop.f32.mrb[0].mxu0
  %v2352 = vpop.f32.mrb[0].mxu0
  %2353 = vdwg.mxu0
  %v2354 = vadd.f32 %v2225, %v2307
  %v2355 = vadd.f32 %v2227, %v2309
  %v2356 = vadd.f32 %v2266, %v2348
  %v2357 = vadd.f32 %v2268, %v2350
  %v2358 = vxor.u32 %v2354, 2147483648
  %v2359 = vmul.f32 %v2358, 1.442695
  %v2360 = vpow.pop %v2359
  %v2361 = vadd.f32 %v2360, 1.0
  %v2362 = vrcp.pop %v2361
  %v2363 = vmul.f32 1.0, %v2362
  %v2364 = vxor.u32 %v2355, 2147483648
  %v2365 = vmul.f32 %v2364, 1.442695
  %v2366 = vpow.pop %v2365
  %v2367 = vadd.f32 %v2366, 1.0
  %v2368 = vrcp.pop %v2367
  %v2369 = vmul.f32 1.0, %v2368
  %v2370 = vtanh.pop %v2356
  %v2371 = vxor.u32 %v2357, 2147483648
  %v2372 = vmul.f32 %v2371, 1.442695
  %v2373 = vpow.pop %v2372
  %v2374 = vadd.f32 %v2373, 1.0
  %v2375 = vrcp.pop %v2374
  %v2376 = vmul.f32 1.0, %v2375
  %v2377 = vmul.f32 %v2369, %v2034
  %v2378 = vmul.f32 %v2363, %v2370
  %v2379 = vadd.f32 %v2377, %v2378
  %v2380 = vtanh.pop %v2379
  %v2381 = vmul.f32 %v2376, %v2380
  %v2382 = vpack.c.bf16 %v2381, %v2381
  %2383 = vmatprep.subr.bf16.mxu0 0
  %2384 = vmatpush1.bf16.msra.mxu0 %v1332
  %2385 = vmatprep.subr.bf16.mxu0 0
  %2386 = vmatpush1.bf16.msra.mxu0 %v1333
  %2387 = vmatprep.subr.bf16.mxu0 0
  %2388 = vmatpush1.bf16.msra.mxu0 %v1334
  %2389 = vmatprep.subr.bf16.mxu0 0
  %2390 = vmatpush1.bf16.msra.mxu0 %v1335
  %2391 = vmatprep.subr.bf16.mxu0 0
  %2392 = vmatpush1.bf16.msra.mxu0 %v1336
  %2393 = vmatprep.subr.bf16.mxu0 0
  %2394 = vmatpush1.bf16.msra.mxu0 %v1337
  %2395 = vmatprep.subr.bf16.mxu0 0
  %2396 = vmatpush1.bf16.msra.mxu0 %v1338
  %2397 = vmatprep.subr.bf16.mxu0 0
  %2398 = vmatpush1.bf16.msra.mxu0 %v1339
  %2399 = vmatprep.subr.bf16.mxu0 0
  %2400 = vmatpush1.bf16.msra.mxu0 0
  %2401 = vmatprep.subr.bf16.mxu0 0
  %2402 = vmatpush1.bf16.msra.mxu0 0
  %2403 = vmatprep.subr.bf16.mxu0 0
  %2404 = vmatpush1.bf16.msra.mxu0 0
  %2405 = vmatprep.subr.bf16.mxu0 0
  %2406 = vmatpush1.bf16.msra.mxu0 0
  %2407 = vmatprep.subr.bf16.mxu0 0
  %2408 = vmatpush1.bf16.msra.mxu0 0
  %2409 = vmatprep.subr.bf16.mxu0 0
  %2410 = vmatpush1.bf16.msra.mxu0 0
  %2411 = vmatprep.subr.bf16.mxu0 0
  %2412 = vmatpush1.bf16.msra.mxu0 0
  %2413 = vmatprep.subr.bf16.mxu0 0
  %2414 = vmatpush1.bf16.msra.mxu0 0
  %2415 = vmatprep.mubr.bf16.mxu0 0
  %2416 = vmatmul.mubr.bf16.gmra.mrb[0].mxu0 %v2382
  %v2417 = vpop.f32.mrb[0].mxu0
  %v2418 = vadd.f32 %v1298, %v2417
  %v2419 = vpop.f32.mrb[0].mxu0
  %v2420 = vpop.f32.mrb[0].mxu0
  %v2421 = vpop.f32.mrb[0].mxu0
  %2422 = vdwg.mxu0
  %v2423 = vtanh.pop %v2418
  %v2424 = vld [vmem:[%s3] sm:$0xff]
  %v2425 = vld [vmem:[%s3 + $0x8] sm:$0xff]
  %v2426 = vld [vmem:[%s3 + $0x10] sm:$0xff]
  %v2427 = vld [vmem:[%s3 + $0x18] sm:$0xff]
  %v2428 = vld [vmem:[%s3 + $0x20] sm:$0xff]
  %v2429 = vld [vmem:[%s3 + $0x28] sm:$0xff]
  %v2430 = vld [vmem:[%s3 + $0x30] sm:$0xff]
  %v2431 = vld [vmem:[%s3 + $0x38] sm:$0xff]
  %v2432 = vld [vmem:[%s3 + $0x40] sm:$0xff]
  %v2433 = vld [vmem:[%s3 + $0x48] sm:$0xff]
  %v2434 = vld [vmem:[%s3 + $0x50] sm:$0xff]
  %v2435 = vld [vmem:[%s3 + $0x58] sm:$0xff]
  %v2436 = vld [vmem:[%s3 + $0x60] sm:$0xff]
  %v2437 = vld [vmem:[%s3 + $0x68] sm:$0xff]
  %v2438 = vld [vmem:[%s3 + $0x70] sm:$0xff]
  %v2439 = vld [vmem:[%s3 + $0x78] sm:$0xff]
  %v2440 = vpack.c.bf16 %v2425, %v2424
  %v2441 = vpack.c.bf16 %v2427, %v2426
  %v2442 = vpack.c.bf16 %v2429, %v2428
  %v2443 = vpack.c.bf16 %v2431, %v2430
  %v2444 = vpack.c.bf16 %v2433, %v2432
  %v2445 = vpack.c.bf16 %v2435, %v2434
  %v2446 = vpack.c.bf16 %v2437, %v2436
  %v2447 = vpack.c.bf16 %v2439, %v2438
  %v2448 = vld [vmem:[%s12] sm:$0xff]
  %v2449 = vld [vmem:[%s12 + $0x8] sm:$0xff]
  %v2450 = vld [vmem:[%s12 + $0x10] sm:$0xff]
  %v2451 = vld [vmem:[%s12 + $0x18] sm:$0xff]
  %v2456 = vunpack.c.l.b16 %v2448
  %v2457 = vunpack.c.h.b16 %v2448
  %v2458 = vunpack.c.l.b16 %v2449
  %v2459 = vunpack.c.h.b16 %v2449
  %v2460 = vunpack.c.l.b16 %v2450
  %v2461 = vunpack.c.h.b16 %v2450
  %v2462 = vunpack.c.l.b16 %v2451
  %v2463 = vunpack.c.h.b16 %v2451
  %v2464 = vpack.c.b16 %v2460, %v2456
  %v2465 = vpack.c.b16 %v2461, %v2457
  %v2466 = vpack.c.b16 %v2462, %v2458
  %v2467 = vpack.c.b16 %v2463, %v2459
  %vm2472 = vcmask 130048
  %v2474 = vsel %vm2472, %v2440, 0
  %v2477 = vsel %vm2472, %v2441, 0
  %v2480 = vsel %vm2472, %v2442, 0
  %v2483 = vsel %vm2472, %v2443, 0
  %v2486 = vsel %vm2472, %v2444, 0
  %v2489 = vsel %vm2472, %v2445, 0
  %v2492 = vsel %vm2472, %v2446, 0
  %v2495 = vsel %vm2472, %v2447, 0
  %2497 = vmatprep.subr.bf16.mxu0 %v2465
  %2498 = vmatpush1.bf16.msra.mxu0 %v2464
  %2499 = vmatprep.subr.bf16.mxu0 0
  %2500 = vmatpush1.bf16.msra.mxu0 0
  %2501 = vmatprep.subr.bf16.mxu0 0
  %2502 = vmatpush1.bf16.msra.mxu0 0
  %2503 = vmatprep.subr.bf16.mxu0 0
  %2504 = vmatpush1.bf16.msra.mxu0 0
  %2505 = vmatprep.subr.bf16.mxu0 0
  %2506 = vmatpush1.bf16.msra.mxu0 0
  %2507 = vmatprep.subr.bf16.mxu0 0
  %2508 = vmatpush1.bf16.msra.mxu0 0
  %2509 = vmatprep.subr.bf16.mxu0 0
  %2510 = vmatpush1.bf16.msra.mxu0 0
  %2511 = vmatprep.subr.bf16.mxu0 0
  %2512 = vmatpush1.bf16.msra.mxu0 0
  %2513 = vmatprep.subr.bf16.mxu0 0
  %2514 = vmatpush1.bf16.msra.mxu0 0
  %2515 = vmatprep.subr.bf16.mxu0 0
  %2516 = vmatpush1.bf16.msra.mxu0 0
  %2517 = vmatprep.subr.bf16.mxu0 0
  %2518 = vmatpush1.bf16.msra.mxu0 0
  %2519 = vmatprep.subr.bf16.mxu0 0
  %2520 = vmatpush1.bf16.msra.mxu0 0
  %2521 = vmatprep.subr.bf16.mxu0 0
  %2522 = vmatpush1.bf16.msra.mxu0 0
  %2523 = vmatprep.subr.bf16.mxu0 0
  %2524 = vmatpush1.bf16.msra.mxu0 0
  %2525 = vmatprep.subr.bf16.mxu0 0
  %2526 = vmatpush1.bf16.msra.mxu0 0
  %2527 = vmatprep.subr.bf16.mxu0 0
  %2528 = vmatpush1.bf16.msra.mxu0 0
  %2529 = vmatprep.mubr.bf16.mxu0 0
  %2530 = vmatmul.mubr.bf16.gmra.mrb[0].mxu0 %v2474
  %v2531 = vpop.f32.mrb[0].mxu0
  %v2532 = vadd.f32 0.0, %v2531
  %v2533 = vpop.f32.mrb[0].mxu0
  %v2534 = vadd.f32 0.0, %v2533
  %v2535 = vpop.f32.mrb[0].mxu0
  %v2536 = vadd.f32 0.0, %v2535
  %v2537 = vpop.f32.mrb[0].mxu0
  %v2538 = vadd.f32 0.0, %v2537
  %2539 = vmatprep.mubr.bf16.mxu0 0
  %2540 = vmatmul.mubr.bf16.gmra.mrb[0].mxu0 %v2477
  %v2541 = vpop.f32.mrb[0].mxu0
  %v2542 = vadd.f32 0.0, %v2541
  %v2543 = vpop.f32.mrb[0].mxu0
  %v2544 = vadd.f32 0.0, %v2543
  %v2545 = vpop.f32.mrb[0].mxu0
  %v2546 = vadd.f32 0.0, %v2545
  %v2547 = vpop.f32.mrb[0].mxu0
  %v2548 = vadd.f32 0.0, %v2547
  %2549 = vmatprep.mubr.bf16.mxu0 0
  %2550 = vmatmul.mubr.bf16.gmra.mrb[0].mxu0 %v2480
  %v2551 = vpop.f32.mrb[0].mxu0
  %v2552 = vadd.f32 0.0, %v2551
  %v2553 = vpop.f32.mrb[0].mxu0
  %v2554 = vadd.f32 0.0, %v2553
  %v2555 = vpop.f32.mrb[0].mxu0
  %v2556 = vadd.f32 0.0, %v2555
  %v2557 = vpop.f32.mrb[0].mxu0
  %v2558 = vadd.f32 0.0, %v2557
  %2559 = vmatprep.mubr.bf16.mxu0 0
  %2560 = vmatmul.mubr.bf16.gmra.mrb[0].mxu0 %v2483
  %v2561 = vpop.f32.mrb[0].mxu0
  %v2562 = vadd.f32 0.0, %v2561
  %v2563 = vpop.f32.mrb[0].mxu0
  %v2564 = vadd.f32 0.0, %v2563
  %v2565 = vpop.f32.mrb[0].mxu0
  %v2566 = vadd.f32 0.0, %v2565
  %v2567 = vpop.f32.mrb[0].mxu0
  %v2568 = vadd.f32 0.0, %v2567
  %2569 = vmatprep.mubr.bf16.mxu0 0
  %2570 = vmatmul.mubr.bf16.gmra.mrb[0].mxu0 %v2486
  %v2571 = vpop.f32.mrb[0].mxu0
  %v2572 = vadd.f32 0.0, %v2571
  %v2573 = vpop.f32.mrb[0].mxu0
  %v2574 = vadd.f32 0.0, %v2573
  %v2575 = vpop.f32.mrb[0].mxu0
  %v2576 = vadd.f32 0.0, %v2575
  %v2577 = vpop.f32.mrb[0].mxu0
  %v2578 = vadd.f32 0.0, %v2577
  %2579 = vmatprep.mubr.bf16.mxu0 0
  %2580 = vmatmul.mubr.bf16.gmra.mrb[0].mxu0 %v2489
  %v2581 = vpop.f32.mrb[0].mxu0
  %v2582 = vadd.f32 0.0, %v2581
  %v2583 = vpop.f32.mrb[0].mxu0
  %v2584 = vadd.f32 0.0, %v2583
  %v2585 = vpop.f32.mrb[0].mxu0
  %v2586 = vadd.f32 0.0, %v2585
  %v2587 = vpop.f32.mrb[0].mxu0
  %v2588 = vadd.f32 0.0, %v2587
  %2589 = vmatprep.mubr.bf16.mxu0 0
  %2590 = vmatmul.mubr.bf16.gmra.mrb[0].mxu0 %v2492
  %v2591 = vpop.f32.mrb[0].mxu0
  %v2592 = vadd.f32 0.0, %v2591
  %v2593 = vpop.f32.mrb[0].mxu0
  %v2594 = vadd.f32 0.0, %v2593
  %v2595 = vpop.f32.mrb[0].mxu0
  %v2596 = vadd.f32 0.0, %v2595
  %v2597 = vpop.f32.mrb[0].mxu0
  %v2598 = vadd.f32 0.0, %v2597
  %2599 = vmatprep.mubr.bf16.mxu0 0
  %2600 = vmatmul.mubr.bf16.gmra.mrb[0].mxu0 %v2495
  %v2601 = vpop.f32.mrb[0].mxu0
  %v2602 = vadd.f32 0.0, %v2601
  %v2603 = vpop.f32.mrb[0].mxu0
  %v2604 = vadd.f32 0.0, %v2603
  %v2605 = vpop.f32.mrb[0].mxu0
  %v2606 = vadd.f32 0.0, %v2605
  %v2607 = vpop.f32.mrb[0].mxu0
  %v2608 = vadd.f32 0.0, %v2607
  %2609 = vdwg.mxu0
  %2610 = vmatprep.subr.bf16.mxu0 %v2467
  %2611 = vmatpush1.bf16.msra.mxu0 %v2466
  %2612 = vmatprep.subr.bf16.mxu0 0
  %2613 = vmatpush1.bf16.msra.mxu0 0
  %2614 = vmatprep.subr.bf16.mxu0 0
  %2615 = vmatpush1.bf16.msra.mxu0 0
  %2616 = vmatprep.subr.bf16.mxu0 0
  %2617 = vmatpush1.bf16.msra.mxu0 0
  %2618 = vmatprep.subr.bf16.mxu0 0
  %2619 = vmatpush1.bf16.msra.mxu0 0
  %2620 = vmatprep.subr.bf16.mxu0 0
  %2621 = vmatpush1.bf16.msra.mxu0 0
  %2622 = vmatprep.subr.bf16.mxu0 0
  %2623 = vmatpush1.bf16.msra.mxu0 0
  %2624 = vmatprep.subr.bf16.mxu0 0
  %2625 = vmatpush1.bf16.msra.mxu0 0
  %2626 = vmatprep.subr.bf16.mxu0 0
  %2627 = vmatpush1.bf16.msra.mxu0 0
  %2628 = vmatprep.subr.bf16.mxu0 0
  %2629 = vmatpush1.bf16.msra.mxu0 0
  %2630 = vmatprep.subr.bf16.mxu0 0
  %2631 = vmatpush1.bf16.msra.mxu0 0
  %2632 = vmatprep.subr.bf16.mxu0 0
  %2633 = vmatpush1.bf16.msra.mxu0 0
  %2634 = vmatprep.subr.bf16.mxu0 0
  %2635 = vmatpush1.bf16.msra.mxu0 0
  %2636 = vmatprep.subr.bf16.mxu0 0
  %2637 = vmatpush1.bf16.msra.mxu0 0
  %2638 = vmatprep.subr.bf16.mxu0 0
  %2639 = vmatpush1.bf16.msra.mxu0 0
  %2640 = vmatprep.subr.bf16.mxu0 0
  %2641 = vmatpush1.bf16.msra.mxu0 0
  %2642 = vmatprep.mubr.bf16.mxu0 0
  %2643 = vmatmul.mubr.bf16.gmra.mrb[0].mxu0 %v2474
  %v2644 = vpop.f32.mrb[0].mxu0
  %v2645 = vadd.f32 0.0, %v2644
  %v2646 = vpop.f32.mrb[0].mxu0
  %v2647 = vadd.f32 0.0, %v2646
  %v2648 = vpop.f32.mrb[0].mxu0
  %v2649 = vadd.f32 0.0, %v2648
  %v2650 = vpop.f32.mrb[0].mxu0
  %v2651 = vadd.f32 0.0, %v2650
  %2652 = vmatprep.mubr.bf16.mxu0 0
  %2653 = vmatmul.mubr.bf16.gmra.mrb[0].mxu0 %v2477
  %v2654 = vpop.f32.mrb[0].mxu0
  %v2655 = vadd.f32 0.0, %v2654
  %v2656 = vpop.f32.mrb[0].mxu0
  %v2657 = vadd.f32 0.0, %v2656
  %v2658 = vpop.f32.mrb[0].mxu0
  %v2659 = vadd.f32 0.0, %v2658
  %v2660 = vpop.f32.mrb[0].mxu0
  %v2661 = vadd.f32 0.0, %v2660
  %2662 = vmatprep.mubr.bf16.mxu0 0
  %2663 = vmatmul.mubr.bf16.gmra.mrb[0].mxu0 %v2480
  %v2664 = vpop.f32.mrb[0].mxu0
  %v2665 = vadd.f32 0.0, %v2664
  %v2666 = vpop.f32.mrb[0].mxu0
  %v2667 = vadd.f32 0.0, %v2666
  %v2668 = vpop.f32.mrb[0].mxu0
  %v2669 = vadd.f32 0.0, %v2668
  %v2670 = vpop.f32.mrb[0].mxu0
  %v2671 = vadd.f32 0.0, %v2670
  %2672 = vmatprep.mubr.bf16.mxu0 0
  %2673 = vmatmul.mubr.bf16.gmra.mrb[0].mxu0 %v2483
  %v2674 = vpop.f32.mrb[0].mxu0
  %v2675 = vadd.f32 0.0, %v2674
  %v2676 = vpop.f32.mrb[0].mxu0
  %v2677 = vadd.f32 0.0, %v2676
  %v2678 = vpop.f32.mrb[0].mxu0
  %v2679 = vadd.f32 0.0, %v2678
  %v2680 = vpop.f32.mrb[0].mxu0
  %v2681 = vadd.f32 0.0, %v2680
  %2682 = vmatprep.mubr.bf16.mxu0 0
  %2683 = vmatmul.mubr.bf16.gmra.mrb[0].mxu0 %v2486
  %v2684 = vpop.f32.mrb[0].mxu0
  %v2685 = vadd.f32 0.0, %v2684
  %v2686 = vpop.f32.mrb[0].mxu0
  %v2687 = vadd.f32 0.0, %v2686
  %v2688 = vpop.f32.mrb[0].mxu0
  %v2689 = vadd.f32 0.0, %v2688
  %v2690 = vpop.f32.mrb[0].mxu0
  %v2691 = vadd.f32 0.0, %v2690
  %2692 = vmatprep.mubr.bf16.mxu0 0
  %2693 = vmatmul.mubr.bf16.gmra.mrb[0].mxu0 %v2489
  %v2694 = vpop.f32.mrb[0].mxu0
  %v2695 = vadd.f32 0.0, %v2694
  %v2696 = vpop.f32.mrb[0].mxu0
  %v2697 = vadd.f32 0.0, %v2696
  %v2698 = vpop.f32.mrb[0].mxu0
  %v2699 = vadd.f32 0.0, %v2698
  %v2700 = vpop.f32.mrb[0].mxu0
  %v2701 = vadd.f32 0.0, %v2700
  %2702 = vmatprep.mubr.bf16.mxu0 0
  %2703 = vmatmul.mubr.bf16.gmra.mrb[0].mxu0 %v2492
  %v2704 = vpop.f32.mrb[0].mxu0
  %v2705 = vadd.f32 0.0, %v2704
  %v2706 = vpop.f32.mrb[0].mxu0
  %v2707 = vadd.f32 0.0, %v2706
  %v2708 = vpop.f32.mrb[0].mxu0
  %v2709 = vadd.f32 0.0, %v2708
  %v2710 = vpop.f32.mrb[0].mxu0
  %v2711 = vadd.f32 0.0, %v2710
  %2712 = vmatprep.mubr.bf16.mxu0 0
  %2713 = vmatmul.mubr.bf16.gmra.mrb[0].mxu0 %v2495
  %v2714 = vpop.f32.mrb[0].mxu0
  %v2715 = vadd.f32 0.0, %v2714
  %v2716 = vpop.f32.mrb[0].mxu0
  %v2717 = vadd.f32 0.0, %v2716
  %v2718 = vpop.f32.mrb[0].mxu0
  %v2719 = vadd.f32 0.0, %v2718
  %v2720 = vpop.f32.mrb[0].mxu0
  %v2721 = vadd.f32 0.0, %v2720
  %2722 = vdwg.mxu0
  %v2723 = vpack.c.bf16 %v1733, %v1388
  %v2724 = vpack.c.bf16 %v2423, %v2078
  %v2725 = vld [vmem:[%s13] sm:$0xff]
  %v2726 = vld [vmem:[%s13 + $0x8] sm:$0xff]
  %v2727 = vld [vmem:[%s13 + $0x10] sm:$0xff]
  %v2728 = vld [vmem:[%s13 + $0x18] sm:$0xff]
  %v2729 = vld [vmem:[%s13 + $0x20] sm:$0xff]
  %v2730 = vld [vmem:[%s13 + $0x28] sm:$0xff]
  %v2731 = vld [vmem:[%s13 + $0x30] sm:$0xff]
  %v2732 = vld [vmem:[%s13 + $0x38] sm:$0xff]
  %v2733 = vld [vmem:[%s13 + $0x40] sm:$0xff]
  %v2734 = vld [vmem:[%s13 + $0x48] sm:$0xff]
  %v2735 = vld [vmem:[%s13 + $0x50] sm:$0xff]
  %v2736 = vld [vmem:[%s13 + $0x58] sm:$0xff]
  %v2737 = vld [vmem:[%s13 + $0x60] sm:$0xff]
  %v2738 = vld [vmem:[%s13 + $0x68] sm:$0xff]
  %v2739 = vld [vmem:[%s13 + $0x70] sm:$0xff]
  %v2740 = vld [vmem:[%s13 + $0x78] sm:$0xff]
  %v2741 = vld [vmem:[%s13 + $0x80] sm:$0xff]
  %v2742 = vld [vmem:[%s13 + $0x88] sm:$0xff]
  %v2743 = vld [vmem:[%s13 + $0x90] sm:$0xff]
  %v2744 = vld [vmem:[%s13 + $0x98] sm:$0xff]
  %v2745 = vld [vmem:[%s13 + $0xa0] sm:$0xff]
  %v2746 = vld [vmem:[%s13 + $0xa8] sm:$0xff]
  %v2747 = vld [vmem:[%s13 + $0xb0] sm:$0xff]
  %v2748 = vld [vmem:[%s13 + $0xb8] sm:$0xff]
  %v2749 = vld [vmem:[%s13 + $0xc0] sm:$0xff]
  %v2750 = vld [vmem:[%s13 + $0xc8] sm:$0xff]
  %v2751 = vld [vmem:[%s13 + $0xd0] sm:$0xff]
  %v2752 = vld [vmem:[%s13 + $0xd8] sm:$0xff]
  %v2753 = vld [vmem:[%s13 + $0xe0] sm:$0xff]
  %v2754 = vld [vmem:[%s13 + $0xe8] sm:$0xff]
  %v2755 = vld [vmem:[%s13 + $0xf0] sm:$0xff]
  %v2756 = vld [vmem:[%s13 + $0xf8] sm:$0xff]
  %v2757 = vld [vmem:[%s15] sm:$0xf]
  %v2759 = vlaneseq
  %v2760 = vshrl.u32 %v2759, 7
  %v2761 = vsub.s32 0, %v2760
  %v2762 = vrot.slane %v2757, %v2761
  %v2763 = vlaneseq
  %v2764 = vshrl.u32 %v2763, 7
  %v2765 = vsub.s32 1, %v2764
  %v2766 = vrot.slane %v2757, %v2765
  %v2767 = vlaneseq
  %v2768 = vshrl.u32 %v2767, 7
  %v2769 = vsub.s32 2, %v2768
  %v2770 = vrot.slane %v2757, %v2769
  %v2771 = vlaneseq
  %v2772 = vshrl.u32 %v2771, 7
  %v2773 = vsub.s32 3, %v2772
  %v2774 = vrot.slane %v2757, %v2773
  %v2811 = vunpack.c.l.b16 %v2725
  %v2812 = vunpack.c.h.b16 %v2725
  %v2813 = vunpack.c.l.b16 %v2726
  %v2814 = vunpack.c.h.b16 %v2726
  %v2815 = vunpack.c.l.b16 %v2727
  %v2816 = vunpack.c.h.b16 %v2727
  %v2817 = vunpack.c.l.b16 %v2728
  %v2818 = vunpack.c.h.b16 %v2728
  %v2819 = vunpack.c.l.b16 %v2729
  %v2820 = vunpack.c.h.b16 %v2729
  %v2821 = vunpack.c.l.b16 %v2730
  %v2822 = vunpack.c.h.b16 %v2730
  %v2823 = vunpack.c.l.b16 %v2731
  %v2824 = vunpack.c.h.b16 %v2731
  %v2825 = vunpack.c.l.b16 %v2732
  %v2826 = vunpack.c.h.b16 %v2732
  %v2827 = vunpack.c.l.b16 %v2733
  %v2828 = vunpack.c.h.b16 %v2733
  %v2829 = vunpack.c.l.b16 %v2734
  %v2830 = vunpack.c.h.b16 %v2734
  %v2831 = vunpack.c.l.b16 %v2735
  %v2832 = vunpack.c.h.b16 %v2735
  %v2833 = vunpack.c.l.b16 %v2736
  %v2834 = vunpack.c.h.b16 %v2736
  %v2835 = vunpack.c.l.b16 %v2737
  %v2836 = vunpack.c.h.b16 %v2737
  %v2837 = vunpack.c.l.b16 %v2738
  %v2838 = vunpack.c.h.b16 %v2738
  %v2839 = vunpack.c.l.b16 %v2739
  %v2840 = vunpack.c.h.b16 %v2739
  %v2841 = vunpack.c.l.b16 %v2740
  %v2842 = vunpack.c.h.b16 %v2740
  %v2843 = vunpack.c.l.b16 %v2741
  %v2844 = vunpack.c.h.b16 %v2741
  %v2845 = vunpack.c.l.b16 %v2742
  %v2846 = vunpack.c.h.b16 %v2742
  %v2847 = vunpack.c.l.b16 %v2743
  %v2848 = vunpack.c.h.b16 %v2743
  %v2849 = vunpack.c.l.b16 %v2744
  %v2850 = vunpack.c.h.b16 %v2744
  %v2851 = vunpack.c.l.b16 %v2745
  %v2852 = vunpack.c.h.b16 %v2745
  %v2853 = vunpack.c.l.b16 %v2746
  %v2854 = vunpack.c.h.b16 %v2746
  %v2855 = vunpack.c.l.b16 %v2747
  %v2856 = vunpack.c.h.b16 %v2747
  %v2857 = vunpack.c.l.b16 %v2748
  %v2858 = vunpack.c.h.b16 %v2748
  %v2859 = vunpack.c.l.b16 %v2749
  %v2860 = vunpack.c.h.b16 %v2749
  %v2861 = vunpack.c.l.b16 %v2750
  %v2862 = vunpack.c.h.b16 %v2750
  %v2863 = vunpack.c.l.b16 %v2751
  %v2864 = vunpack.c.h.b16 %v2751
  %v2865 = vunpack.c.l.b16 %v2752
  %v2866 = vunpack.c.h.b16 %v2752
  %v2867 = vunpack.c.l.b16 %v2753
  %v2868 = vunpack.c.h.b16 %v2753
  %v2869 = vunpack.c.l.b16 %v2754
  %v2870 = vunpack.c.h.b16 %v2754
  %v2871 = vunpack.c.l.b16 %v2755
  %v2872 = vunpack.c.h.b16 %v2755
  %v2873 = vunpack.c.l.b16 %v2756
  %v2874 = vunpack.c.h.b16 %v2756
  %v2875 = vpack.c.b16 %v2815, %v2811
  %v2876 = vpack.c.b16 %v2816, %v2812
  %v2877 = vpack.c.b16 %v2817, %v2813
  %v2878 = vpack.c.b16 %v2818, %v2814
  %v2879 = vpack.c.b16 %v2823, %v2819
  %v2880 = vpack.c.b16 %v2824, %v2820
  %v2881 = vpack.c.b16 %v2825, %v2821
  %v2882 = vpack.c.b16 %v2826, %v2822
  %v2883 = vpack.c.b16 %v2831, %v2827
  %v2884 = vpack.c.b16 %v2832, %v2828
  %v2885 = vpack.c.b16 %v2833, %v2829
  %v2886 = vpack.c.b16 %v2834, %v2830
  %v2887 = vpack.c.b16 %v2839, %v2835
  %v2888 = vpack.c.b16 %v2840, %v2836
  %v2889 = vpack.c.b16 %v2841, %v2837
  %v2890 = vpack.c.b16 %v2842, %v2838
  %v2891 = vpack.c.b16 %v2847, %v2843
  %v2892 = vpack.c.b16 %v2848, %v2844
  %v2893 = vpack.c.b16 %v2849, %v2845
  %v2894 = vpack.c.b16 %v2850, %v2846
  %v2895 = vpack.c.b16 %v2855, %v2851
  %v2896 = vpack.c.b16 %v2856, %v2852
  %v2897 = vpack.c.b16 %v2857, %v2853
  %v2898 = vpack.c.b16 %v2858, %v2854
  %v2899 = vpack.c.b16 %v2863, %v2859
  %v2900 = vpack.c.b16 %v2864, %v2860
  %v2901 = vpack.c.b16 %v2865, %v2861
  %v2902 = vpack.c.b16 %v2866, %v2862
  %v2903 = vpack.c.b16 %v2871, %v2867
  %v2904 = vpack.c.b16 %v2872, %v2868
  %v2905 = vpack.c.b16 %v2873, %v2869
  %v2906 = vpack.c.b16 %v2874, %v2870
  %2939 = vmatprep.subr.bf16.mxu0 %v2876
  %2940 = vmatpush1.bf16.msra.mxu0 %v2875
  %2941 = vmatprep.subr.bf16.mxu0 %v2880
  %2942 = vmatpush1.bf16.msra.mxu0 %v2879
  %2943 = vmatprep.subr.bf16.mxu0 %v2884
  %2944 = vmatpush1.bf16.msra.mxu0 %v2883
  %2945 = vmatprep.subr.bf16.mxu0 %v2888
  %2946 = vmatpush1.bf16.msra.mxu0 %v2887
  %2947 = vmatprep.subr.bf16.mxu0 %v2892
  %2948 = vmatpush1.bf16.msra.mxu0 %v2891
  %2949 = vmatprep.subr.bf16.mxu0 %v2896
  %2950 = vmatpush1.bf16.msra.mxu0 %v2895
  %2951 = vmatprep.subr.bf16.mxu0 %v2900
  %2952 = vmatpush1.bf16.msra.mxu0 %v2899
  %2953 = vmatprep.subr.bf16.mxu0 %v2904
  %2954 = vmatpush1.bf16.msra.mxu0 %v2903
  %2955 = vmatprep.subr.bf16.mxu0 0
  %2956 = vmatpush1.bf16.msra.mxu0 0
  %2957 = vmatprep.subr.bf16.mxu0 0
  %2958 = vmatpush1.bf16.msra.mxu0 0
  %2959 = vmatprep.subr.bf16.mxu0 0
  %2960 = vmatpush1.bf16.msra.mxu0 0
  %2961 = vmatprep.subr.bf16.mxu0 0
  %2962 = vmatpush1.bf16.msra.mxu0 0
  %2963 = vmatprep.subr.bf16.mxu0 0
  %2964 = vmatpush1.bf16.msra.mxu0 0
  %2965 = vmatprep.subr.bf16.mxu0 0
  %2966 = vmatpush1.bf16.msra.mxu0 0
  %2967 = vmatprep.subr.bf16.mxu0 0
  %2968 = vmatpush1.bf16.msra.mxu0 0
  %2969 = vmatprep.subr.bf16.mxu0 0
  %2970 = vmatpush1.bf16.msra.mxu0 0
  %2971 = vmatprep.mubr.bf16.mxu0 0
  %2972 = vmatmul.mubr.bf16.gmra.mrb[0].mxu0 %v2723
  %v2973 = vpop.f32.mrb[0].mxu0
  %v2974 = vadd.f32 %v2762, %v2973
  %v2975 = vpop.f32.mrb[0].mxu0
  %v2976 = vadd.f32 %v2766, %v2975
  %v2977 = vpop.f32.mrb[0].mxu0
  %v2978 = vadd.f32 %v2762, %v2977
  %v2979 = vpop.f32.mrb[0].mxu0
  %v2980 = vadd.f32 %v2766, %v2979
  %2981 = vmatprep.mubr.bf16.mxu0 0
  %2982 = vmatmul.mubr.bf16.gmra.mrb[0].mxu0 %v2724
  %v2983 = vpop.f32.mrb[0].mxu0
  %v2984 = vadd.f32 %v2762, %v2983
  %v2985 = vpop.f32.mrb[0].mxu0
  %v2986 = vadd.f32 %v2766, %v2985
  %v2987 = vpop.f32.mrb[0].mxu0
  %v2988 = vadd.f32 %v2762, %v2987
  %v2989 = vpop.f32.mrb[0].mxu0
  %v2990 = vadd.f32 %v2766, %v2989
  %2991 = vdwg.mxu0
  %2992 = vmatprep.subr.bf16.mxu0 %v2878
  %2993 = vmatpush1.bf16.msra.mxu0 %v2877
  %2994 = vmatprep.subr.bf16.mxu0 %v2882
  %2995 = vmatpush1.bf16.msra.mxu0 %v2881
  %2996 = vmatprep.subr.bf16.mxu0 %v2886
  %2997 = vmatpush1.bf16.msra.mxu0 %v2885
  %2998 = vmatprep.subr.bf16.mxu0 %v2890
  %2999 = vmatpush1.bf16.msra.mxu0 %v2889
  %3000 = vmatprep.subr.bf16.mxu0 %v2894
  %3001 = vmatpush1.bf16.msra.mxu0 %v2893
  %3002 = vmatprep.subr.bf16.mxu0 %v2898
  %3003 = vmatpush1.bf16.msra.mxu0 %v2897
  %3004 = vmatprep.subr.bf16.mxu0 %v2902
  %3005 = vmatpush1.bf16.msra.mxu0 %v2901
  %3006 = vmatprep.subr.bf16.mxu0 %v2906
  %3007 = vmatpush1.bf16.msra.mxu0 %v2905
  %3008 = vmatprep.subr.bf16.mxu0 0
  %3009 = vmatpush1.bf16.msra.mxu0 0
  %3010 = vmatprep.subr.bf16.mxu0 0
  %3011 = vmatpush1.bf16.msra.mxu0 0
  %3012 = vmatprep.subr.bf16.mxu0 0
  %3013 = vmatpush1.bf16.msra.mxu0 0
  %3014 = vmatprep.subr.bf16.mxu0 0
  %3015 = vmatpush1.bf16.msra.mxu0 0
  %3016 = vmatprep.subr.bf16.mxu0 0
  %3017 = vmatpush1.bf16.msra.mxu0 0
  %3018 = vmatprep.subr.bf16.mxu0 0
  %3019 = vmatpush1.bf16.msra.mxu0 0
  %3020 = vmatprep.subr.bf16.mxu0 0
  %3021 = vmatpush1.bf16.msra.mxu0 0
  %3022 = vmatprep.subr.bf16.mxu0 0
  %3023 = vmatpush1.bf16.msra.mxu0 0
  %3024 = vmatprep.mubr.bf16.mxu0 0
  %3025 = vmatmul.mubr.bf16.gmra.mrb[0].mxu0 %v2723
  %v3026 = vpop.f32.mrb[0].mxu0
  %v3027 = vadd.f32 %v2770, %v3026
  %v3028 = vpop.f32.mrb[0].mxu0
  %v3029 = vadd.f32 %v2774, %v3028
  %v3030 = vpop.f32.mrb[0].mxu0
  %v3031 = vadd.f32 %v2770, %v3030
  %v3032 = vpop.f32.mrb[0].mxu0
  %v3033 = vadd.f32 %v2774, %v3032
  %3034 = vmatprep.mubr.bf16.mxu0 0
  %3035 = vmatmul.mubr.bf16.gmra.mrb[0].mxu0 %v2724
  %v3036 = vpop.f32.mrb[0].mxu0
  %v3037 = vadd.f32 %v2770, %v3036
  %v3038 = vpop.f32.mrb[0].mxu0
  %v3039 = vadd.f32 %v2774, %v3038
  %v3040 = vpop.f32.mrb[0].mxu0
  %v3041 = vadd.f32 %v2770, %v3040
  %v3042 = vpop.f32.mrb[0].mxu0
  %v3043 = vadd.f32 %v2774, %v3042
  %3044 = vdwg.mxu0
  %v3045 = vadd.f32 %v2532, %v2974
  %v3046 = vadd.f32 %v2534, %v2976
  %v3047 = vadd.f32 %v2645, %v3027
  %v3048 = vadd.f32 %v2647, %v3029
  %v3049 = vadd.f32 %v2536, %v2978
  %v3050 = vadd.f32 %v2538, %v2980
  %v3051 = vadd.f32 %v2649, %v3031
  %v3052 = vadd.f32 %v2651, %v3033
  %v3053 = vadd.f32 %v2542, %v2984
  %v3054 = vadd.f32 %v2544, %v2986
  %v3055 = vadd.f32 %v2655, %v3037
  %v3056 = vadd.f32 %v2657, %v3039
  %v3057 = vadd.f32 %v2546, %v2988
  %v3058 = vadd.f32 %v2548, %v2990
  %v3059 = vadd.f32 %v2659, %v3041
  %v3060 = vadd.f32 %v2661, %v3043
  %v3061 = vadd.f32 %v2552, %v2974
  %v3062 = vadd.f32 %v2554, %v2976
  %v3063 = vadd.f32 %v2665, %v3027
  %v3064 = vadd.f32 %v2667, %v3029
  %v3065 = vadd.f32 %v2556, %v2978
  %v3066 = vadd.f32 %v2558, %v2980
  %v3067 = vadd.f32 %v2669, %v3031
  %v3068 = vadd.f32 %v2671, %v3033
  %v3069 = vadd.f32 %v2562, %v2984
  %v3070 = vadd.f32 %v2564, %v2986
  %v3071 = vadd.f32 %v2675, %v3037
  %v3072 = vadd.f32 %v2677, %v3039
  %v3073 = vadd.f32 %v2566, %v2988
  %v3074 = vadd.f32 %v2568, %v2990
  %v3075 = vadd.f32 %v2679, %v3041
  %v3076 = vadd.f32 %v2681, %v3043
  %v3077 = vadd.f32 %v2572, %v2974
  %v3078 = vadd.f32 %v2574, %v2976
  %v3079 = vadd.f32 %v2685, %v3027
  %v3080 = vadd.f32 %v2687, %v3029
  %v3081 = vadd.f32 %v2576, %v2978
  %v3082 = vadd.f32 %v2578, %v2980
  %v3083 = vadd.f32 %v2689, %v3031
  %v3084 = vadd.f32 %v2691, %v3033
  %v3085 = vadd.f32 %v2582, %v2984
  %v3086 = vadd.f32 %v2584, %v2986
  %v3087 = vadd.f32 %v2695, %v3037
  %v3088 = vadd.f32 %v2697, %v3039
  %v3089 = vadd.f32 %v2586, %v2988
  %v3090 = vadd.f32 %v2588, %v2990
  %v3091 = vadd.f32 %v2699, %v3041
  %v3092 = vadd.f32 %v2701, %v3043
  %v3093 = vadd.f32 %v2592, %v2974
  %v3094 = vadd.f32 %v2594, %v2976
  %v3095 = vadd.f32 %v2705, %v3027
  %v3096 = vadd.f32 %v2707, %v3029
  %v3097 = vadd.f32 %v2596, %v2978
  %v3098 = vadd.f32 %v2598, %v2980
  %v3099 = vadd.f32 %v2709, %v3031
  %v3100 = vadd.f32 %v2711, %v3033
  %v3101 = vadd.f32 %v2602, %v2984
  %v3102 = vadd.f32 %v2604, %v2986
  %v3103 = vadd.f32 %v2715, %v3037
  %v3104 = vadd.f32 %v2717, %v3039
  %v3105 = vadd.f32 %v2606, %v2988
  %v3106 = vadd.f32 %v2608, %v2990
  %v3107 = vadd.f32 %v2719, %v3041
  %v3108 = vadd.f32 %v2721, %v3043
  %3109 = vst [vmem:[#allocation2] sm:$0xff] %v3045
  %3110 = vst [vmem:[#allocation2 + $0x8] sm:$0xff] %v3046
  %3111 = vst [vmem:[#allocation2 + $0x10] sm:$0xff] %v3047
  %3112 = vst [vmem:[#allocation2 + $0x18] sm:$0xff] %v3048
  %3113 = vst [vmem:[#allocation2 + $0x20] sm:$0xff] %v3049
  %3114 = vst [vmem:[#allocation2 + $0x28] sm:$0xff] %v3050
  %3115 = vst [vmem:[#allocation2 + $0x30] sm:$0xff] %v3051
  %3116 = vst [vmem:[#allocation2 + $0x38] sm:$0xff] %v3052
  %3117 = vst [vmem:[#allocation2 + $0x40] sm:$0xff] %v3053
  %3118 = vst [vmem:[#allocation2 + $0x48] sm:$0xff] %v3054
  %3119 = vst [vmem:[#allocation2 + $0x50] sm:$0xff] %v3055
  %3120 = vst [vmem:[#allocation2 + $0x58] sm:$0xff] %v3056
  %3121 = vst [vmem:[#allocation2 + $0x60] sm:$0xff] %v3057
  %3122 = vst [vmem:[#allocation2 + $0x68] sm:$0xff] %v3058
  %3123 = vst [vmem:[#allocation2 + $0x70] sm:$0xff] %v3059
  %3124 = vst [vmem:[#allocation2 + $0x78] sm:$0xff] %v3060
  %3125 = vst [vmem:[#allocation2 + $0x80] sm:$0xff] %v3061
  %3126 = vst [vmem:[#allocation2 + $0x88] sm:$0xff] %v3062
  %3127 = vst [vmem:[#allocation2 + $0x90] sm:$0xff] %v3063
  %3128 = vst [vmem:[#allocation2 + $0x98] sm:$0xff] %v3064
  %3129 = vst [vmem:[#allocation2 + $0xa0] sm:$0xff] %v3065
  %3130 = vst [vmem:[#allocation2 + $0xa8] sm:$0xff] %v3066
  %3131 = vst [vmem:[#allocation2 + $0xb0] sm:$0xff] %v3067
  %3132 = vst [vmem:[#allocation2 + $0xb8] sm:$0xff] %v3068
  %3133 = vst [vmem:[#allocation2 + $0xc0] sm:$0xff] %v3069
  %3134 = vst [vmem:[#allocation2 + $0xc8] sm:$0xff] %v3070
  %3135 = vst [vmem:[#allocation2 + $0xd0] sm:$0xff] %v3071
  %3136 = vst [vmem:[#allocation2 + $0xd8] sm:$0xff] %v3072
  %3137 = vst [vmem:[#allocation2 + $0xe0] sm:$0xff] %v3073
  %3138 = vst [vmem:[#allocation2 + $0xe8] sm:$0xff] %v3074
  %3139 = vst [vmem:[#allocation2 + $0xf0] sm:$0xff] %v3075
  %3140 = vst [vmem:[#allocation2 + $0xf8] sm:$0xff] %v3076
  %3141 = vst [vmem:[#allocation2 + $0x100] sm:$0xff] %v3077
  %3142 = vst [vmem:[#allocation2 + $0x108] sm:$0xff] %v3078
  %3143 = vst [vmem:[#allocation2 + $0x110] sm:$0xff] %v3079
  %3144 = vst [vmem:[#allocation2 + $0x118] sm:$0xff] %v3080
  %3145 = vst [vmem:[#allocation2 + $0x120] sm:$0xff] %v3081
  %3146 = vst [vmem:[#allocation2 + $0x128] sm:$0xff] %v3082
  %3147 = vst [vmem:[#allocation2 + $0x130] sm:$0xff] %v3083
  %3148 = vst [vmem:[#allocation2 + $0x138] sm:$0xff] %v3084
  %3149 = vst [vmem:[#allocation2 + $0x140] sm:$0xff] %v3085
  %3150 = vst [vmem:[#allocation2 + $0x148] sm:$0xff] %v3086
  %3151 = vst [vmem:[#allocation2 + $0x150] sm:$0xff] %v3087
  %3152 = vst [vmem:[#allocation2 + $0x158] sm:$0xff] %v3088
  %3153 = vst [vmem:[#allocation2 + $0x160] sm:$0xff] %v3089
  %3154 = vst [vmem:[#allocation2 + $0x168] sm:$0xff] %v3090
  %3155 = vst [vmem:[#allocation2 + $0x170] sm:$0xff] %v3091
  %3156 = vst [vmem:[#allocation2 + $0x178] sm:$0xff] %v3092
  %3157 = vst [vmem:[#allocation2 + $0x180] sm:$0xff] %v3093
  %3158 = vst [vmem:[#allocation2 + $0x188] sm:$0xff] %v3094
  %3159 = vst [vmem:[#allocation2 + $0x190] sm:$0xff] %v3095
  %3160 = vst [vmem:[#allocation2 + $0x198] sm:$0xff] %v3096
  %3161 = vst [vmem:[#allocation2 + $0x1a0] sm:$0xff] %v3097
  %3162 = vst [vmem:[#allocation2 + $0x1a8] sm:$0xff] %v3098
  %3163 = vst [vmem:[#allocation2 + $0x1b0] sm:$0xff] %v3099
  %3164 = vst [vmem:[#allocation2 + $0x1b8] sm:$0xff] %v3100
  %3165 = vst [vmem:[#allocation2 + $0x1c0] sm:$0xff] %v3101
  %3166 = vst [vmem:[#allocation2 + $0x1c8] sm:$0xff] %v3102
  %3167 = vst [vmem:[#allocation2 + $0x1d0] sm:$0xff] %v3103
  %3168 = vst [vmem:[#allocation2 + $0x1d8] sm:$0xff] %v3104
  %3169 = vst [vmem:[#allocation2 + $0x1e0] sm:$0xff] %v3105
  %3170 = vst [vmem:[#allocation2 + $0x1e8] sm:$0xff] %v3106
  %3171 = vst [vmem:[#allocation2 + $0x1f0] sm:$0xff] %v3107
  %3172 = vst [vmem:[#allocation2 + $0x1f8] sm:$0xff] %v3108
  %v3173 = vld [vmem:[%s18] sm:$0xf]
  %v3174 = vld [vmem:[#allocation2] sm:$0xff]
  %v3175 = vld [vmem:[#allocation2 + $0x8] sm:$0xff]
  %v3176 = vld [vmem:[#allocation2 + $0x10] sm:$0xff]
  %v3177 = vld [vmem:[#allocation2 + $0x18] sm:$0xff]
  %v3178 = vld [vmem:[#allocation2 + $0x20] sm:$0xff]
  %v3179 = vld [vmem:[#allocation2 + $0x28] sm:$0xff]
  %v3180 = vld [vmem:[#allocation2 + $0x30] sm:$0xff]
  %v3181 = vld [vmem:[#allocation2 + $0x38] sm:$0xff]
  %v3182 = vld [vmem:[#allocation2 + $0x40] sm:$0xff]
  %v3183 = vld [vmem:[#allocation2 + $0x48] sm:$0xff]
  %v3184 = vld [vmem:[#allocation2 + $0x50] sm:$0xff]
  %v3185 = vld [vmem:[#allocation2 + $0x58] sm:$0xff]
  %v3186 = vld [vmem:[#allocation2 + $0x60] sm:$0xff]
  %v3187 = vld [vmem:[#allocation2 + $0x68] sm:$0xff]
  %v3188 = vld [vmem:[#allocation2 + $0x70] sm:$0xff]
  %v3189 = vld [vmem:[#allocation2 + $0x78] sm:$0xff]
  %v3190 = vld [vmem:[%s14] sm:$0xff]
  %v3191 = vld [vmem:[%s14 + $0x8] sm:$0xff]
  %v3192 = vld [vmem:[%s14 + $0x10] sm:$0xff]
  %v3193 = vld [vmem:[%s14 + $0x18] sm:$0xff]
  %v3194 = vld [vmem:[%s14 + $0x20] sm:$0xff]
  %v3195 = vld [vmem:[%s14 + $0x28] sm:$0xff]
  %v3196 = vld [vmem:[%s14 + $0x30] sm:$0xff]
  %v3197 = vld [vmem:[%s14 + $0x38] sm:$0xff]
  %v3198 = vld [vmem:[%s14 + $0x40] sm:$0xff]
  %v3199 = vld [vmem:[%s14 + $0x48] sm:$0xff]
  %v3200 = vld [vmem:[%s14 + $0x50] sm:$0xff]
  %v3201 = vld [vmem:[%s14 + $0x58] sm:$0xff]
  %v3202 = vld [vmem:[%s14 + $0x60] sm:$0xff]
  %v3203 = vld [vmem:[%s14 + $0x68] sm:$0xff]
  %v3204 = vld [vmem:[%s14 + $0x70] sm:$0xff]
  %v3205 = vld [vmem:[%s14 + $0x78] sm:$0xff]
  %v3206 = vld [vmem:[%s14 + $0x80] sm:$0xff]
  %v3207 = vld [vmem:[%s14 + $0x88] sm:$0xff]
  %v3208 = vld [vmem:[%s14 + $0x90] sm:$0xff]
  %v3209 = vld [vmem:[%s14 + $0x98] sm:$0xff]
  %v3210 = vld [vmem:[%s14 + $0xa0] sm:$0xff]
  %v3211 = vld [vmem:[%s14 + $0xa8] sm:$0xff]
  %v3212 = vld [vmem:[%s14 + $0xb0] sm:$0xff]
  %v3213 = vld [vmem:[%s14 + $0xb8] sm:$0xff]
  %v3214 = vld [vmem:[%s14 + $0xc0] sm:$0xff]
  %v3215 = vld [vmem:[%s14 + $0xc8] sm:$0xff]
  %v3216 = vld [vmem:[%s14 + $0xd0] sm:$0xff]
  %v3217 = vld [vmem:[%s14 + $0xd8] sm:$0xff]
  %v3218 = vld [vmem:[%s14 + $0xe0] sm:$0xff]
  %v3219 = vld [vmem:[%s14 + $0xe8] sm:$0xff]
  %v3220 = vld [vmem:[%s14 + $0xf0] sm:$0xff]
  %v3221 = vld [vmem:[%s14 + $0xf8] sm:$0xff]
  %v3254 = vunpack.c.l.b16 %v3190
  %v3255 = vunpack.c.h.b16 %v3190
  %v3256 = vunpack.c.l.b16 %v3191
  %v3257 = vunpack.c.h.b16 %v3191
  %v3258 = vunpack.c.l.b16 %v3192
  %v3259 = vunpack.c.h.b16 %v3192
  %v3260 = vunpack.c.l.b16 %v3193
  %v3261 = vunpack.c.h.b16 %v3193
  %v3262 = vunpack.c.l.b16 %v3194
  %v3263 = vunpack.c.h.b16 %v3194
  %v3264 = vunpack.c.l.b16 %v3195
  %v3265 = vunpack.c.h.b16 %v3195
  %v3266 = vunpack.c.l.b16 %v3196
  %v3267 = vunpack.c.h.b16 %v3196
  %v3268 = vunpack.c.l.b16 %v3197
  %v3269 = vunpack.c.h.b16 %v3197
  %v3270 = vunpack.c.l.b16 %v3198
  %v3271 = vunpack.c.h.b16 %v3198
  %v3272 = vunpack.c.l.b16 %v3199
  %v3273 = vunpack.c.h.b16 %v3199
  %v3274 = vunpack.c.l.b16 %v3200
  %v3275 = vunpack.c.h.b16 %v3200
  %v3276 = vunpack.c.l.b16 %v3201
  %v3277 = vunpack.c.h.b16 %v3201
  %v3278 = vunpack.c.l.b16 %v3202
  %v3279 = vunpack.c.h.b16 %v3202
  %v3280 = vunpack.c.l.b16 %v3203
  %v3281 = vunpack.c.h.b16 %v3203
  %v3282 = vunpack.c.l.b16 %v3204
  %v3283 = vunpack.c.h.b16 %v3204
  %v3284 = vunpack.c.l.b16 %v3205
  %v3285 = vunpack.c.h.b16 %v3205
  %v3286 = vunpack.c.l.b16 %v3206
  %v3287 = vunpack.c.h.b16 %v3206
  %v3288 = vunpack.c.l.b16 %v3207
  %v3289 = vunpack.c.h.b16 %v3207
  %v3290 = vunpack.c.l.b16 %v3208
  %v3291 = vunpack.c.h.b16 %v3208
  %v3292 = vunpack.c.l.b16 %v3209
  %v3293 = vunpack.c.h.b16 %v3209
  %v3294 = vunpack.c.l.b16 %v3210
  %v3295 = vunpack.c.h.b16 %v3210
  %v3296 = vunpack.c.l.b16 %v3211
  %v3297 = vunpack.c.h.b16 %v3211
  %v3298 = vunpack.c.l.b16 %v3212
  %v3299 = vunpack.c.h.b16 %v3212
  %v3300 = vunpack.c.l.b16 %v3213
  %v3301 = vunpack.c.h.b16 %v3213
  %v3302 = vunpack.c.l.b16 %v3214
  %v3303 = vunpack.c.h.b16 %v3214
  %v3304 = vunpack.c.l.b16 %v3215
  %v3305 = vunpack.c.h.b16 %v3215
  %v3306 = vunpack.c.l.b16 %v3216
  %v3307 = vunpack.c.h.b16 %v3216
  %v3308 = vunpack.c.l.b16 %v3217
  %v3309 = vunpack.c.h.b16 %v3217
  %v3310 = vunpack.c.l.b16 %v3218
  %v3311 = vunpack.c.h.b16 %v3218
  %v3312 = vunpack.c.l.b16 %v3219
  %v3313 = vunpack.c.h.b16 %v3219
  %v3314 = vunpack.c.l.b16 %v3220
  %v3315 = vunpack.c.h.b16 %v3220
  %v3316 = vunpack.c.l.b16 %v3221
  %v3317 = vunpack.c.h.b16 %v3221
  %v3318 = vpack.c.b16 %v3258, %v3254
  %v3319 = vpack.c.b16 %v3259, %v3255
  %v3320 = vpack.c.b16 %v3260, %v3256
  %v3321 = vpack.c.b16 %v3261, %v3257
  %v3322 = vpack.c.b16 %v3266, %v3262
  %v3323 = vpack.c.b16 %v3267, %v3263
  %v3324 = vpack.c.b16 %v3268, %v3264
  %v3325 = vpack.c.b16 %v3269, %v3265
  %v3326 = vpack.c.b16 %v3274, %v3270
  %v3327 = vpack.c.b16 %v3275, %v3271
  %v3328 = vpack.c.b16 %v3276, %v3272
  %v3329 = vpack.c.b16 %v3277, %v3273
  %v3330 = vpack.c.b16 %v3282, %v3278
  %v3331 = vpack.c.b16 %v3283, %v3279
  %v3332 = vpack.c.b16 %v3284, %v3280
  %v3333 = vpack.c.b16 %v3285, %v3281
  %v3334 = vpack.c.b16 %v3290, %v3286
  %v3335 = vpack.c.b16 %v3291, %v3287
  %v3336 = vpack.c.b16 %v3292, %v3288
  %v3337 = vpack.c.b16 %v3293, %v3289
  %v3338 = vpack.c.b16 %v3298, %v3294
  %v3339 = vpack.c.b16 %v3299, %v3295
  %v3340 = vpack.c.b16 %v3300, %v3296
  %v3341 = vpack.c.b16 %v3301, %v3297
  %v3342 = vpack.c.b16 %v3306, %v3302
  %v3343 = vpack.c.b16 %v3307, %v3303
  %v3344 = vpack.c.b16 %v3308, %v3304
  %v3345 = vpack.c.b16 %v3309, %v3305
  %v3346 = vpack.c.b16 %v3314, %v3310
  %v3347 = vpack.c.b16 %v3315, %v3311
  %v3348 = vpack.c.b16 %v3316, %v3312
  %v3349 = vpack.c.b16 %v3317, %v3313
  %3382 = vmatprep.subr.bf16.mxu0 %v3319
  %3383 = vmatpush1.bf16.msra.mxu0 %v3318
  %3384 = vmatprep.subr.bf16.mxu0 %v3323
  %3385 = vmatpush1.bf16.msra.mxu0 %v3322
  %3386 = vmatprep.subr.bf16.mxu0 %v3327
  %3387 = vmatpush1.bf16.msra.mxu0 %v3326
  %3388 = vmatprep.subr.bf16.mxu0 %v3331
  %3389 = vmatpush1.bf16.msra.mxu0 %v3330
  %3390 = vmatprep.subr.bf16.mxu0 %v3335
  %3391 = vmatpush1.bf16.msra.mxu0 %v3334
  %3392 = vmatprep.subr.bf16.mxu0 %v3339
  %3393 = vmatpush1.bf16.msra.mxu0 %v3338
  %3394 = vmatprep.subr.bf16.mxu0 %v3343
  %3395 = vmatpush1.bf16.msra.mxu0 %v3342
  %3396 = vmatprep.subr.bf16.mxu0 %v3347
  %3397 = vmatpush1.bf16.msra.mxu0 %v3346
  %3398 = vmatprep.subr.bf16.mxu0 0
  %3399 = vmatpush1.bf16.msra.mxu0 0
  %3400 = vmatprep.subr.bf16.mxu0 0
  %3401 = vmatpush1.bf16.msra.mxu0 0
  %3402 = vmatprep.subr.bf16.mxu0 0
  %3403 = vmatpush1.bf16.msra.mxu0 0
  %3404 = vmatprep.subr.bf16.mxu0 0
  %3405 = vmatpush1.bf16.msra.mxu0 0
  %3406 = vmatprep.subr.bf16.mxu0 0
  %3407 = vmatpush1.bf16.msra.mxu0 0
  %3408 = vmatprep.subr.bf16.mxu0 0
  %3409 = vmatpush1.bf16.msra.mxu0 0
  %3410 = vmatprep.subr.bf16.mxu0 0
  %3411 = vmatpush1.bf16.msra.mxu0 0
  %3412 = vmatprep.subr.bf16.mxu0 0
  %3413 = vmatpush1.bf16.msra.mxu0 0
  %3414 = vmatprep.mubr.bf16.mxu0 0
  %3415 = vmatmul.mubr.bf16.gmra.mrb[0].mxu0 0
  %v3416 = vpop.f32.mrb[0].mxu0
  %v3417 = vadd.f32 0.0, %v3416
  %v3418 = vpop.f32.mrb[0].mxu0
  %v3419 = vadd.f32 0.0, %v3418
  %v3420 = vpop.f32.mrb[0].mxu0
  %v3421 = vadd.f32 0.0, %v3420
  %v3422 = vpop.f32.mrb[0].mxu0
  %v3423 = vadd.f32 0.0, %v3422
  %3424 = vmatprep.mubr.bf16.mxu0 0
  %3425 = vmatmul.mubr.bf16.gmra.mrb[0].mxu0 0
  %v3426 = vpop.f32.mrb[0].mxu0
  %v3427 = vadd.f32 0.0, %v3426
  %v3428 = vpop.f32.mrb[0].mxu0
  %v3429 = vadd.f32 0.0, %v3428
  %v3430 = vpop.f32.mrb[0].mxu0
  %v3431 = vadd.f32 0.0, %v3430
  %v3432 = vpop.f32.mrb[0].mxu0
  %v3433 = vadd.f32 0.0, %v3432
  %3434 = vdwg.mxu0
  %3435 = vmatprep.subr.bf16.mxu0 %v3321
  %3436 = vmatpush1.bf16.msra.mxu0 %v3320
  %3437 = vmatprep.subr.bf16.mxu0 %v3325
  %3438 = vmatpush1.bf16.msra.mxu0 %v3324
  %3439 = vmatprep.subr.bf16.mxu0 %v3329
  %3440 = vmatpush1.bf16.msra.mxu0 %v3328
  %3441 = vmatprep.subr.bf16.mxu0 %v3333
  %3442 = vmatpush1.bf16.msra.mxu0 %v3332
  %3443 = vmatprep.subr.bf16.mxu0 %v3337
  %3444 = vmatpush1.bf16.msra.mxu0 %v3336
  %3445 = vmatprep.subr.bf16.mxu0 %v3341
  %3446 = vmatpush1.bf16.msra.mxu0 %v3340
  %3447 = vmatprep.subr.bf16.mxu0 %v3345
  %3448 = vmatpush1.bf16.msra.mxu0 %v3344
  %3449 = vmatprep.subr.bf16.mxu0 %v3349
  %3450 = vmatpush1.bf16.msra.mxu0 %v3348
  %3451 = vmatprep.subr.bf16.mxu0 0
  %3452 = vmatpush1.bf16.msra.mxu0 0
  %3453 = vmatprep.subr.bf16.mxu0 0
  %3454 = vmatpush1.bf16.msra.mxu0 0
  %3455 = vmatprep.subr.bf16.mxu0 0
  %3456 = vmatpush1.bf16.msra.mxu0 0
  %3457 = vmatprep.subr.bf16.mxu0 0
  %3458 = vmatpush1.bf16.msra.mxu0 0
  %3459 = vmatprep.subr.bf16.mxu0 0
  %3460 = vmatpush1.bf16.msra.mxu0 0
  %3461 = vmatprep.subr.bf16.mxu0 0
  %3462 = vmatpush1.bf16.msra.mxu0 0
  %3463 = vmatprep.subr.bf16.mxu0 0
  %3464 = vmatpush1.bf16.msra.mxu0 0
  %3465 = vmatprep.subr.bf16.mxu0 0
  %3466 = vmatpush1.bf16.msra.mxu0 0
  %3467 = vmatprep.mubr.bf16.mxu0 0
  %3468 = vmatmul.mubr.bf16.gmra.mrb[0].mxu0 0
  %v3469 = vpop.f32.mrb[0].mxu0
  %v3470 = vadd.f32 0.0, %v3469
  %v3471 = vpop.f32.mrb[0].mxu0
  %v3472 = vadd.f32 0.0, %v3471
  %v3473 = vpop.f32.mrb[0].mxu0
  %v3474 = vadd.f32 0.0, %v3473
  %v3475 = vpop.f32.mrb[0].mxu0
  %v3476 = vadd.f32 0.0, %v3475
  %3477 = vmatprep.mubr.bf16.mxu0 0
  %3478 = vmatmul.mubr.bf16.gmra.mrb[0].mxu0 0
  %v3479 = vpop.f32.mrb[0].mxu0
  %v3480 = vadd.f32 0.0, %v3479
  %v3481 = vpop.f32.mrb[0].mxu0
  %v3482 = vadd.f32 0.0, %v3481
  %v3483 = vpop.f32.mrb[0].mxu0
  %v3484 = vadd.f32 0.0, %v3483
  %v3485 = vpop.f32.mrb[0].mxu0
  %v3486 = vadd.f32 0.0, %v3485
  %3487 = vdwg.mxu0
  %v3488 = vadd.f32 %v3174, %v3417
  %v3489 = vadd.f32 %v3175, %v3419
  %v3490 = vadd.f32 %v3176, %v3470
  %v3491 = vadd.f32 %v3177, %v3472
  %v3492 = vadd.f32 %v3178, %v3421
  %v3493 = vadd.f32 %v3179, %v3423
  %v3494 = vadd.f32 %v3180, %v3474
  %v3495 = vadd.f32 %v3181, %v3476
  %v3496 = vadd.f32 %v3182, %v3427
  %v3497 = vadd.f32 %v3183, %v3429
  %v3498 = vadd.f32 %v3184, %v3480
  %v3499 = vadd.f32 %v3185, %v3482
  %v3500 = vadd.f32 %v3186, %v3431
  %v3501 = vadd.f32 %v3187, %v3433
  %v3502 = vadd.f32 %v3188, %v3484
  %v3503 = vadd.f32 %v3189, %v3486
  %v3504 = vxor.u32 %v3488, 2147483648
  %v3505 = vxor.u32 %v3492, 2147483648
  %v3506 = vxor.u32 %v3496, 2147483648
  %v3507 = vxor.u32 %v3500, 2147483648
  %v3508 = vmul.f32 %v3504, 1.442695
  %v3509 = vpow.pop %v3508
  %v3510 = vmul.f32 %v3505, 1.442695
  %v3511 = vpow.pop %v3510
  %v3512 = vmul.f32 %v3506, 1.442695
  %v3513 = vpow.pop %v3512
  %v3514 = vmul.f32 %v3507, 1.442695
  %v3515 = vpow.pop %v3514
  %v3516 = vadd.f32 %v3509, 1.0
  %v3517 = vadd.f32 %v3511, 1.0
  %v3518 = vadd.f32 %v3513, 1.0
  %v3519 = vadd.f32 %v3515, 1.0
  %v3520 = vrcp.pop %v3516
  %v3521 = vmul.f32 1.0, %v3520
  %v3522 = vrcp.pop %v3517
  %v3523 = vmul.f32 1.0, %v3522
  %v3524 = vrcp.pop %v3518
  %v3525 = vmul.f32 1.0, %v3524
  %v3526 = vrcp.pop %v3519
  %v3527 = vmul.f32 1.0, %v3526
  %v3528 = vxor.u32 %v3489, 2147483648
  %v3529 = vxor.u32 %v3493, 2147483648
  %v3530 = vxor.u32 %v3497, 2147483648
  %v3531 = vxor.u32 %v3501, 2147483648
  %v3532 = vmul.f32 %v3528, 1.442695
  %v3533 = vpow.pop %v3532
  %v3534 = vmul.f32 %v3529, 1.442695
  %v3535 = vpow.pop %v3534
  %v3536 = vmul.f32 %v3530, 1.442695
  %v3537 = vpow.pop %v3536
  %v3538 = vmul.f32 %v3531, 1.442695
  %v3539 = vpow.pop %v3538
  %v3540 = vadd.f32 %v3533, 1.0
  %v3541 = vadd.f32 %v3535, 1.0
  %v3542 = vadd.f32 %v3537, 1.0
  %v3543 = vadd.f32 %v3539, 1.0
  %v3544 = vrcp.pop %v3540
  %v3545 = vmul.f32 1.0, %v3544
  %v3546 = vrcp.pop %v3541
  %v3547 = vmul.f32 1.0, %v3546
  %v3548 = vrcp.pop %v3542
  %v3549 = vmul.f32 1.0, %v3548
  %v3550 = vrcp.pop %v3543
  %v3551 = vmul.f32 1.0, %v3550
  %v3552 = vtanh.pop %v3490
  %v3553 = vtanh.pop %v3494
  %v3554 = vtanh.pop %v3498
  %v3555 = vtanh.pop %v3502
  %v3556 = vxor.u32 %v3491, 2147483648
  %v3557 = vxor.u32 %v3495, 2147483648
  %v3558 = vxor.u32 %v3499, 2147483648
  %v3559 = vxor.u32 %v3503, 2147483648
  %v3560 = vmul.f32 %v3556, 1.442695
  %v3561 = vpow.pop %v3560
  %v3562 = vmul.f32 %v3557, 1.442695
  %v3563 = vpow.pop %v3562
  %v3564 = vmul.f32 %v3558, 1.442695
  %v3565 = vpow.pop %v3564
  %v3566 = vmul.f32 %v3559, 1.442695
  %v3567 = vpow.pop %v3566
  %v3568 = vadd.f32 %v3561, 1.0
  %v3569 = vadd.f32 %v3563, 1.0
  %v3570 = vadd.f32 %v3565, 1.0
  %v3571 = vadd.f32 %v3567, 1.0
  %v3572 = vrcp.pop %v3568
  %v3573 = vmul.f32 1.0, %v3572
  %v3574 = vrcp.pop %v3569
  %v3575 = vmul.f32 1.0, %v3574
  %v3576 = vrcp.pop %v3570
  %v3577 = vmul.f32 1.0, %v3576
  %v3578 = vrcp.pop %v3571
  %v3579 = vmul.f32 1.0, %v3578
  %v3580 = vmul.f32 %v3545, 0.0
  %v3581 = vmul.f32 %v3547, 0.0
  %v3582 = vmul.f32 %v3549, 0.0
  %v3583 = vmul.f32 %v3551, 0.0
  %v3584 = vmul.f32 %v3521, %v3552
  %v3585 = vmul.f32 %v3523, %v3553
  %v3586 = vmul.f32 %v3525, %v3554
  %v3587 = vmul.f32 %v3527, %v3555
  %v3588 = vadd.f32 %v3580, %v3584
  %v3589 = vadd.f32 %v3581, %v3585
  %v3590 = vadd.f32 %v3582, %v3586
  %v3591 = vadd.f32 %v3583, %v3587
  %v3592 = vtanh.pop %v3588
  %v3593 = vtanh.pop %v3589
  %v3594 = vtanh.pop %v3590
  %v3595 = vtanh.pop %v3591
  %v3596 = vmul.f32 %v3573, %v3592
  %v3597 = vmul.f32 %v3575, %v3593
  %v3598 = vmul.f32 %v3577, %v3594
  %v3599 = vmul.f32 %v3579, %v3595
  %v3600 = vpack.c.bf16 %v3597, %v3596
  %v3601 = vpack.c.bf16 %v3599, %v3598
  %v3602 = vld [vmem:[%s16] sm:$0xff]
  %v3603 = vld [vmem:[%s16 + $0x8] sm:$0xff]
  %v3604 = vld [vmem:[%s16 + $0x10] sm:$0xff]
  %v3605 = vld [vmem:[%s16 + $0x18] sm:$0xff]
  %v3606 = vld [vmem:[%s16 + $0x20] sm:$0xff]
  %v3607 = vld [vmem:[%s16 + $0x28] sm:$0xff]
  %v3608 = vld [vmem:[%s16 + $0x30] sm:$0xff]
  %v3609 = vld [vmem:[%s16 + $0x38] sm:$0xff]
  %v3610 = vld [vmem:[%s16 + $0x40] sm:$0xff]
  %v3611 = vld [vmem:[%s16 + $0x48] sm:$0xff]
  %v3612 = vld [vmem:[%s16 + $0x50] sm:$0xff]
  %v3613 = vld [vmem:[%s16 + $0x58] sm:$0xff]
  %v3614 = vld [vmem:[%s16 + $0x60] sm:$0xff]
  %v3615 = vld [vmem:[%s16 + $0x68] sm:$0xff]
  %v3616 = vld [vmem:[%s16 + $0x70] sm:$0xff]
  %v3617 = vld [vmem:[%s16 + $0x78] sm:$0xff]
  %v3618 = vld [vmem:[%s16 + $0x80] sm:$0xff]
  %v3619 = vld [vmem:[%s16 + $0x88] sm:$0xff]
  %v3620 = vld [vmem:[%s16 + $0x90] sm:$0xff]
  %v3621 = vld [vmem:[%s16 + $0x98] sm:$0xff]
  %v3622 = vld [vmem:[%s16 + $0xa0] sm:$0xff]
  %v3623 = vld [vmem:[%s16 + $0xa8] sm:$0xff]
  %v3624 = vld [vmem:[%s16 + $0xb0] sm:$0xff]
  %v3625 = vld [vmem:[%s16 + $0xb8] sm:$0xff]
  %v3626 = vld [vmem:[%s16 + $0xc0] sm:$0xff]
  %v3627 = vld [vmem:[%s16 + $0xc8] sm:$0xff]
  %v3628 = vld [vmem:[%s16 + $0xd0] sm:$0xff]
  %v3629 = vld [vmem:[%s16 + $0xd8] sm:$0xff]
  %v3630 = vld [vmem:[%s16 + $0xe0] sm:$0xff]
  %v3631 = vld [vmem:[%s16 + $0xe8] sm:$0xff]
  %v3632 = vld [vmem:[%s16 + $0xf0] sm:$0xff]
  %v3633 = vld [vmem:[%s16 + $0xf8] sm:$0xff]
  %v3635 = vlaneseq
  %v3636 = vshrl.u32 %v3635, 7
  %v3637 = vsub.s32 0, %v3636
  %v3638 = vrot.slane %v3173, %v3637
  %v3639 = vlaneseq
  %v3640 = vshrl.u32 %v3639, 7
  %v3641 = vsub.s32 1, %v3640
  %v3642 = vrot.slane %v3173, %v3641
  %v3643 = vlaneseq
  %v3644 = vshrl.u32 %v3643, 7
  %v3645 = vsub.s32 2, %v3644
  %v3646 = vrot.slane %v3173, %v3645
  %v3647 = vlaneseq
  %v3648 = vshrl.u32 %v3647, 7
  %v3649 = vsub.s32 3, %v3648
  %v3650 = vrot.slane %v3173, %v3649
  %v3687 = vunpack.c.l.b16 %v3602
  %v3688 = vunpack.c.h.b16 %v3602
  %v3689 = vunpack.c.l.b16 %v3603
  %v3690 = vunpack.c.h.b16 %v3603
  %v3691 = vunpack.c.l.b16 %v3604
  %v3692 = vunpack.c.h.b16 %v3604
  %v3693 = vunpack.c.l.b16 %v3605
  %v3694 = vunpack.c.h.b16 %v3605
  %v3695 = vunpack.c.l.b16 %v3606
  %v3696 = vunpack.c.h.b16 %v3606
  %v3697 = vunpack.c.l.b16 %v3607
  %v3698 = vunpack.c.h.b16 %v3607
  %v3699 = vunpack.c.l.b16 %v3608
  %v3700 = vunpack.c.h.b16 %v3608
  %v3701 = vunpack.c.l.b16 %v3609
  %v3702 = vunpack.c.h.b16 %v3609
  %v3703 = vunpack.c.l.b16 %v3610
  %v3704 = vunpack.c.h.b16 %v3610
  %v3705 = vunpack.c.l.b16 %v3611
  %v3706 = vunpack.c.h.b16 %v3611
  %v3707 = vunpack.c.l.b16 %v3612
  %v3708 = vunpack.c.h.b16 %v3612
  %v3709 = vunpack.c.l.b16 %v3613
  %v3710 = vunpack.c.h.b16 %v3613
  %v3711 = vunpack.c.l.b16 %v3614
  %v3712 = vunpack.c.h.b16 %v3614
  %v3713 = vunpack.c.l.b16 %v3615
  %v3714 = vunpack.c.h.b16 %v3615
  %v3715 = vunpack.c.l.b16 %v3616
  %v3716 = vunpack.c.h.b16 %v3616
  %v3717 = vunpack.c.l.b16 %v3617
  %v3718 = vunpack.c.h.b16 %v3617
  %v3719 = vunpack.c.l.b16 %v3618
  %v3720 = vunpack.c.h.b16 %v3618
  %v3721 = vunpack.c.l.b16 %v3619
  %v3722 = vunpack.c.h.b16 %v3619
  %v3723 = vunpack.c.l.b16 %v3620
  %v3724 = vunpack.c.h.b16 %v3620
  %v3725 = vunpack.c.l.b16 %v3621
  %v3726 = vunpack.c.h.b16 %v3621
  %v3727 = vunpack.c.l.b16 %v3622
  %v3728 = vunpack.c.h.b16 %v3622
  %v3729 = vunpack.c.l.b16 %v3623
  %v3730 = vunpack.c.h.b16 %v3623
  %v3731 = vunpack.c.l.b16 %v3624
  %v3732 = vunpack.c.h.b16 %v3624
  %v3733 = vunpack.c.l.b16 %v3625
  %v3734 = vunpack.c.h.b16 %v3625
  %v3735 = vunpack.c.l.b16 %v3626
  %v3736 = vunpack.c.h.b16 %v3626
  %v3737 = vunpack.c.l.b16 %v3627
  %v3738 = vunpack.c.h.b16 %v3627
  %v3739 = vunpack.c.l.b16 %v3628
  %v3740 = vunpack.c.h.b16 %v3628
  %v3741 = vunpack.c.l.b16 %v3629
  %v3742 = vunpack.c.h.b16 %v3629
  %v3743 = vunpack.c.l.b16 %v3630
  %v3744 = vunpack.c.h.b16 %v3630
  %v3745 = vunpack.c.l.b16 %v3631
  %v3746 = vunpack.c.h.b16 %v3631
  %v3747 = vunpack.c.l.b16 %v3632
  %v3748 = vunpack.c.h.b16 %v3632
  %v3749 = vunpack.c.l.b16 %v3633
  %v3750 = vunpack.c.h.b16 %v3633
  %v3751 = vpack.c.b16 %v3691, %v3687
  %v3752 = vpack.c.b16 %v3692, %v3688
  %v3753 = vpack.c.b16 %v3693, %v3689
  %v3754 = vpack.c.b16 %v3694, %v3690
  %v3755 = vpack.c.b16 %v3699, %v3695
  %v3756 = vpack.c.b16 %v3700, %v3696
  %v3757 = vpack.c.b16 %v3701, %v3697
  %v3758 = vpack.c.b16 %v3702, %v3698
  %v3759 = vpack.c.b16 %v3707, %v3703
  %v3760 = vpack.c.b16 %v3708, %v3704
  %v3761 = vpack.c.b16 %v3709, %v3705
  %v3762 = vpack.c.b16 %v3710, %v3706
  %v3763 = vpack.c.b16 %v3715, %v3711
  %v3764 = vpack.c.b16 %v3716, %v3712
  %v3765 = vpack.c.b16 %v3717, %v3713
  %v3766 = vpack.c.b16 %v3718, %v3714
  %v3767 = vpack.c.b16 %v3723, %v3719
  %v3768 = vpack.c.b16 %v3724, %v3720
  %v3769 = vpack.c.b16 %v3725, %v3721
  %v3770 = vpack.c.b16 %v3726, %v3722
  %v3771 = vpack.c.b16 %v3731, %v3727
  %v3772 = vpack.c.b16 %v3732, %v3728
  %v3773 = vpack.c.b16 %v3733, %v3729
  %v3774 = vpack.c.b16 %v3734, %v3730
  %v3775 = vpack.c.b16 %v3739, %v3735
  %v3776 = vpack.c.b16 %v3740, %v3736
  %v3777 = vpack.c.b16 %v3741, %v3737
  %v3778 = vpack.c.b16 %v3742, %v3738
  %v3779 = vpack.c.b16 %v3747, %v3743
  %v3780 = vpack.c.b16 %v3748, %v3744
  %v3781 = vpack.c.b16 %v3749, %v3745
  %v3782 = vpack.c.b16 %v3750, %v3746
  %3815 = vmatprep.subr.bf16.mxu0 %v3752
  %3816 = vmatpush1.bf16.msra.mxu0 %v3751
  %3817 = vmatprep.subr.bf16.mxu0 %v3756
  %3818 = vmatpush1.bf16.msra.mxu0 %v3755
  %3819 = vmatprep.subr.bf16.mxu0 %v3760
  %3820 = vmatpush1.bf16.msra.mxu0 %v3759
  %3821 = vmatprep.subr.bf16.mxu0 %v3764
  %3822 = vmatpush1.bf16.msra.mxu0 %v3763
  %3823 = vmatprep.subr.bf16.mxu0 %v3768
  %3824 = vmatpush1.bf16.msra.mxu0 %v3767
  %3825 = vmatprep.subr.bf16.mxu0 %v3772
  %3826 = vmatpush1.bf16.msra.mxu0 %v3771
  %3827 = vmatprep.subr.bf16.mxu0 %v3776
  %3828 = vmatpush1.bf16.msra.mxu0 %v3775
  %3829 = vmatprep.subr.bf16.mxu0 %v3780
  %3830 = vmatpush1.bf16.msra.mxu0 %v3779
  %3831 = vmatprep.subr.bf16.mxu0 0
  %3832 = vmatpush1.bf16.msra.mxu0 0
  %3833 = vmatprep.subr.bf16.mxu0 0
  %3834 = vmatpush1.bf16.msra.mxu0 0
  %3835 = vmatprep.subr.bf16.mxu0 0
  %3836 = vmatpush1.bf16.msra.mxu0 0
  %3837 = vmatprep.subr.bf16.mxu0 0
  %3838 = vmatpush1.bf16.msra.mxu0 0
  %3839 = vmatprep.subr.bf16.mxu0 0
  %3840 = vmatpush1.bf16.msra.mxu0 0
  %3841 = vmatprep.subr.bf16.mxu0 0
  %3842 = vmatpush1.bf16.msra.mxu0 0
  %3843 = vmatprep.subr.bf16.mxu0 0
  %3844 = vmatpush1.bf16.msra.mxu0 0
  %3845 = vmatprep.subr.bf16.mxu0 0
  %3846 = vmatpush1.bf16.msra.mxu0 0
  %3847 = vmatprep.mubr.bf16.mxu0 0
  %3848 = vmatmul.mubr.bf16.gmra.mrb[0].mxu0 %v3600
  %v3849 = vpop.f32.mrb[0].mxu0
  %v3850 = vadd.f32 %v3638, %v3849
  %v3851 = vpop.f32.mrb[0].mxu0
  %v3852 = vadd.f32 %v3642, %v3851
  %v3853 = vpop.f32.mrb[0].mxu0
  %v3854 = vadd.f32 %v3638, %v3853
  %v3855 = vpop.f32.mrb[0].mxu0
  %v3856 = vadd.f32 %v3642, %v3855
  %3857 = vmatprep.mubr.bf16.mxu0 0
  %3858 = vmatmul.mubr.bf16.gmra.mrb[0].mxu0 %v3601
  %v3859 = vpop.f32.mrb[0].mxu0
  %v3860 = vadd.f32 %v3638, %v3859
  %v3861 = vpop.f32.mrb[0].mxu0
  %v3862 = vadd.f32 %v3642, %v3861
  %v3863 = vpop.f32.mrb[0].mxu0
  %v3864 = vadd.f32 %v3638, %v3863
  %v3865 = vpop.f32.mrb[0].mxu0
  %v3866 = vadd.f32 %v3642, %v3865
  %3867 = vdwg.mxu0
  %3868 = vmatprep.subr.bf16.mxu0 %v3754
  %3869 = vmatpush1.bf16.msra.mxu0 %v3753
  %3870 = vmatprep.subr.bf16.mxu0 %v3758
  %3871 = vmatpush1.bf16.msra.mxu0 %v3757
  %3872 = vmatprep.subr.bf16.mxu0 %v3762
  %3873 = vmatpush1.bf16.msra.mxu0 %v3761
  %3874 = vmatprep.subr.bf16.mxu0 %v3766
  %3875 = vmatpush1.bf16.msra.mxu0 %v3765
  %3876 = vmatprep.subr.bf16.mxu0 %v3770
  %3877 = vmatpush1.bf16.msra.mxu0 %v3769
  %3878 = vmatprep.subr.bf16.mxu0 %v3774
  %3879 = vmatpush1.bf16.msra.mxu0 %v3773
  %3880 = vmatprep.subr.bf16.mxu0 %v3778
  %3881 = vmatpush1.bf16.msra.mxu0 %v3777
  %3882 = vmatprep.subr.bf16.mxu0 %v3782
  %3883 = vmatpush1.bf16.msra.mxu0 %v3781
  %3884 = vmatprep.subr.bf16.mxu0 0
  %3885 = vmatpush1.bf16.msra.mxu0 0
  %3886 = vmatprep.subr.bf16.mxu0 0
  %3887 = vmatpush1.bf16.msra.mxu0 0
  %3888 = vmatprep.subr.bf16.mxu0 0
  %3889 = vmatpush1.bf16.msra.mxu0 0
  %3890 = vmatprep.subr.bf16.mxu0 0
  %3891 = vmatpush1.bf16.msra.mxu0 0
  %3892 = vmatprep.subr.bf16.mxu0 0
  %3893 = vmatpush1.bf16.msra.mxu0 0
  %3894 = vmatprep.subr.bf16.mxu0 0
  %3895 = vmatpush1.bf16.msra.mxu0 0
  %3896 = vmatprep.subr.bf16.mxu0 0
  %3897 = vmatpush1.bf16.msra.mxu0 0
  %3898 = vmatprep.subr.bf16.mxu0 0
  %3899 = vmatpush1.bf16.msra.mxu0 0
  %3900 = vmatprep.mubr.bf16.mxu0 0
  %3901 = vmatmul.mubr.bf16.gmra.mrb[0].mxu0 %v3600
  %v3902 = vpop.f32.mrb[0].mxu0
  %v3903 = vadd.f32 %v3646, %v3902
  %v3904 = vpop.f32.mrb[0].mxu0
  %v3905 = vadd.f32 %v3650, %v3904
  %v3906 = vpop.f32.mrb[0].mxu0
  %v3907 = vadd.f32 %v3646, %v3906
  %v3908 = vpop.f32.mrb[0].mxu0
  %v3909 = vadd.f32 %v3650, %v3908
  %3910 = vmatprep.mubr.bf16.mxu0 0
  %3911 = vmatmul.mubr.bf16.gmra.mrb[0].mxu0 %v3601
  %v3912 = vpop.f32.mrb[0].mxu0
  %v3913 = vadd.f32 %v3646, %v3912
  %v3914 = vpop.f32.mrb[0].mxu0
  %v3915 = vadd.f32 %v3650, %v3914
  %v3916 = vpop.f32.mrb[0].mxu0
  %v3917 = vadd.f32 %v3646, %v3916
  %v3918 = vpop.f32.mrb[0].mxu0
  %v3919 = vadd.f32 %v3650, %v3918
  %3920 = vdwg.mxu0
  %v3921 = vld [vmem:[%s17] sm:$0xff]
  %v3922 = vld [vmem:[%s17 + $0x8] sm:$0xff]
  %v3923 = vld [vmem:[%s17 + $0x10] sm:$0xff]
  %v3924 = vld [vmem:[%s17 + $0x18] sm:$0xff]
  %v3925 = vld [vmem:[%s17 + $0x20] sm:$0xff]
  %v3926 = vld [vmem:[%s17 + $0x28] sm:$0xff]
  %v3927 = vld [vmem:[%s17 + $0x30] sm:$0xff]
  %v3928 = vld [vmem:[%s17 + $0x38] sm:$0xff]
  %v3929 = vld [vmem:[%s17 + $0x40] sm:$0xff]
  %v3930 = vld [vmem:[%s17 + $0x48] sm:$0xff]
  %v3931 = vld [vmem:[%s17 + $0x50] sm:$0xff]
  %v3932 = vld [vmem:[%s17 + $0x58] sm:$0xff]
  %v3933 = vld [vmem:[%s17 + $0x60] sm:$0xff]
  %v3934 = vld [vmem:[%s17 + $0x68] sm:$0xff]
  %v3935 = vld [vmem:[%s17 + $0x70] sm:$0xff]
  %v3936 = vld [vmem:[%s17 + $0x78] sm:$0xff]
  %v3937 = vld [vmem:[%s17 + $0x80] sm:$0xff]
  %v3938 = vld [vmem:[%s17 + $0x88] sm:$0xff]
  %v3939 = vld [vmem:[%s17 + $0x90] sm:$0xff]
  %v3940 = vld [vmem:[%s17 + $0x98] sm:$0xff]
  %v3941 = vld [vmem:[%s17 + $0xa0] sm:$0xff]
  %v3942 = vld [vmem:[%s17 + $0xa8] sm:$0xff]
  %v3943 = vld [vmem:[%s17 + $0xb0] sm:$0xff]
  %v3944 = vld [vmem:[%s17 + $0xb8] sm:$0xff]
  %v3945 = vld [vmem:[%s17 + $0xc0] sm:$0xff]
  %v3946 = vld [vmem:[%s17 + $0xc8] sm:$0xff]
  %v3947 = vld [vmem:[%s17 + $0xd0] sm:$0xff]
  %v3948 = vld [vmem:[%s17 + $0xd8] sm:$0xff]
  %v3949 = vld [vmem:[%s17 + $0xe0] sm:$0xff]
  %v3950 = vld [vmem:[%s17 + $0xe8] sm:$0xff]
  %v3951 = vld [vmem:[%s17 + $0xf0] sm:$0xff]
  %v3952 = vld [vmem:[%s17 + $0xf8] sm:$0xff]
  %v3985 = vunpack.c.l.b16 %v3921
  %v3986 = vunpack.c.h.b16 %v3921
  %v3987 = vunpack.c.l.b16 %v3922
  %v3988 = vunpack.c.h.b16 %v3922
  %v3989 = vunpack.c.l.b16 %v3923
  %v3990 = vunpack.c.h.b16 %v3923
  %v3991 = vunpack.c.l.b16 %v3924
  %v3992 = vunpack.c.h.b16 %v3924
  %v3993 = vunpack.c.l.b16 %v3925
  %v3994 = vunpack.c.h.b16 %v3925
  %v3995 = vunpack.c.l.b16 %v3926
  %v3996 = vunpack.c.h.b16 %v3926
  %v3997 = vunpack.c.l.b16 %v3927
  %v3998 = vunpack.c.h.b16 %v3927
  %v3999 = vunpack.c.l.b16 %v3928
  %v4000 = vunpack.c.h.b16 %v3928
  %v4001 = vunpack.c.l.b16 %v3929
  %v4002 = vunpack.c.h.b16 %v3929
  %v4003 = vunpack.c.l.b16 %v3930
  %v4004 = vunpack.c.h.b16 %v3930
  %v4005 = vunpack.c.l.b16 %v3931
  %v4006 = vunpack.c.h.b16 %v3931
  %v4007 = vunpack.c.l.b16 %v3932
  %v4008 = vunpack.c.h.b16 %v3932
  %v4009 = vunpack.c.l.b16 %v3933
  %v4010 = vunpack.c.h.b16 %v3933
  %v4011 = vunpack.c.l.b16 %v3934
  %v4012 = vunpack.c.h.b16 %v3934
  %v4013 = vunpack.c.l.b16 %v3935
  %v4014 = vunpack.c.h.b16 %v3935
  %v4015 = vunpack.c.l.b16 %v3936
  %v4016 = vunpack.c.h.b16 %v3936
  %v4017 = vunpack.c.l.b16 %v3937
  %v4018 = vunpack.c.h.b16 %v3937
  %v4019 = vunpack.c.l.b16 %v3938
  %v4020 = vunpack.c.h.b16 %v3938
  %v4021 = vunpack.c.l.b16 %v3939
  %v4022 = vunpack.c.h.b16 %v3939
  %v4023 = vunpack.c.l.b16 %v3940
  %v4024 = vunpack.c.h.b16 %v3940
  %v4025 = vunpack.c.l.b16 %v3941
  %v4026 = vunpack.c.h.b16 %v3941
  %v4027 = vunpack.c.l.b16 %v3942
  %v4028 = vunpack.c.h.b16 %v3942
  %v4029 = vunpack.c.l.b16 %v3943
  %v4030 = vunpack.c.h.b16 %v3943
  %v4031 = vunpack.c.l.b16 %v3944
  %v4032 = vunpack.c.h.b16 %v3944
  %v4033 = vunpack.c.l.b16 %v3945
  %v4034 = vunpack.c.h.b16 %v3945
  %v4035 = vunpack.c.l.b16 %v3946
  %v4036 = vunpack.c.h.b16 %v3946
  %v4037 = vunpack.c.l.b16 %v3947
  %v4038 = vunpack.c.h.b16 %v3947
  %v4039 = vunpack.c.l.b16 %v3948
  %v4040 = vunpack.c.h.b16 %v3948
  %v4041 = vunpack.c.l.b16 %v3949
  %v4042 = vunpack.c.h.b16 %v3949
  %v4043 = vunpack.c.l.b16 %v3950
  %v4044 = vunpack.c.h.b16 %v3950
  %v4045 = vunpack.c.l.b16 %v3951
  %v4046 = vunpack.c.h.b16 %v3951
  %v4047 = vunpack.c.l.b16 %v3952
  %v4048 = vunpack.c.h.b16 %v3952
  %v4049 = vpack.c.b16 %v3989, %v3985
  %v4050 = vpack.c.b16 %v3990, %v3986
  %v4051 = vpack.c.b16 %v3991, %v3987
  %v4052 = vpack.c.b16 %v3992, %v3988
  %v4053 = vpack.c.b16 %v3997, %v3993
  %v4054 = vpack.c.b16 %v3998, %v3994
  %v4055 = vpack.c.b16 %v3999, %v3995
  %v4056 = vpack.c.b16 %v4000, %v3996
  %v4057 = vpack.c.b16 %v4005, %v4001
  %v4058 = vpack.c.b16 %v4006, %v4002
  %v4059 = vpack.c.b16 %v4007, %v4003
  %v4060 = vpack.c.b16 %v4008, %v4004
  %v4061 = vpack.c.b16 %v4013, %v4009
  %v4062 = vpack.c.b16 %v4014, %v4010
  %v4063 = vpack.c.b16 %v4015, %v4011
  %v4064 = vpack.c.b16 %v4016, %v4012
  %v4065 = vpack.c.b16 %v4021, %v4017
  %v4066 = vpack.c.b16 %v4022, %v4018
  %v4067 = vpack.c.b16 %v4023, %v4019
  %v4068 = vpack.c.b16 %v4024, %v4020
  %v4069 = vpack.c.b16 %v4029, %v4025
  %v4070 = vpack.c.b16 %v4030, %v4026
  %v4071 = vpack.c.b16 %v4031, %v4027
  %v4072 = vpack.c.b16 %v4032, %v4028
  %v4073 = vpack.c.b16 %v4037, %v4033
  %v4074 = vpack.c.b16 %v4038, %v4034
  %v4075 = vpack.c.b16 %v4039, %v4035
  %v4076 = vpack.c.b16 %v4040, %v4036
  %v4077 = vpack.c.b16 %v4045, %v4041
  %v4078 = vpack.c.b16 %v4046, %v4042
  %v4079 = vpack.c.b16 %v4047, %v4043
  %v4080 = vpack.c.b16 %v4048, %v4044
  %4113 = vmatprep.subr.bf16.mxu0 %v4050
  %4114 = vmatpush1.bf16.msra.mxu0 %v4049
  %4115 = vmatprep.subr.bf16.mxu0 %v4054
  %4116 = vmatpush1.bf16.msra.mxu0 %v4053
  %4117 = vmatprep.subr.bf16.mxu0 %v4058
  %4118 = vmatpush1.bf16.msra.mxu0 %v4057
  %4119 = vmatprep.subr.bf16.mxu0 %v4062
  %4120 = vmatpush1.bf16.msra.mxu0 %v4061
  %4121 = vmatprep.subr.bf16.mxu0 %v4066
  %4122 = vmatpush1.bf16.msra.mxu0 %v4065
  %4123 = vmatprep.subr.bf16.mxu0 %v4070
  %4124 = vmatpush1.bf16.msra.mxu0 %v4069
  %4125 = vmatprep.subr.bf16.mxu0 %v4074
  %4126 = vmatpush1.bf16.msra.mxu0 %v4073
  %4127 = vmatprep.subr.bf16.mxu0 %v4078
  %4128 = vmatpush1.bf16.msra.mxu0 %v4077
  %4129 = vmatprep.subr.bf16.mxu0 0
  %4130 = vmatpush1.bf16.msra.mxu0 0
  %4131 = vmatprep.subr.bf16.mxu0 0
  %4132 = vmatpush1.bf16.msra.mxu0 0
  %4133 = vmatprep.subr.bf16.mxu0 0
  %4134 = vmatpush1.bf16.msra.mxu0 0
  %4135 = vmatprep.subr.bf16.mxu0 0
  %4136 = vmatpush1.bf16.msra.mxu0 0
  %4137 = vmatprep.subr.bf16.mxu0 0
  %4138 = vmatpush1.bf16.msra.mxu0 0
  %4139 = vmatprep.subr.bf16.mxu0 0
  %4140 = vmatpush1.bf16.msra.mxu0 0
  %4141 = vmatprep.subr.bf16.mxu0 0
  %4142 = vmatpush1.bf16.msra.mxu0 0
  %4143 = vmatprep.subr.bf16.mxu0 0
  %4144 = vmatpush1.bf16.msra.mxu0 0
  %4145 = vmatprep.mubr.bf16.mxu0 0
  %4146 = vmatmul.mubr.bf16.gmra.mrb[0].mxu0 0
  %v4147 = vpop.f32.mrb[0].mxu0
  %v4148 = vadd.f32 0.0, %v4147
  %v4149 = vpop.f32.mrb[0].mxu0
  %v4150 = vadd.f32 0.0, %v4149
  %v4151 = vpop.f32.mrb[0].mxu0
  %v4152 = vadd.f32 0.0, %v4151
  %v4153 = vpop.f32.mrb[0].mxu0
  %v4154 = vadd.f32 0.0, %v4153
  %4155 = vmatprep.mubr.bf16.mxu0 0
  %4156 = vmatmul.mubr.bf16.gmra.mrb[0].mxu0 0
  %v4157 = vpop.f32.mrb[0].mxu0
  %v4158 = vadd.f32 0.0, %v4157
  %v4159 = vpop.f32.mrb[0].mxu0
  %v4160 = vadd.f32 0.0, %v4159
  %v4161 = vpop.f32.mrb[0].mxu0
  %v4162 = vadd.f32 0.0, %v4161
  %v4163 = vpop.f32.mrb[0].mxu0
  %v4164 = vadd.f32 0.0, %v4163
  %4165 = vdwg.mxu0
  %4166 = vmatprep.subr.bf16.mxu0 %v4052
  %4167 = vmatpush1.bf16.msra.mxu0 %v4051
  %4168 = vmatprep.subr.bf16.mxu0 %v4056
  %4169 = vmatpush1.bf16.msra.mxu0 %v4055
  %4170 = vmatprep.subr.bf16.mxu0 %v4060
  %4171 = vmatpush1.bf16.msra.mxu0 %v4059
  %4172 = vmatprep.subr.bf16.mxu0 %v4064
  %4173 = vmatpush1.bf16.msra.mxu0 %v4063
  %4174 = vmatprep.subr.bf16.mxu0 %v4068
  %4175 = vmatpush1.bf16.msra.mxu0 %v4067
  %4176 = vmatprep.subr.bf16.mxu0 %v4072
  %4177 = vmatpush1.bf16.msra.mxu0 %v4071
  %4178 = vmatprep.subr.bf16.mxu0 %v4076
  %4179 = vmatpush1.bf16.msra.mxu0 %v4075
  %4180 = vmatprep.subr.bf16.mxu0 %v4080
  %4181 = vmatpush1.bf16.msra.mxu0 %v4079
  %4182 = vmatprep.subr.bf16.mxu0 0
  %4183 = vmatpush1.bf16.msra.mxu0 0
  %4184 = vmatprep.subr.bf16.mxu0 0
  %4185 = vmatpush1.bf16.msra.mxu0 0
  %4186 = vmatprep.subr.bf16.mxu0 0
  %4187 = vmatpush1.bf16.msra.mxu0 0
  %4188 = vmatprep.subr.bf16.mxu0 0
  %4189 = vmatpush1.bf16.msra.mxu0 0
  %4190 = vmatprep.subr.bf16.mxu0 0
  %4191 = vmatpush1.bf16.msra.mxu0 0
  %4192 = vmatprep.subr.bf16.mxu0 0
  %4193 = vmatpush1.bf16.msra.mxu0 0
  %4194 = vmatprep.subr.bf16.mxu0 0
  %4195 = vmatpush1.bf16.msra.mxu0 0
  %4196 = vmatprep.subr.bf16.mxu0 0
  %4197 = vmatpush1.bf16.msra.mxu0 0
  %4198 = vmatprep.mubr.bf16.mxu0 0
  %4199 = vmatmul.mubr.bf16.gmra.mrb[0].mxu0 0
  %v4200 = vpop.f32.mrb[0].mxu0
  %v4201 = vadd.f32 0.0, %v4200
  %v4202 = vpop.f32.mrb[0].mxu0
  %v4203 = vadd.f32 0.0, %v4202
  %v4204 = vpop.f32.mrb[0].mxu0
  %v4205 = vadd.f32 0.0, %v4204
  %v4206 = vpop.f32.mrb[0].mxu0
  %v4207 = vadd.f32 0.0, %v4206
  %4208 = vmatprep.mubr.bf16.mxu0 0
  %4209 = vmatmul.mubr.bf16.gmra.mrb[0].mxu0 0
  %v4210 = vpop.f32.mrb[0].mxu0
  %v4211 = vadd.f32 0.0, %v4210
  %v4212 = vpop.f32.mrb[0].mxu0
  %v4213 = vadd.f32 0.0, %v4212
  %v4214 = vpop.f32.mrb[0].mxu0
  %v4215 = vadd.f32 0.0, %v4214
  %v4216 = vpop.f32.mrb[0].mxu0
  %v4217 = vadd.f32 0.0, %v4216
  %4218 = vdwg.mxu0
  %v4219 = vadd.f32 %v3850, %v4148
  %v4220 = vadd.f32 %v3852, %v4150
  %v4221 = vadd.f32 %v3903, %v4201
  %v4222 = vadd.f32 %v3905, %v4203
  %v4223 = vadd.f32 %v3854, %v4152
  %v4224 = vadd.f32 %v3856, %v4154
  %v4225 = vadd.f32 %v3907, %v4205
  %v4226 = vadd.f32 %v3909, %v4207
  %v4227 = vadd.f32 %v3860, %v4158
  %v4228 = vadd.f32 %v3862, %v4160
  %v4229 = vadd.f32 %v3913, %v4211
  %v4230 = vadd.f32 %v3915, %v4213
  %v4231 = vadd.f32 %v3864, %v4162
  %v4232 = vadd.f32 %v3866, %v4164
  %v4233 = vadd.f32 %v3917, %v4215
  %v4234 = vadd.f32 %v3919, %v4217
  %v4235 = vxor.u32 %v4219, 2147483648
  %v4236 = vxor.u32 %v4223, 2147483648
  %v4237 = vxor.u32 %v4227, 2147483648
  %v4238 = vxor.u32 %v4231, 2147483648
  %v4239 = vmul.f32 %v4235, 1.442695
  %v4240 = vpow.pop %v4239
  %v4241 = vmul.f32 %v4236, 1.442695
  %v4242 = vpow.pop %v4241
  %v4243 = vmul.f32 %v4237, 1.442695
  %v4244 = vpow.pop %v4243
  %v4245 = vmul.f32 %v4238, 1.442695
  %v4246 = vpow.pop %v4245
  %v4247 = vadd.f32 %v4240, 1.0
  %v4248 = vadd.f32 %v4242, 1.0
  %v4249 = vadd.f32 %v4244, 1.0
  %v4250 = vadd.f32 %v4246, 1.0
  %v4251 = vrcp.pop %v4247
  %v4252 = vmul.f32 1.0, %v4251
  %v4253 = vrcp.pop %v4248
  %v4254 = vmul.f32 1.0, %v4253
  %v4255 = vrcp.pop %v4249
  %v4256 = vmul.f32 1.0, %v4255
  %v4257 = vrcp.pop %v4250
  %v4258 = vmul.f32 1.0, %v4257
  %v4259 = vxor.u32 %v4220, 2147483648
  %v4260 = vxor.u32 %v4224, 2147483648
  %v4261 = vxor.u32 %v4228, 2147483648
  %v4262 = vxor.u32 %v4232, 2147483648
  %v4263 = vmul.f32 %v4259, 1.442695
  %v4264 = vpow.pop %v4263
  %v4265 = vmul.f32 %v4260, 1.442695
  %v4266 = vpow.pop %v4265
  %v4267 = vmul.f32 %v4261, 1.442695
  %v4268 = vpow.pop %v4267
  %v4269 = vmul.f32 %v4262, 1.442695
  %v4270 = vpow.pop %v4269
  %v4271 = vadd.f32 %v4264, 1.0
  %v4272 = vadd.f32 %v4266, 1.0
  %v4273 = vadd.f32 %v4268, 1.0
  %v4274 = vadd.f32 %v4270, 1.0
  %v4275 = vrcp.pop %v4271
  %v4276 = vmul.f32 1.0, %v4275
  %v4277 = vrcp.pop %v4272
  %v4278 = vmul.f32 1.0, %v4277
  %v4279 = vrcp.pop %v4273
  %v4280 = vmul.f32 1.0, %v4279
  %v4281 = vrcp.pop %v4274
  %v4282 = vmul.f32 1.0, %v4281
  %v4283 = vtanh.pop %v4221
  %v4284 = vtanh.pop %v4225
  %v4285 = vtanh.pop %v4229
  %v4286 = vtanh.pop %v4233
  %v4287 = vxor.u32 %v4222, 2147483648
  %v4288 = vxor.u32 %v4226, 2147483648
  %v4289 = vxor.u32 %v4230, 2147483648
  %v4290 = vxor.u32 %v4234, 2147483648
  %v4291 = vmul.f32 %v4287, 1.442695
  %v4292 = vpow.pop %v4291
  %v4293 = vmul.f32 %v4288, 1.442695
  %v4294 = vpow.pop %v4293
  %v4295 = vmul.f32 %v4289, 1.442695
  %v4296 = vpow.pop %v4295
  %v4297 = vmul.f32 %v4290, 1.442695
  %v4298 = vpow.pop %v4297
  %v4299 = vadd.f32 %v4292, 1.0
  %v4300 = vadd.f32 %v4294, 1.0
  %v4301 = vadd.f32 %v4296, 1.0
  %v4302 = vadd.f32 %v4298, 1.0
  %v4303 = vrcp.pop %v4299
  %v4304 = vmul.f32 1.0, %v4303
  %v4305 = vrcp.pop %v4300
  %v4306 = vmul.f32 1.0, %v4305
  %v4307 = vrcp.pop %v4301
  %v4308 = vmul.f32 1.0, %v4307
  %v4309 = vrcp.pop %v4302
  %v4310 = vmul.f32 1.0, %v4309
  %v4311 = vmul.f32 %v4276, 0.0
  %v4312 = vmul.f32 %v4278, 0.0
  %v4313 = vmul.f32 %v4280, 0.0
  %v4314 = vmul.f32 %v4282, 0.0
  %v4315 = vmul.f32 %v4252, %v4283
  %v4316 = vmul.f32 %v4254, %v4284
  %v4317 = vmul.f32 %v4256, %v4285
  %v4318 = vmul.f32 %v4258, %v4286
  %v4319 = vadd.f32 %v4311, %v4315
  %v4320 = vadd.f32 %v4312, %v4316
  %v4321 = vadd.f32 %v4313, %v4317
  %v4322 = vadd.f32 %v4314, %v4318
  %v4323 = vtanh.pop %v4319
  %v4324 = vtanh.pop %v4320
  %v4325 = vtanh.pop %v4321
  %v4326 = vtanh.pop %v4322
  %v4327 = vmul.f32 %v4304, %v4323
  %v4328 = vmul.f32 %v4306, %v4324
  %v4329 = vmul.f32 %v4308, %v4325
  %v4330 = vmul.f32 %v4310, %v4326
  %4331 = vst [vmem:[#allocation3] sm:$0xff] %v4327
  %4332 = vst [vmem:[#allocation3 + $0x8] sm:$0xff] %v4328
  %4333 = vst [vmem:[#allocation3 + $0x10] sm:$0xff] %v4329
  %4334 = vst [vmem:[#allocation3 + $0x18] sm:$0xff] %v4330
  %s4335 = scalar_lea.vmem [#allocation2], 128
  %v4336 = vld [vmem:[%s4335] sm:$0xff]
  %v4337 = vld [vmem:[%s4335 + $0x8] sm:$0xff]
  %v4338 = vld [vmem:[%s4335 + $0x10] sm:$0xff]
  %v4339 = vld [vmem:[%s4335 + $0x18] sm:$0xff]
  %v4340 = vld [vmem:[%s4335 + $0x20] sm:$0xff]
  %v4341 = vld [vmem:[%s4335 + $0x28] sm:$0xff]
  %v4342 = vld [vmem:[%s4335 + $0x30] sm:$0xff]
  %v4343 = vld [vmem:[%s4335 + $0x38] sm:$0xff]
  %v4344 = vld [vmem:[%s4335 + $0x40] sm:$0xff]
  %v4345 = vld [vmem:[%s4335 + $0x48] sm:$0xff]
  %v4346 = vld [vmem:[%s4335 + $0x50] sm:$0xff]
  %v4347 = vld [vmem:[%s4335 + $0x58] sm:$0xff]
  %v4348 = vld [vmem:[%s4335 + $0x60] sm:$0xff]
  %v4349 = vld [vmem:[%s4335 + $0x68] sm:$0xff]
  %v4350 = vld [vmem:[%s4335 + $0x70] sm:$0xff]
  %v4351 = vld [vmem:[%s4335 + $0x78] sm:$0xff]
  %v4352 = vld [vmem:[%s14] sm:$0xff]
  %v4353 = vld [vmem:[%s14 + $0x8] sm:$0xff]
  %v4354 = vld [vmem:[%s14 + $0x10] sm:$0xff]
  %v4355 = vld [vmem:[%s14 + $0x18] sm:$0xff]
  %v4356 = vld [vmem:[%s14 + $0x20] sm:$0xff]
  %v4357 = vld [vmem:[%s14 + $0x28] sm:$0xff]
  %v4358 = vld [vmem:[%s14 + $0x30] sm:$0xff]
  %v4359 = vld [vmem:[%s14 + $0x38] sm:$0xff]
  %v4360 = vld [vmem:[%s14 + $0x40] sm:$0xff]
  %v4361 = vld [vmem:[%s14 + $0x48] sm:$0xff]
  %v4362 = vld [vmem:[%s14 + $0x50] sm:$0xff]
  %v4363 = vld [vmem:[%s14 + $0x58] sm:$0xff]
  %v4364 = vld [vmem:[%s14 + $0x60] sm:$0xff]
  %v4365 = vld [vmem:[%s14 + $0x68] sm:$0xff]
  %v4366 = vld [vmem:[%s14 + $0x70] sm:$0xff]
  %v4367 = vld [vmem:[%s14 + $0x78] sm:$0xff]
  %v4368 = vld [vmem:[%s14 + $0x80] sm:$0xff]
  %v4369 = vld [vmem:[%s14 + $0x88] sm:$0xff]
  %v4370 = vld [vmem:[%s14 + $0x90] sm:$0xff]
  %v4371 = vld [vmem:[%s14 + $0x98] sm:$0xff]
  %v4372 = vld [vmem:[%s14 + $0xa0] sm:$0xff]
  %v4373 = vld [vmem:[%s14 + $0xa8] sm:$0xff]
  %v4374 = vld [vmem:[%s14 + $0xb0] sm:$0xff]
  %v4375 = vld [vmem:[%s14 + $0xb8] sm:$0xff]
  %v4376 = vld [vmem:[%s14 + $0xc0] sm:$0xff]
  %v4377 = vld [vmem:[%s14 + $0xc8] sm:$0xff]
  %v4378 = vld [vmem:[%s14 + $0xd0] sm:$0xff]
  %v4379 = vld [vmem:[%s14 + $0xd8] sm:$0xff]
  %v4380 = vld [vmem:[%s14 + $0xe0] sm:$0xff]
  %v4381 = vld [vmem:[%s14 + $0xe8] sm:$0xff]
  %v4382 = vld [vmem:[%s14 + $0xf0] sm:$0xff]
  %v4383 = vld [vmem:[%s14 + $0xf8] sm:$0xff]
  %v4416 = vunpack.c.l.b16 %v4352
  %v4417 = vunpack.c.h.b16 %v4352
  %v4418 = vunpack.c.l.b16 %v4353
  %v4419 = vunpack.c.h.b16 %v4353
  %v4420 = vunpack.c.l.b16 %v4354
  %v4421 = vunpack.c.h.b16 %v4354
  %v4422 = vunpack.c.l.b16 %v4355
  %v4423 = vunpack.c.h.b16 %v4355
  %v4424 = vunpack.c.l.b16 %v4356
  %v4425 = vunpack.c.h.b16 %v4356
  %v4426 = vunpack.c.l.b16 %v4357
  %v4427 = vunpack.c.h.b16 %v4357
  %v4428 = vunpack.c.l.b16 %v4358
  %v4429 = vunpack.c.h.b16 %v4358
  %v4430 = vunpack.c.l.b16 %v4359
  %v4431 = vunpack.c.h.b16 %v4359
  %v4432 = vunpack.c.l.b16 %v4360
  %v4433 = vunpack.c.h.b16 %v4360
  %v4434 = vunpack.c.l.b16 %v4361
  %v4435 = vunpack.c.h.b16 %v4361
  %v4436 = vunpack.c.l.b16 %v4362
  %v4437 = vunpack.c.h.b16 %v4362
  %v4438 = vunpack.c.l.b16 %v4363
  %v4439 = vunpack.c.h.b16 %v4363
  %v4440 = vunpack.c.l.b16 %v4364
  %v4441 = vunpack.c.h.b16 %v4364
  %v4442 = vunpack.c.l.b16 %v4365
  %v4443 = vunpack.c.h.b16 %v4365
  %v4444 = vunpack.c.l.b16 %v4366
  %v4445 = vunpack.c.h.b16 %v4366
  %v4446 = vunpack.c.l.b16 %v4367
  %v4447 = vunpack.c.h.b16 %v4367
  %v4448 = vunpack.c.l.b16 %v4368
  %v4449 = vunpack.c.h.b16 %v4368
  %v4450 = vunpack.c.l.b16 %v4369
  %v4451 = vunpack.c.h.b16 %v4369
  %v4452 = vunpack.c.l.b16 %v4370
  %v4453 = vunpack.c.h.b16 %v4370
  %v4454 = vunpack.c.l.b16 %v4371
  %v4455 = vunpack.c.h.b16 %v4371
  %v4456 = vunpack.c.l.b16 %v4372
  %v4457 = vunpack.c.h.b16 %v4372
  %v4458 = vunpack.c.l.b16 %v4373
  %v4459 = vunpack.c.h.b16 %v4373
  %v4460 = vunpack.c.l.b16 %v4374
  %v4461 = vunpack.c.h.b16 %v4374
  %v4462 = vunpack.c.l.b16 %v4375
  %v4463 = vunpack.c.h.b16 %v4375
  %v4464 = vunpack.c.l.b16 %v4376
  %v4465 = vunpack.c.h.b16 %v4376
  %v4466 = vunpack.c.l.b16 %v4377
  %v4467 = vunpack.c.h.b16 %v4377
  %v4468 = vunpack.c.l.b16 %v4378
  %v4469 = vunpack.c.h.b16 %v4378
  %v4470 = vunpack.c.l.b16 %v4379
  %v4471 = vunpack.c.h.b16 %v4379
  %v4472 = vunpack.c.l.b16 %v4380
  %v4473 = vunpack.c.h.b16 %v4380
  %v4474 = vunpack.c.l.b16 %v4381
  %v4475 = vunpack.c.h.b16 %v4381
  %v4476 = vunpack.c.l.b16 %v4382
  %v4477 = vunpack.c.h.b16 %v4382
  %v4478 = vunpack.c.l.b16 %v4383
  %v4479 = vunpack.c.h.b16 %v4383
  %v4480 = vpack.c.b16 %v4420, %v4416
  %v4481 = vpack.c.b16 %v4421, %v4417
  %v4482 = vpack.c.b16 %v4422, %v4418
  %v4483 = vpack.c.b16 %v4423, %v4419
  %v4484 = vpack.c.b16 %v4428, %v4424
  %v4485 = vpack.c.b16 %v4429, %v4425
  %v4486 = vpack.c.b16 %v4430, %v4426
  %v4487 = vpack.c.b16 %v4431, %v4427
  %v4488 = vpack.c.b16 %v4436, %v4432
  %v4489 = vpack.c.b16 %v4437, %v4433
  %v4490 = vpack.c.b16 %v4438, %v4434
  %v4491 = vpack.c.b16 %v4439, %v4435
  %v4492 = vpack.c.b16 %v4444, %v4440
  %v4493 = vpack.c.b16 %v4445, %v4441
  %v4494 = vpack.c.b16 %v4446, %v4442
  %v4495 = vpack.c.b16 %v4447, %v4443
  %v4496 = vpack.c.b16 %v4452, %v4448
  %v4497 = vpack.c.b16 %v4453, %v4449
  %v4498 = vpack.c.b16 %v4454, %v4450
  %v4499 = vpack.c.b16 %v4455, %v4451
  %v4500 = vpack.c.b16 %v4460, %v4456
  %v4501 = vpack.c.b16 %v4461, %v4457
  %v4502 = vpack.c.b16 %v4462, %v4458
  %v4503 = vpack.c.b16 %v4463, %v4459
  %v4504 = vpack.c.b16 %v4468, %v4464
  %v4505 = vpack.c.b16 %v4469, %v4465
  %v4506 = vpack.c.b16 %v4470, %v4466
  %v4507 = vpack.c.b16 %v4471, %v4467
  %v4508 = vpack.c.b16 %v4476, %v4472
  %v4509 = vpack.c.b16 %v4477, %v4473
  %v4510 = vpack.c.b16 %v4478, %v4474
  %v4511 = vpack.c.b16 %v4479, %v4475
  %4544 = vmatprep.subr.bf16.mxu0 %v4481
  %4545 = vmatpush1.bf16.msra.mxu0 %v4480
  %4546 = vmatprep.subr.bf16.mxu0 %v4485
  %4547 = vmatpush1.bf16.msra.mxu0 %v4484
  %4548 = vmatprep.subr.bf16.mxu0 %v4489
  %4549 = vmatpush1.bf16.msra.mxu0 %v4488
  %4550 = vmatprep.subr.bf16.mxu0 %v4493
  %4551 = vmatpush1.bf16.msra.mxu0 %v4492
  %4552 = vmatprep.subr.bf16.mxu0 %v4497
  %4553 = vmatpush1.bf16.msra.mxu0 %v4496
  %4554 = vmatprep.subr.bf16.mxu0 %v4501
  %4555 = vmatpush1.bf16.msra.mxu0 %v4500
  %4556 = vmatprep.subr.bf16.mxu0 %v4505
  %4557 = vmatpush1.bf16.msra.mxu0 %v4504
  %4558 = vmatprep.subr.bf16.mxu0 %v4509
  %4559 = vmatpush1.bf16.msra.mxu0 %v4508
  %4560 = vmatprep.subr.bf16.mxu0 0
  %4561 = vmatpush1.bf16.msra.mxu0 0
  %4562 = vmatprep.subr.bf16.mxu0 0
  %4563 = vmatpush1.bf16.msra.mxu0 0
  %4564 = vmatprep.subr.bf16.mxu0 0
  %4565 = vmatpush1.bf16.msra.mxu0 0
  %4566 = vmatprep.subr.bf16.mxu0 0
  %4567 = vmatpush1.bf16.msra.mxu0 0
  %4568 = vmatprep.subr.bf16.mxu0 0
  %4569 = vmatpush1.bf16.msra.mxu0 0
  %4570 = vmatprep.subr.bf16.mxu0 0
  %4571 = vmatpush1.bf16.msra.mxu0 0
  %4572 = vmatprep.subr.bf16.mxu0 0
  %4573 = vmatpush1.bf16.msra.mxu0 0
  %4574 = vmatprep.subr.bf16.mxu0 0
  %4575 = vmatpush1.bf16.msra.mxu0 0
  %4576 = vmatprep.mubr.bf16.mxu0 0
  %4577 = vmatmul.mubr.bf16.gmra.mrb[0].mxu0 %v3600
  %v4578 = vpop.f32.mrb[0].mxu0
  %v4579 = vadd.f32 0.0, %v4578
  %v4580 = vpop.f32.mrb[0].mxu0
  %v4581 = vadd.f32 0.0, %v4580
  %v4582 = vpop.f32.mrb[0].mxu0
  %v4583 = vadd.f32 0.0, %v4582
  %v4584 = vpop.f32.mrb[0].mxu0
  %v4585 = vadd.f32 0.0, %v4584
  %4586 = vmatprep.mubr.bf16.mxu0 0
  %4587 = vmatmul.mubr.bf16.gmra.mrb[0].mxu0 %v3601
  %v4588 = vpop.f32.mrb[0].mxu0
  %v4589 = vadd.f32 0.0, %v4588
  %v4590 = vpop.f32.mrb[0].mxu0
  %v4591 = vadd.f32 0.0, %v4590
  %v4592 = vpop.f32.mrb[0].mxu0
  %v4593 = vadd.f32 0.0, %v4592
  %v4594 = vpop.f32.mrb[0].mxu0
  %v4595 = vadd.f32 0.0, %v4594
  %4596 = vdwg.mxu0
  %4597 = vmatprep.subr.bf16.mxu0 %v4483
  %4598 = vmatpush1.bf16.msra.mxu0 %v4482
  %4599 = vmatprep.subr.bf16.mxu0 %v4487
  %4600 = vmatpush1.bf16.msra.mxu0 %v4486
  %4601 = vmatprep.subr.bf16.mxu0 %v4491
  %4602 = vmatpush1.bf16.msra.mxu0 %v4490
  %4603 = vmatprep.subr.bf16.mxu0 %v4495
  %4604 = vmatpush1.bf16.msra.mxu0 %v4494
  %4605 = vmatprep.subr.bf16.mxu0 %v4499
  %4606 = vmatpush1.bf16.msra.mxu0 %v4498
  %4607 = vmatprep.subr.bf16.mxu0 %v4503
  %4608 = vmatpush1.bf16.msra.mxu0 %v4502
  %4609 = vmatprep.subr.bf16.mxu0 %v4507
  %4610 = vmatpush1.bf16.msra.mxu0 %v4506
  %4611 = vmatprep.subr.bf16.mxu0 %v4511
  %4612 = vmatpush1.bf16.msra.mxu0 %v4510
  %4613 = vmatprep.subr.bf16.mxu0 0
  %4614 = vmatpush1.bf16.msra.mxu0 0
  %4615 = vmatprep.subr.bf16.mxu0 0
  %4616 = vmatpush1.bf16.msra.mxu0 0
  %4617 = vmatprep.subr.bf16.mxu0 0
  %4618 = vmatpush1.bf16.msra.mxu0 0
  %4619 = vmatprep.subr.bf16.mxu0 0
  %4620 = vmatpush1.bf16.msra.mxu0 0
  %4621 = vmatprep.subr.bf16.mxu0 0
  %4622 = vmatpush1.bf16.msra.mxu0 0
  %4623 = vmatprep.subr.bf16.mxu0 0
  %4624 = vmatpush1.bf16.msra.mxu0 0
  %4625 = vmatprep.subr.bf16.mxu0 0
  %4626 = vmatpush1.bf16.msra.mxu0 0
  %4627 = vmatprep.subr.bf16.mxu0 0
  %4628 = vmatpush1.bf16.msra.mxu0 0
  %4629 = vmatprep.mubr.bf16.mxu0 0
  %4630 = vmatmul.mubr.bf16.gmra.mrb[0].mxu0 %v3600
  %v4631 = vpop.f32.mrb[0].mxu0
  %v4632 = vadd.f32 0.0, %v4631
  %v4633 = vpop.f32.mrb[0].mxu0
  %v4634 = vadd.f32 0.0, %v4633
  %v4635 = vpop.f32.mrb[0].mxu0
  %v4636 = vadd.f32 0.0, %v4635
  %v4637 = vpop.f32.mrb[0].mxu0
  %v4638 = vadd.f32 0.0, %v4637
  %4639 = vmatprep.mubr.bf16.mxu0 0
  %4640 = vmatmul.mubr.bf16.gmra.mrb[0].mxu0 %v3601
  %v4641 = vpop.f32.mrb[0].mxu0
  %v4642 = vadd.f32 0.0, %v4641
  %v4643 = vpop.f32.mrb[0].mxu0
  %v4644 = vadd.f32 0.0, %v4643
  %v4645 = vpop.f32.mrb[0].mxu0
  %v4646 = vadd.f32 0.0, %v4645
  %v4647 = vpop.f32.mrb[0].mxu0
  %v4648 = vadd.f32 0.0, %v4647
  %4649 = vdwg.mxu0
  %v4650 = vadd.f32 %v4336, %v4579
  %v4651 = vadd.f32 %v4337, %v4581
  %v4652 = vadd.f32 %v4338, %v4632
  %v4653 = vadd.f32 %v4339, %v4634
  %v4654 = vadd.f32 %v4340, %v4583
  %v4655 = vadd.f32 %v4341, %v4585
  %v4656 = vadd.f32 %v4342, %v4636
  %v4657 = vadd.f32 %v4343, %v4638
  %v4658 = vadd.f32 %v4344, %v4589
  %v4659 = vadd.f32 %v4345, %v4591
  %v4660 = vadd.f32 %v4346, %v4642
  %v4661 = vadd.f32 %v4347, %v4644
  %v4662 = vadd.f32 %v4348, %v4593
  %v4663 = vadd.f32 %v4349, %v4595
  %v4664 = vadd.f32 %v4350, %v4646
  %v4665 = vadd.f32 %v4351, %v4648
  %v4666 = vxor.u32 %v4650, 2147483648
  %v4667 = vxor.u32 %v4654, 2147483648
  %v4668 = vxor.u32 %v4658, 2147483648
  %v4669 = vxor.u32 %v4662, 2147483648
  %v4670 = vmul.f32 %v4666, 1.442695
  %v4671 = vpow.pop %v4670
  %v4672 = vmul.f32 %v4667, 1.442695
  %v4673 = vpow.pop %v4672
  %v4674 = vmul.f32 %v4668, 1.442695
  %v4675 = vpow.pop %v4674
  %v4676 = vmul.f32 %v4669, 1.442695
  %v4677 = vpow.pop %v4676
  %v4678 = vadd.f32 %v4671, 1.0
  %v4679 = vadd.f32 %v4673, 1.0
  %v4680 = vadd.f32 %v4675, 1.0
  %v4681 = vadd.f32 %v4677, 1.0
  %v4682 = vrcp.pop %v4678
  %v4683 = vmul.f32 1.0, %v4682
  %v4684 = vrcp.pop %v4679
  %v4685 = vmul.f32 1.0, %v4684
  %v4686 = vrcp.pop %v4680
  %v4687 = vmul.f32 1.0, %v4686
  %v4688 = vrcp.pop %v4681
  %v4689 = vmul.f32 1.0, %v4688
  %v4690 = vxor.u32 %v4651, 2147483648
  %v4691 = vxor.u32 %v4655, 2147483648
  %v4692 = vxor.u32 %v4659, 2147483648
  %v4693 = vxor.u32 %v4663, 2147483648
  %v4694 = vmul.f32 %v4690, 1.442695
  %v4695 = vpow.pop %v4694
  %v4696 = vmul.f32 %v4691, 1.442695
  %v4697 = vpow.pop %v4696
  %v4698 = vmul.f32 %v4692, 1.442695
  %v4699 = vpow.pop %v4698
  %v4700 = vmul.f32 %v4693, 1.442695
  %v4701 = vpow.pop %v4700
  %v4702 = vadd.f32 %v4695, 1.0
  %v4703 = vadd.f32 %v4697, 1.0
  %v4704 = vadd.f32 %v4699, 1.0
  %v4705 = vadd.f32 %v4701, 1.0
  %v4706 = vrcp.pop %v4702
  %v4707 = vmul.f32 1.0, %v4706
  %v4708 = vrcp.pop %v4703
  %v4709 = vmul.f32 1.0, %v4708
  %v4710 = vrcp.pop %v4704
  %v4711 = vmul.f32 1.0, %v4710
  %v4712 = vrcp.pop %v4705
  %v4713 = vmul.f32 1.0, %v4712
  %v4714 = vtanh.pop %v4652
  %v4715 = vtanh.pop %v4656
  %v4716 = vtanh.pop %v4660
  %v4717 = vtanh.pop %v4664
  %v4718 = vxor.u32 %v4653, 2147483648
  %v4719 = vxor.u32 %v4657, 2147483648
  %v4720 = vxor.u32 %v4661, 2147483648
  %v4721 = vxor.u32 %v4665, 2147483648
  %v4722 = vmul.f32 %v4718, 1.442695
  %v4723 = vpow.pop %v4722
  %v4724 = vmul.f32 %v4719, 1.442695
  %v4725 = vpow.pop %v4724
  %v4726 = vmul.f32 %v4720, 1.442695
  %v4727 = vpow.pop %v4726
  %v4728 = vmul.f32 %v4721, 1.442695
  %v4729 = vpow.pop %v4728
  %v4730 = vadd.f32 %v4723, 1.0
  %v4731 = vadd.f32 %v4725, 1.0
  %v4732 = vadd.f32 %v4727, 1.0
  %v4733 = vadd.f32 %v4729, 1.0
  %v4734 = vrcp.pop %v4730
  %v4735 = vmul.f32 1.0, %v4734
  %v4736 = vrcp.pop %v4731
  %v4737 = vmul.f32 1.0, %v4736
  %v4738 = vrcp.pop %v4732
  %v4739 = vmul.f32 1.0, %v4738
  %v4740 = vrcp.pop %v4733
  %v4741 = vmul.f32 1.0, %v4740
  %v4742 = vmul.f32 %v4707, %v3588
  %v4743 = vmul.f32 %v4709, %v3589
  %v4744 = vmul.f32 %v4711, %v3590
  %v4745 = vmul.f32 %v4713, %v3591
  %v4746 = vmul.f32 %v4683, %v4714
  %v4747 = vmul.f32 %v4685, %v4715
  %v4748 = vmul.f32 %v4687, %v4716
  %v4749 = vmul.f32 %v4689, %v4717
  %v4750 = vadd.f32 %v4742, %v4746
  %v4751 = vadd.f32 %v4743, %v4747
  %v4752 = vadd.f32 %v4744, %v4748
  %v4753 = vadd.f32 %v4745, %v4749
  %v4754 = vtanh.pop %v4750
  %v4755 = vtanh.pop %v4751
  %v4756 = vtanh.pop %v4752
  %v4757 = vtanh.pop %v4753
  %v4758 = vmul.f32 %v4735, %v4754
  %v4759 = vmul.f32 %v4737, %v4755
  %v4760 = vmul.f32 %v4739, %v4756
  %v4761 = vmul.f32 %v4741, %v4757
  %v4762 = vpack.c.bf16 %v4759, %v4758
  %v4763 = vpack.c.bf16 %v4761, %v4760
  %v4764 = vld [vmem:[%s16] sm:$0xff]
  %v4765 = vld [vmem:[%s16 + $0x8] sm:$0xff]
  %v4766 = vld [vmem:[%s16 + $0x10] sm:$0xff]
  %v4767 = vld [vmem:[%s16 + $0x18] sm:$0xff]
  %v4768 = vld [vmem:[%s16 + $0x20] sm:$0xff]
  %v4769 = vld [vmem:[%s16 + $0x28] sm:$0xff]
  %v4770 = vld [vmem:[%s16 + $0x30] sm:$0xff]
  %v4771 = vld [vmem:[%s16 + $0x38] sm:$0xff]
  %v4772 = vld [vmem:[%s16 + $0x40] sm:$0xff]
  %v4773 = vld [vmem:[%s16 + $0x48] sm:$0xff]
  %v4774 = vld [vmem:[%s16 + $0x50] sm:$0xff]
  %v4775 = vld [vmem:[%s16 + $0x58] sm:$0xff]
  %v4776 = vld [vmem:[%s16 + $0x60] sm:$0xff]
  %v4777 = vld [vmem:[%s16 + $0x68] sm:$0xff]
  %v4778 = vld [vmem:[%s16 + $0x70] sm:$0xff]
  %v4779 = vld [vmem:[%s16 + $0x78] sm:$0xff]
  %v4780 = vld [vmem:[%s16 + $0x80] sm:$0xff]
  %v4781 = vld [vmem:[%s16 + $0x88] sm:$0xff]
  %v4782 = vld [vmem:[%s16 + $0x90] sm:$0xff]
  %v4783 = vld [vmem:[%s16 + $0x98] sm:$0xff]
  %v4784 = vld [vmem:[%s16 + $0xa0] sm:$0xff]
  %v4785 = vld [vmem:[%s16 + $0xa8] sm:$0xff]
  %v4786 = vld [vmem:[%s16 + $0xb0] sm:$0xff]
  %v4787 = vld [vmem:[%s16 + $0xb8] sm:$0xff]
  %v4788 = vld [vmem:[%s16 + $0xc0] sm:$0xff]
  %v4789 = vld [vmem:[%s16 + $0xc8] sm:$0xff]
  %v4790 = vld [vmem:[%s16 + $0xd0] sm:$0xff]
  %v4791 = vld [vmem:[%s16 + $0xd8] sm:$0xff]
  %v4792 = vld [vmem:[%s16 + $0xe0] sm:$0xff]
  %v4793 = vld [vmem:[%s16 + $0xe8] sm:$0xff]
  %v4794 = vld [vmem:[%s16 + $0xf0] sm:$0xff]
  %v4795 = vld [vmem:[%s16 + $0xf8] sm:$0xff]
  %v4828 = vunpack.c.l.b16 %v4764
  %v4829 = vunpack.c.h.b16 %v4764
  %v4830 = vunpack.c.l.b16 %v4765
  %v4831 = vunpack.c.h.b16 %v4765
  %v4832 = vunpack.c.l.b16 %v4766
  %v4833 = vunpack.c.h.b16 %v4766
  %v4834 = vunpack.c.l.b16 %v4767
  %v4835 = vunpack.c.h.b16 %v4767
  %v4836 = vunpack.c.l.b16 %v4768
  %v4837 = vunpack.c.h.b16 %v4768
  %v4838 = vunpack.c.l.b16 %v4769
  %v4839 = vunpack.c.h.b16 %v4769
  %v4840 = vunpack.c.l.b16 %v4770
  %v4841 = vunpack.c.h.b16 %v4770
  %v4842 = vunpack.c.l.b16 %v4771
  %v4843 = vunpack.c.h.b16 %v4771
  %v4844 = vunpack.c.l.b16 %v4772
  %v4845 = vunpack.c.h.b16 %v4772
  %v4846 = vunpack.c.l.b16 %v4773
  %v4847 = vunpack.c.h.b16 %v4773
  %v4848 = vunpack.c.l.b16 %v4774
  %v4849 = vunpack.c.h.b16 %v4774
  %v4850 = vunpack.c.l.b16 %v4775
  %v4851 = vunpack.c.h.b16 %v4775
  %v4852 = vunpack.c.l.b16 %v4776
  %v4853 = vunpack.c.h.b16 %v4776
  %v4854 = vunpack.c.l.b16 %v4777
  %v4855 = vunpack.c.h.b16 %v4777
  %v4856 = vunpack.c.l.b16 %v4778
  %v4857 = vunpack.c.h.b16 %v4778
  %v4858 = vunpack.c.l.b16 %v4779
  %v4859 = vunpack.c.h.b16 %v4779
  %v4860 = vunpack.c.l.b16 %v4780
  %v4861 = vunpack.c.h.b16 %v4780
  %v4862 = vunpack.c.l.b16 %v4781
  %v4863 = vunpack.c.h.b16 %v4781
  %v4864 = vunpack.c.l.b16 %v4782
  %v4865 = vunpack.c.h.b16 %v4782
  %v4866 = vunpack.c.l.b16 %v4783
  %v4867 = vunpack.c.h.b16 %v4783
  %v4868 = vunpack.c.l.b16 %v4784
  %v4869 = vunpack.c.h.b16 %v4784
  %v4870 = vunpack.c.l.b16 %v4785
  %v4871 = vunpack.c.h.b16 %v4785
  %v4872 = vunpack.c.l.b16 %v4786
  %v4873 = vunpack.c.h.b16 %v4786
  %v4874 = vunpack.c.l.b16 %v4787
  %v4875 = vunpack.c.h.b16 %v4787
  %v4876 = vunpack.c.l.b16 %v4788
  %v4877 = vunpack.c.h.b16 %v4788
  %v4878 = vunpack.c.l.b16 %v4789
  %v4879 = vunpack.c.h.b16 %v4789
  %v4880 = vunpack.c.l.b16 %v4790
  %v4881 = vunpack.c.h.b16 %v4790
  %v4882 = vunpack.c.l.b16 %v4791
  %v4883 = vunpack.c.h.b16 %v4791
  %v4884 = vunpack.c.l.b16 %v4792
  %v4885 = vunpack.c.h.b16 %v4792
  %v4886 = vunpack.c.l.b16 %v4793
  %v4887 = vunpack.c.h.b16 %v4793
  %v4888 = vunpack.c.l.b16 %v4794
  %v4889 = vunpack.c.h.b16 %v4794
  %v4890 = vunpack.c.l.b16 %v4795
  %v4891 = vunpack.c.h.b16 %v4795
  %v4892 = vpack.c.b16 %v4832, %v4828
  %v4893 = vpack.c.b16 %v4833, %v4829
  %v4894 = vpack.c.b16 %v4834, %v4830
  %v4895 = vpack.c.b16 %v4835, %v4831
  %v4896 = vpack.c.b16 %v4840, %v4836
  %v4897 = vpack.c.b16 %v4841, %v4837
  %v4898 = vpack.c.b16 %v4842, %v4838
  %v4899 = vpack.c.b16 %v4843, %v4839
  %v4900 = vpack.c.b16 %v4848, %v4844
  %v4901 = vpack.c.b16 %v4849, %v4845
  %v4902 = vpack.c.b16 %v4850, %v4846
  %v4903 = vpack.c.b16 %v4851, %v4847
  %v4904 = vpack.c.b16 %v4856, %v4852
  %v4905 = vpack.c.b16 %v4857, %v4853
  %v4906 = vpack.c.b16 %v4858, %v4854
  %v4907 = vpack.c.b16 %v4859, %v4855
  %v4908 = vpack.c.b16 %v4864, %v4860
  %v4909 = vpack.c.b16 %v4865, %v4861
  %v4910 = vpack.c.b16 %v4866, %v4862
  %v4911 = vpack.c.b16 %v4867, %v4863
  %v4912 = vpack.c.b16 %v4872, %v4868
  %v4913 = vpack.c.b16 %v4873, %v4869
  %v4914 = vpack.c.b16 %v4874, %v4870
  %v4915 = vpack.c.b16 %v4875, %v4871
  %v4916 = vpack.c.b16 %v4880, %v4876
  %v4917 = vpack.c.b16 %v4881, %v4877
  %v4918 = vpack.c.b16 %v4882, %v4878
  %v4919 = vpack.c.b16 %v4883, %v4879
  %v4920 = vpack.c.b16 %v4888, %v4884
  %v4921 = vpack.c.b16 %v4889, %v4885
  %v4922 = vpack.c.b16 %v4890, %v4886
  %v4923 = vpack.c.b16 %v4891, %v4887
  %4956 = vmatprep.subr.bf16.mxu0 %v4893
  %4957 = vmatpush1.bf16.msra.mxu0 %v4892
  %4958 = vmatprep.subr.bf16.mxu0 %v4897
  %4959 = vmatpush1.bf16.msra.mxu0 %v4896
  %4960 = vmatprep.subr.bf16.mxu0 %v4901
  %4961 = vmatpush1.bf16.msra.mxu0 %v4900
  %4962 = vmatprep.subr.bf16.mxu0 %v4905
  %4963 = vmatpush1.bf16.msra.mxu0 %v4904
  %4964 = vmatprep.subr.bf16.mxu0 %v4909
  %4965 = vmatpush1.bf16.msra.mxu0 %v4908
  %4966 = vmatprep.subr.bf16.mxu0 %v4913
  %4967 = vmatpush1.bf16.msra.mxu0 %v4912
  %4968 = vmatprep.subr.bf16.mxu0 %v4917
  %4969 = vmatpush1.bf16.msra.mxu0 %v4916
  %4970 = vmatprep.subr.bf16.mxu0 %v4921
  %4971 = vmatpush1.bf16.msra.mxu0 %v4920
  %4972 = vmatprep.subr.bf16.mxu0 0
  %4973 = vmatpush1.bf16.msra.mxu0 0
  %4974 = vmatprep.subr.bf16.mxu0 0
  %4975 = vmatpush1.bf16.msra.mxu0 0
  %4976 = vmatprep.subr.bf16.mxu0 0
  %4977 = vmatpush1.bf16.msra.mxu0 0
  %4978 = vmatprep.subr.bf16.mxu0 0
  %4979 = vmatpush1.bf16.msra.mxu0 0
  %4980 = vmatprep.subr.bf16.mxu0 0
  %4981 = vmatpush1.bf16.msra.mxu0 0
  %4982 = vmatprep.subr.bf16.mxu0 0
  %4983 = vmatpush1.bf16.msra.mxu0 0
  %4984 = vmatprep.subr.bf16.mxu0 0
  %4985 = vmatpush1.bf16.msra.mxu0 0
  %4986 = vmatprep.subr.bf16.mxu0 0
  %4987 = vmatpush1.bf16.msra.mxu0 0
  %4988 = vmatprep.mubr.bf16.mxu0 0
  %4989 = vmatmul.mubr.bf16.gmra.mrb[0].mxu0 %v4762
  %v4990 = vpop.f32.mrb[0].mxu0
  %v4991 = vadd.f32 %v3638, %v4990
  %v4992 = vpop.f32.mrb[0].mxu0
  %v4993 = vadd.f32 %v3642, %v4992
  %v4994 = vpop.f32.mrb[0].mxu0
  %v4995 = vadd.f32 %v3638, %v4994
  %v4996 = vpop.f32.mrb[0].mxu0
  %v4997 = vadd.f32 %v3642, %v4996
  %4998 = vmatprep.mubr.bf16.mxu0 0
  %4999 = vmatmul.mubr.bf16.gmra.mrb[0].mxu0 %v4763
  %v5000 = vpop.f32.mrb[0].mxu0
  %v5001 = vadd.f32 %v3638, %v5000
  %v5002 = vpop.f32.mrb[0].mxu0
  %v5003 = vadd.f32 %v3642, %v5002
  %v5004 = vpop.f32.mrb[0].mxu0
  %v5005 = vadd.f32 %v3638, %v5004
  %v5006 = vpop.f32.mrb[0].mxu0
  %v5007 = vadd.f32 %v3642, %v5006
  %5008 = vdwg.mxu0
  %5009 = vmatprep.subr.bf16.mxu0 %v4895
  %5010 = vmatpush1.bf16.msra.mxu0 %v4894
  %5011 = vmatprep.subr.bf16.mxu0 %v4899
  %5012 = vmatpush1.bf16.msra.mxu0 %v4898
  %5013 = vmatprep.subr.bf16.mxu0 %v4903
  %5014 = vmatpush1.bf16.msra.mxu0 %v4902
  %5015 = vmatprep.subr.bf16.mxu0 %v4907
  %5016 = vmatpush1.bf16.msra.mxu0 %v4906
  %5017 = vmatprep.subr.bf16.mxu0 %v4911
  %5018 = vmatpush1.bf16.msra.mxu0 %v4910
  %5019 = vmatprep.subr.bf16.mxu0 %v4915
  %5020 = vmatpush1.bf16.msra.mxu0 %v4914
  %5021 = vmatprep.subr.bf16.mxu0 %v4919
  %5022 = vmatpush1.bf16.msra.mxu0 %v4918
  %5023 = vmatprep.subr.bf16.mxu0 %v4923
  %5024 = vmatpush1.bf16.msra.mxu0 %v4922
  %5025 = vmatprep.subr.bf16.mxu0 0
  %5026 = vmatpush1.bf16.msra.mxu0 0
  %5027 = vmatprep.subr.bf16.mxu0 0
  %5028 = vmatpush1.bf16.msra.mxu0 0
  %5029 = vmatprep.subr.bf16.mxu0 0
  %5030 = vmatpush1.bf16.msra.mxu0 0
  %5031 = vmatprep.subr.bf16.mxu0 0
  %5032 = vmatpush1.bf16.msra.mxu0 0
  %5033 = vmatprep.subr.bf16.mxu0 0
  %5034 = vmatpush1.bf16.msra.mxu0 0
  %5035 = vmatprep.subr.bf16.mxu0 0
  %5036 = vmatpush1.bf16.msra.mxu0 0
  %5037 = vmatprep.subr.bf16.mxu0 0
  %5038 = vmatpush1.bf16.msra.mxu0 0
  %5039 = vmatprep.subr.bf16.mxu0 0
  %5040 = vmatpush1.bf16.msra.mxu0 0
  %5041 = vmatprep.mubr.bf16.mxu0 0
  %5042 = vmatmul.mubr.bf16.gmra.mrb[0].mxu0 %v4762
  %v5043 = vpop.f32.mrb[0].mxu0
  %v5044 = vadd.f32 %v3646, %v5043
  %v5045 = vpop.f32.mrb[0].mxu0
  %v5046 = vadd.f32 %v3650, %v5045
  %v5047 = vpop.f32.mrb[0].mxu0
  %v5048 = vadd.f32 %v3646, %v5047
  %v5049 = vpop.f32.mrb[0].mxu0
  %v5050 = vadd.f32 %v3650, %v5049
  %5051 = vmatprep.mubr.bf16.mxu0 0
  %5052 = vmatmul.mubr.bf16.gmra.mrb[0].mxu0 %v4763
  %v5053 = vpop.f32.mrb[0].mxu0
  %v5054 = vadd.f32 %v3646, %v5053
  %v5055 = vpop.f32.mrb[0].mxu0
  %v5056 = vadd.f32 %v3650, %v5055
  %v5057 = vpop.f32.mrb[0].mxu0
  %v5058 = vadd.f32 %v3646, %v5057
  %v5059 = vpop.f32.mrb[0].mxu0
  %v5060 = vadd.f32 %v3650, %v5059
  %5061 = vdwg.mxu0
  %v5062 = vpack.c.bf16 %v4328, %v4327
  %v5063 = vpack.c.bf16 %v4330, %v4329
  %v5064 = vld [vmem:[%s17] sm:$0xff]
  %v5065 = vld [vmem:[%s17 + $0x8] sm:$0xff]
  %v5066 = vld [vmem:[%s17 + $0x10] sm:$0xff]
  %v5067 = vld [vmem:[%s17 + $0x18] sm:$0xff]
  %v5068 = vld [vmem:[%s17 + $0x20] sm:$0xff]
  %v5069 = vld [vmem:[%s17 + $0x28] sm:$0xff]
  %v5070 = vld [vmem:[%s17 + $0x30] sm:$0xff]
  %v5071 = vld [vmem:[%s17 + $0x38] sm:$0xff]
  %v5072 = vld [vmem:[%s17 + $0x40] sm:$0xff]
  %v5073 = vld [vmem:[%s17 + $0x48] sm:$0xff]
  %v5074 = vld [vmem:[%s17 + $0x50] sm:$0xff]
  %v5075 = vld [vmem:[%s17 + $0x58] sm:$0xff]
  %v5076 = vld [vmem:[%s17 + $0x60] sm:$0xff]
  %v5077 = vld [vmem:[%s17 + $0x68] sm:$0xff]
  %v5078 = vld [vmem:[%s17 + $0x70] sm:$0xff]
  %v5079 = vld [vmem:[%s17 + $0x78] sm:$0xff]
  %v5080 = vld [vmem:[%s17 + $0x80] sm:$0xff]
  %v5081 = vld [vmem:[%s17 + $0x88] sm:$0xff]
  %v5082 = vld [vmem:[%s17 + $0x90] sm:$0xff]
  %v5083 = vld [vmem:[%s17 + $0x98] sm:$0xff]
  %v5084 = vld [vmem:[%s17 + $0xa0] sm:$0xff]
  %v5085 = vld [vmem:[%s17 + $0xa8] sm:$0xff]
  %v5086 = vld [vmem:[%s17 + $0xb0] sm:$0xff]
  %v5087 = vld [vmem:[%s17 + $0xb8] sm:$0xff]
  %v5088 = vld [vmem:[%s17 + $0xc0] sm:$0xff]
  %v5089 = vld [vmem:[%s17 + $0xc8] sm:$0xff]
  %v5090 = vld [vmem:[%s17 + $0xd0] sm:$0xff]
  %v5091 = vld [vmem:[%s17 + $0xd8] sm:$0xff]
  %v5092 = vld [vmem:[%s17 + $0xe0] sm:$0xff]
  %v5093 = vld [vmem:[%s17 + $0xe8] sm:$0xff]
  %v5094 = vld [vmem:[%s17 + $0xf0] sm:$0xff]
  %v5095 = vld [vmem:[%s17 + $0xf8] sm:$0xff]
  %v5128 = vunpack.c.l.b16 %v5064
  %v5129 = vunpack.c.h.b16 %v5064
  %v5130 = vunpack.c.l.b16 %v5065
  %v5131 = vunpack.c.h.b16 %v5065
  %v5132 = vunpack.c.l.b16 %v5066
  %v5133 = vunpack.c.h.b16 %v5066
  %v5134 = vunpack.c.l.b16 %v5067
  %v5135 = vunpack.c.h.b16 %v5067
  %v5136 = vunpack.c.l.b16 %v5068
  %v5137 = vunpack.c.h.b16 %v5068
  %v5138 = vunpack.c.l.b16 %v5069
  %v5139 = vunpack.c.h.b16 %v5069
  %v5140 = vunpack.c.l.b16 %v5070
  %v5141 = vunpack.c.h.b16 %v5070
  %v5142 = vunpack.c.l.b16 %v5071
  %v5143 = vunpack.c.h.b16 %v5071
  %v5144 = vunpack.c.l.b16 %v5072
  %v5145 = vunpack.c.h.b16 %v5072
  %v5146 = vunpack.c.l.b16 %v5073
  %v5147 = vunpack.c.h.b16 %v5073
  %v5148 = vunpack.c.l.b16 %v5074
  %v5149 = vunpack.c.h.b16 %v5074
  %v5150 = vunpack.c.l.b16 %v5075
  %v5151 = vunpack.c.h.b16 %v5075
  %v5152 = vunpack.c.l.b16 %v5076
  %v5153 = vunpack.c.h.b16 %v5076
  %v5154 = vunpack.c.l.b16 %v5077
  %v5155 = vunpack.c.h.b16 %v5077
  %v5156 = vunpack.c.l.b16 %v5078
  %v5157 = vunpack.c.h.b16 %v5078
  %v5158 = vunpack.c.l.b16 %v5079
  %v5159 = vunpack.c.h.b16 %v5079
  %v5160 = vunpack.c.l.b16 %v5080
  %v5161 = vunpack.c.h.b16 %v5080
  %v5162 = vunpack.c.l.b16 %v5081
  %v5163 = vunpack.c.h.b16 %v5081
  %v5164 = vunpack.c.l.b16 %v5082
  %v5165 = vunpack.c.h.b16 %v5082
  %v5166 = vunpack.c.l.b16 %v5083
  %v5167 = vunpack.c.h.b16 %v5083
  %v5168 = vunpack.c.l.b16 %v5084
  %v5169 = vunpack.c.h.b16 %v5084
  %v5170 = vunpack.c.l.b16 %v5085
  %v5171 = vunpack.c.h.b16 %v5085
  %v5172 = vunpack.c.l.b16 %v5086
  %v5173 = vunpack.c.h.b16 %v5086
  %v5174 = vunpack.c.l.b16 %v5087
  %v5175 = vunpack.c.h.b16 %v5087
  %v5176 = vunpack.c.l.b16 %v5088
  %v5177 = vunpack.c.h.b16 %v5088
  %v5178 = vunpack.c.l.b16 %v5089
  %v5179 = vunpack.c.h.b16 %v5089
  %v5180 = vunpack.c.l.b16 %v5090
  %v5181 = vunpack.c.h.b16 %v5090
  %v5182 = vunpack.c.l.b16 %v5091
  %v5183 = vunpack.c.h.b16 %v5091
  %v5184 = vunpack.c.l.b16 %v5092
  %v5185 = vunpack.c.h.b16 %v5092
  %v5186 = vunpack.c.l.b16 %v5093
  %v5187 = vunpack.c.h.b16 %v5093
  %v5188 = vunpack.c.l.b16 %v5094
  %v5189 = vunpack.c.h.b16 %v5094
  %v5190 = vunpack.c.l.b16 %v5095
  %v5191 = vunpack.c.h.b16 %v5095
  %v5192 = vpack.c.b16 %v5132, %v5128
  %v5193 = vpack.c.b16 %v5133, %v5129
  %v5194 = vpack.c.b16 %v5134, %v5130
  %v5195 = vpack.c.b16 %v5135, %v5131
  %v5196 = vpack.c.b16 %v5140, %v5136
  %v5197 = vpack.c.b16 %v5141, %v5137
  %v5198 = vpack.c.b16 %v5142, %v5138
  %v5199 = vpack.c.b16 %v5143, %v5139
  %v5200 = vpack.c.b16 %v5148, %v5144
  %v5201 = vpack.c.b16 %v5149, %v5145
  %v5202 = vpack.c.b16 %v5150, %v5146
  %v5203 = vpack.c.b16 %v5151, %v5147
  %v5204 = vpack.c.b16 %v5156, %v5152
  %v5205 = vpack.c.b16 %v5157, %v5153
  %v5206 = vpack.c.b16 %v5158, %v5154
  %v5207 = vpack.c.b16 %v5159, %v5155
  %v5208 = vpack.c.b16 %v5164, %v5160
  %v5209 = vpack.c.b16 %v5165, %v5161
  %v5210 = vpack.c.b16 %v5166, %v5162
  %v5211 = vpack.c.b16 %v5167, %v5163
  %v5212 = vpack.c.b16 %v5172, %v5168
  %v5213 = vpack.c.b16 %v5173, %v5169
  %v5214 = vpack.c.b16 %v5174, %v5170
  %v5215 = vpack.c.b16 %v5175, %v5171
  %v5216 = vpack.c.b16 %v5180, %v5176
  %v5217 = vpack.c.b16 %v5181, %v5177
  %v5218 = vpack.c.b16 %v5182, %v5178
  %v5219 = vpack.c.b16 %v5183, %v5179
  %v5220 = vpack.c.b16 %v5188, %v5184
  %v5221 = vpack.c.b16 %v5189, %v5185
  %v5222 = vpack.c.b16 %v5190, %v5186
  %v5223 = vpack.c.b16 %v5191, %v5187
  %5256 = vmatprep.subr.bf16.mxu0 %v5193
  %5257 = vmatpush1.bf16.msra.mxu0 %v5192
  %5258 = vmatprep.subr.bf16.mxu0 %v5197
  %5259 = vmatpush1.bf16.msra.mxu0 %v5196
  %5260 = vmatprep.subr.bf16.mxu0 %v5201
  %5261 = vmatpush1.bf16.msra.mxu0 %v5200
  %5262 = vmatprep.subr.bf16.mxu0 %v5205
  %5263 = vmatpush1.bf16.msra.mxu0 %v5204
  %5264 = vmatprep.subr.bf16.mxu0 %v5209
  %5265 = vmatpush1.bf16.msra.mxu0 %v5208
  %5266 = vmatprep.subr.bf16.mxu0 %v5213
  %5267 = vmatpush1.bf16.msra.mxu0 %v5212
  %5268 = vmatprep.subr.bf16.mxu0 %v5217
  %5269 = vmatpush1.bf16.msra.mxu0 %v5216
  %5270 = vmatprep.subr.bf16.mxu0 %v5221
  %5271 = vmatpush1.bf16.msra.mxu0 %v5220
  %5272 = vmatprep.subr.bf16.mxu0 0
  %5273 = vmatpush1.bf16.msra.mxu0 0
  %5274 = vmatprep.subr.bf16.mxu0 0
  %5275 = vmatpush1.bf16.msra.mxu0 0
  %5276 = vmatprep.subr.bf16.mxu0 0
  %5277 = vmatpush1.bf16.msra.mxu0 0
  %5278 = vmatprep.subr.bf16.mxu0 0
  %5279 = vmatpush1.bf16.msra.mxu0 0
  %5280 = vmatprep.subr.bf16.mxu0 0
  %5281 = vmatpush1.bf16.msra.mxu0 0
  %5282 = vmatprep.subr.bf16.mxu0 0
  %5283 = vmatpush1.bf16.msra.mxu0 0
  %5284 = vmatprep.subr.bf16.mxu0 0
  %5285 = vmatpush1.bf16.msra.mxu0 0
  %5286 = vmatprep.subr.bf16.mxu0 0
  %5287 = vmatpush1.bf16.msra.mxu0 0
  %5288 = vmatprep.mubr.bf16.mxu0 0
  %5289 = vmatmul.mubr.bf16.gmra.mrb[0].mxu0 %v5062
  %v5290 = vpop.f32.mrb[0].mxu0
  %v5291 = vadd.f32 0.0, %v5290
  %v5292 = vpop.f32.mrb[0].mxu0
  %v5293 = vadd.f32 0.0, %v5292
  %v5294 = vpop.f32.mrb[0].mxu0
  %v5295 = vadd.f32 0.0, %v5294
  %v5296 = vpop.f32.mrb[0].mxu0
  %v5297 = vadd.f32 0.0, %v5296
  %5298 = vmatprep.mubr.bf16.mxu0 0
  %5299 = vmatmul.mubr.bf16.gmra.mrb[0].mxu0 %v5063
  %v5300 = vpop.f32.mrb[0].mxu0
  %v5301 = vadd.f32 0.0, %v5300
  %v5302 = vpop.f32.mrb[0].mxu0
  %v5303 = vadd.f32 0.0, %v5302
  %v5304 = vpop.f32.mrb[0].mxu0
  %v5305 = vadd.f32 0.0, %v5304
  %v5306 = vpop.f32.mrb[0].mxu0
  %v5307 = vadd.f32 0.0, %v5306
  %5308 = vdwg.mxu0
  %5309 = vmatprep.subr.bf16.mxu0 %v5195
  %5310 = vmatpush1.bf16.msra.mxu0 %v5194
  %5311 = vmatprep.subr.bf16.mxu0 %v5199
  %5312 = vmatpush1.bf16.msra.mxu0 %v5198
  %5313 = vmatprep.subr.bf16.mxu0 %v5203
  %5314 = vmatpush1.bf16.msra.mxu0 %v5202
  %5315 = vmatprep.subr.bf16.mxu0 %v5207
  %5316 = vmatpush1.bf16.msra.mxu0 %v5206
  %5317 = vmatprep.subr.bf16.mxu0 %v5211
  %5318 = vmatpush1.bf16.msra.mxu0 %v5210
  %5319 = vmatprep.subr.bf16.mxu0 %v5215
  %5320 = vmatpush1.bf16.msra.mxu0 %v5214
  %5321 = vmatprep.subr.bf16.mxu0 %v5219
  %5322 = vmatpush1.bf16.msra.mxu0 %v5218
  %5323 = vmatprep.subr.bf16.mxu0 %v5223
  %5324 = vmatpush1.bf16.msra.mxu0 %v5222
  %5325 = vmatprep.subr.bf16.mxu0 0
  %5326 = vmatpush1.bf16.msra.mxu0 0
  %5327 = vmatprep.subr.bf16.mxu0 0
  %5328 = vmatpush1.bf16.msra.mxu0 0
  %5329 = vmatprep.subr.bf16.mxu0 0
  %5330 = vmatpush1.bf16.msra.mxu0 0
  %5331 = vmatprep.subr.bf16.mxu0 0
  %5332 = vmatpush1.bf16.msra.mxu0 0
  %5333 = vmatprep.subr.bf16.mxu0 0
  %5334 = vmatpush1.bf16.msra.mxu0 0
  %5335 = vmatprep.subr.bf16.mxu0 0
  %5336 = vmatpush1.bf16.msra.mxu0 0
  %5337 = vmatprep.subr.bf16.mxu0 0
  %5338 = vmatpush1.bf16.msra.mxu0 0
  %5339 = vmatprep.subr.bf16.mxu0 0
  %5340 = vmatpush1.bf16.msra.mxu0 0
  %5341 = vmatprep.mubr.bf16.mxu0 0
  %5342 = vmatmul.mubr.bf16.gmra.mrb[0].mxu0 %v5062
  %v5343 = vpop.f32.mrb[0].mxu0
  %v5344 = vadd.f32 0.0, %v5343
  %v5345 = vpop.f32.mrb[0].mxu0
  %v5346 = vadd.f32 0.0, %v5345
  %v5347 = vpop.f32.mrb[0].mxu0
  %v5348 = vadd.f32 0.0, %v5347
  %v5349 = vpop.f32.mrb[0].mxu0
  %v5350 = vadd.f32 0.0, %v5349
  %5351 = vmatprep.mubr.bf16.mxu0 0
  %5352 = vmatmul.mubr.bf16.gmra.mrb[0].mxu0 %v5063
  %v5353 = vpop.f32.mrb[0].mxu0
  %v5354 = vadd.f32 0.0, %v5353
  %v5355 = vpop.f32.mrb[0].mxu0
  %v5356 = vadd.f32 0.0, %v5355
  %v5357 = vpop.f32.mrb[0].mxu0
  %v5358 = vadd.f32 0.0, %v5357
  %v5359 = vpop.f32.mrb[0].mxu0
  %v5360 = vadd.f32 0.0, %v5359
  %5361 = vdwg.mxu0
  %v5362 = vadd.f32 %v4991, %v5291
  %v5363 = vadd.f32 %v4993, %v5293
  %v5364 = vadd.f32 %v5044, %v5344
  %v5365 = vadd.f32 %v5046, %v5346
  %v5366 = vadd.f32 %v4995, %v5295
  %v5367 = vadd.f32 %v4997, %v5297
  %v5368 = vadd.f32 %v5048, %v5348
  %v5369 = vadd.f32 %v5050, %v5350
  %v5370 = vadd.f32 %v5001, %v5301
  %v5371 = vadd.f32 %v5003, %v5303
  %v5372 = vadd.f32 %v5054, %v5354
  %v5373 = vadd.f32 %v5056, %v5356
  %v5374 = vadd.f32 %v5005, %v5305
  %v5375 = vadd.f32 %v5007, %v5307
  %v5376 = vadd.f32 %v5058, %v5358
  %v5377 = vadd.f32 %v5060, %v5360
  %v5378 = vxor.u32 %v5362, 2147483648
  %v5379 = vxor.u32 %v5366, 2147483648
  %v5380 = vxor.u32 %v5370, 2147483648
  %v5381 = vxor.u32 %v5374, 2147483648
  %v5382 = vmul.f32 %v5378, 1.442695
  %v5383 = vpow.pop %v5382
  %v5384 = vmul.f32 %v5379, 1.442695
  %v5385 = vpow.pop %v5384
  %v5386 = vmul.f32 %v5380, 1.442695
  %v5387 = vpow.pop %v5386
  %v5388 = vmul.f32 %v5381, 1.442695
  %v5389 = vpow.pop %v5388
  %v5390 = vadd.f32 %v5383, 1.0
  %v5391 = vadd.f32 %v5385, 1.0
  %v5392 = vadd.f32 %v5387, 1.0
  %v5393 = vadd.f32 %v5389, 1.0
  %v5394 = vrcp.pop %v5390
  %v5395 = vmul.f32 1.0, %v5394
  %v5396 = vrcp.pop %v5391
  %v5397 = vmul.f32 1.0, %v5396
  %v5398 = vrcp.pop %v5392
  %v5399 = vmul.f32 1.0, %v5398
  %v5400 = vrcp.pop %v5393
  %v5401 = vmul.f32 1.0, %v5400
  %v5402 = vxor.u32 %v5363, 2147483648
  %v5403 = vxor.u32 %v5367, 2147483648
  %v5404 = vxor.u32 %v5371, 2147483648
  %v5405 = vxor.u32 %v5375, 2147483648
  %v5406 = vmul.f32 %v5402, 1.442695
  %v5407 = vpow.pop %v5406
  %v5408 = vmul.f32 %v5403, 1.442695
  %v5409 = vpow.pop %v5408
  %v5410 = vmul.f32 %v5404, 1.442695
  %v5411 = vpow.pop %v5410
  %v5412 = vmul.f32 %v5405, 1.442695
  %v5413 = vpow.pop %v5412
  %v5414 = vadd.f32 %v5407, 1.0
  %v5415 = vadd.f32 %v5409, 1.0
  %v5416 = vadd.f32 %v5411, 1.0
  %v5417 = vadd.f32 %v5413, 1.0
  %v5418 = vrcp.pop %v5414
  %v5419 = vmul.f32 1.0, %v5418
  %v5420 = vrcp.pop %v5415
  %v5421 = vmul.f32 1.0, %v5420
  %v5422 = vrcp.pop %v5416
  %v5423 = vmul.f32 1.0, %v5422
  %v5424 = vrcp.pop %v5417
  %v5425 = vmul.f32 1.0, %v5424
  %v5426 = vtanh.pop %v5364
  %v5427 = vtanh.pop %v5368
  %v5428 = vtanh.pop %v5372
  %v5429 = vtanh.pop %v5376
  %v5430 = vxor.u32 %v5365, 2147483648
  %v5431 = vxor.u32 %v5369, 2147483648
  %v5432 = vxor.u32 %v5373, 2147483648
  %v5433 = vxor.u32 %v5377, 2147483648
  %v5434 = vmul.f32 %v5430, 1.442695
  %v5435 = vpow.pop %v5434
  %v5436 = vmul.f32 %v5431, 1.442695
  %v5437 = vpow.pop %v5436
  %v5438 = vmul.f32 %v5432, 1.442695
  %v5439 = vpow.pop %v5438
  %v5440 = vmul.f32 %v5433, 1.442695
  %v5441 = vpow.pop %v5440
  %v5442 = vadd.f32 %v5435, 1.0
  %v5443 = vadd.f32 %v5437, 1.0
  %v5444 = vadd.f32 %v5439, 1.0
  %v5445 = vadd.f32 %v5441, 1.0
  %v5446 = vrcp.pop %v5442
  %v5447 = vmul.f32 1.0, %v5446
  %v5448 = vrcp.pop %v5443
  %v5449 = vmul.f32 1.0, %v5448
  %v5450 = vrcp.pop %v5444
  %v5451 = vmul.f32 1.0, %v5450
  %v5452 = vrcp.pop %v5445
  %v5453 = vmul.f32 1.0, %v5452
  %v5454 = vmul.f32 %v5419, %v4319
  %v5455 = vmul.f32 %v5421, %v4320
  %v5456 = vmul.f32 %v5423, %v4321
  %v5457 = vmul.f32 %v5425, %v4322
  %v5458 = vmul.f32 %v5395, %v5426
  %v5459 = vmul.f32 %v5397, %v5427
  %v5460 = vmul.f32 %v5399, %v5428
  %v5461 = vmul.f32 %v5401, %v5429
  %v5462 = vadd.f32 %v5454, %v5458
  %v5463 = vadd.f32 %v5455, %v5459
  %v5464 = vadd.f32 %v5456, %v5460
  %v5465 = vadd.f32 %v5457, %v5461
  %v5466 = vtanh.pop %v5462
  %v5467 = vtanh.pop %v5463
  %v5468 = vtanh.pop %v5464
  %v5469 = vtanh.pop %v5465
  %v5470 = vmul.f32 %v5447, %v5466
  %v5471 = vmul.f32 %v5449, %v5467
  %v5472 = vmul.f32 %v5451, %v5468
  %v5473 = vmul.f32 %v5453, %v5469
  %s5474 = scalar_lea.vmem [#allocation3], 32
  %5475 = vst [vmem:[%s5474] sm:$0xff] %v5470
  %5476 = vst [vmem:[%s5474 + $0x8] sm:$0xff] %v5471
  %5477 = vst [vmem:[%s5474 + $0x10] sm:$0xff] %v5472
  %5478 = vst [vmem:[%s5474 + $0x18] sm:$0xff] %v5473
  %s5479 = scalar_lea.vmem [#allocation2], 256
  %v5480 = vld [vmem:[%s5479] sm:$0xff]
  %v5481 = vld [vmem:[%s5479 + $0x8] sm:$0xff]
  %v5482 = vld [vmem:[%s5479 + $0x10] sm:$0xff]
  %v5483 = vld [vmem:[%s5479 + $0x18] sm:$0xff]
  %v5484 = vld [vmem:[%s5479 + $0x20] sm:$0xff]
  %v5485 = vld [vmem:[%s5479 + $0x28] sm:$0xff]
  %v5486 = vld [vmem:[%s5479 + $0x30] sm:$0xff]
  %v5487 = vld [vmem:[%s5479 + $0x38] sm:$0xff]
  %v5488 = vld [vmem:[%s5479 + $0x40] sm:$0xff]
  %v5489 = vld [vmem:[%s5479 + $0x48] sm:$0xff]
  %v5490 = vld [vmem:[%s5479 + $0x50] sm:$0xff]
  %v5491 = vld [vmem:[%s5479 + $0x58] sm:$0xff]
  %v5492 = vld [vmem:[%s5479 + $0x60] sm:$0xff]
  %v5493 = vld [vmem:[%s5479 + $0x68] sm:$0xff]
  %v5494 = vld [vmem:[%s5479 + $0x70] sm:$0xff]
  %v5495 = vld [vmem:[%s5479 + $0x78] sm:$0xff]
  %v5496 = vld [vmem:[%s14] sm:$0xff]
  %v5497 = vld [vmem:[%s14 + $0x8] sm:$0xff]
  %v5498 = vld [vmem:[%s14 + $0x10] sm:$0xff]
  %v5499 = vld [vmem:[%s14 + $0x18] sm:$0xff]
  %v5500 = vld [vmem:[%s14 + $0x20] sm:$0xff]
  %v5501 = vld [vmem:[%s14 + $0x28] sm:$0xff]
  %v5502 = vld [vmem:[%s14 + $0x30] sm:$0xff]
  %v5503 = vld [vmem:[%s14 + $0x38] sm:$0xff]
  %v5504 = vld [vmem:[%s14 + $0x40] sm:$0xff]
  %v5505 = vld [vmem:[%s14 + $0x48] sm:$0xff]
  %v5506 = vld [vmem:[%s14 + $0x50] sm:$0xff]
  %v5507 = vld [vmem:[%s14 + $0x58] sm:$0xff]
  %v5508 = vld [vmem:[%s14 + $0x60] sm:$0xff]
  %v5509 = vld [vmem:[%s14 + $0x68] sm:$0xff]
  %v5510 = vld [vmem:[%s14 + $0x70] sm:$0xff]
  %v5511 = vld [vmem:[%s14 + $0x78] sm:$0xff]
  %v5512 = vld [vmem:[%s14 + $0x80] sm:$0xff]
  %v5513 = vld [vmem:[%s14 + $0x88] sm:$0xff]
  %v5514 = vld [vmem:[%s14 + $0x90] sm:$0xff]
  %v5515 = vld [vmem:[%s14 + $0x98] sm:$0xff]
  %v5516 = vld [vmem:[%s14 + $0xa0] sm:$0xff]
  %v5517 = vld [vmem:[%s14 + $0xa8] sm:$0xff]
  %v5518 = vld [vmem:[%s14 + $0xb0] sm:$0xff]
  %v5519 = vld [vmem:[%s14 + $0xb8] sm:$0xff]
  %v5520 = vld [vmem:[%s14 + $0xc0] sm:$0xff]
  %v5521 = vld [vmem:[%s14 + $0xc8] sm:$0xff]
  %v5522 = vld [vmem:[%s14 + $0xd0] sm:$0xff]
  %v5523 = vld [vmem:[%s14 + $0xd8] sm:$0xff]
  %v5524 = vld [vmem:[%s14 + $0xe0] sm:$0xff]
  %v5525 = vld [vmem:[%s14 + $0xe8] sm:$0xff]
  %v5526 = vld [vmem:[%s14 + $0xf0] sm:$0xff]
  %v5527 = vld [vmem:[%s14 + $0xf8] sm:$0xff]
  %v5560 = vunpack.c.l.b16 %v5496
  %v5561 = vunpack.c.h.b16 %v5496
  %v5562 = vunpack.c.l.b16 %v5497
  %v5563 = vunpack.c.h.b16 %v5497
  %v5564 = vunpack.c.l.b16 %v5498
  %v5565 = vunpack.c.h.b16 %v5498
  %v5566 = vunpack.c.l.b16 %v5499
  %v5567 = vunpack.c.h.b16 %v5499
  %v5568 = vunpack.c.l.b16 %v5500
  %v5569 = vunpack.c.h.b16 %v5500
  %v5570 = vunpack.c.l.b16 %v5501
  %v5571 = vunpack.c.h.b16 %v5501
  %v5572 = vunpack.c.l.b16 %v5502
  %v5573 = vunpack.c.h.b16 %v5502
  %v5574 = vunpack.c.l.b16 %v5503
  %v5575 = vunpack.c.h.b16 %v5503
  %v5576 = vunpack.c.l.b16 %v5504
  %v5577 = vunpack.c.h.b16 %v5504
  %v5578 = vunpack.c.l.b16 %v5505
  %v5579 = vunpack.c.h.b16 %v5505
  %v5580 = vunpack.c.l.b16 %v5506
  %v5581 = vunpack.c.h.b16 %v5506
  %v5582 = vunpack.c.l.b16 %v5507
  %v5583 = vunpack.c.h.b16 %v5507
  %v5584 = vunpack.c.l.b16 %v5508
  %v5585 = vunpack.c.h.b16 %v5508
  %v5586 = vunpack.c.l.b16 %v5509
  %v5587 = vunpack.c.h.b16 %v5509
  %v5588 = vunpack.c.l.b16 %v5510
  %v5589 = vunpack.c.h.b16 %v5510
  %v5590 = vunpack.c.l.b16 %v5511
  %v5591 = vunpack.c.h.b16 %v5511
  %v5592 = vunpack.c.l.b16 %v5512
  %v5593 = vunpack.c.h.b16 %v5512
  %v5594 = vunpack.c.l.b16 %v5513
  %v5595 = vunpack.c.h.b16 %v5513
  %v5596 = vunpack.c.l.b16 %v5514
  %v5597 = vunpack.c.h.b16 %v5514
  %v5598 = vunpack.c.l.b16 %v5515
  %v5599 = vunpack.c.h.b16 %v5515
  %v5600 = vunpack.c.l.b16 %v5516
  %v5601 = vunpack.c.h.b16 %v5516
  %v5602 = vunpack.c.l.b16 %v5517
  %v5603 = vunpack.c.h.b16 %v5517
  %v5604 = vunpack.c.l.b16 %v5518
  %v5605 = vunpack.c.h.b16 %v5518
  %v5606 = vunpack.c.l.b16 %v5519
  %v5607 = vunpack.c.h.b16 %v5519
  %v5608 = vunpack.c.l.b16 %v5520
  %v5609 = vunpack.c.h.b16 %v5520
  %v5610 = vunpack.c.l.b16 %v5521
  %v5611 = vunpack.c.h.b16 %v5521
  %v5612 = vunpack.c.l.b16 %v5522
  %v5613 = vunpack.c.h.b16 %v5522
  %v5614 = vunpack.c.l.b16 %v5523
  %v5615 = vunpack.c.h.b16 %v5523
  %v5616 = vunpack.c.l.b16 %v5524
  %v5617 = vunpack.c.h.b16 %v5524
  %v5618 = vunpack.c.l.b16 %v5525
  %v5619 = vunpack.c.h.b16 %v5525
  %v5620 = vunpack.c.l.b16 %v5526
  %v5621 = vunpack.c.h.b16 %v5526
  %v5622 = vunpack.c.l.b16 %v5527
  %v5623 = vunpack.c.h.b16 %v5527
  %v5624 = vpack.c.b16 %v5564, %v5560
  %v5625 = vpack.c.b16 %v5565, %v5561
  %v5626 = vpack.c.b16 %v5566, %v5562
  %v5627 = vpack.c.b16 %v5567, %v5563
  %v5628 = vpack.c.b16 %v5572, %v5568
  %v5629 = vpack.c.b16 %v5573, %v5569
  %v5630 = vpack.c.b16 %v5574, %v5570
  %v5631 = vpack.c.b16 %v5575, %v5571
  %v5632 = vpack.c.b16 %v5580, %v5576
  %v5633 = vpack.c.b16 %v5581, %v5577
  %v5634 = vpack.c.b16 %v5582, %v5578
  %v5635 = vpack.c.b16 %v5583, %v5579
  %v5636 = vpack.c.b16 %v5588, %v5584
  %v5637 = vpack.c.b16 %v5589, %v5585
  %v5638 = vpack.c.b16 %v5590, %v5586
  %v5639 = vpack.c.b16 %v5591, %v5587
  %v5640 = vpack.c.b16 %v5596, %v5592
  %v5641 = vpack.c.b16 %v5597, %v5593
  %v5642 = vpack.c.b16 %v5598, %v5594
  %v5643 = vpack.c.b16 %v5599, %v5595
  %v5644 = vpack.c.b16 %v5604, %v5600
  %v5645 = vpack.c.b16 %v5605, %v5601
  %v5646 = vpack.c.b16 %v5606, %v5602
  %v5647 = vpack.c.b16 %v5607, %v5603
  %v5648 = vpack.c.b16 %v5612, %v5608
  %v5649 = vpack.c.b16 %v5613, %v5609
  %v5650 = vpack.c.b16 %v5614, %v5610
  %v5651 = vpack.c.b16 %v5615, %v5611
  %v5652 = vpack.c.b16 %v5620, %v5616
  %v5653 = vpack.c.b16 %v5621, %v5617
  %v5654 = vpack.c.b16 %v5622, %v5618
  %v5655 = vpack.c.b16 %v5623, %v5619
  %5688 = vmatprep.subr.bf16.mxu0 %v5625
  %5689 = vmatpush1.bf16.msra.mxu0 %v5624
  %5690 = vmatprep.subr.bf16.mxu0 %v5629
  %5691 = vmatpush1.bf16.msra.mxu0 %v5628
  %5692 = vmatprep.subr.bf16.mxu0 %v5633
  %5693 = vmatpush1.bf16.msra.mxu0 %v5632
  %5694 = vmatprep.subr.bf16.mxu0 %v5637
  %5695 = vmatpush1.bf16.msra.mxu0 %v5636
  %5696 = vmatprep.subr.bf16.mxu0 %v5641
  %5697 = vmatpush1.bf16.msra.mxu0 %v5640
  %5698 = vmatprep.subr.bf16.mxu0 %v5645
  %5699 = vmatpush1.bf16.msra.mxu0 %v5644
  %5700 = vmatprep.subr.bf16.mxu0 %v5649
  %5701 = vmatpush1.bf16.msra.mxu0 %v5648
  %5702 = vmatprep.subr.bf16.mxu0 %v5653
  %5703 = vmatpush1.bf16.msra.mxu0 %v5652
  %5704 = vmatprep.subr.bf16.mxu0 0
  %5705 = vmatpush1.bf16.msra.mxu0 0
  %5706 = vmatprep.subr.bf16.mxu0 0
  %5707 = vmatpush1.bf16.msra.mxu0 0
  %5708 = vmatprep.subr.bf16.mxu0 0
  %5709 = vmatpush1.bf16.msra.mxu0 0
  %5710 = vmatprep.subr.bf16.mxu0 0
  %5711 = vmatpush1.bf16.msra.mxu0 0
  %5712 = vmatprep.subr.bf16.mxu0 0
  %5713 = vmatpush1.bf16.msra.mxu0 0
  %5714 = vmatprep.subr.bf16.mxu0 0
  %5715 = vmatpush1.bf16.msra.mxu0 0
  %5716 = vmatprep.subr.bf16.mxu0 0
  %5717 = vmatpush1.bf16.msra.mxu0 0
  %5718 = vmatprep.subr.bf16.mxu0 0
  %5719 = vmatpush1.bf16.msra.mxu0 0
  %5720 = vmatprep.mubr.bf16.mxu0 0
  %5721 = vmatmul.mubr.bf16.gmra.mrb[0].mxu0 %v4762
  %v5722 = vpop.f32.mrb[0].mxu0
  %v5723 = vadd.f32 0.0, %v5722
  %v5724 = vpop.f32.mrb[0].mxu0
  %v5725 = vadd.f32 0.0, %v5724
  %v5726 = vpop.f32.mrb[0].mxu0
  %v5727 = vadd.f32 0.0, %v5726
  %v5728 = vpop.f32.mrb[0].mxu0
  %v5729 = vadd.f32 0.0, %v5728
  %5730 = vmatprep.mubr.bf16.mxu0 0
  %5731 = vmatmul.mubr.bf16.gmra.mrb[0].mxu0 %v4763
  %v5732 = vpop.f32.mrb[0].mxu0
  %v5733 = vadd.f32 0.0, %v5732
  %v5734 = vpop.f32.mrb[0].mxu0
  %v5735 = vadd.f32 0.0, %v5734
  %v5736 = vpop.f32.mrb[0].mxu0
  %v5737 = vadd.f32 0.0, %v5736
  %v5738 = vpop.f32.mrb[0].mxu0
  %v5739 = vadd.f32 0.0, %v5738
  %5740 = vdwg.mxu0
  %5741 = vmatprep.subr.bf16.mxu0 %v5627
  %5742 = vmatpush1.bf16.msra.mxu0 %v5626
  %5743 = vmatprep.subr.bf16.mxu0 %v5631
  %5744 = vmatpush1.bf16.msra.mxu0 %v5630
  %5745 = vmatprep.subr.bf16.mxu0 %v5635
  %5746 = vmatpush1.bf16.msra.mxu0 %v5634
  %5747 = vmatprep.subr.bf16.mxu0 %v5639
  %5748 = vmatpush1.bf16.msra.mxu0 %v5638
  %5749 = vmatprep.subr.bf16.mxu0 %v5643
  %5750 = vmatpush1.bf16.msra.mxu0 %v5642
  %5751 = vmatprep.subr.bf16.mxu0 %v5647
  %5752 = vmatpush1.bf16.msra.mxu0 %v5646
  %5753 = vmatprep.subr.bf16.mxu0 %v5651
  %5754 = vmatpush1.bf16.msra.mxu0 %v5650
  %5755 = vmatprep.subr.bf16.mxu0 %v5655
  %5756 = vmatpush1.bf16.msra.mxu0 %v5654
  %5757 = vmatprep.subr.bf16.mxu0 0
  %5758 = vmatpush1.bf16.msra.mxu0 0
  %5759 = vmatprep.subr.bf16.mxu0 0
  %5760 = vmatpush1.bf16.msra.mxu0 0
  %5761 = vmatprep.subr.bf16.mxu0 0
  %5762 = vmatpush1.bf16.msra.mxu0 0
  %5763 = vmatprep.subr.bf16.mxu0 0
  %5764 = vmatpush1.bf16.msra.mxu0 0
  %5765 = vmatprep.subr.bf16.mxu0 0
  %5766 = vmatpush1.bf16.msra.mxu0 0
  %5767 = vmatprep.subr.bf16.mxu0 0
  %5768 = vmatpush1.bf16.msra.mxu0 0
  %5769 = vmatprep.subr.bf16.mxu0 0
  %5770 = vmatpush1.bf16.msra.mxu0 0
  %5771 = vmatprep.subr.bf16.mxu0 0
  %5772 = vmatpush1.bf16.msra.mxu0 0
  %5773 = vmatprep.mubr.bf16.mxu0 0
  %5774 = vmatmul.mubr.bf16.gmra.mrb[0].mxu0 %v4762
  %v5775 = vpop.f32.mrb[0].mxu0
  %v5776 = vadd.f32 0.0, %v5775
  %v5777 = vpop.f32.mrb[0].mxu0
  %v5778 = vadd.f32 0.0, %v5777
  %v5779 = vpop.f32.mrb[0].mxu0
  %v5780 = vadd.f32 0.0, %v5779
  %v5781 = vpop.f32.mrb[0].mxu0
  %v5782 = vadd.f32 0.0, %v5781
  %5783 = vmatprep.mubr.bf16.mxu0 0
  %5784 = vmatmul.mubr.bf16.gmra.mrb[0].mxu0 %v4763
  %v5785 = vpop.f32.mrb[0].mxu0
  %v5786 = vadd.f32 0.0, %v5785
  %v5787 = vpop.f32.mrb[0].mxu0
  %v5788 = vadd.f32 0.0, %v5787
  %v5789 = vpop.f32.mrb[0].mxu0
  %v5790 = vadd.f32 0.0, %v5789
  %v5791 = vpop.f32.mrb[0].mxu0
  %v5792 = vadd.f32 0.0, %v5791
  %5793 = vdwg.mxu0
  %v5794 = vadd.f32 %v5480, %v5723
  %v5795 = vadd.f32 %v5481, %v5725
  %v5796 = vadd.f32 %v5482, %v5776
  %v5797 = vadd.f32 %v5483, %v5778
  %v5798 = vadd.f32 %v5484, %v5727
  %v5799 = vadd.f32 %v5485, %v5729
  %v5800 = vadd.f32 %v5486, %v5780
  %v5801 = vadd.f32 %v5487, %v5782
  %v5802 = vadd.f32 %v5488, %v5733
  %v5803 = vadd.f32 %v5489, %v5735
  %v5804 = vadd.f32 %v5490, %v5786
  %v5805 = vadd.f32 %v5491, %v5788
  %v5806 = vadd.f32 %v5492, %v5737
  %v5807 = vadd.f32 %v5493, %v5739
  %v5808 = vadd.f32 %v5494, %v5790
  %v5809 = vadd.f32 %v5495, %v5792
  %v5810 = vxor.u32 %v5794, 2147483648
  %v5811 = vxor.u32 %v5798, 2147483648
  %v5812 = vxor.u32 %v5802, 2147483648
  %v5813 = vxor.u32 %v5806, 2147483648
  %v5814 = vmul.f32 %v5810, 1.442695
  %v5815 = vpow.pop %v5814
  %v5816 = vmul.f32 %v5811, 1.442695
  %v5817 = vpow.pop %v5816
  %v5818 = vmul.f32 %v5812, 1.442695
  %v5819 = vpow.pop %v5818
  %v5820 = vmul.f32 %v5813, 1.442695
  %v5821 = vpow.pop %v5820
  %v5822 = vadd.f32 %v5815, 1.0
  %v5823 = vadd.f32 %v5817, 1.0
  %v5824 = vadd.f32 %v5819, 1.0
  %v5825 = vadd.f32 %v5821, 1.0
  %v5826 = vrcp.pop %v5822
  %v5827 = vmul.f32 1.0, %v5826
  %v5828 = vrcp.pop %v5823
  %v5829 = vmul.f32 1.0, %v5828
  %v5830 = vrcp.pop %v5824
  %v5831 = vmul.f32 1.0, %v5830
  %v5832 = vrcp.pop %v5825
  %v5833 = vmul.f32 1.0, %v5832
  %v5834 = vxor.u32 %v5795, 2147483648
  %v5835 = vxor.u32 %v5799, 2147483648
  %v5836 = vxor.u32 %v5803, 2147483648
  %v5837 = vxor.u32 %v5807, 2147483648
  %v5838 = vmul.f32 %v5834, 1.442695
  %v5839 = vpow.pop %v5838
  %v5840 = vmul.f32 %v5835, 1.442695
  %v5841 = vpow.pop %v5840
  %v5842 = vmul.f32 %v5836, 1.442695
  %v5843 = vpow.pop %v5842
  %v5844 = vmul.f32 %v5837, 1.442695
  %v5845 = vpow.pop %v5844
  %v5846 = vadd.f32 %v5839, 1.0
  %v5847 = vadd.f32 %v5841, 1.0
  %v5848 = vadd.f32 %v5843, 1.0
  %v5849 = vadd.f32 %v5845, 1.0
  %v5850 = vrcp.pop %v5846
  %v5851 = vmul.f32 1.0, %v5850
  %v5852 = vrcp.pop %v5847
  %v5853 = vmul.f32 1.0, %v5852
  %v5854 = vrcp.pop %v5848
  %v5855 = vmul.f32 1.0, %v5854
  %v5856 = vrcp.pop %v5849
  %v5857 = vmul.f32 1.0, %v5856
  %v5858 = vtanh.pop %v5796
  %v5859 = vtanh.pop %v5800
  %v5860 = vtanh.pop %v5804
  %v5861 = vtanh.pop %v5808
  %v5862 = vxor.u32 %v5797, 2147483648
  %v5863 = vxor.u32 %v5801, 2147483648
  %v5864 = vxor.u32 %v5805, 2147483648
  %v5865 = vxor.u32 %v5809, 2147483648
  %v5866 = vmul.f32 %v5862, 1.442695
  %v5867 = vpow.pop %v5866
  %v5868 = vmul.f32 %v5863, 1.442695
  %v5869 = vpow.pop %v5868
  %v5870 = vmul.f32 %v5864, 1.442695
  %v5871 = vpow.pop %v5870
  %v5872 = vmul.f32 %v5865, 1.442695
  %v5873 = vpow.pop %v5872
  %v5874 = vadd.f32 %v5867, 1.0
  %v5875 = vadd.f32 %v5869, 1.0
  %v5876 = vadd.f32 %v5871, 1.0
  %v5877 = vadd.f32 %v5873, 1.0
  %v5878 = vrcp.pop %v5874
  %v5879 = vmul.f32 1.0, %v5878
  %v5880 = vrcp.pop %v5875
  %v5881 = vmul.f32 1.0, %v5880
  %v5882 = vrcp.pop %v5876
  %v5883 = vmul.f32 1.0, %v5882
  %v5884 = vrcp.pop %v5877
  %v5885 = vmul.f32 1.0, %v5884
  %v5886 = vmul.f32 %v5851, %v4750
  %v5887 = vmul.f32 %v5853, %v4751
  %v5888 = vmul.f32 %v5855, %v4752
  %v5889 = vmul.f32 %v5857, %v4753
  %v5890 = vmul.f32 %v5827, %v5858
  %v5891 = vmul.f32 %v5829, %v5859
  %v5892 = vmul.f32 %v5831, %v5860
  %v5893 = vmul.f32 %v5833, %v5861
  %v5894 = vadd.f32 %v5886, %v5890
  %v5895 = vadd.f32 %v5887, %v5891
  %v5896 = vadd.f32 %v5888, %v5892
  %v5897 = vadd.f32 %v5889, %v5893
  %v5898 = vtanh.pop %v5894
  %v5899 = vtanh.pop %v5895
  %v5900 = vtanh.pop %v5896
  %v5901 = vtanh.pop %v5897
  %v5902 = vmul.f32 %v5879, %v5898
  %v5903 = vmul.f32 %v5881, %v5899
  %v5904 = vmul.f32 %v5883, %v5900
  %v5905 = vmul.f32 %v5885, %v5901
  %v5906 = vpack.c.bf16 %v5903, %v5902
  %v5907 = vpack.c.bf16 %v5905, %v5904
  %v5908 = vld [vmem:[%s16] sm:$0xff]
  %v5909 = vld [vmem:[%s16 + $0x8] sm:$0xff]
  %v5910 = vld [vmem:[%s16 + $0x10] sm:$0xff]
  %v5911 = vld [vmem:[%s16 + $0x18] sm:$0xff]
  %v5912 = vld [vmem:[%s16 + $0x20] sm:$0xff]
  %v5913 = vld [vmem:[%s16 + $0x28] sm:$0xff]
  %v5914 = vld [vmem:[%s16 + $0x30] sm:$0xff]
  %v5915 = vld [vmem:[%s16 + $0x38] sm:$0xff]
  %v5916 = vld [vmem:[%s16 + $0x40] sm:$0xff]
  %v5917 = vld [vmem:[%s16 + $0x48] sm:$0xff]
  %v5918 = vld [vmem:[%s16 + $0x50] sm:$0xff]
  %v5919 = vld [vmem:[%s16 + $0x58] sm:$0xff]
  %v5920 = vld [vmem:[%s16 + $0x60] sm:$0xff]
  %v5921 = vld [vmem:[%s16 + $0x68] sm:$0xff]
  %v5922 = vld [vmem:[%s16 + $0x70] sm:$0xff]
  %v5923 = vld [vmem:[%s16 + $0x78] sm:$0xff]
  %v5924 = vld [vmem:[%s16 + $0x80] sm:$0xff]
  %v5925 = vld [vmem:[%s16 + $0x88] sm:$0xff]
  %v5926 = vld [vmem:[%s16 + $0x90] sm:$0xff]
  %v5927 = vld [vmem:[%s16 + $0x98] sm:$0xff]
  %v5928 = vld [vmem:[%s16 + $0xa0] sm:$0xff]
  %v5929 = vld [vmem:[%s16 + $0xa8] sm:$0xff]
  %v5930 = vld [vmem:[%s16 + $0xb0] sm:$0xff]
  %v5931 = vld [vmem:[%s16 + $0xb8] sm:$0xff]
  %v5932 = vld [vmem:[%s16 + $0xc0] sm:$0xff]
  %v5933 = vld [vmem:[%s16 + $0xc8] sm:$0xff]
  %v5934 = vld [vmem:[%s16 + $0xd0] sm:$0xff]
  %v5935 = vld [vmem:[%s16 + $0xd8] sm:$0xff]
  %v5936 = vld [vmem:[%s16 + $0xe0] sm:$0xff]
  %v5937 = vld [vmem:[%s16 + $0xe8] sm:$0xff]
  %v5938 = vld [vmem:[%s16 + $0xf0] sm:$0xff]
  %v5939 = vld [vmem:[%s16 + $0xf8] sm:$0xff]
  %v5972 = vunpack.c.l.b16 %v5908
  %v5973 = vunpack.c.h.b16 %v5908
  %v5974 = vunpack.c.l.b16 %v5909
  %v5975 = vunpack.c.h.b16 %v5909
  %v5976 = vunpack.c.l.b16 %v5910
  %v5977 = vunpack.c.h.b16 %v5910
  %v5978 = vunpack.c.l.b16 %v5911
  %v5979 = vunpack.c.h.b16 %v5911
  %v5980 = vunpack.c.l.b16 %v5912
  %v5981 = vunpack.c.h.b16 %v5912
  %v5982 = vunpack.c.l.b16 %v5913
  %v5983 = vunpack.c.h.b16 %v5913
  %v5984 = vunpack.c.l.b16 %v5914
  %v5985 = vunpack.c.h.b16 %v5914
  %v5986 = vunpack.c.l.b16 %v5915
  %v5987 = vunpack.c.h.b16 %v5915
  %v5988 = vunpack.c.l.b16 %v5916
  %v5989 = vunpack.c.h.b16 %v5916
  %v5990 = vunpack.c.l.b16 %v5917
  %v5991 = vunpack.c.h.b16 %v5917
  %v5992 = vunpack.c.l.b16 %v5918
  %v5993 = vunpack.c.h.b16 %v5918
  %v5994 = vunpack.c.l.b16 %v5919
  %v5995 = vunpack.c.h.b16 %v5919
  %v5996 = vunpack.c.l.b16 %v5920
  %v5997 = vunpack.c.h.b16 %v5920
  %v5998 = vunpack.c.l.b16 %v5921
  %v5999 = vunpack.c.h.b16 %v5921
  %v6000 = vunpack.c.l.b16 %v5922
  %v6001 = vunpack.c.h.b16 %v5922
  %v6002 = vunpack.c.l.b16 %v5923
  %v6003 = vunpack.c.h.b16 %v5923
  %v6004 = vunpack.c.l.b16 %v5924
  %v6005 = vunpack.c.h.b16 %v5924
  %v6006 = vunpack.c.l.b16 %v5925
  %v6007 = vunpack.c.h.b16 %v5925
  %v6008 = vunpack.c.l.b16 %v5926
  %v6009 = vunpack.c.h.b16 %v5926
  %v6010 = vunpack.c.l.b16 %v5927
  %v6011 = vunpack.c.h.b16 %v5927
  %v6012 = vunpack.c.l.b16 %v5928
  %v6013 = vunpack.c.h.b16 %v5928
  %v6014 = vunpack.c.l.b16 %v5929
  %v6015 = vunpack.c.h.b16 %v5929
  %v6016 = vunpack.c.l.b16 %v5930
  %v6017 = vunpack.c.h.b16 %v5930
  %v6018 = vunpack.c.l.b16 %v5931
  %v6019 = vunpack.c.h.b16 %v5931
  %v6020 = vunpack.c.l.b16 %v5932
  %v6021 = vunpack.c.h.b16 %v5932
  %v6022 = vunpack.c.l.b16 %v5933
  %v6023 = vunpack.c.h.b16 %v5933
  %v6024 = vunpack.c.l.b16 %v5934
  %v6025 = vunpack.c.h.b16 %v5934
  %v6026 = vunpack.c.l.b16 %v5935
  %v6027 = vunpack.c.h.b16 %v5935
  %v6028 = vunpack.c.l.b16 %v5936
  %v6029 = vunpack.c.h.b16 %v5936
  %v6030 = vunpack.c.l.b16 %v5937
  %v6031 = vunpack.c.h.b16 %v5937
  %v6032 = vunpack.c.l.b16 %v5938
  %v6033 = vunpack.c.h.b16 %v5938
  %v6034 = vunpack.c.l.b16 %v5939
  %v6035 = vunpack.c.h.b16 %v5939
  %v6036 = vpack.c.b16 %v5976, %v5972
  %v6037 = vpack.c.b16 %v5977, %v5973
  %v6038 = vpack.c.b16 %v5978, %v5974
  %v6039 = vpack.c.b16 %v5979, %v5975
  %v6040 = vpack.c.b16 %v5984, %v5980
  %v6041 = vpack.c.b16 %v5985, %v5981
  %v6042 = vpack.c.b16 %v5986, %v5982
  %v6043 = vpack.c.b16 %v5987, %v5983
  %v6044 = vpack.c.b16 %v5992, %v5988
  %v6045 = vpack.c.b16 %v5993, %v5989
  %v6046 = vpack.c.b16 %v5994, %v5990
  %v6047 = vpack.c.b16 %v5995, %v5991
  %v6048 = vpack.c.b16 %v6000, %v5996
  %v6049 = vpack.c.b16 %v6001, %v5997
  %v6050 = vpack.c.b16 %v6002, %v5998
  %v6051 = vpack.c.b16 %v6003, %v5999
  %v6052 = vpack.c.b16 %v6008, %v6004
  %v6053 = vpack.c.b16 %v6009, %v6005
  %v6054 = vpack.c.b16 %v6010, %v6006
  %v6055 = vpack.c.b16 %v6011, %v6007
  %v6056 = vpack.c.b16 %v6016, %v6012
  %v6057 = vpack.c.b16 %v6017, %v6013
  %v6058 = vpack.c.b16 %v6018, %v6014
  %v6059 = vpack.c.b16 %v6019, %v6015
  %v6060 = vpack.c.b16 %v6024, %v6020
  %v6061 = vpack.c.b16 %v6025, %v6021
  %v6062 = vpack.c.b16 %v6026, %v6022
  %v6063 = vpack.c.b16 %v6027, %v6023
  %v6064 = vpack.c.b16 %v6032, %v6028
  %v6065 = vpack.c.b16 %v6033, %v6029
  %v6066 = vpack.c.b16 %v6034, %v6030
  %v6067 = vpack.c.b16 %v6035, %v6031
  %6100 = vmatprep.subr.bf16.mxu0 %v6037
  %6101 = vmatpush1.bf16.msra.mxu0 %v6036
  %6102 = vmatprep.subr.bf16.mxu0 %v6041
  %6103 = vmatpush1.bf16.msra.mxu0 %v6040
  %6104 = vmatprep.subr.bf16.mxu0 %v6045
  %6105 = vmatpush1.bf16.msra.mxu0 %v6044
  %6106 = vmatprep.subr.bf16.mxu0 %v6049
  %6107 = vmatpush1.bf16.msra.mxu0 %v6048
  %6108 = vmatprep.subr.bf16.mxu0 %v6053
  %6109 = vmatpush1.bf16.msra.mxu0 %v6052
  %6110 = vmatprep.subr.bf16.mxu0 %v6057
  %6111 = vmatpush1.bf16.msra.mxu0 %v6056
  %6112 = vmatprep.subr.bf16.mxu0 %v6061
  %6113 = vmatpush1.bf16.msra.mxu0 %v6060
  %6114 = vmatprep.subr.bf16.mxu0 %v6065
  %6115 = vmatpush1.bf16.msra.mxu0 %v6064
  %6116 = vmatprep.subr.bf16.mxu0 0
  %6117 = vmatpush1.bf16.msra.mxu0 0
  %6118 = vmatprep.subr.bf16.mxu0 0
  %6119 = vmatpush1.bf16.msra.mxu0 0
  %6120 = vmatprep.subr.bf16.mxu0 0
  %6121 = vmatpush1.bf16.msra.mxu0 0
  %6122 = vmatprep.subr.bf16.mxu0 0
  %6123 = vmatpush1.bf16.msra.mxu0 0
  %6124 = vmatprep.subr.bf16.mxu0 0
  %6125 = vmatpush1.bf16.msra.mxu0 0
  %6126 = vmatprep.subr.bf16.mxu0 0
  %6127 = vmatpush1.bf16.msra.mxu0 0
  %6128 = vmatprep.subr.bf16.mxu0 0
  %6129 = vmatpush1.bf16.msra.mxu0 0
  %6130 = vmatprep.subr.bf16.mxu0 0
  %6131 = vmatpush1.bf16.msra.mxu0 0
  %6132 = vmatprep.mubr.bf16.mxu0 0
  %6133 = vmatmul.mubr.bf16.gmra.mrb[0].mxu0 %v5906
  %v6134 = vpop.f32.mrb[0].mxu0
  %v6135 = vadd.f32 %v3638, %v6134
  %v6136 = vpop.f32.mrb[0].mxu0
  %v6137 = vadd.f32 %v3642, %v6136
  %v6138 = vpop.f32.mrb[0].mxu0
  %v6139 = vadd.f32 %v3638, %v6138
  %v6140 = vpop.f32.mrb[0].mxu0
  %v6141 = vadd.f32 %v3642, %v6140
  %6142 = vmatprep.mubr.bf16.mxu0 0
  %6143 = vmatmul.mubr.bf16.gmra.mrb[0].mxu0 %v5907
  %v6144 = vpop.f32.mrb[0].mxu0
  %v6145 = vadd.f32 %v3638, %v6144
  %v6146 = vpop.f32.mrb[0].mxu0
  %v6147 = vadd.f32 %v3642, %v6146
  %v6148 = vpop.f32.mrb[0].mxu0
  %v6149 = vadd.f32 %v3638, %v6148
  %v6150 = vpop.f32.mrb[0].mxu0
  %v6151 = vadd.f32 %v3642, %v6150
  %6152 = vdwg.mxu0
  %6153 = vmatprep.subr.bf16.mxu0 %v6039
  %6154 = vmatpush1.bf16.msra.mxu0 %v6038
  %6155 = vmatprep.subr.bf16.mxu0 %v6043
  %6156 = vmatpush1.bf16.msra.mxu0 %v6042
  %6157 = vmatprep.subr.bf16.mxu0 %v6047
  %6158 = vmatpush1.bf16.msra.mxu0 %v6046
  %6159 = vmatprep.subr.bf16.mxu0 %v6051
  %6160 = vmatpush1.bf16.msra.mxu0 %v6050
  %6161 = vmatprep.subr.bf16.mxu0 %v6055
  %6162 = vmatpush1.bf16.msra.mxu0 %v6054
  %6163 = vmatprep.subr.bf16.mxu0 %v6059
  %6164 = vmatpush1.bf16.msra.mxu0 %v6058
  %6165 = vmatprep.subr.bf16.mxu0 %v6063
  %6166 = vmatpush1.bf16.msra.mxu0 %v6062
  %6167 = vmatprep.subr.bf16.mxu0 %v6067
  %6168 = vmatpush1.bf16.msra.mxu0 %v6066
  %6169 = vmatprep.subr.bf16.mxu0 0
  %6170 = vmatpush1.bf16.msra.mxu0 0
  %6171 = vmatprep.subr.bf16.mxu0 0
  %6172 = vmatpush1.bf16.msra.mxu0 0
  %6173 = vmatprep.subr.bf16.mxu0 0
  %6174 = vmatpush1.bf16.msra.mxu0 0
  %6175 = vmatprep.subr.bf16.mxu0 0
  %6176 = vmatpush1.bf16.msra.mxu0 0
  %6177 = vmatprep.subr.bf16.mxu0 0
  %6178 = vmatpush1.bf16.msra.mxu0 0
  %6179 = vmatprep.subr.bf16.mxu0 0
  %6180 = vmatpush1.bf16.msra.mxu0 0
  %6181 = vmatprep.subr.bf16.mxu0 0
  %6182 = vmatpush1.bf16.msra.mxu0 0
  %6183 = vmatprep.subr.bf16.mxu0 0
  %6184 = vmatpush1.bf16.msra.mxu0 0
  %6185 = vmatprep.mubr.bf16.mxu0 0
  %6186 = vmatmul.mubr.bf16.gmra.mrb[0].mxu0 %v5906
  %v6187 = vpop.f32.mrb[0].mxu0
  %v6188 = vadd.f32 %v3646, %v6187
  %v6189 = vpop.f32.mrb[0].mxu0
  %v6190 = vadd.f32 %v3650, %v6189
  %v6191 = vpop.f32.mrb[0].mxu0
  %v6192 = vadd.f32 %v3646, %v6191
  %v6193 = vpop.f32.mrb[0].mxu0
  %v6194 = vadd.f32 %v3650, %v6193
  %6195 = vmatprep.mubr.bf16.mxu0 0
  %6196 = vmatmul.mubr.bf16.gmra.mrb[0].mxu0 %v5907
  %v6197 = vpop.f32.mrb[0].mxu0
  %v6198 = vadd.f32 %v3646, %v6197
  %v6199 = vpop.f32.mrb[0].mxu0
  %v6200 = vadd.f32 %v3650, %v6199
  %v6201 = vpop.f32.mrb[0].mxu0
  %v6202 = vadd.f32 %v3646, %v6201
  %v6203 = vpop.f32.mrb[0].mxu0
  %v6204 = vadd.f32 %v3650, %v6203
  %6205 = vdwg.mxu0
  %v6206 = vpack.c.bf16 %v5471, %v5470
  %v6207 = vpack.c.bf16 %v5473, %v5472
  %v6208 = vld [vmem:[%s17] sm:$0xff]
  %v6209 = vld [vmem:[%s17 + $0x8] sm:$0xff]
  %v6210 = vld [vmem:[%s17 + $0x10] sm:$0xff]
  %v6211 = vld [vmem:[%s17 + $0x18] sm:$0xff]
  %v6212 = vld [vmem:[%s17 + $0x20] sm:$0xff]
  %v6213 = vld [vmem:[%s17 + $0x28] sm:$0xff]
  %v6214 = vld [vmem:[%s17 + $0x30] sm:$0xff]
  %v6215 = vld [vmem:[%s17 + $0x38] sm:$0xff]
  %v6216 = vld [vmem:[%s17 + $0x40] sm:$0xff]
  %v6217 = vld [vmem:[%s17 + $0x48] sm:$0xff]
  %v6218 = vld [vmem:[%s17 + $0x50] sm:$0xff]
  %v6219 = vld [vmem:[%s17 + $0x58] sm:$0xff]
  %v6220 = vld [vmem:[%s17 + $0x60] sm:$0xff]
  %v6221 = vld [vmem:[%s17 + $0x68] sm:$0xff]
  %v6222 = vld [vmem:[%s17 + $0x70] sm:$0xff]
  %v6223 = vld [vmem:[%s17 + $0x78] sm:$0xff]
  %v6224 = vld [vmem:[%s17 + $0x80] sm:$0xff]
  %v6225 = vld [vmem:[%s17 + $0x88] sm:$0xff]
  %v6226 = vld [vmem:[%s17 + $0x90] sm:$0xff]
  %v6227 = vld [vmem:[%s17 + $0x98] sm:$0xff]
  %v6228 = vld [vmem:[%s17 + $0xa0] sm:$0xff]
  %v6229 = vld [vmem:[%s17 + $0xa8] sm:$0xff]
  %v6230 = vld [vmem:[%s17 + $0xb0] sm:$0xff]
  %v6231 = vld [vmem:[%s17 + $0xb8] sm:$0xff]
  %v6232 = vld [vmem:[%s17 + $0xc0] sm:$0xff]
  %v6233 = vld [vmem:[%s17 + $0xc8] sm:$0xff]
  %v6234 = vld [vmem:[%s17 + $0xd0] sm:$0xff]
  %v6235 = vld [vmem:[%s17 + $0xd8] sm:$0xff]
  %v6236 = vld [vmem:[%s17 + $0xe0] sm:$0xff]
  %v6237 = vld [vmem:[%s17 + $0xe8] sm:$0xff]
  %v6238 = vld [vmem:[%s17 + $0xf0] sm:$0xff]
  %v6239 = vld [vmem:[%s17 + $0xf8] sm:$0xff]
  %v6272 = vunpack.c.l.b16 %v6208
  %v6273 = vunpack.c.h.b16 %v6208
  %v6274 = vunpack.c.l.b16 %v6209
  %v6275 = vunpack.c.h.b16 %v6209
  %v6276 = vunpack.c.l.b16 %v6210
  %v6277 = vunpack.c.h.b16 %v6210
  %v6278 = vunpack.c.l.b16 %v6211
  %v6279 = vunpack.c.h.b16 %v6211
  %v6280 = vunpack.c.l.b16 %v6212
  %v6281 = vunpack.c.h.b16 %v6212
  %v6282 = vunpack.c.l.b16 %v6213
  %v6283 = vunpack.c.h.b16 %v6213
  %v6284 = vunpack.c.l.b16 %v6214
  %v6285 = vunpack.c.h.b16 %v6214
  %v6286 = vunpack.c.l.b16 %v6215
  %v6287 = vunpack.c.h.b16 %v6215
  %v6288 = vunpack.c.l.b16 %v6216
  %v6289 = vunpack.c.h.b16 %v6216
  %v6290 = vunpack.c.l.b16 %v6217
  %v6291 = vunpack.c.h.b16 %v6217
  %v6292 = vunpack.c.l.b16 %v6218
  %v6293 = vunpack.c.h.b16 %v6218
  %v6294 = vunpack.c.l.b16 %v6219
  %v6295 = vunpack.c.h.b16 %v6219
  %v6296 = vunpack.c.l.b16 %v6220
  %v6297 = vunpack.c.h.b16 %v6220
  %v6298 = vunpack.c.l.b16 %v6221
  %v6299 = vunpack.c.h.b16 %v6221
  %v6300 = vunpack.c.l.b16 %v6222
  %v6301 = vunpack.c.h.b16 %v6222
  %v6302 = vunpack.c.l.b16 %v6223
  %v6303 = vunpack.c.h.b16 %v6223
  %v6304 = vunpack.c.l.b16 %v6224
  %v6305 = vunpack.c.h.b16 %v6224
  %v6306 = vunpack.c.l.b16 %v6225
  %v6307 = vunpack.c.h.b16 %v6225
  %v6308 = vunpack.c.l.b16 %v6226
  %v6309 = vunpack.c.h.b16 %v6226
  %v6310 = vunpack.c.l.b16 %v6227
  %v6311 = vunpack.c.h.b16 %v6227
  %v6312 = vunpack.c.l.b16 %v6228
  %v6313 = vunpack.c.h.b16 %v6228
  %v6314 = vunpack.c.l.b16 %v6229
  %v6315 = vunpack.c.h.b16 %v6229
  %v6316 = vunpack.c.l.b16 %v6230
  %v6317 = vunpack.c.h.b16 %v6230
  %v6318 = vunpack.c.l.b16 %v6231
  %v6319 = vunpack.c.h.b16 %v6231
  %v6320 = vunpack.c.l.b16 %v6232
  %v6321 = vunpack.c.h.b16 %v6232
  %v6322 = vunpack.c.l.b16 %v6233
  %v6323 = vunpack.c.h.b16 %v6233
  %v6324 = vunpack.c.l.b16 %v6234
  %v6325 = vunpack.c.h.b16 %v6234
  %v6326 = vunpack.c.l.b16 %v6235
  %v6327 = vunpack.c.h.b16 %v6235
  %v6328 = vunpack.c.l.b16 %v6236
  %v6329 = vunpack.c.h.b16 %v6236
  %v6330 = vunpack.c.l.b16 %v6237
  %v6331 = vunpack.c.h.b16 %v6237
  %v6332 = vunpack.c.l.b16 %v6238
  %v6333 = vunpack.c.h.b16 %v6238
  %v6334 = vunpack.c.l.b16 %v6239
  %v6335 = vunpack.c.h.b16 %v6239
  %v6336 = vpack.c.b16 %v6276, %v6272
  %v6337 = vpack.c.b16 %v6277, %v6273
  %v6338 = vpack.c.b16 %v6278, %v6274
  %v6339 = vpack.c.b16 %v6279, %v6275
  %v6340 = vpack.c.b16 %v6284, %v6280
  %v6341 = vpack.c.b16 %v6285, %v6281
  %v6342 = vpack.c.b16 %v6286, %v6282
  %v6343 = vpack.c.b16 %v6287, %v6283
  %v6344 = vpack.c.b16 %v6292, %v6288
  %v6345 = vpack.c.b16 %v6293, %v6289
  %v6346 = vpack.c.b16 %v6294, %v6290
  %v6347 = vpack.c.b16 %v6295, %v6291
  %v6348 = vpack.c.b16 %v6300, %v6296
  %v6349 = vpack.c.b16 %v6301, %v6297
  %v6350 = vpack.c.b16 %v6302, %v6298
  %v6351 = vpack.c.b16 %v6303, %v6299
  %v6352 = vpack.c.b16 %v6308, %v6304
  %v6353 = vpack.c.b16 %v6309, %v6305
  %v6354 = vpack.c.b16 %v6310, %v6306
  %v6355 = vpack.c.b16 %v6311, %v6307
  %v6356 = vpack.c.b16 %v6316, %v6312
  %v6357 = vpack.c.b16 %v6317, %v6313
  %v6358 = vpack.c.b16 %v6318, %v6314
  %v6359 = vpack.c.b16 %v6319, %v6315
  %v6360 = vpack.c.b16 %v6324, %v6320
  %v6361 = vpack.c.b16 %v6325, %v6321
  %v6362 = vpack.c.b16 %v6326, %v6322
  %v6363 = vpack.c.b16 %v6327, %v6323
  %v6364 = vpack.c.b16 %v6332, %v6328
  %v6365 = vpack.c.b16 %v6333, %v6329
  %v6366 = vpack.c.b16 %v6334, %v6330
  %v6367 = vpack.c.b16 %v6335, %v6331
  %6400 = vmatprep.subr.bf16.mxu0 %v6337
  %6401 = vmatpush1.bf16.msra.mxu0 %v6336
  %6402 = vmatprep.subr.bf16.mxu0 %v6341
  %6403 = vmatpush1.bf16.msra.mxu0 %v6340
  %6404 = vmatprep.subr.bf16.mxu0 %v6345
  %6405 = vmatpush1.bf16.msra.mxu0 %v6344
  %6406 = vmatprep.subr.bf16.mxu0 %v6349
  %6407 = vmatpush1.bf16.msra.mxu0 %v6348
  %6408 = vmatprep.subr.bf16.mxu0 %v6353
  %6409 = vmatpush1.bf16.msra.mxu0 %v6352
  %6410 = vmatprep.subr.bf16.mxu0 %v6357
  %6411 = vmatpush1.bf16.msra.mxu0 %v6356
  %6412 = vmatprep.subr.bf16.mxu0 %v6361
  %6413 = vmatpush1.bf16.msra.mxu0 %v6360
  %6414 = vmatprep.subr.bf16.mxu0 %v6365
  %6415 = vmatpush1.bf16.msra.mxu0 %v6364
  %6416 = vmatprep.subr.bf16.mxu0 0
  %6417 = vmatpush1.bf16.msra.mxu0 0
  %6418 = vmatprep.subr.bf16.mxu0 0
  %6419 = vmatpush1.bf16.msra.mxu0 0
  %6420 = vmatprep.subr.bf16.mxu0 0
  %6421 = vmatpush1.bf16.msra.mxu0 0
  %6422 = vmatprep.subr.bf16.mxu0 0
  %6423 = vmatpush1.bf16.msra.mxu0 0
  %6424 = vmatprep.subr.bf16.mxu0 0
  %6425 = vmatpush1.bf16.msra.mxu0 0
  %6426 = vmatprep.subr.bf16.mxu0 0
  %6427 = vmatpush1.bf16.msra.mxu0 0
  %6428 = vmatprep.subr.bf16.mxu0 0
  %6429 = vmatpush1.bf16.msra.mxu0 0
  %6430 = vmatprep.subr.bf16.mxu0 0
  %6431 = vmatpush1.bf16.msra.mxu0 0
  %6432 = vmatprep.mubr.bf16.mxu0 0
  %6433 = vmatmul.mubr.bf16.gmra.mrb[0].mxu0 %v6206
  %v6434 = vpop.f32.mrb[0].mxu0
  %v6435 = vadd.f32 0.0, %v6434
  %v6436 = vpop.f32.mrb[0].mxu0
  %v6437 = vadd.f32 0.0, %v6436
  %v6438 = vpop.f32.mrb[0].mxu0
  %v6439 = vadd.f32 0.0, %v6438
  %v6440 = vpop.f32.mrb[0].mxu0
  %v6441 = vadd.f32 0.0, %v6440
  %6442 = vmatprep.mubr.bf16.mxu0 0
  %6443 = vmatmul.mubr.bf16.gmra.mrb[0].mxu0 %v6207
  %v6444 = vpop.f32.mrb[0].mxu0
  %v6445 = vadd.f32 0.0, %v6444
  %v6446 = vpop.f32.mrb[0].mxu0
  %v6447 = vadd.f32 0.0, %v6446
  %v6448 = vpop.f32.mrb[0].mxu0
  %v6449 = vadd.f32 0.0, %v6448
  %v6450 = vpop.f32.mrb[0].mxu0
  %v6451 = vadd.f32 0.0, %v6450
  %6452 = vdwg.mxu0
  %6453 = vmatprep.subr.bf16.mxu0 %v6339
  %6454 = vmatpush1.bf16.msra.mxu0 %v6338
  %6455 = vmatprep.subr.bf16.mxu0 %v6343
  %6456 = vmatpush1.bf16.msra.mxu0 %v6342
  %6457 = vmatprep.subr.bf16.mxu0 %v6347
  %6458 = vmatpush1.bf16.msra.mxu0 %v6346
  %6459 = vmatprep.subr.bf16.mxu0 %v6351
  %6460 = vmatpush1.bf16.msra.mxu0 %v6350
  %6461 = vmatprep.subr.bf16.mxu0 %v6355
  %6462 = vmatpush1.bf16.msra.mxu0 %v6354
  %6463 = vmatprep.subr.bf16.mxu0 %v6359
  %6464 = vmatpush1.bf16.msra.mxu0 %v6358
  %6465 = vmatprep.subr.bf16.mxu0 %v6363
  %6466 = vmatpush1.bf16.msra.mxu0 %v6362
  %6467 = vmatprep.subr.bf16.mxu0 %v6367
  %6468 = vmatpush1.bf16.msra.mxu0 %v6366
  %6469 = vmatprep.subr.bf16.mxu0 0
  %6470 = vmatpush1.bf16.msra.mxu0 0
  %6471 = vmatprep.subr.bf16.mxu0 0
  %6472 = vmatpush1.bf16.msra.mxu0 0
  %6473 = vmatprep.subr.bf16.mxu0 0
  %6474 = vmatpush1.bf16.msra.mxu0 0
  %6475 = vmatprep.subr.bf16.mxu0 0
  %6476 = vmatpush1.bf16.msra.mxu0 0
  %6477 = vmatprep.subr.bf16.mxu0 0
  %6478 = vmatpush1.bf16.msra.mxu0 0
  %6479 = vmatprep.subr.bf16.mxu0 0
  %6480 = vmatpush1.bf16.msra.mxu0 0
  %6481 = vmatprep.subr.bf16.mxu0 0
  %6482 = vmatpush1.bf16.msra.mxu0 0
  %6483 = vmatprep.subr.bf16.mxu0 0
  %6484 = vmatpush1.bf16.msra.mxu0 0
  %6485 = vmatprep.mubr.bf16.mxu0 0
  %6486 = vmatmul.mubr.bf16.gmra.mrb[0].mxu0 %v6206
  %v6487 = vpop.f32.mrb[0].mxu0
  %v6488 = vadd.f32 0.0, %v6487
  %v6489 = vpop.f32.mrb[0].mxu0
  %v6490 = vadd.f32 0.0, %v6489
  %v6491 = vpop.f32.mrb[0].mxu0
  %v6492 = vadd.f32 0.0, %v6491
  %v6493 = vpop.f32.mrb[0].mxu0
  %v6494 = vadd.f32 0.0, %v6493
  %6495 = vmatprep.mubr.bf16.mxu0 0
  %6496 = vmatmul.mubr.bf16.gmra.mrb[0].mxu0 %v6207
  %v6497 = vpop.f32.mrb[0].mxu0
  %v6498 = vadd.f32 0.0, %v6497
  %v6499 = vpop.f32.mrb[0].mxu0
  %v6500 = vadd.f32 0.0, %v6499
  %v6501 = vpop.f32.mrb[0].mxu0
  %v6502 = vadd.f32 0.0, %v6501
  %v6503 = vpop.f32.mrb[0].mxu0
  %v6504 = vadd.f32 0.0, %v6503
  %6505 = vdwg.mxu0
  %v6506 = vadd.f32 %v6135, %v6435
  %v6507 = vadd.f32 %v6137, %v6437
  %v6508 = vadd.f32 %v6188, %v6488
  %v6509 = vadd.f32 %v6190, %v6490
  %v6510 = vadd.f32 %v6139, %v6439
  %v6511 = vadd.f32 %v6141, %v6441
  %v6512 = vadd.f32 %v6192, %v6492
  %v6513 = vadd.f32 %v6194, %v6494
  %v6514 = vadd.f32 %v6145, %v6445
  %v6515 = vadd.f32 %v6147, %v6447
  %v6516 = vadd.f32 %v6198, %v6498
  %v6517 = vadd.f32 %v6200, %v6500
  %v6518 = vadd.f32 %v6149, %v6449
  %v6519 = vadd.f32 %v6151, %v6451
  %v6520 = vadd.f32 %v6202, %v6502
  %v6521 = vadd.f32 %v6204, %v6504
  %v6522 = vxor.u32 %v6506, 2147483648
  %v6523 = vxor.u32 %v6510, 2147483648
  %v6524 = vxor.u32 %v6514, 2147483648
  %v6525 = vxor.u32 %v6518, 2147483648
  %v6526 = vmul.f32 %v6522, 1.442695
  %v6527 = vpow.pop %v6526
  %v6528 = vmul.f32 %v6523, 1.442695
  %v6529 = vpow.pop %v6528
  %v6530 = vmul.f32 %v6524, 1.442695
  %v6531 = vpow.pop %v6530
  %v6532 = vmul.f32 %v6525, 1.442695
  %v6533 = vpow.pop %v6532
  %v6534 = vadd.f32 %v6527, 1.0
  %v6535 = vadd.f32 %v6529, 1.0
  %v6536 = vadd.f32 %v6531, 1.0
  %v6537 = vadd.f32 %v6533, 1.0
  %v6538 = vrcp.pop %v6534
  %v6539 = vmul.f32 1.0, %v6538
  %v6540 = vrcp.pop %v6535
  %v6541 = vmul.f32 1.0, %v6540
  %v6542 = vrcp.pop %v6536
  %v6543 = vmul.f32 1.0, %v6542
  %v6544 = vrcp.pop %v6537
  %v6545 = vmul.f32 1.0, %v6544
  %v6546 = vxor.u32 %v6507, 2147483648
  %v6547 = vxor.u32 %v6511, 2147483648
  %v6548 = vxor.u32 %v6515, 2147483648
  %v6549 = vxor.u32 %v6519, 2147483648
  %v6550 = vmul.f32 %v6546, 1.442695
  %v6551 = vpow.pop %v6550
  %v6552 = vmul.f32 %v6547, 1.442695
  %v6553 = vpow.pop %v6552
  %v6554 = vmul.f32 %v6548, 1.442695
  %v6555 = vpow.pop %v6554
  %v6556 = vmul.f32 %v6549, 1.442695
  %v6557 = vpow.pop %v6556
  %v6558 = vadd.f32 %v6551, 1.0
  %v6559 = vadd.f32 %v6553, 1.0
  %v6560 = vadd.f32 %v6555, 1.0
  %v6561 = vadd.f32 %v6557, 1.0
  %v6562 = vrcp.pop %v6558
  %v6563 = vmul.f32 1.0, %v6562
  %v6564 = vrcp.pop %v6559
  %v6565 = vmul.f32 1.0, %v6564
  %v6566 = vrcp.pop %v6560
  %v6567 = vmul.f32 1.0, %v6566
  %v6568 = vrcp.pop %v6561
  %v6569 = vmul.f32 1.0, %v6568
  %v6570 = vtanh.pop %v6508
  %v6571 = vtanh.pop %v6512
  %v6572 = vtanh.pop %v6516
  %v6573 = vtanh.pop %v6520
  %v6574 = vxor.u32 %v6509, 2147483648
  %v6575 = vxor.u32 %v6513, 2147483648
  %v6576 = vxor.u32 %v6517, 2147483648
  %v6577 = vxor.u32 %v6521, 2147483648
  %v6578 = vmul.f32 %v6574, 1.442695
  %v6579 = vpow.pop %v6578
  %v6580 = vmul.f32 %v6575, 1.442695
  %v6581 = vpow.pop %v6580
  %v6582 = vmul.f32 %v6576, 1.442695
  %v6583 = vpow.pop %v6582
  %v6584 = vmul.f32 %v6577, 1.442695
  %v6585 = vpow.pop %v6584
  %v6586 = vadd.f32 %v6579, 1.0
  %v6587 = vadd.f32 %v6581, 1.0
  %v6588 = vadd.f32 %v6583, 1.0
  %v6589 = vadd.f32 %v6585, 1.0
  %v6590 = vrcp.pop %v6586
  %v6591 = vmul.f32 1.0, %v6590
  %v6592 = vrcp.pop %v6587
  %v6593 = vmul.f32 1.0, %v6592
  %v6594 = vrcp.pop %v6588
  %v6595 = vmul.f32 1.0, %v6594
  %v6596 = vrcp.pop %v6589
  %v6597 = vmul.f32 1.0, %v6596
  %v6598 = vmul.f32 %v6563, %v5462
  %v6599 = vmul.f32 %v6565, %v5463
  %v6600 = vmul.f32 %v6567, %v5464
  %v6601 = vmul.f32 %v6569, %v5465
  %v6602 = vmul.f32 %v6539, %v6570
  %v6603 = vmul.f32 %v6541, %v6571
  %v6604 = vmul.f32 %v6543, %v6572
  %v6605 = vmul.f32 %v6545, %v6573
  %v6606 = vadd.f32 %v6598, %v6602
  %v6607 = vadd.f32 %v6599, %v6603
  %v6608 = vadd.f32 %v6600, %v6604
  %v6609 = vadd.f32 %v6601, %v6605
  %v6610 = vtanh.pop %v6606
  %v6611 = vtanh.pop %v6607
  %v6612 = vtanh.pop %v6608
  %v6613 = vtanh.pop %v6609
  %v6614 = vmul.f32 %v6591, %v6610
  %v6615 = vmul.f32 %v6593, %v6611
  %v6616 = vmul.f32 %v6595, %v6612
  %v6617 = vmul.f32 %v6597, %v6613
  %s6618 = scalar_lea.vmem [#allocation3], 64
  %6619 = vst [vmem:[%s6618] sm:$0xff] %v6614
  %6620 = vst [vmem:[%s6618 + $0x8] sm:$0xff] %v6615
  %6621 = vst [vmem:[%s6618 + $0x10] sm:$0xff] %v6616
  %6622 = vst [vmem:[%s6618 + $0x18] sm:$0xff] %v6617
  %s6623 = scalar_lea.vmem [#allocation2], 384
  %v6624 = vld [vmem:[%s6623] sm:$0xff]
  %v6625 = vld [vmem:[%s6623 + $0x8] sm:$0xff]
  %v6626 = vld [vmem:[%s6623 + $0x10] sm:$0xff]
  %v6627 = vld [vmem:[%s6623 + $0x18] sm:$0xff]
  %v6628 = vld [vmem:[%s6623 + $0x20] sm:$0xff]
  %v6629 = vld [vmem:[%s6623 + $0x28] sm:$0xff]
  %v6630 = vld [vmem:[%s6623 + $0x30] sm:$0xff]
  %v6631 = vld [vmem:[%s6623 + $0x38] sm:$0xff]
  %v6632 = vld [vmem:[%s6623 + $0x40] sm:$0xff]
  %v6633 = vld [vmem:[%s6623 + $0x48] sm:$0xff]
  %v6634 = vld [vmem:[%s6623 + $0x50] sm:$0xff]
  %v6635 = vld [vmem:[%s6623 + $0x58] sm:$0xff]
  %v6636 = vld [vmem:[%s6623 + $0x60] sm:$0xff]
  %v6637 = vld [vmem:[%s6623 + $0x68] sm:$0xff]
  %v6638 = vld [vmem:[%s6623 + $0x70] sm:$0xff]
  %v6639 = vld [vmem:[%s6623 + $0x78] sm:$0xff]
  %v6640 = vld [vmem:[%s14] sm:$0xff]
  %v6641 = vld [vmem:[%s14 + $0x8] sm:$0xff]
  %v6642 = vld [vmem:[%s14 + $0x10] sm:$0xff]
  %v6643 = vld [vmem:[%s14 + $0x18] sm:$0xff]
  %v6644 = vld [vmem:[%s14 + $0x20] sm:$0xff]
  %v6645 = vld [vmem:[%s14 + $0x28] sm:$0xff]
  %v6646 = vld [vmem:[%s14 + $0x30] sm:$0xff]
  %v6647 = vld [vmem:[%s14 + $0x38] sm:$0xff]
  %v6648 = vld [vmem:[%s14 + $0x40] sm:$0xff]
  %v6649 = vld [vmem:[%s14 + $0x48] sm:$0xff]
  %v6650 = vld [vmem:[%s14 + $0x50] sm:$0xff]
  %v6651 = vld [vmem:[%s14 + $0x58] sm:$0xff]
  %v6652 = vld [vmem:[%s14 + $0x60] sm:$0xff]
  %v6653 = vld [vmem:[%s14 + $0x68] sm:$0xff]
  %v6654 = vld [vmem:[%s14 + $0x70] sm:$0xff]
  %v6655 = vld [vmem:[%s14 + $0x78] sm:$0xff]
  %v6656 = vld [vmem:[%s14 + $0x80] sm:$0xff]
  %v6657 = vld [vmem:[%s14 + $0x88] sm:$0xff]
  %v6658 = vld [vmem:[%s14 + $0x90] sm:$0xff]
  %v6659 = vld [vmem:[%s14 + $0x98] sm:$0xff]
  %v6660 = vld [vmem:[%s14 + $0xa0] sm:$0xff]
  %v6661 = vld [vmem:[%s14 + $0xa8] sm:$0xff]
  %v6662 = vld [vmem:[%s14 + $0xb0] sm:$0xff]
  %v6663 = vld [vmem:[%s14 + $0xb8] sm:$0xff]
  %v6664 = vld [vmem:[%s14 + $0xc0] sm:$0xff]
  %v6665 = vld [vmem:[%s14 + $0xc8] sm:$0xff]
  %v6666 = vld [vmem:[%s14 + $0xd0] sm:$0xff]
  %v6667 = vld [vmem:[%s14 + $0xd8] sm:$0xff]
  %v6668 = vld [vmem:[%s14 + $0xe0] sm:$0xff]
  %v6669 = vld [vmem:[%s14 + $0xe8] sm:$0xff]
  %v6670 = vld [vmem:[%s14 + $0xf0] sm:$0xff]
  %v6671 = vld [vmem:[%s14 + $0xf8] sm:$0xff]
  %v6704 = vunpack.c.l.b16 %v6640
  %v6705 = vunpack.c.h.b16 %v6640
  %v6706 = vunpack.c.l.b16 %v6641
  %v6707 = vunpack.c.h.b16 %v6641
  %v6708 = vunpack.c.l.b16 %v6642
  %v6709 = vunpack.c.h.b16 %v6642
  %v6710 = vunpack.c.l.b16 %v6643
  %v6711 = vunpack.c.h.b16 %v6643
  %v6712 = vunpack.c.l.b16 %v6644
  %v6713 = vunpack.c.h.b16 %v6644
  %v6714 = vunpack.c.l.b16 %v6645
  %v6715 = vunpack.c.h.b16 %v6645
  %v6716 = vunpack.c.l.b16 %v6646
  %v6717 = vunpack.c.h.b16 %v6646
  %v6718 = vunpack.c.l.b16 %v6647
  %v6719 = vunpack.c.h.b16 %v6647
  %v6720 = vunpack.c.l.b16 %v6648
  %v6721 = vunpack.c.h.b16 %v6648
  %v6722 = vunpack.c.l.b16 %v6649
  %v6723 = vunpack.c.h.b16 %v6649
  %v6724 = vunpack.c.l.b16 %v6650
  %v6725 = vunpack.c.h.b16 %v6650
  %v6726 = vunpack.c.l.b16 %v6651
  %v6727 = vunpack.c.h.b16 %v6651
  %v6728 = vunpack.c.l.b16 %v6652
  %v6729 = vunpack.c.h.b16 %v6652
  %v6730 = vunpack.c.l.b16 %v6653
  %v6731 = vunpack.c.h.b16 %v6653
  %v6732 = vunpack.c.l.b16 %v6654
  %v6733 = vunpack.c.h.b16 %v6654
  %v6734 = vunpack.c.l.b16 %v6655
  %v6735 = vunpack.c.h.b16 %v6655
  %v6736 = vunpack.c.l.b16 %v6656
  %v6737 = vunpack.c.h.b16 %v6656
  %v6738 = vunpack.c.l.b16 %v6657
  %v6739 = vunpack.c.h.b16 %v6657
  %v6740 = vunpack.c.l.b16 %v6658
  %v6741 = vunpack.c.h.b16 %v6658
  %v6742 = vunpack.c.l.b16 %v6659
  %v6743 = vunpack.c.h.b16 %v6659
  %v6744 = vunpack.c.l.b16 %v6660
  %v6745 = vunpack.c.h.b16 %v6660
  %v6746 = vunpack.c.l.b16 %v6661
  %v6747 = vunpack.c.h.b16 %v6661
  %v6748 = vunpack.c.l.b16 %v6662
  %v6749 = vunpack.c.h.b16 %v6662
  %v6750 = vunpack.c.l.b16 %v6663
  %v6751 = vunpack.c.h.b16 %v6663
  %v6752 = vunpack.c.l.b16 %v6664
  %v6753 = vunpack.c.h.b16 %v6664
  %v6754 = vunpack.c.l.b16 %v6665
  %v6755 = vunpack.c.h.b16 %v6665
  %v6756 = vunpack.c.l.b16 %v6666
  %v6757 = vunpack.c.h.b16 %v6666
  %v6758 = vunpack.c.l.b16 %v6667
  %v6759 = vunpack.c.h.b16 %v6667
  %v6760 = vunpack.c.l.b16 %v6668
  %v6761 = vunpack.c.h.b16 %v6668
  %v6762 = vunpack.c.l.b16 %v6669
  %v6763 = vunpack.c.h.b16 %v6669
  %v6764 = vunpack.c.l.b16 %v6670
  %v6765 = vunpack.c.h.b16 %v6670
  %v6766 = vunpack.c.l.b16 %v6671
  %v6767 = vunpack.c.h.b16 %v6671
  %v6768 = vpack.c.b16 %v6708, %v6704
  %v6769 = vpack.c.b16 %v6709, %v6705
  %v6770 = vpack.c.b16 %v6710, %v6706
  %v6771 = vpack.c.b16 %v6711, %v6707
  %v6772 = vpack.c.b16 %v6716, %v6712
  %v6773 = vpack.c.b16 %v6717, %v6713
  %v6774 = vpack.c.b16 %v6718, %v6714
  %v6775 = vpack.c.b16 %v6719, %v6715
  %v6776 = vpack.c.b16 %v6724, %v6720
  %v6777 = vpack.c.b16 %v6725, %v6721
  %v6778 = vpack.c.b16 %v6726, %v6722
  %v6779 = vpack.c.b16 %v6727, %v6723
  %v6780 = vpack.c.b16 %v6732, %v6728
  %v6781 = vpack.c.b16 %v6733, %v6729
  %v6782 = vpack.c.b16 %v6734, %v6730
  %v6783 = vpack.c.b16 %v6735, %v6731
  %v6784 = vpack.c.b16 %v6740, %v6736
  %v6785 = vpack.c.b16 %v6741, %v6737
  %v6786 = vpack.c.b16 %v6742, %v6738
  %v6787 = vpack.c.b16 %v6743, %v6739
  %v6788 = vpack.c.b16 %v6748, %v6744
  %v6789 = vpack.c.b16 %v6749, %v6745
  %v6790 = vpack.c.b16 %v6750, %v6746
  %v6791 = vpack.c.b16 %v6751, %v6747
  %v6792 = vpack.c.b16 %v6756, %v6752
  %v6793 = vpack.c.b16 %v6757, %v6753
  %v6794 = vpack.c.b16 %v6758, %v6754
  %v6795 = vpack.c.b16 %v6759, %v6755
  %v6796 = vpack.c.b16 %v6764, %v6760
  %v6797 = vpack.c.b16 %v6765, %v6761
  %v6798 = vpack.c.b16 %v6766, %v6762
  %v6799 = vpack.c.b16 %v6767, %v6763
  %6832 = vmatprep.subr.bf16.mxu0 %v6769
  %6833 = vmatpush1.bf16.msra.mxu0 %v6768
  %6834 = vmatprep.subr.bf16.mxu0 %v6773
  %6835 = vmatpush1.bf16.msra.mxu0 %v6772
  %6836 = vmatprep.subr.bf16.mxu0 %v6777
  %6837 = vmatpush1.bf16.msra.mxu0 %v6776
  %6838 = vmatprep.subr.bf16.mxu0 %v6781
  %6839 = vmatpush1.bf16.msra.mxu0 %v6780
  %6840 = vmatprep.subr.bf16.mxu0 %v6785
  %6841 = vmatpush1.bf16.msra.mxu0 %v6784
  %6842 = vmatprep.subr.bf16.mxu0 %v6789
  %6843 = vmatpush1.bf16.msra.mxu0 %v6788
  %6844 = vmatprep.subr.bf16.mxu0 %v6793
  %6845 = vmatpush1.bf16.msra.mxu0 %v6792
  %6846 = vmatprep.subr.bf16.mxu0 %v6797
  %6847 = vmatpush1.bf16.msra.mxu0 %v6796
  %6848 = vmatprep.subr.bf16.mxu0 0
  %6849 = vmatpush1.bf16.msra.mxu0 0
  %6850 = vmatprep.subr.bf16.mxu0 0
  %6851 = vmatpush1.bf16.msra.mxu0 0
  %6852 = vmatprep.subr.bf16.mxu0 0
  %6853 = vmatpush1.bf16.msra.mxu0 0
  %6854 = vmatprep.subr.bf16.mxu0 0
  %6855 = vmatpush1.bf16.msra.mxu0 0
  %6856 = vmatprep.subr.bf16.mxu0 0
  %6857 = vmatpush1.bf16.msra.mxu0 0
  %6858 = vmatprep.subr.bf16.mxu0 0
  %6859 = vmatpush1.bf16.msra.mxu0 0
  %6860 = vmatprep.subr.bf16.mxu0 0
  %6861 = vmatpush1.bf16.msra.mxu0 0
  %6862 = vmatprep.subr.bf16.mxu0 0
  %6863 = vmatpush1.bf16.msra.mxu0 0
  %6864 = vmatprep.mubr.bf16.mxu0 0
  %6865 = vmatmul.mubr.bf16.gmra.mrb[0].mxu0 %v5906
  %v6866 = vpop.f32.mrb[0].mxu0
  %v6867 = vadd.f32 0.0, %v6866
  %v6868 = vpop.f32.mrb[0].mxu0
  %v6869 = vadd.f32 0.0, %v6868
  %v6870 = vpop.f32.mrb[0].mxu0
  %v6871 = vadd.f32 0.0, %v6870
  %v6872 = vpop.f32.mrb[0].mxu0
  %v6873 = vadd.f32 0.0, %v6872
  %6874 = vmatprep.mubr.bf16.mxu0 0
  %6875 = vmatmul.mubr.bf16.gmra.mrb[0].mxu0 %v5907
  %v6876 = vpop.f32.mrb[0].mxu0
  %v6877 = vadd.f32 0.0, %v6876
  %v6878 = vpop.f32.mrb[0].mxu0
  %v6879 = vadd.f32 0.0, %v6878
  %v6880 = vpop.f32.mrb[0].mxu0
  %v6881 = vadd.f32 0.0, %v6880
  %v6882 = vpop.f32.mrb[0].mxu0
  %v6883 = vadd.f32 0.0, %v6882
  %6884 = vdwg.mxu0
  %6885 = vmatprep.subr.bf16.mxu0 %v6771
  %6886 = vmatpush1.bf16.msra.mxu0 %v6770
  %6887 = vmatprep.subr.bf16.mxu0 %v6775
  %6888 = vmatpush1.bf16.msra.mxu0 %v6774
  %6889 = vmatprep.subr.bf16.mxu0 %v6779
  %6890 = vmatpush1.bf16.msra.mxu0 %v6778
  %6891 = vmatprep.subr.bf16.mxu0 %v6783
  %6892 = vmatpush1.bf16.msra.mxu0 %v6782
  %6893 = vmatprep.subr.bf16.mxu0 %v6787
  %6894 = vmatpush1.bf16.msra.mxu0 %v6786
  %6895 = vmatprep.subr.bf16.mxu0 %v6791
  %6896 = vmatpush1.bf16.msra.mxu0 %v6790
  %6897 = vmatprep.subr.bf16.mxu0 %v6795
  %6898 = vmatpush1.bf16.msra.mxu0 %v6794
  %6899 = vmatprep.subr.bf16.mxu0 %v6799
  %6900 = vmatpush1.bf16.msra.mxu0 %v6798
  %6901 = vmatprep.subr.bf16.mxu0 0
  %6902 = vmatpush1.bf16.msra.mxu0 0
  %6903 = vmatprep.subr.bf16.mxu0 0
  %6904 = vmatpush1.bf16.msra.mxu0 0
  %6905 = vmatprep.subr.bf16.mxu0 0
  %6906 = vmatpush1.bf16.msra.mxu0 0
  %6907 = vmatprep.subr.bf16.mxu0 0
  %6908 = vmatpush1.bf16.msra.mxu0 0
  %6909 = vmatprep.subr.bf16.mxu0 0
  %6910 = vmatpush1.bf16.msra.mxu0 0
  %6911 = vmatprep.subr.bf16.mxu0 0
  %6912 = vmatpush1.bf16.msra.mxu0 0
  %6913 = vmatprep.subr.bf16.mxu0 0
  %6914 = vmatpush1.bf16.msra.mxu0 0
  %6915 = vmatprep.subr.bf16.mxu0 0
  %6916 = vmatpush1.bf16.msra.mxu0 0
  %6917 = vmatprep.mubr.bf16.mxu0 0
  %6918 = vmatmul.mubr.bf16.gmra.mrb[0].mxu0 %v5906
  %v6919 = vpop.f32.mrb[0].mxu0
  %v6920 = vadd.f32 0.0, %v6919
  %v6921 = vpop.f32.mrb[0].mxu0
  %v6922 = vadd.f32 0.0, %v6921
  %v6923 = vpop.f32.mrb[0].mxu0
  %v6924 = vadd.f32 0.0, %v6923
  %v6925 = vpop.f32.mrb[0].mxu0
  %v6926 = vadd.f32 0.0, %v6925
  %6927 = vmatprep.mubr.bf16.mxu0 0
  %6928 = vmatmul.mubr.bf16.gmra.mrb[0].mxu0 %v5907
  %v6929 = vpop.f32.mrb[0].mxu0
  %v6930 = vadd.f32 0.0, %v6929
  %v6931 = vpop.f32.mrb[0].mxu0
  %v6932 = vadd.f32 0.0, %v6931
  %v6933 = vpop.f32.mrb[0].mxu0
  %v6934 = vadd.f32 0.0, %v6933
  %v6935 = vpop.f32.mrb[0].mxu0
  %v6936 = vadd.f32 0.0, %v6935
  %6937 = vdwg.mxu0
  %v6938 = vadd.f32 %v6624, %v6867
  %v6939 = vadd.f32 %v6625, %v6869
  %v6940 = vadd.f32 %v6626, %v6920
  %v6941 = vadd.f32 %v6627, %v6922
  %v6942 = vadd.f32 %v6628, %v6871
  %v6943 = vadd.f32 %v6629, %v6873
  %v6944 = vadd.f32 %v6630, %v6924
  %v6945 = vadd.f32 %v6631, %v6926
  %v6946 = vadd.f32 %v6632, %v6877
  %v6947 = vadd.f32 %v6633, %v6879
  %v6948 = vadd.f32 %v6634, %v6930
  %v6949 = vadd.f32 %v6635, %v6932
  %v6950 = vadd.f32 %v6636, %v6881
  %v6951 = vadd.f32 %v6637, %v6883
  %v6952 = vadd.f32 %v6638, %v6934
  %v6953 = vadd.f32 %v6639, %v6936
  %v6954 = vxor.u32 %v6938, 2147483648
  %v6955 = vxor.u32 %v6942, 2147483648
  %v6956 = vxor.u32 %v6946, 2147483648
  %v6957 = vxor.u32 %v6950, 2147483648
  %v6958 = vmul.f32 %v6954, 1.442695
  %v6959 = vpow.pop %v6958
  %v6960 = vmul.f32 %v6955, 1.442695
  %v6961 = vpow.pop %v6960
  %v6962 = vmul.f32 %v6956, 1.442695
  %v6963 = vpow.pop %v6962
  %v6964 = vmul.f32 %v6957, 1.442695
  %v6965 = vpow.pop %v6964
  %v6966 = vadd.f32 %v6959, 1.0
  %v6967 = vadd.f32 %v6961, 1.0
  %v6968 = vadd.f32 %v6963, 1.0
  %v6969 = vadd.f32 %v6965, 1.0
  %v6970 = vrcp.pop %v6966
  %v6971 = vmul.f32 1.0, %v6970
  %v6972 = vrcp.pop %v6967
  %v6973 = vmul.f32 1.0, %v6972
  %v6974 = vrcp.pop %v6968
  %v6975 = vmul.f32 1.0, %v6974
  %v6976 = vrcp.pop %v6969
  %v6977 = vmul.f32 1.0, %v6976
  %v6978 = vxor.u32 %v6939, 2147483648
  %v6979 = vxor.u32 %v6943, 2147483648
  %v6980 = vxor.u32 %v6947, 2147483648
  %v6981 = vxor.u32 %v6951, 2147483648
  %v6982 = vmul.f32 %v6978, 1.442695
  %v6983 = vpow.pop %v6982
  %v6984 = vmul.f32 %v6979, 1.442695
  %v6985 = vpow.pop %v6984
  %v6986 = vmul.f32 %v6980, 1.442695
  %v6987 = vpow.pop %v6986
  %v6988 = vmul.f32 %v6981, 1.442695
  %v6989 = vpow.pop %v6988
  %v6990 = vadd.f32 %v6983, 1.0
  %v6991 = vadd.f32 %v6985, 1.0
  %v6992 = vadd.f32 %v6987, 1.0
  %v6993 = vadd.f32 %v6989, 1.0
  %v6994 = vrcp.pop %v6990
  %v6995 = vmul.f32 1.0, %v6994
  %v6996 = vrcp.pop %v6991
  %v6997 = vmul.f32 1.0, %v6996
  %v6998 = vrcp.pop %v6992
  %v6999 = vmul.f32 1.0, %v6998
  %v7000 = vrcp.pop %v6993
  %v7001 = vmul.f32 1.0, %v7000
  %v7002 = vtanh.pop %v6940
  %v7003 = vtanh.pop %v6944
  %v7004 = vtanh.pop %v6948
  %v7005 = vtanh.pop %v6952
  %v7006 = vxor.u32 %v6941, 2147483648
  %v7007 = vxor.u32 %v6945, 2147483648
  %v7008 = vxor.u32 %v6949, 2147483648
  %v7009 = vxor.u32 %v6953, 2147483648
  %v7010 = vmul.f32 %v7006, 1.442695
  %v7011 = vpow.pop %v7010
  %v7012 = vmul.f32 %v7007, 1.442695
  %v7013 = vpow.pop %v7012
  %v7014 = vmul.f32 %v7008, 1.442695
  %v7015 = vpow.pop %v7014
  %v7016 = vmul.f32 %v7009, 1.442695
  %v7017 = vpow.pop %v7016
  %v7018 = vadd.f32 %v7011, 1.0
  %v7019 = vadd.f32 %v7013, 1.0
  %v7020 = vadd.f32 %v7015, 1.0
  %v7021 = vadd.f32 %v7017, 1.0
  %v7022 = vrcp.pop %v7018
  %v7023 = vmul.f32 1.0, %v7022
  %v7024 = vrcp.pop %v7019
  %v7025 = vmul.f32 1.0, %v7024
  %v7026 = vrcp.pop %v7020
  %v7027 = vmul.f32 1.0, %v7026
  %v7028 = vrcp.pop %v7021
  %v7029 = vmul.f32 1.0, %v7028
  %v7030 = vmul.f32 %v6995, %v5894
  %v7031 = vmul.f32 %v6997, %v5895
  %v7032 = vmul.f32 %v6999, %v5896
  %v7033 = vmul.f32 %v7001, %v5897
  %v7034 = vmul.f32 %v6971, %v7002
  %v7035 = vmul.f32 %v6973, %v7003
  %v7036 = vmul.f32 %v6975, %v7004
  %v7037 = vmul.f32 %v6977, %v7005
  %v7038 = vadd.f32 %v7030, %v7034
  %v7039 = vadd.f32 %v7031, %v7035
  %v7040 = vadd.f32 %v7032, %v7036
  %v7041 = vadd.f32 %v7033, %v7037
  %v7042 = vtanh.pop %v7038
  %v7043 = vtanh.pop %v7039
  %v7044 = vtanh.pop %v7040
  %v7045 = vtanh.pop %v7041
  %v7046 = vmul.f32 %v7023, %v7042
  %v7047 = vmul.f32 %v7025, %v7043
  %v7048 = vmul.f32 %v7027, %v7044
  %v7049 = vmul.f32 %v7029, %v7045
  %v7050 = vpack.c.bf16 %v7047, %v7046
  %v7051 = vpack.c.bf16 %v7049, %v7048
  %v7052 = vld [vmem:[%s16] sm:$0xff]
  %v7053 = vld [vmem:[%s16 + $0x8] sm:$0xff]
  %v7054 = vld [vmem:[%s16 + $0x10] sm:$0xff]
  %v7055 = vld [vmem:[%s16 + $0x18] sm:$0xff]
  %v7056 = vld [vmem:[%s16 + $0x20] sm:$0xff]
  %v7057 = vld [vmem:[%s16 + $0x28] sm:$0xff]
  %v7058 = vld [vmem:[%s16 + $0x30] sm:$0xff]
  %v7059 = vld [vmem:[%s16 + $0x38] sm:$0xff]
  %v7060 = vld [vmem:[%s16 + $0x40] sm:$0xff]
  %v7061 = vld [vmem:[%s16 + $0x48] sm:$0xff]
  %v7062 = vld [vmem:[%s16 + $0x50] sm:$0xff]
  %v7063 = vld [vmem:[%s16 + $0x58] sm:$0xff]
  %v7064 = vld [vmem:[%s16 + $0x60] sm:$0xff]
  %v7065 = vld [vmem:[%s16 + $0x68] sm:$0xff]
  %v7066 = vld [vmem:[%s16 + $0x70] sm:$0xff]
  %v7067 = vld [vmem:[%s16 + $0x78] sm:$0xff]
  %v7068 = vld [vmem:[%s16 + $0x80] sm:$0xff]
  %v7069 = vld [vmem:[%s16 + $0x88] sm:$0xff]
  %v7070 = vld [vmem:[%s16 + $0x90] sm:$0xff]
  %v7071 = vld [vmem:[%s16 + $0x98] sm:$0xff]
  %v7072 = vld [vmem:[%s16 + $0xa0] sm:$0xff]
  %v7073 = vld [vmem:[%s16 + $0xa8] sm:$0xff]
  %v7074 = vld [vmem:[%s16 + $0xb0] sm:$0xff]
  %v7075 = vld [vmem:[%s16 + $0xb8] sm:$0xff]
  %v7076 = vld [vmem:[%s16 + $0xc0] sm:$0xff]
  %v7077 = vld [vmem:[%s16 + $0xc8] sm:$0xff]
  %v7078 = vld [vmem:[%s16 + $0xd0] sm:$0xff]
  %v7079 = vld [vmem:[%s16 + $0xd8] sm:$0xff]
  %v7080 = vld [vmem:[%s16 + $0xe0] sm:$0xff]
  %v7081 = vld [vmem:[%s16 + $0xe8] sm:$0xff]
  %v7082 = vld [vmem:[%s16 + $0xf0] sm:$0xff]
  %v7083 = vld [vmem:[%s16 + $0xf8] sm:$0xff]
  %v7116 = vunpack.c.l.b16 %v7052
  %v7117 = vunpack.c.h.b16 %v7052
  %v7118 = vunpack.c.l.b16 %v7053
  %v7119 = vunpack.c.h.b16 %v7053
  %v7120 = vunpack.c.l.b16 %v7054
  %v7121 = vunpack.c.h.b16 %v7054
  %v7122 = vunpack.c.l.b16 %v7055
  %v7123 = vunpack.c.h.b16 %v7055
  %v7124 = vunpack.c.l.b16 %v7056
  %v7125 = vunpack.c.h.b16 %v7056
  %v7126 = vunpack.c.l.b16 %v7057
  %v7127 = vunpack.c.h.b16 %v7057
  %v7128 = vunpack.c.l.b16 %v7058
  %v7129 = vunpack.c.h.b16 %v7058
  %v7130 = vunpack.c.l.b16 %v7059
  %v7131 = vunpack.c.h.b16 %v7059
  %v7132 = vunpack.c.l.b16 %v7060
  %v7133 = vunpack.c.h.b16 %v7060
  %v7134 = vunpack.c.l.b16 %v7061
  %v7135 = vunpack.c.h.b16 %v7061
  %v7136 = vunpack.c.l.b16 %v7062
  %v7137 = vunpack.c.h.b16 %v7062
  %v7138 = vunpack.c.l.b16 %v7063
  %v7139 = vunpack.c.h.b16 %v7063
  %v7140 = vunpack.c.l.b16 %v7064
  %v7141 = vunpack.c.h.b16 %v7064
  %v7142 = vunpack.c.l.b16 %v7065
  %v7143 = vunpack.c.h.b16 %v7065
  %v7144 = vunpack.c.l.b16 %v7066
  %v7145 = vunpack.c.h.b16 %v7066
  %v7146 = vunpack.c.l.b16 %v7067
  %v7147 = vunpack.c.h.b16 %v7067
  %v7148 = vunpack.c.l.b16 %v7068
  %v7149 = vunpack.c.h.b16 %v7068
  %v7150 = vunpack.c.l.b16 %v7069
  %v7151 = vunpack.c.h.b16 %v7069
  %v7152 = vunpack.c.l.b16 %v7070
  %v7153 = vunpack.c.h.b16 %v7070
  %v7154 = vunpack.c.l.b16 %v7071
  %v7155 = vunpack.c.h.b16 %v7071
  %v7156 = vunpack.c.l.b16 %v7072
  %v7157 = vunpack.c.h.b16 %v7072
  %v7158 = vunpack.c.l.b16 %v7073
  %v7159 = vunpack.c.h.b16 %v7073
  %v7160 = vunpack.c.l.b16 %v7074
  %v7161 = vunpack.c.h.b16 %v7074
  %v7162 = vunpack.c.l.b16 %v7075
  %v7163 = vunpack.c.h.b16 %v7075
  %v7164 = vunpack.c.l.b16 %v7076
  %v7165 = vunpack.c.h.b16 %v7076
  %v7166 = vunpack.c.l.b16 %v7077
  %v7167 = vunpack.c.h.b16 %v7077
  %v7168 = vunpack.c.l.b16 %v7078
  %v7169 = vunpack.c.h.b16 %v7078
  %v7170 = vunpack.c.l.b16 %v7079
  %v7171 = vunpack.c.h.b16 %v7079
  %v7172 = vunpack.c.l.b16 %v7080
  %v7173 = vunpack.c.h.b16 %v7080
  %v7174 = vunpack.c.l.b16 %v7081
  %v7175 = vunpack.c.h.b16 %v7081
  %v7176 = vunpack.c.l.b16 %v7082
  %v7177 = vunpack.c.h.b16 %v7082
  %v7178 = vunpack.c.l.b16 %v7083
  %v7179 = vunpack.c.h.b16 %v7083
  %v7180 = vpack.c.b16 %v7120, %v7116
  %v7181 = vpack.c.b16 %v7121, %v7117
  %v7182 = vpack.c.b16 %v7122, %v7118
  %v7183 = vpack.c.b16 %v7123, %v7119
  %v7184 = vpack.c.b16 %v7128, %v7124
  %v7185 = vpack.c.b16 %v7129, %v7125
  %v7186 = vpack.c.b16 %v7130, %v7126
  %v7187 = vpack.c.b16 %v7131, %v7127
  %v7188 = vpack.c.b16 %v7136, %v7132
  %v7189 = vpack.c.b16 %v7137, %v7133
  %v7190 = vpack.c.b16 %v7138, %v7134
  %v7191 = vpack.c.b16 %v7139, %v7135
  %v7192 = vpack.c.b16 %v7144, %v7140
  %v7193 = vpack.c.b16 %v7145, %v7141
  %v7194 = vpack.c.b16 %v7146, %v7142
  %v7195 = vpack.c.b16 %v7147, %v7143
  %v7196 = vpack.c.b16 %v7152, %v7148
  %v7197 = vpack.c.b16 %v7153, %v7149
  %v7198 = vpack.c.b16 %v7154, %v7150
  %v7199 = vpack.c.b16 %v7155, %v7151
  %v7200 = vpack.c.b16 %v7160, %v7156
  %v7201 = vpack.c.b16 %v7161, %v7157
  %v7202 = vpack.c.b16 %v7162, %v7158
  %v7203 = vpack.c.b16 %v7163, %v7159
  %v7204 = vpack.c.b16 %v7168, %v7164
  %v7205 = vpack.c.b16 %v7169, %v7165
  %v7206 = vpack.c.b16 %v7170, %v7166
  %v7207 = vpack.c.b16 %v7171, %v7167
  %v7208 = vpack.c.b16 %v7176, %v7172
  %v7209 = vpack.c.b16 %v7177, %v7173
  %v7210 = vpack.c.b16 %v7178, %v7174
  %v7211 = vpack.c.b16 %v7179, %v7175
  %7244 = vmatprep.subr.bf16.mxu0 %v7181
  %7245 = vmatpush1.bf16.msra.mxu0 %v7180
  %7246 = vmatprep.subr.bf16.mxu0 %v7185
  %7247 = vmatpush1.bf16.msra.mxu0 %v7184
  %7248 = vmatprep.subr.bf16.mxu0 %v7189
  %7249 = vmatpush1.bf16.msra.mxu0 %v7188
  %7250 = vmatprep.subr.bf16.mxu0 %v7193
  %7251 = vmatpush1.bf16.msra.mxu0 %v7192
  %7252 = vmatprep.subr.bf16.mxu0 %v7197
  %7253 = vmatpush1.bf16.msra.mxu0 %v7196
  %7254 = vmatprep.subr.bf16.mxu0 %v7201
  %7255 = vmatpush1.bf16.msra.mxu0 %v7200
  %7256 = vmatprep.subr.bf16.mxu0 %v7205
  %7257 = vmatpush1.bf16.msra.mxu0 %v7204
  %7258 = vmatprep.subr.bf16.mxu0 %v7209
  %7259 = vmatpush1.bf16.msra.mxu0 %v7208
  %7260 = vmatprep.subr.bf16.mxu0 0
  %7261 = vmatpush1.bf16.msra.mxu0 0
  %7262 = vmatprep.subr.bf16.mxu0 0
  %7263 = vmatpush1.bf16.msra.mxu0 0
  %7264 = vmatprep.subr.bf16.mxu0 0
  %7265 = vmatpush1.bf16.msra.mxu0 0
  %7266 = vmatprep.subr.bf16.mxu0 0
  %7267 = vmatpush1.bf16.msra.mxu0 0
  %7268 = vmatprep.subr.bf16.mxu0 0
  %7269 = vmatpush1.bf16.msra.mxu0 0
  %7270 = vmatprep.subr.bf16.mxu0 0
  %7271 = vmatpush1.bf16.msra.mxu0 0
  %7272 = vmatprep.subr.bf16.mxu0 0
  %7273 = vmatpush1.bf16.msra.mxu0 0
  %7274 = vmatprep.subr.bf16.mxu0 0
  %7275 = vmatpush1.bf16.msra.mxu0 0
  %7276 = vmatprep.mubr.bf16.mxu0 0
  %7277 = vmatmul.mubr.bf16.gmra.mrb[0].mxu0 %v7050
  %v7278 = vpop.f32.mrb[0].mxu0
  %v7279 = vadd.f32 %v3638, %v7278
  %v7280 = vpop.f32.mrb[0].mxu0
  %v7281 = vadd.f32 %v3642, %v7280
  %v7282 = vpop.f32.mrb[0].mxu0
  %v7283 = vadd.f32 %v3638, %v7282
  %v7284 = vpop.f32.mrb[0].mxu0
  %v7285 = vadd.f32 %v3642, %v7284
  %7286 = vmatprep.mubr.bf16.mxu0 0
  %7287 = vmatmul.mubr.bf16.gmra.mrb[0].mxu0 %v7051
  %v7288 = vpop.f32.mrb[0].mxu0
  %v7289 = vadd.f32 %v3638, %v7288
  %v7290 = vpop.f32.mrb[0].mxu0
  %v7291 = vadd.f32 %v3642, %v7290
  %v7292 = vpop.f32.mrb[0].mxu0
  %v7293 = vadd.f32 %v3638, %v7292
  %v7294 = vpop.f32.mrb[0].mxu0
  %v7295 = vadd.f32 %v3642, %v7294
  %7296 = vdwg.mxu0
  %7297 = vmatprep.subr.bf16.mxu0 %v7183
  %7298 = vmatpush1.bf16.msra.mxu0 %v7182
  %7299 = vmatprep.subr.bf16.mxu0 %v7187
  %7300 = vmatpush1.bf16.msra.mxu0 %v7186
  %7301 = vmatprep.subr.bf16.mxu0 %v7191
  %7302 = vmatpush1.bf16.msra.mxu0 %v7190
  %7303 = vmatprep.subr.bf16.mxu0 %v7195
  %7304 = vmatpush1.bf16.msra.mxu0 %v7194
  %7305 = vmatprep.subr.bf16.mxu0 %v7199
  %7306 = vmatpush1.bf16.msra.mxu0 %v7198
  %7307 = vmatprep.subr.bf16.mxu0 %v7203
  %7308 = vmatpush1.bf16.msra.mxu0 %v7202
  %7309 = vmatprep.subr.bf16.mxu0 %v7207
  %7310 = vmatpush1.bf16.msra.mxu0 %v7206
  %7311 = vmatprep.subr.bf16.mxu0 %v7211
  %7312 = vmatpush1.bf16.msra.mxu0 %v7210
  %7313 = vmatprep.subr.bf16.mxu0 0
  %7314 = vmatpush1.bf16.msra.mxu0 0
  %7315 = vmatprep.subr.bf16.mxu0 0
  %7316 = vmatpush1.bf16.msra.mxu0 0
  %7317 = vmatprep.subr.bf16.mxu0 0
  %7318 = vmatpush1.bf16.msra.mxu0 0
  %7319 = vmatprep.subr.bf16.mxu0 0
  %7320 = vmatpush1.bf16.msra.mxu0 0
  %7321 = vmatprep.subr.bf16.mxu0 0
  %7322 = vmatpush1.bf16.msra.mxu0 0
  %7323 = vmatprep.subr.bf16.mxu0 0
  %7324 = vmatpush1.bf16.msra.mxu0 0
  %7325 = vmatprep.subr.bf16.mxu0 0
  %7326 = vmatpush1.bf16.msra.mxu0 0
  %7327 = vmatprep.subr.bf16.mxu0 0
  %7328 = vmatpush1.bf16.msra.mxu0 0
  %7329 = vmatprep.mubr.bf16.mxu0 0
  %7330 = vmatmul.mubr.bf16.gmra.mrb[0].mxu0 %v7050
  %v7331 = vpop.f32.mrb[0].mxu0
  %v7332 = vadd.f32 %v3646, %v7331
  %v7333 = vpop.f32.mrb[0].mxu0
  %v7334 = vadd.f32 %v3650, %v7333
  %v7335 = vpop.f32.mrb[0].mxu0
  %v7336 = vadd.f32 %v3646, %v7335
  %v7337 = vpop.f32.mrb[0].mxu0
  %v7338 = vadd.f32 %v3650, %v7337
  %7339 = vmatprep.mubr.bf16.mxu0 0
  %7340 = vmatmul.mubr.bf16.gmra.mrb[0].mxu0 %v7051
  %v7341 = vpop.f32.mrb[0].mxu0
  %v7342 = vadd.f32 %v3646, %v7341
  %v7343 = vpop.f32.mrb[0].mxu0
  %v7344 = vadd.f32 %v3650, %v7343
  %v7345 = vpop.f32.mrb[0].mxu0
  %v7346 = vadd.f32 %v3646, %v7345
  %v7347 = vpop.f32.mrb[0].mxu0
  %v7348 = vadd.f32 %v3650, %v7347
  %7349 = vdwg.mxu0
  %v7350 = vpack.c.bf16 %v6615, %v6614
  %v7351 = vpack.c.bf16 %v6617, %v6616
  %v7352 = vld [vmem:[%s17] sm:$0xff]
  %v7353 = vld [vmem:[%s17 + $0x8] sm:$0xff]
  %v7354 = vld [vmem:[%s17 + $0x10] sm:$0xff]
  %v7355 = vld [vmem:[%s17 + $0x18] sm:$0xff]
  %v7356 = vld [vmem:[%s17 + $0x20] sm:$0xff]
  %v7357 = vld [vmem:[%s17 + $0x28] sm:$0xff]
  %v7358 = vld [vmem:[%s17 + $0x30] sm:$0xff]
  %v7359 = vld [vmem:[%s17 + $0x38] sm:$0xff]
  %v7360 = vld [vmem:[%s17 + $0x40] sm:$0xff]
  %v7361 = vld [vmem:[%s17 + $0x48] sm:$0xff]
  %v7362 = vld [vmem:[%s17 + $0x50] sm:$0xff]
  %v7363 = vld [vmem:[%s17 + $0x58] sm:$0xff]
  %v7364 = vld [vmem:[%s17 + $0x60] sm:$0xff]
  %v7365 = vld [vmem:[%s17 + $0x68] sm:$0xff]
  %v7366 = vld [vmem:[%s17 + $0x70] sm:$0xff]
  %v7367 = vld [vmem:[%s17 + $0x78] sm:$0xff]
  %v7368 = vld [vmem:[%s17 + $0x80] sm:$0xff]
  %v7369 = vld [vmem:[%s17 + $0x88] sm:$0xff]
  %v7370 = vld [vmem:[%s17 + $0x90] sm:$0xff]
  %v7371 = vld [vmem:[%s17 + $0x98] sm:$0xff]
  %v7372 = vld [vmem:[%s17 + $0xa0] sm:$0xff]
  %v7373 = vld [vmem:[%s17 + $0xa8] sm:$0xff]
  %v7374 = vld [vmem:[%s17 + $0xb0] sm:$0xff]
  %v7375 = vld [vmem:[%s17 + $0xb8] sm:$0xff]
  %v7376 = vld [vmem:[%s17 + $0xc0] sm:$0xff]
  %v7377 = vld [vmem:[%s17 + $0xc8] sm:$0xff]
  %v7378 = vld [vmem:[%s17 + $0xd0] sm:$0xff]
  %v7379 = vld [vmem:[%s17 + $0xd8] sm:$0xff]
  %v7380 = vld [vmem:[%s17 + $0xe0] sm:$0xff]
  %v7381 = vld [vmem:[%s17 + $0xe8] sm:$0xff]
  %v7382 = vld [vmem:[%s17 + $0xf0] sm:$0xff]
  %v7383 = vld [vmem:[%s17 + $0xf8] sm:$0xff]
  %v7416 = vunpack.c.l.b16 %v7352
  %v7417 = vunpack.c.h.b16 %v7352
  %v7418 = vunpack.c.l.b16 %v7353
  %v7419 = vunpack.c.h.b16 %v7353
  %v7420 = vunpack.c.l.b16 %v7354
  %v7421 = vunpack.c.h.b16 %v7354
  %v7422 = vunpack.c.l.b16 %v7355
  %v7423 = vunpack.c.h.b16 %v7355
  %v7424 = vunpack.c.l.b16 %v7356
  %v7425 = vunpack.c.h.b16 %v7356
  %v7426 = vunpack.c.l.b16 %v7357
  %v7427 = vunpack.c.h.b16 %v7357
  %v7428 = vunpack.c.l.b16 %v7358
  %v7429 = vunpack.c.h.b16 %v7358
  %v7430 = vunpack.c.l.b16 %v7359
  %v7431 = vunpack.c.h.b16 %v7359
  %v7432 = vunpack.c.l.b16 %v7360
  %v7433 = vunpack.c.h.b16 %v7360
  %v7434 = vunpack.c.l.b16 %v7361
  %v7435 = vunpack.c.h.b16 %v7361
  %v7436 = vunpack.c.l.b16 %v7362
  %v7437 = vunpack.c.h.b16 %v7362
  %v7438 = vunpack.c.l.b16 %v7363
  %v7439 = vunpack.c.h.b16 %v7363
  %v7440 = vunpack.c.l.b16 %v7364
  %v7441 = vunpack.c.h.b16 %v7364
  %v7442 = vunpack.c.l.b16 %v7365
  %v7443 = vunpack.c.h.b16 %v7365
  %v7444 = vunpack.c.l.b16 %v7366
  %v7445 = vunpack.c.h.b16 %v7366
  %v7446 = vunpack.c.l.b16 %v7367
  %v7447 = vunpack.c.h.b16 %v7367
  %v7448 = vunpack.c.l.b16 %v7368
  %v7449 = vunpack.c.h.b16 %v7368
  %v7450 = vunpack.c.l.b16 %v7369
  %v7451 = vunpack.c.h.b16 %v7369
  %v7452 = vunpack.c.l.b16 %v7370
  %v7453 = vunpack.c.h.b16 %v7370
  %v7454 = vunpack.c.l.b16 %v7371
  %v7455 = vunpack.c.h.b16 %v7371
  %v7456 = vunpack.c.l.b16 %v7372
  %v7457 = vunpack.c.h.b16 %v7372
  %v7458 = vunpack.c.l.b16 %v7373
  %v7459 = vunpack.c.h.b16 %v7373
  %v7460 = vunpack.c.l.b16 %v7374
  %v7461 = vunpack.c.h.b16 %v7374
  %v7462 = vunpack.c.l.b16 %v7375
  %v7463 = vunpack.c.h.b16 %v7375
  %v7464 = vunpack.c.l.b16 %v7376
  %v7465 = vunpack.c.h.b16 %v7376
  %v7466 = vunpack.c.l.b16 %v7377
  %v7467 = vunpack.c.h.b16 %v7377
  %v7468 = vunpack.c.l.b16 %v7378
  %v7469 = vunpack.c.h.b16 %v7378
  %v7470 = vunpack.c.l.b16 %v7379
  %v7471 = vunpack.c.h.b16 %v7379
  %v7472 = vunpack.c.l.b16 %v7380
  %v7473 = vunpack.c.h.b16 %v7380
  %v7474 = vunpack.c.l.b16 %v7381
  %v7475 = vunpack.c.h.b16 %v7381
  %v7476 = vunpack.c.l.b16 %v7382
  %v7477 = vunpack.c.h.b16 %v7382
  %v7478 = vunpack.c.l.b16 %v7383
  %v7479 = vunpack.c.h.b16 %v7383
  %v7480 = vpack.c.b16 %v7420, %v7416
  %v7481 = vpack.c.b16 %v7421, %v7417
  %v7482 = vpack.c.b16 %v7422, %v7418
  %v7483 = vpack.c.b16 %v7423, %v7419
  %v7484 = vpack.c.b16 %v7428, %v7424
  %v7485 = vpack.c.b16 %v7429, %v7425
  %v7486 = vpack.c.b16 %v7430, %v7426
  %v7487 = vpack.c.b16 %v7431, %v7427
  %v7488 = vpack.c.b16 %v7436, %v7432
  %v7489 = vpack.c.b16 %v7437, %v7433
  %v7490 = vpack.c.b16 %v7438, %v7434
  %v7491 = vpack.c.b16 %v7439, %v7435
  %v7492 = vpack.c.b16 %v7444, %v7440
  %v7493 = vpack.c.b16 %v7445, %v7441
  %v7494 = vpack.c.b16 %v7446, %v7442
  %v7495 = vpack.c.b16 %v7447, %v7443
  %v7496 = vpack.c.b16 %v7452, %v7448
  %v7497 = vpack.c.b16 %v7453, %v7449
  %v7498 = vpack.c.b16 %v7454, %v7450
  %v7499 = vpack.c.b16 %v7455, %v7451
  %v7500 = vpack.c.b16 %v7460, %v7456
  %v7501 = vpack.c.b16 %v7461, %v7457
  %v7502 = vpack.c.b16 %v7462, %v7458
  %v7503 = vpack.c.b16 %v7463, %v7459
  %v7504 = vpack.c.b16 %v7468, %v7464
  %v7505 = vpack.c.b16 %v7469, %v7465
  %v7506 = vpack.c.b16 %v7470, %v7466
  %v7507 = vpack.c.b16 %v7471, %v7467
  %v7508 = vpack.c.b16 %v7476, %v7472
  %v7509 = vpack.c.b16 %v7477, %v7473
  %v7510 = vpack.c.b16 %v7478, %v7474
  %v7511 = vpack.c.b16 %v7479, %v7475
  %7544 = vmatprep.subr.bf16.mxu0 %v7481
  %7545 = vmatpush1.bf16.msra.mxu0 %v7480
  %7546 = vmatprep.subr.bf16.mxu0 %v7485
  %7547 = vmatpush1.bf16.msra.mxu0 %v7484
  %7548 = vmatprep.subr.bf16.mxu0 %v7489
  %7549 = vmatpush1.bf16.msra.mxu0 %v7488
  %7550 = vmatprep.subr.bf16.mxu0 %v7493
  %7551 = vmatpush1.bf16.msra.mxu0 %v7492
  %7552 = vmatprep.subr.bf16.mxu0 %v7497
  %7553 = vmatpush1.bf16.msra.mxu0 %v7496
  %7554 = vmatprep.subr.bf16.mxu0 %v7501
  %7555 = vmatpush1.bf16.msra.mxu0 %v7500
  %7556 = vmatprep.subr.bf16.mxu0 %v7505
  %7557 = vmatpush1.bf16.msra.mxu0 %v7504
  %7558 = vmatprep.subr.bf16.mxu0 %v7509
  %7559 = vmatpush1.bf16.msra.mxu0 %v7508
  %7560 = vmatprep.subr.bf16.mxu0 0
  %7561 = vmatpush1.bf16.msra.mxu0 0
  %7562 = vmatprep.subr.bf16.mxu0 0
  %7563 = vmatpush1.bf16.msra.mxu0 0
  %7564 = vmatprep.subr.bf16.mxu0 0
  %7565 = vmatpush1.bf16.msra.mxu0 0
  %7566 = vmatprep.subr.bf16.mxu0 0
  %7567 = vmatpush1.bf16.msra.mxu0 0
  %7568 = vmatprep.subr.bf16.mxu0 0
  %7569 = vmatpush1.bf16.msra.mxu0 0
  %7570 = vmatprep.subr.bf16.mxu0 0
  %7571 = vmatpush1.bf16.msra.mxu0 0
  %7572 = vmatprep.subr.bf16.mxu0 0
  %7573 = vmatpush1.bf16.msra.mxu0 0
  %7574 = vmatprep.subr.bf16.mxu0 0
  %7575 = vmatpush1.bf16.msra.mxu0 0
  %7576 = vmatprep.mubr.bf16.mxu0 0
  %7577 = vmatmul.mubr.bf16.gmra.mrb[0].mxu0 %v7350
  %v7578 = vpop.f32.mrb[0].mxu0
  %v7579 = vadd.f32 0.0, %v7578
  %v7580 = vpop.f32.mrb[0].mxu0
  %v7581 = vadd.f32 0.0, %v7580
  %v7582 = vpop.f32.mrb[0].mxu0
  %v7583 = vadd.f32 0.0, %v7582
  %v7584 = vpop.f32.mrb[0].mxu0
  %v7585 = vadd.f32 0.0, %v7584
  %7586 = vmatprep.mubr.bf16.mxu0 0
  %7587 = vmatmul.mubr.bf16.gmra.mrb[0].mxu0 %v7351
  %v7588 = vpop.f32.mrb[0].mxu0
  %v7589 = vadd.f32 0.0, %v7588
  %v7590 = vpop.f32.mrb[0].mxu0
  %v7591 = vadd.f32 0.0, %v7590
  %v7592 = vpop.f32.mrb[0].mxu0
  %v7593 = vadd.f32 0.0, %v7592
  %v7594 = vpop.f32.mrb[0].mxu0
  %v7595 = vadd.f32 0.0, %v7594
  %7596 = vdwg.mxu0
  %7597 = vmatprep.subr.bf16.mxu0 %v7483
  %7598 = vmatpush1.bf16.msra.mxu0 %v7482
  %7599 = vmatprep.subr.bf16.mxu0 %v7487
  %7600 = vmatpush1.bf16.msra.mxu0 %v7486
  %7601 = vmatprep.subr.bf16.mxu0 %v7491
  %7602 = vmatpush1.bf16.msra.mxu0 %v7490
  %7603 = vmatprep.subr.bf16.mxu0 %v7495
  %7604 = vmatpush1.bf16.msra.mxu0 %v7494
  %7605 = vmatprep.subr.bf16.mxu0 %v7499
  %7606 = vmatpush1.bf16.msra.mxu0 %v7498
  %7607 = vmatprep.subr.bf16.mxu0 %v7503
  %7608 = vmatpush1.bf16.msra.mxu0 %v7502
  %7609 = vmatprep.subr.bf16.mxu0 %v7507
  %7610 = vmatpush1.bf16.msra.mxu0 %v7506
  %7611 = vmatprep.subr.bf16.mxu0 %v7511
  %7612 = vmatpush1.bf16.msra.mxu0 %v7510
  %7613 = vmatprep.subr.bf16.mxu0 0
  %7614 = vmatpush1.bf16.msra.mxu0 0
  %7615 = vmatprep.subr.bf16.mxu0 0
  %7616 = vmatpush1.bf16.msra.mxu0 0
  %7617 = vmatprep.subr.bf16.mxu0 0
  %7618 = vmatpush1.bf16.msra.mxu0 0
  %7619 = vmatprep.subr.bf16.mxu0 0
  %7620 = vmatpush1.bf16.msra.mxu0 0
  %7621 = vmatprep.subr.bf16.mxu0 0
  %7622 = vmatpush1.bf16.msra.mxu0 0
  %7623 = vmatprep.subr.bf16.mxu0 0
  %7624 = vmatpush1.bf16.msra.mxu0 0
  %7625 = vmatprep.subr.bf16.mxu0 0
  %7626 = vmatpush1.bf16.msra.mxu0 0
  %7627 = vmatprep.subr.bf16.mxu0 0
  %7628 = vmatpush1.bf16.msra.mxu0 0
  %7629 = vmatprep.mubr.bf16.mxu0 0
  %7630 = vmatmul.mubr.bf16.gmra.mrb[0].mxu0 %v7350
  %v7631 = vpop.f32.mrb[0].mxu0
  %v7632 = vadd.f32 0.0, %v7631
  %v7633 = vpop.f32.mrb[0].mxu0
  %v7634 = vadd.f32 0.0, %v7633
  %v7635 = vpop.f32.mrb[0].mxu0
  %v7636 = vadd.f32 0.0, %v7635
  %v7637 = vpop.f32.mrb[0].mxu0
  %v7638 = vadd.f32 0.0, %v7637
  %7639 = vmatprep.mubr.bf16.mxu0 0
  %7640 = vmatmul.mubr.bf16.gmra.mrb[0].mxu0 %v7351
  %v7641 = vpop.f32.mrb[0].mxu0
  %v7642 = vadd.f32 0.0, %v7641
  %v7643 = vpop.f32.mrb[0].mxu0
  %v7644 = vadd.f32 0.0, %v7643
  %v7645 = vpop.f32.mrb[0].mxu0
  %v7646 = vadd.f32 0.0, %v7645
  %v7647 = vpop.f32.mrb[0].mxu0
  %v7648 = vadd.f32 0.0, %v7647
  %7649 = vdwg.mxu0
  %v7650 = vadd.f32 %v7279, %v7579
  %v7651 = vadd.f32 %v7281, %v7581
  %v7652 = vadd.f32 %v7332, %v7632
  %v7653 = vadd.f32 %v7334, %v7634
  %v7654 = vadd.f32 %v7283, %v7583
  %v7655 = vadd.f32 %v7285, %v7585
  %v7656 = vadd.f32 %v7336, %v7636
  %v7657 = vadd.f32 %v7338, %v7638
  %v7658 = vadd.f32 %v7289, %v7589
  %v7659 = vadd.f32 %v7291, %v7591
  %v7660 = vadd.f32 %v7342, %v7642
  %v7661 = vadd.f32 %v7344, %v7644
  %v7662 = vadd.f32 %v7293, %v7593
  %v7663 = vadd.f32 %v7295, %v7595
  %v7664 = vadd.f32 %v7346, %v7646
  %v7665 = vadd.f32 %v7348, %v7648
  %v7666 = vxor.u32 %v7650, 2147483648
  %v7667 = vxor.u32 %v7654, 2147483648
  %v7668 = vxor.u32 %v7658, 2147483648
  %v7669 = vxor.u32 %v7662, 2147483648
  %v7670 = vmul.f32 %v7666, 1.442695
  %v7671 = vpow.pop %v7670
  %v7672 = vmul.f32 %v7667, 1.442695
  %v7673 = vpow.pop %v7672
  %v7674 = vmul.f32 %v7668, 1.442695
  %v7675 = vpow.pop %v7674
  %v7676 = vmul.f32 %v7669, 1.442695
  %v7677 = vpow.pop %v7676
  %v7678 = vadd.f32 %v7671, 1.0
  %v7679 = vadd.f32 %v7673, 1.0
  %v7680 = vadd.f32 %v7675, 1.0
  %v7681 = vadd.f32 %v7677, 1.0
  %v7682 = vrcp.pop %v7678
  %v7683 = vmul.f32 1.0, %v7682
  %v7684 = vrcp.pop %v7679
  %v7685 = vmul.f32 1.0, %v7684
  %v7686 = vrcp.pop %v7680
  %v7687 = vmul.f32 1.0, %v7686
  %v7688 = vrcp.pop %v7681
  %v7689 = vmul.f32 1.0, %v7688
  %v7690 = vxor.u32 %v7651, 2147483648
  %v7691 = vxor.u32 %v7655, 2147483648
  %v7692 = vxor.u32 %v7659, 2147483648
  %v7693 = vxor.u32 %v7663, 2147483648
  %v7694 = vmul.f32 %v7690, 1.442695
  %v7695 = vpow.pop %v7694
  %v7696 = vmul.f32 %v7691, 1.442695
  %v7697 = vpow.pop %v7696
  %v7698 = vmul.f32 %v7692, 1.442695
  %v7699 = vpow.pop %v7698
  %v7700 = vmul.f32 %v7693, 1.442695
  %v7701 = vpow.pop %v7700
  %v7702 = vadd.f32 %v7695, 1.0
  %v7703 = vadd.f32 %v7697, 1.0
  %v7704 = vadd.f32 %v7699, 1.0
  %v7705 = vadd.f32 %v7701, 1.0
  %v7706 = vrcp.pop %v7702
  %v7707 = vmul.f32 1.0, %v7706
  %v7708 = vrcp.pop %v7703
  %v7709 = vmul.f32 1.0, %v7708
  %v7710 = vrcp.pop %v7704
  %v7711 = vmul.f32 1.0, %v7710
  %v7712 = vrcp.pop %v7705
  %v7713 = vmul.f32 1.0, %v7712
  %v7714 = vtanh.pop %v7652
  %v7715 = vtanh.pop %v7656
  %v7716 = vtanh.pop %v7660
  %v7717 = vtanh.pop %v7664
  %v7718 = vxor.u32 %v7653, 2147483648
  %v7719 = vxor.u32 %v7657, 2147483648
  %v7720 = vxor.u32 %v7661, 2147483648
  %v7721 = vxor.u32 %v7665, 2147483648
  %v7722 = vmul.f32 %v7718, 1.442695
  %v7723 = vpow.pop %v7722
  %v7724 = vmul.f32 %v7719, 1.442695
  %v7725 = vpow.pop %v7724
  %v7726 = vmul.f32 %v7720, 1.442695
  %v7727 = vpow.pop %v7726
  %v7728 = vmul.f32 %v7721, 1.442695
  %v7729 = vpow.pop %v7728
  %v7730 = vadd.f32 %v7723, 1.0
  %v7731 = vadd.f32 %v7725, 1.0
  %v7732 = vadd.f32 %v7727, 1.0
  %v7733 = vadd.f32 %v7729, 1.0
  %v7734 = vrcp.pop %v7730
  %v7735 = vmul.f32 1.0, %v7734
  %v7736 = vrcp.pop %v7731
  %v7737 = vmul.f32 1.0, %v7736
  %v7738 = vrcp.pop %v7732
  %v7739 = vmul.f32 1.0, %v7738
  %v7740 = vrcp.pop %v7733
  %v7741 = vmul.f32 1.0, %v7740
  %v7742 = vmul.f32 %v7707, %v6606
  %v7743 = vmul.f32 %v7709, %v6607
  %v7744 = vmul.f32 %v7711, %v6608
  %v7745 = vmul.f32 %v7713, %v6609
  %v7746 = vmul.f32 %v7683, %v7714
  %v7747 = vmul.f32 %v7685, %v7715
  %v7748 = vmul.f32 %v7687, %v7716
  %v7749 = vmul.f32 %v7689, %v7717
  %v7750 = vadd.f32 %v7742, %v7746
  %v7751 = vadd.f32 %v7743, %v7747
  %v7752 = vadd.f32 %v7744, %v7748
  %v7753 = vadd.f32 %v7745, %v7749
  %v7754 = vtanh.pop %v7750
  %v7755 = vtanh.pop %v7751
  %v7756 = vtanh.pop %v7752
  %v7757 = vtanh.pop %v7753
  %v7758 = vmul.f32 %v7735, %v7754
  %v7759 = vmul.f32 %v7737, %v7755
  %v7760 = vmul.f32 %v7739, %v7756
  %v7761 = vmul.f32 %v7741, %v7757
  %s7762 = scalar_lea.vmem [#allocation3], 96
  %7763 = vst [vmem:[%s7762] sm:$0xff] %v7758
  %7764 = vst [vmem:[%s7762 + $0x8] sm:$0xff] %v7759
  %7765 = vst [vmem:[%s7762 + $0x10] sm:$0xff] %v7760
  %7766 = vst [vmem:[%s7762 + $0x18] sm:$0xff] %v7761
  %v7767 = vld [vmem:[#allocation3] sm:$0xff]
  %v7768 = vld [vmem:[#allocation3 + $0x8] sm:$0xff]
  %v7769 = vld [vmem:[#allocation3 + $0x10] sm:$0xff]
  %v7770 = vld [vmem:[#allocation3 + $0x18] sm:$0xff]
  %v7771 = vld [vmem:[#allocation3 + $0x20] sm:$0xff]
  %v7772 = vld [vmem:[#allocation3 + $0x28] sm:$0xff]
  %v7773 = vld [vmem:[#allocation3 + $0x30] sm:$0xff]
  %v7774 = vld [vmem:[#allocation3 + $0x38] sm:$0xff]
  %v7775 = vld [vmem:[#allocation3 + $0x40] sm:$0xff]
  %v7776 = vld [vmem:[#allocation3 + $0x48] sm:$0xff]
  %v7777 = vld [vmem:[#allocation3 + $0x50] sm:$0xff]
  %v7778 = vld [vmem:[#allocation3 + $0x58] sm:$0xff]
  %v7779 = vld [vmem:[#allocation3 + $0x60] sm:$0xff]
  %v7780 = vld [vmem:[#allocation3 + $0x68] sm:$0xff]
  %v7781 = vld [vmem:[#allocation3 + $0x70] sm:$0xff]
  %v7782 = vld [vmem:[#allocation3 + $0x78] sm:$0xff]
  %v7783 = vpack.c.bf16 %v7768, %v7767
  %v7784 = vpack.c.bf16 %v7770, %v7769
  %v7785 = vpack.c.bf16 %v7772, %v7771
  %v7786 = vpack.c.bf16 %v7774, %v7773
  %v7787 = vpack.c.bf16 %v7776, %v7775
  %v7788 = vpack.c.bf16 %v7778, %v7777
  %v7789 = vpack.c.bf16 %v7780, %v7779
  %v7790 = vpack.c.bf16 %v7782, %v7781
  %v7791 = vld [vmem:[%s19] sm:$0xf]
  %v7792 = vld [vmem:[%s19 + $0x4] sm:$0xf]
  %v7793 = vld [vmem:[%s19 + $0x8] sm:$0xf]
  %v7794 = vld [vmem:[%s19 + $0xc] sm:$0xf]
  %v7795 = vld [vmem:[%s19 + $0x10] sm:$0xf]
  %v7796 = vld [vmem:[%s19 + $0x14] sm:$0xf]
  %v7797 = vld [vmem:[%s19 + $0x18] sm:$0xf]
  %v7798 = vld [vmem:[%s19 + $0x1c] sm:$0xf]
  %v7799 = vld [vmem:[%s19 + $0x20] sm:$0xf]
  %v7800 = vld [vmem:[%s19 + $0x24] sm:$0xf]
  %v7801 = vld [vmem:[%s19 + $0x28] sm:$0xf]
  %v7802 = vld [vmem:[%s19 + $0x2c] sm:$0xf]
  %v7803 = vld [vmem:[%s19 + $0x30] sm:$0xf]
  %v7804 = vld [vmem:[%s19 + $0x34] sm:$0xf]
  %v7805 = vld [vmem:[%s19 + $0x38] sm:$0xf]
  %v7806 = vld [vmem:[%s19 + $0x3c] sm:$0xf]
  %v7807 = vld [vmem:[%s20] sm:$0x1]
  %v7809 = vlaneseq
  %v7810 = vshrl.u32 %v7809, 7
  %v7811 = vsub.s32 0, %v7810
  %v7812 = vrot.slane %v7807, %v7811
  %v7830 = vunpack.c.l.b16 %v7791
  %v7831 = vunpack.c.l.b16 %v7792
  %v7832 = vunpack.c.l.b16 %v7793
  %v7833 = vunpack.c.l.b16 %v7794
  %v7834 = vunpack.c.l.b16 %v7795
  %v7835 = vunpack.c.l.b16 %v7796
  %v7836 = vunpack.c.l.b16 %v7797
  %v7837 = vunpack.c.l.b16 %v7798
  %v7838 = vunpack.c.l.b16 %v7799
  %v7839 = vunpack.c.l.b16 %v7800
  %v7840 = vunpack.c.l.b16 %v7801
  %v7841 = vunpack.c.l.b16 %v7802
  %v7842 = vunpack.c.l.b16 %v7803
  %v7843 = vunpack.c.l.b16 %v7804
  %v7844 = vunpack.c.l.b16 %v7805
  %v7845 = vunpack.c.l.b16 %v7806
  %v7846 = vpack.c.b16 %v7831, %v7830
  %v7847 = vpack.c.b16 %v7833, %v7832
  %v7848 = vpack.c.b16 %v7835, %v7834
  %v7849 = vpack.c.b16 %v7837, %v7836
  %v7850 = vpack.c.b16 %v7839, %v7838
  %v7851 = vpack.c.b16 %v7841, %v7840
  %v7852 = vpack.c.b16 %v7843, %v7842
  %v7853 = vpack.c.b16 %v7845, %v7844
  %7862 = vmatprep.subr.bf16.mxu0 0
  %7863 = vmatpush1.bf16.msra.mxu0 %v7846
  %7864 = vmatprep.subr.bf16.mxu0 0
  %7865 = vmatpush1.bf16.msra.mxu0 %v7847
  %7866 = vmatprep.subr.bf16.mxu0 0
  %7867 = vmatpush1.bf16.msra.mxu0 %v7848
  %7868 = vmatprep.subr.bf16.mxu0 0
  %7869 = vmatpush1.bf16.msra.mxu0 %v7849
  %7870 = vmatprep.subr.bf16.mxu0 0
  %7871 = vmatpush1.bf16.msra.mxu0 %v7850
  %7872 = vmatprep.subr.bf16.mxu0 0
  %7873 = vmatpush1.bf16.msra.mxu0 %v7851
  %7874 = vmatprep.subr.bf16.mxu0 0
  %7875 = vmatpush1.bf16.msra.mxu0 %v7852
  %7876 = vmatprep.subr.bf16.mxu0 0
  %7877 = vmatpush1.bf16.msra.mxu0 %v7853
  %7878 = vmatprep.subr.bf16.mxu0 0
  %7879 = vmatpush1.bf16.msra.mxu0 0
  %7880 = vmatprep.subr.bf16.mxu0 0
  %7881 = vmatpush1.bf16.msra.mxu0 0
  %7882 = vmatprep.subr.bf16.mxu0 0
  %7883 = vmatpush1.bf16.msra.mxu0 0
  %7884 = vmatprep.subr.bf16.mxu0 0
  %7885 = vmatpush1.bf16.msra.mxu0 0
  %7886 = vmatprep.subr.bf16.mxu0 0
  %7887 = vmatpush1.bf16.msra.mxu0 0
  %7888 = vmatprep.subr.bf16.mxu0 0
  %7889 = vmatpush1.bf16.msra.mxu0 0
  %7890 = vmatprep.subr.bf16.mxu0 0
  %7891 = vmatpush1.bf16.msra.mxu0 0
  %7892 = vmatprep.subr.bf16.mxu0 0
  %7893 = vmatpush1.bf16.msra.mxu0 0
  %7894 = vmatprep.mubr.bf16.mxu0 0
  %7895 = vmatmul.mubr.bf16.gmra.mrb[0].mxu0 %v7783
  %v7896 = vpop.f32.mrb[0].mxu0
  %v7897 = vadd.f32 %v7812, %v7896
  %v7898 = vpop.f32.mrb[0].mxu0
  %v7899 = vpop.f32.mrb[0].mxu0
  %v7900 = vadd.f32 %v7812, %v7899
  %v7901 = vpop.f32.mrb[0].mxu0
  %7902 = vmatprep.mubr.bf16.mxu0 0
  %7903 = vmatmul.mubr.bf16.gmra.mrb[0].mxu0 %v7784
  %v7904 = vpop.f32.mrb[0].mxu0
  %v7905 = vadd.f32 %v7812, %v7904
  %v7906 = vpop.f32.mrb[0].mxu0
  %v7907 = vpop.f32.mrb[0].mxu0
  %v7908 = vadd.f32 %v7812, %v7907
  %v7909 = vpop.f32.mrb[0].mxu0
  %7910 = vmatprep.mubr.bf16.mxu0 0
  %7911 = vmatmul.mubr.bf16.gmra.mrb[0].mxu0 %v7785
  %v7912 = vpop.f32.mrb[0].mxu0
  %v7913 = vadd.f32 %v7812, %v7912
  %v7914 = vpop.f32.mrb[0].mxu0
  %v7915 = vpop.f32.mrb[0].mxu0
  %v7916 = vadd.f32 %v7812, %v7915
  %v7917 = vpop.f32.mrb[0].mxu0
  %7918 = vmatprep.mubr.bf16.mxu0 0
  %7919 = vmatmul.mubr.bf16.gmra.mrb[0].mxu0 %v7786
  %v7920 = vpop.f32.mrb[0].mxu0
  %v7921 = vadd.f32 %v7812, %v7920
  %v7922 = vpop.f32.mrb[0].mxu0
  %v7923 = vpop.f32.mrb[0].mxu0
  %v7924 = vadd.f32 %v7812, %v7923
  %v7925 = vpop.f32.mrb[0].mxu0
  %7926 = vmatprep.mubr.bf16.mxu0 0
  %7927 = vmatmul.mubr.bf16.gmra.mrb[0].mxu0 %v7787
  %v7928 = vpop.f32.mrb[0].mxu0
  %v7929 = vadd.f32 %v7812, %v7928
  %v7930 = vpop.f32.mrb[0].mxu0
  %v7931 = vpop.f32.mrb[0].mxu0
  %v7932 = vadd.f32 %v7812, %v7931
  %v7933 = vpop.f32.mrb[0].mxu0
  %7934 = vmatprep.mubr.bf16.mxu0 0
  %7935 = vmatmul.mubr.bf16.gmra.mrb[0].mxu0 %v7788
  %v7936 = vpop.f32.mrb[0].mxu0
  %v7937 = vadd.f32 %v7812, %v7936
  %v7938 = vpop.f32.mrb[0].mxu0
  %v7939 = vpop.f32.mrb[0].mxu0
  %v7940 = vadd.f32 %v7812, %v7939
  %v7941 = vpop.f32.mrb[0].mxu0
  %7942 = vmatprep.mubr.bf16.mxu0 0
  %7943 = vmatmul.mubr.bf16.gmra.mrb[0].mxu0 %v7789
  %v7944 = vpop.f32.mrb[0].mxu0
  %v7945 = vadd.f32 %v7812, %v7944
  %v7946 = vpop.f32.mrb[0].mxu0
  %v7947 = vpop.f32.mrb[0].mxu0
  %v7948 = vadd.f32 %v7812, %v7947
  %v7949 = vpop.f32.mrb[0].mxu0
  %7950 = vmatprep.mubr.bf16.mxu0 0
  %7951 = vmatmul.mubr.bf16.gmra.mrb[0].mxu0 %v7790
  %v7952 = vpop.f32.mrb[0].mxu0
  %v7953 = vadd.f32 %v7812, %v7952
  %v7954 = vpop.f32.mrb[0].mxu0
  %v7955 = vpop.f32.mrb[0].mxu0
  %v7956 = vadd.f32 %v7812, %v7955
  %v7957 = vpop.f32.mrb[0].mxu0
  %7958 = vdwg.mxu0
  %7959 = vmax.xlane.f32.xlu0 %v7897
  %v7960 = vpop.xlane.xlu0 %7959
  %7961 = vmax.xlane.f32.xlu0 %v7900
  %v7962 = vpop.xlane.xlu0 %7961
  %7963 = vmax.xlane.f32.xlu0 %v7905
  %v7964 = vpop.xlane.xlu0 %7963
  %7965 = vmax.xlane.f32.xlu0 %v7908
  %v7966 = vpop.xlane.xlu0 %7965
  %7967 = vmax.xlane.f32.xlu0 %v7913
  %v7968 = vpop.xlane.xlu0 %7967
  %7969 = vmax.xlane.f32.xlu0 %v7916
  %v7970 = vpop.xlane.xlu0 %7969
  %7971 = vmax.xlane.f32.xlu0 %v7921
  %v7972 = vpop.xlane.xlu0 %7971
  %7973 = vmax.xlane.f32.xlu0 %v7924
  %v7974 = vpop.xlane.xlu0 %7973
  %7975 = vmax.xlane.f32.xlu0 %v7929
  %v7976 = vpop.xlane.xlu0 %7975
  %7977 = vmax.xlane.f32.xlu0 %v7932
  %v7978 = vpop.xlane.xlu0 %7977
  %7979 = vmax.xlane.f32.xlu0 %v7937
  %v7980 = vpop.xlane.xlu0 %7979
  %7981 = vmax.xlane.f32.xlu0 %v7940
  %v7982 = vpop.xlane.xlu0 %7981
  %7983 = vmax.xlane.f32.xlu0 %v7945
  %v7984 = vpop.xlane.xlu0 %7983
  %7985 = vmax.xlane.f32.xlu0 %v7948
  %v7986 = vpop.xlane.xlu0 %7985
  %7987 = vmax.xlane.f32.xlu0 %v7953
  %v7988 = vpop.xlane.xlu0 %7987
  %7989 = vmax.xlane.f32.xlu0 %v7956
  %v7990 = vpop.xlane.xlu0 %7989
  %v7991 = vsub.f32 %v7897, %v7960
  %v7992 = vsub.f32 %v7900, %v7962
  %v7993 = vsub.f32 %v7905, %v7964
  %v7994 = vsub.f32 %v7908, %v7966
  %v7995 = vsub.f32 %v7913, %v7968
  %v7996 = vsub.f32 %v7916, %v7970
  %v7997 = vsub.f32 %v7921, %v7972
  %v7998 = vsub.f32 %v7924, %v7974
  %v7999 = vsub.f32 %v7929, %v7976
  %v8000 = vsub.f32 %v7932, %v7978
  %v8001 = vsub.f32 %v7937, %v7980
  %v8002 = vsub.f32 %v7940, %v7982
  %v8003 = vsub.f32 %v7945, %v7984
  %v8004 = vsub.f32 %v7948, %v7986
  %v8005 = vsub.f32 %v7953, %v7988
  %v8006 = vsub.f32 %v7956, %v7990
  %v8007 = vmul.f32 %v7991, 1.442695
  %v8008 = vpow.pop %v8007
  %v8009 = vmul.f32 %v7992, 1.442695
  %v8010 = vpow.pop %v8009
  %v8011 = vmul.f32 %v7993, 1.442695
  %v8012 = vpow.pop %v8011
  %v8013 = vmul.f32 %v7994, 1.442695
  %v8014 = vpow.pop %v8013
  %v8015 = vmul.f32 %v7995, 1.442695
  %v8016 = vpow.pop %v8015
  %v8017 = vmul.f32 %v7996, 1.442695
  %v8018 = vpow.pop %v8017
  %v8019 = vmul.f32 %v7997, 1.442695
  %v8020 = vpow.pop %v8019
  %v8021 = vmul.f32 %v7998, 1.442695
  %v8022 = vpow.pop %v8021
  %v8023 = vmul.f32 %v7999, 1.442695
  %v8024 = vpow.pop %v8023
  %v8025 = vmul.f32 %v8000, 1.442695
  %v8026 = vpow.pop %v8025
  %v8027 = vmul.f32 %v8001, 1.442695
  %v8028 = vpow.pop %v8027
  %v8029 = vmul.f32 %v8002, 1.442695
  %v8030 = vpow.pop %v8029
  %v8031 = vmul.f32 %v8003, 1.442695
  %v8032 = vpow.pop %v8031
  %v8033 = vmul.f32 %v8004, 1.442695
  %v8034 = vpow.pop %v8033
  %v8035 = vmul.f32 %v8005, 1.442695
  %v8036 = vpow.pop %v8035
  %v8037 = vmul.f32 %v8006, 1.442695
  %v8038 = vpow.pop %v8037
  %8039 = vadd.xlane.f32.xlu0 %v8008
  %v8040 = vpop.xlane.xlu0 %8039
  %8041 = vadd.xlane.f32.xlu0 %v8010
  %v8042 = vpop.xlane.xlu0 %8041
  %8043 = vadd.xlane.f32.xlu0 %v8012
  %v8044 = vpop.xlane.xlu0 %8043
  %8045 = vadd.xlane.f32.xlu0 %v8014
  %v8046 = vpop.xlane.xlu0 %8045
  %8047 = vadd.xlane.f32.xlu0 %v8016
  %v8048 = vpop.xlane.xlu0 %8047
  %8049 = vadd.xlane.f32.xlu0 %v8018
  %v8050 = vpop.xlane.xlu0 %8049
  %8051 = vadd.xlane.f32.xlu0 %v8020
  %v8052 = vpop.xlane.xlu0 %8051
  %8053 = vadd.xlane.f32.xlu0 %v8022
  %v8054 = vpop.xlane.xlu0 %8053
  %8055 = vadd.xlane.f32.xlu0 %v8024
  %v8056 = vpop.xlane.xlu0 %8055
  %8057 = vadd.xlane.f32.xlu0 %v8026
  %v8058 = vpop.xlane.xlu0 %8057
  %8059 = vadd.xlane.f32.xlu0 %v8028
  %v8060 = vpop.xlane.xlu0 %8059
  %8061 = vadd.xlane.f32.xlu0 %v8030
  %v8062 = vpop.xlane.xlu0 %8061
  %8063 = vadd.xlane.f32.xlu0 %v8032
  %v8064 = vpop.xlane.xlu0 %8063
  %8065 = vadd.xlane.f32.xlu0 %v8034
  %v8066 = vpop.xlane.xlu0 %8065
  %8067 = vadd.xlane.f32.xlu0 %v8036
  %v8068 = vpop.xlane.xlu0 %8067
  %8069 = vadd.xlane.f32.xlu0 %v8038
  %v8070 = vpop.xlane.xlu0 %8069
  %v8071 = vrcp.pop %v8040
  %v8072 = vrcp.pop %v8042
  %v8073 = vrcp.pop %v8044
  %v8074 = vrcp.pop %v8046
  %v8075 = vrcp.pop %v8048
  %v8076 = vrcp.pop %v8050
  %v8077 = vrcp.pop %v8052
  %v8078 = vrcp.pop %v8054
  %v8079 = vrcp.pop %v8056
  %v8080 = vrcp.pop %v8058
  %v8081 = vrcp.pop %v8060
  %v8082 = vrcp.pop %v8062
  %v8083 = vrcp.pop %v8064
  %v8084 = vrcp.pop %v8066
  %v8085 = vrcp.pop %v8068
  %v8086 = vrcp.pop %v8070
  %v8087 = vmul.f32 %v8008, %v8071
  %v8088 = vmul.f32 %v8010, %v8072
  %v8089 = vmul.f32 %v8012, %v8073
  %v8090 = vmul.f32 %v8014, %v8074
  %v8091 = vmul.f32 %v8016, %v8075
  %v8092 = vmul.f32 %v8018, %v8076
  %v8093 = vmul.f32 %v8020, %v8077
  %v8094 = vmul.f32 %v8022, %v8078
  %v8095 = vmul.f32 %v8024, %v8079
  %v8096 = vmul.f32 %v8026, %v8080
  %v8097 = vmul.f32 %v8028, %v8081
  %v8098 = vmul.f32 %v8030, %v8082
  %v8099 = vmul.f32 %v8032, %v8083
  %v8100 = vmul.f32 %v8034, %v8084
  %v8101 = vmul.f32 %v8036, %v8085
  %v8102 = vmul.f32 %v8038, %v8086
  %8103 = vst [vmem:[%s21] sm:$0xff] %v8087
  %8104 = vst [vmem:[%s21 + $0x8] sm:$0xff] %v8088
  %8105 = vst [vmem:[%s21 + $0x10] sm:$0xff] %v8089
  %8106 = vst [vmem:[%s21 + $0x18] sm:$0xff] %v8090
  %8107 = vst [vmem:[%s21 + $0x20] sm:$0xff] %v8091
  %8108 = vst [vmem:[%s21 + $0x28] sm:$0xff] %v8092
  %8109 = vst [vmem:[%s21 + $0x30] sm:$0xff] %v8093
  %8110 = vst [vmem:[%s21 + $0x38] sm:$0xff] %v8094
  %8111 = vst [vmem:[%s21 + $0x40] sm:$0xff] %v8095
  %8112 = vst [vmem:[%s21 + $0x48] sm:$0xff] %v8096
  %8113 = vst [vmem:[%s21 + $0x50] sm:$0xff] %v8097
  %8114 = vst [vmem:[%s21 + $0x58] sm:$0xff] %v8098
  %8115 = vst [vmem:[%s21 + $0x60] sm:$0xff] %v8099
  %8116 = vst [vmem:[%s21 + $0x68] sm:$0xff] %v8100
  %8117 = vst [vmem:[%s21 + $0x70] sm:$0xff] %v8101
  %8118 = vst [vmem:[%s21 + $0x78] sm:$0xff] %v8102
  // Predicated region
  $region86: #{hierarchical_lstm_decoder.1} parent=0 // pred_check
    _
  $region87: #{hierarchical_lstm_decoder.1} parent=0 // pred_check_branch
    %8120 = sbr.rel (0) target = $region89
  $region88: #{hierarchical_lstm_decoder.1} parent=0 // pred_region
    _
  $region89: #{hierarchical_lstm_decoder.1} parent=0 // pred_fallthru
    _
  // Predicated region
  $region90: #{hierarchical_lstm_decoder.1} parent=0 // pred_check
    _
  $region91: #{hierarchical_lstm_decoder.1} parent=0 // pred_check_branch
    %8122 = sbr.rel (0) target = $region93
  $region92: #{hierarchical_lstm_decoder.1} parent=0 // pred_region
    _
  $region93: #{hierarchical_lstm_decoder.1} parent=0 // pred_fallthru
    _

</llo_original>
